<compile_context>
chip_gen: v7x
topology: tpu7x:2x2x1
jax: 0.10.0
libtpu: 0.0.40
codegen_flags: <defaults>
</compile_context>

<pallas_src>
import functools

import jax
import jax.numpy as jnp
from jax import lax
from jax.experimental import pallas as pl
from jax.experimental.pallas import tpu as pltpu


# Channel schedule of the point-branch shared MLPs (PVCNN2Unet with the
# LatentPointDecPVC sa_blocks / fp_blocks, embed_dim=0).
SA_STAGES = ((32, 64), (64, 128), (128, 256), (128, 128, 128))
FP_STAGES = ((128, 128), (128, 128), (128, 128), (128, 128, 64))
HEADS = 8
FILM_PAD = 256      # lane padding for packed bias / FiLM rows
CTX_LANES = 128     # lane-dense ctx / output width
SLAB_WIDTH = 256    # lane width of the packed bf16 weight slab


# ----------------------------------------------------------------------------
# Fused Pallas kernel: entire decoder for one batch block per grid step.
# ----------------------------------------------------------------------------
def _fused_decoder_kernel(ctx_ref, slab_ref, bias_ref, mod_ref, out_ref, *,
                          w_meta, skip_weight):
    rows, CW = ctx_ref.shape            # rows = Bb * N
    Bb = mod_ref.shape[0]
    N = rows // Bb
    n_style = mod_ref.shape[1] // 2

    ctx = ctx_ref[...]                  # (rows, 128) f32; lanes 0..d_ctx-1 real

    st = {"w": 0, "b": 0, "s": 0}

    def next_w():
        off, cin, cout = w_meta[st["w"]]
        st["w"] += 1
        return slab_ref[off:off + cin, 0:cout]          # bf16 (cin, cout)

    def next_b(cout):
        b = bias_ref[st["b"], 0:cout]                   # (cout,) f32
        st["b"] += 1
        return b

    def matmul(x, w):
        # bf16 MXU matmul with f32 accumulation.
        return jnp.dot(x.astype(w.dtype), w, preferred_element_type=jnp.float32)

    def film(y, cout):
        # Per-batch-element style FiLM: y * (1 + gamma_b) + beta_b.
        idx = st["s"]
        st["s"] += 1
        parts = []
        for b in range(Bb):                             # static unroll over Bb
            g = mod_ref[b, idx, 0:cout]
            be = mod_ref[b, n_style + idx, 0:cout]
            parts.append(y[b * N:(b + 1) * N] * (1.0 + g) + be)
        return parts[0] if Bb == 1 else jnp.concatenate(parts, axis=0)

    def film_layer(x, extra=None):
        # Conv1d(1x1) + bias -> LeakyReLU(0.1) -> per-batch style FiLM.
        w = next_w()
        cout = w.shape[1]
        y = matmul(x, w)
        if extra is not None:                           # U-Net skip as 2nd matmul
            y = y + matmul(extra, next_w())
        y = y + next_b(cout)
        y = jnp.where(y > 0, y, 0.1 * y)
        return film(y, cout)

    # ---- SA path -------------------------------------------------------------
    feats = ctx
    skips = []
    for stage in SA_STAGES:
        skips.append(feats.astype(jnp.bfloat16))        # live across attention
        for _ in stage:
            feats = film_layer(feats)
    # TODO(synk): farthest-point sampling / ball-query grouping / voxel-conv
    # branches of the SA & FP blocks are not modeled; only the point-branch
    # shared MLPs are, at full point resolution.

    # ---- global linear attention (heads fused via block-diag mask from slab) -
    dim = feats.shape[1]
    q = matmul(feats, next_w())                         # (rows, dim), no bias
    k = matmul(feats, next_w())
    v = matmul(feats, next_w())
    head_mask = next_w()                                # (dim, dim) bf16 block-diag
    attn_parts = []
    for b in range(Bb):                                 # per-batch softmax/contract
        rs = slice(b * N, (b + 1) * N)
        kb = k[rs]
        kb = kb - jnp.max(kb, axis=0, keepdims=True)    # softmax over point axis
        kb = jnp.exp(kb)
        kb = kb / jnp.sum(kb, axis=0, keepdims=True)
        ctx_hh = lax.dot_general(                       # softmax(K)^T V, bf16 MXU
            kb.astype(jnp.bfloat16), v[rs].astype(jnp.bfloat16),
            dimension_numbers=(((0,), (0,)), ((), ())),
            preferred_element_type=jnp.float32)         # (dim, dim)
        ctx_hh = ctx_hh.astype(jnp.bfloat16) * head_mask
        attn_parts.append(
            jnp.dot(q[rs].astype(jnp.bfloat16), ctx_hh,
                    preferred_element_type=jnp.float32))
    attn = attn_parts[0] if Bb == 1 else jnp.concatenate(attn_parts, axis=0)
    feats = matmul(attn, next_w()) + next_b(dim)        # out projection (no act)

    # ---- FP path (U-Net skips via split weights, no concat) -------------------
    fp_skips = [skips[3], skips[2], skips[1], ctx]      # last stage: ctx extra feats
    for si, stage in enumerate(FP_STAGES):
        for li, _ in enumerate(stage):
            feats = film_layer(feats, extra=fp_skips[si] if li == 0 else None)

    # ---- classifier ------------------------------------------------------------
    feats = film_layer(feats)                           # SharedMLP 64 -> 128 (style)
    # TODO(synk): Dropout is identity at inference time; omitted.
    w_fin = next_w()                                    # (128,128); cols>=point_dim zero
    y = matmul(feats, w_fin) + next_b(w_fin.shape[1])

    # ---- fused `output * skip_weight + x` (x = first point_dim lanes of ctx) ---
    xmask = bias_ref[bias_ref.shape[0] - 1, 0:CW]       # precomputed lane mask
    out_ref[...] = (y * skip_weight + ctx * xmask).astype(out_ref.dtype)


# ----------------------------------------------------------------------------
# Deterministic synthetic parameters (shapes from the module's __init__),
# packed into a single bf16 weight slab + one bias/mask array + FiLM tables.
# ----------------------------------------------------------------------------
def init_params(key, context_dim, point_dim, style_dim):
    d_ctx = context_dim + point_dim
    keys = iter(jax.random.split(key, 160))

    w_entries = []          # f32 matrices in exact kernel consumption order
    biases, film_g, film_b = [], [], []

    def rand_w(cin, cout, fan_in=None):
        fan = float(fan_in if fan_in is not None else cin)
        return jax.random.normal(next(keys), (cin, cout), jnp.float32) / jnp.sqrt(fan)

    def add_w(w):
        w_entries.append(w)

    def add_bias(cout):
        b = 0.01 * jax.random.normal(next(keys), (cout,), jnp.float32)
        biases.append(jnp.pad(b, (0, FILM_PAD - cout)))

    def add_film():
        film_g.append(0.02 * jax.random.normal(next(keys), (style_dim, FILM_PAD),
                                               jnp.float32))
        film_b.append(0.02 * jax.random.normal(next(keys), (style_dim, FILM_PAD),
                                               jnp.float32))

    # SA (set-abstraction) stages.
    c = d_ctx
    sa_in = []
    for stage_idx, stage in enumerate(SA_STAGES):
        sa_in.append(c)
        for cout in stage:
            w = rand_w(c, cout)
            if stage_idx == 0 and c == d_ctx:
                # first layer reads the 128-lane padded ctx: zero-pad rows d_ctx..127
                w = jnp.pad(w, ((0, CTX_LANES - d_ctx), (0, 0)))
            add_w(w)
            add_bias(cout)
            add_film()
            c = cout

    # Global linear attention (use_att=1), 8 heads on channels_sa_features.
    dim = c                                    # 128
    d_head = dim // HEADS
    add_w(rand_w(dim, dim))                    # q projection (no bias)
    add_w(rand_w(dim, dim))                    # k projection
    add_w(rand_w(dim, dim))                    # v projection
    head_id = jnp.arange(dim) // d_head        # block-diagonal head mask (constant)
    add_w((head_id[:, None] == head_id[None, :]).astype(jnp.float32))
    add_w(rand_w(dim, dim))                    # output projection
    add_bias(dim)

    # FP (feature-propagation) stages; first layer of each stage split into
    # (feats rows, skip rows) so the kernel never concatenates.
    skip_ch = [sa_in[3], sa_in[2], sa_in[1], context_dim]
    for si, stage in enumerate(FP_STAGES):
        s = skip_ch[si]
        for li, cout in enumerate(stage):
            if li == 0:
                fan = c + s
                add_w(rand_w(c, cout, fan_in=fan))          # rows for feats
                wb = rand_w(s, cout, fan_in=fan)            # rows for the skip
                if si == len(FP_STAGES) - 1:
                    # last-stage skip = ctx lanes [point_dim : point_dim+context_dim]
                    wb = jnp.pad(wb, ((point_dim, CTX_LANES - point_dim - s), (0, 0)))
                add_w(wb)
            else:
                add_w(rand_w(c, cout))
            add_bias(cout)
            add_film()
            c = cout

    # Classifier: SharedMLP(64 -> 128) + Dropout(identity) + Conv1d(128 -> point_dim).
    add_w(rand_w(c, 128))
    add_bias(128)
    add_film()
    w_fin = jnp.pad(rand_w(128, point_dim), ((0, 0), (0, CTX_LANES - point_dim)))
    add_w(w_fin)
    b_fin = 0.01 * jax.random.normal(next(keys), (point_dim,), jnp.float32)
    biases.append(jnp.pad(b_fin, (0, FILM_PAD - point_dim)))   # final conv bias

    # x-passthrough lane mask (lanes < point_dim), appended as the last bias row.
    biases.append((jnp.arange(FILM_PAD) < point_dim).astype(jnp.float32))

    # Pack every weight into ONE bf16 slab (row-concatenated, SLAB_WIDTH lanes).
    blocks, meta, off = [], [], 0
    for w in w_entries:
        cin, cout = w.shape
        assert cin % 8 == 0, cin
        blocks.append(jnp.pad(w, ((0, 0), (0, SLAB_WIDTH - cout))))
        meta.append((off, cin, cout))
        off += cin
    slab = jnp.concatenate(blocks, axis=0).astype(jnp.bfloat16)

    return {
        "slab": slab,                           # (~3616, 256) bf16
        "w_meta": tuple(meta),                  # static (offset, cin, cout) per weight
        "bias": jnp.stack(biases),              # (22, 256) f32 (incl. x lane mask)
        "film_g": jnp.stack(film_g),            # (19, style_dim, 256) f32
        "film_b": jnp.stack(film_b),            # (19, style_dim, 256) f32
        "n_style": len(film_g),
    }


def _pick_batch_block(B, N):
    # Target M = Bb*N ~ 256 rows per matmul (MXU depth), but keep >= 2 grid
    # steps when B allows so v7x's two TensorCores both get work.
    target = max(1, 256 // max(N, 1))
    best = 1
    for d in range(1, B + 1):
        if B % d == 0 and d <= target and (B // d >= 2 or B == 1):
            best = d
    return best


# ----------------------------------------------------------------------------
# Forward pass (LatentPointDecPVC.forward semantics).
# ----------------------------------------------------------------------------
def latent_point_dec_forward(context, style, params, *, num_points, point_dim,
                             context_dim, skip_weight, batch_block=None):
    B = context.shape[0]
    d_ctx = context_dim + point_dim
    N = num_points
    assert context.shape[1] == N * d_ctx
    CW = CTX_LANES

    # Latent points, lane-dense to 128; lanes 0..point_dim-1 double as the
    # residual x of the `out*skip_weight + x` epilogue.
    ctx = context.reshape(B, N, d_ctx).astype(jnp.float32)
    ctx128 = jnp.pad(ctx, ((0, 0), (0, 0), (0, CW - d_ctx)))
    ctx_flat = ctx128.reshape(B * N, CW)

    # All FiLM (style) modulations of the network in two batched matmuls,
    # packed as [gammas ; betas] along rows.
    style_f = style.astype(jnp.float32)
    gamma = jnp.einsum("bs,lsc->blc", style_f, params["film_g"])   # (B, n_style, 256)
    beta = jnp.einsum("bs,lsc->blc", style_f, params["film_b"])    # (B, n_style, 256)
    mods = jnp.concatenate([gamma, beta], axis=1)                  # (B, 2*n_style, 256)

    Bb = batch_block if batch_block is not None else _pick_batch_block(B, N)
    assert B % Bb == 0
    rows = Bb * N

    kernel = functools.partial(
        _fused_decoder_kernel,
        w_meta=params["w_meta"],
        skip_weight=float(skip_weight))

    in_specs = [
        pl.BlockSpec((rows, CW), lambda b: (b, 0)),                # ctx / x
        pl.BlockSpec(params["slab"].shape, lambda b: (0, 0)),      # packed weights
        pl.BlockSpec(params["bias"].shape, lambda b: (0, 0)),      # biases + x mask
        pl.BlockSpec((Bb,) + mods.shape[1:], lambda b: (b, 0, 0)), # FiLM gammas/betas
    ]

    out_flat = pl.pallas_call(
        kernel,
        out_shape=jax.ShapeDtypeStruct((B * N, CW), jnp.float32),
        grid_spec=pltpu.PrefetchScalarGridSpec(
            num_scalar_prefetch=0,
            grid=(B // Bb,),                         # batch blocks per step
            in_specs=in_specs,
            out_specs=pl.BlockSpec((rows, CW), lambda b: (b, 0)),
        ),
        compiler_params=pltpu.CompilerParams(
            dimension_semantics=("parallel",)),      # lets v7x use both TCs
    )(ctx_flat, params["slab"], params["bias"], mods)

    return out_flat.reshape(B, N, CW)[:, :, :point_dim]            # (B, N, point_dim)


# ----------------------------------------------------------------------------
if __name__ == "__main__":
    key = jax.random.PRNGKey(0)
    B, N = 4, 64
    point_dim, context_dim, style_dim = 3, 4, 32
    d_ctx = point_dim + context_dim
    skip_weight = 0.1

    kp, kc, ks, kx, kb = jax.random.split(key, 5)
    params = init_params(kp, context_dim, point_dim, style_dim)

    context = jax.random.normal(kc, (B, N * d_ctx), jnp.float32)      # latent points
    style = jax.random.normal(ks, (B, style_dim), jnp.float32)        # shape latent
    x_unused = jax.random.normal(kx, (B, N, point_dim), jnp.float32)  # unused (as in torch)
    beta_unused = jax.random.uniform(kb, (B,), jnp.float32)           # unused (as in torch)

    out = latent_point_dec_forward(
        context, style, params,
        num_points=N, point_dim=point_dim, context_dim=context_dim,
        skip_weight=skip_weight)
    out = jax.block_until_ready(out)
    assert out.shape == (B, N, point_dim) and out.dtype == jnp.float32
    assert bool(jnp.all(jnp.isfinite(out)))
    print("KERNEL_OK")
</pallas_src>

<mosaic_0001>
module attributes {stable_mosaic.version = 11 : i64} {
  func.func @_fused_decoder_kernel(%arg0: i32, %arg1: memref<128x128xf32, #tpu.memory_space<vmem>>, %arg2: memref<3616x256xbf16, #tpu.memory_space<vmem>>, %arg3: memref<22x256xf32, #tpu.memory_space<vmem>>, %arg4: memref<2x38x256xf32, #tpu.memory_space<vmem>>, %arg5: memref<128x128xf32, #tpu.memory_space<vmem>>) attributes {dimension_semantics = [#tpu.dimension_semantics<parallel>], iteration_bounds = array<i64: 2>, scalar_prefetch = 0 : i64, scratch_operands = 0 : i64, tpu.core_type = #tpu.core_type<tc>, window_params = [{transform_indices = @transform_0, window_bounds = array<i64: 128, 128>}, {pipeline_mode = #tpu.pipeline_mode<synchronous>, transform_indices = @transform_1, window_bounds = array<i64: 3616, 256>}, {pipeline_mode = #tpu.pipeline_mode<synchronous>, transform_indices = @transform_2, window_bounds = array<i64: 22, 256>}, {transform_indices = @transform_3, window_bounds = array<i64: 2, 38, 256>}, {transform_indices = @transform_4, window_bounds = array<i64: 128, 128>}]} {
    %c0 = arith.constant 0 : index
    %c0_0 = arith.constant 0 : index
    %0 = vector.load %arg1[%c0, %c0_0] : memref<128x128xf32, #tpu.memory_space<vmem>>, vector<128x128xf32>
    %c0_1 = arith.constant 0 : index
    %c0_2 = arith.constant 0 : index
    %1 = vector.load %arg2[%c0_1, %c0_2] : memref<3616x256xbf16, #tpu.memory_space<vmem>>, vector<128x32xbf16>
    %2 = arith.truncf %0 : vector<128x128xf32> to vector<128x128xbf16>
    %cst = arith.constant dense<0.000000e+00> : vector<128x32xf32>
    %3 = tpu.matmul %2, %1, %cst {dimension_numbers = #tpu.dot_dimension_numbers<[1], [0], [0], [1], [0, 0, 1, 1], [], []>} : vector<128x128xbf16>, vector<128x32xbf16>, vector<128x32xf32> -> vector<128x32xf32>
    %c0_3 = arith.constant 0 : index
    %c0_4 = arith.constant 0 : index
    %4 = vector.load %arg3[%c0_3, %c0_4] : memref<22x256xf32, #tpu.memory_space<vmem>>, vector<1x32xf32>
    %5 = vector.shape_cast %4 : vector<1x32xf32> to vector<32xf32>
    %6 = vector.shape_cast %5 : vector<32xf32> to vector<1x32xf32>
    %7 = vector.broadcast %6 : vector<1x32xf32> to vector<128x32xf32>
    %8 = arith.addf %3, %7 : vector<128x32xf32>
    %cst_5 = arith.constant 0.000000e+00 : f32
    %9 = vector.broadcast %cst_5 : f32 to vector<128x32xf32>
    %10 = arith.cmpf ogt, %8, %9 : vector<128x32xf32>
    %cst_6 = arith.constant 1.000000e-01 : f32
    %11 = vector.broadcast %cst_6 : f32 to vector<128x32xf32>
    %12 = arith.mulf %11, %8 : vector<128x32xf32>
    %13 = arith.select %10, %8, %12 : vector<128x32xi1>, vector<128x32xf32>
    %c0_7 = arith.constant 0 : index
    %c0_8 = arith.constant 0 : index
    %c0_9 = arith.constant 0 : index
    %14 = vector.load %arg4[%c0_7, %c0_8, %c0_9] : memref<2x38x256xf32, #tpu.memory_space<vmem>>, vector<1x1x32xf32>
    %15 = vector.shape_cast %14 : vector<1x1x32xf32> to vector<32xf32>
    %c0_10 = arith.constant 0 : index
    %c19 = arith.constant 19 : index
    %c0_11 = arith.constant 0 : index
    %16 = vector.load %arg4[%c0_10, %c19, %c0_11] : memref<2x38x256xf32, #tpu.memory_space<vmem>>, vector<1x1x32xf32>
    %17 = vector.shape_cast %16 : vector<1x1x32xf32> to vector<32xf32>
    %18 = vector.extract_strided_slice %13 {offsets = [0, 0], sizes = [64, 32], strides = [1, 1]} : vector<128x32xf32> to vector<64x32xf32>
    %cst_12 = arith.constant 1.000000e+00 : f32
    %19 = vector.broadcast %cst_12 : f32 to vector<32xf32>
    %20 = arith.addf %19, %15 : vector<32xf32>
    %21 = vector.shape_cast %20 : vector<32xf32> to vector<1x32xf32>
    %22 = vector.broadcast %21 : vector<1x32xf32> to vector<64x32xf32>
    %23 = arith.mulf %18, %22 : vector<64x32xf32>
    %24 = vector.shape_cast %17 : vector<32xf32> to vector<1x32xf32>
    %25 = vector.broadcast %24 : vector<1x32xf32> to vector<64x32xf32>
    %26 = arith.addf %23, %25 : vector<64x32xf32>
    %c1 = arith.constant 1 : index
    %c0_13 = arith.constant 0 : index
    %c0_14 = arith.constant 0 : index
    %27 = vector.load %arg4[%c1, %c0_13, %c0_14] : memref<2x38x256xf32, #tpu.memory_space<vmem>>, vector<1x1x32xf32>
    %28 = vector.shape_cast %27 : vector<1x1x32xf32> to vector<32xf32>
    %c1_15 = arith.constant 1 : index
    %c19_16 = arith.constant 19 : index
    %c0_17 = arith.constant 0 : index
    %29 = vector.load %arg4[%c1_15, %c19_16, %c0_17] : memref<2x38x256xf32, #tpu.memory_space<vmem>>, vector<1x1x32xf32>
    %30 = vector.shape_cast %29 : vector<1x1x32xf32> to vector<32xf32>
    %31 = vector.extract_strided_slice %13 {offsets = [64, 0], sizes = [64, 32], strides = [1, 1]} : vector<128x32xf32> to vector<64x32xf32>
    %cst_18 = arith.constant 1.000000e+00 : f32
    %32 = vector.broadcast %cst_18 : f32 to vector<32xf32>
    %33 = arith.addf %32, %28 : vector<32xf32>
    %34 = vector.shape_cast %33 : vector<32xf32> to vector<1x32xf32>
    %35 = vector.broadcast %34 : vector<1x32xf32> to vector<64x32xf32>
    %36 = arith.mulf %31, %35 : vector<64x32xf32>
    %37 = vector.shape_cast %30 : vector<32xf32> to vector<1x32xf32>
    %38 = vector.broadcast %37 : vector<1x32xf32> to vector<64x32xf32>
    %39 = arith.addf %36, %38 : vector<64x32xf32>
    %40 = tpu.concatenate %26, %39 in 0 : vector<64x32xf32>, vector<64x32xf32> -> vector<128x32xf32>
    %c128 = arith.constant 128 : index
    %c0_19 = arith.constant 0 : index
    %41 = vector.load %arg2[%c128, %c0_19] : memref<3616x256xbf16, #tpu.memory_space<vmem>>, vector<32x64xbf16>
    %42 = arith.truncf %40 : vector<128x32xf32> to vector<128x32xbf16>
    %cst_20 = arith.constant dense<0.000000e+00> : vector<128x64xf32>
    %43 = tpu.matmul %42, %41, %cst_20 {dimension_numbers = #tpu.dot_dimension_numbers<[1], [0], [0], [1], [0, 0, 1, 1], [], []>} : vector<128x32xbf16>, vector<32x64xbf16>, vector<128x64xf32> -> vector<128x64xf32>
    %c1_21 = arith.constant 1 : index
    %c0_22 = arith.constant 0 : index
    %44 = vector.load %arg3[%c1_21, %c0_22] : memref<22x256xf32, #tpu.memory_space<vmem>>, vector<1x64xf32>
    %45 = vector.shape_cast %44 : vector<1x64xf32> to vector<64xf32>
    %46 = vector.shape_cast %45 : vector<64xf32> to vector<1x64xf32>
    %47 = vector.broadcast %46 : vector<1x64xf32> to vector<128x64xf32>
    %48 = arith.addf %43, %47 : vector<128x64xf32>
    %cst_23 = arith.constant 0.000000e+00 : f32
    %49 = vector.broadcast %cst_23 : f32 to vector<128x64xf32>
    %50 = arith.cmpf ogt, %48, %49 : vector<128x64xf32>
    %cst_24 = arith.constant 1.000000e-01 : f32
    %51 = vector.broadcast %cst_24 : f32 to vector<128x64xf32>
    %52 = arith.mulf %51, %48 : vector<128x64xf32>
    %53 = arith.select %50, %48, %52 : vector<128x64xi1>, vector<128x64xf32>
    %c0_25 = arith.constant 0 : index
    %c1_26 = arith.constant 1 : index
    %c0_27 = arith.constant 0 : index
    %54 = vector.load %arg4[%c0_25, %c1_26, %c0_27] : memref<2x38x256xf32, #tpu.memory_space<vmem>>, vector<1x1x64xf32>
    %55 = vector.shape_cast %54 : vector<1x1x64xf32> to vector<64xf32>
    %c0_28 = arith.constant 0 : index
    %c20 = arith.constant 20 : index
    %c0_29 = arith.constant 0 : index
    %56 = vector.load %arg4[%c0_28, %c20, %c0_29] : memref<2x38x256xf32, #tpu.memory_space<vmem>>, vector<1x1x64xf32>
    %57 = vector.shape_cast %56 : vector<1x1x64xf32> to vector<64xf32>
    %58 = vector.extract_strided_slice %53 {offsets = [0, 0], sizes = [64, 64], strides = [1, 1]} : vector<128x64xf32> to vector<64x64xf32>
    %cst_30 = arith.constant 1.000000e+00 : f32
    %59 = vector.broadcast %cst_30 : f32 to vector<64xf32>
    %60 = arith.addf %59, %55 : vector<64xf32>
    %61 = vector.shape_cast %60 : vector<64xf32> to vector<1x64xf32>
    %62 = vector.broadcast %61 : vector<1x64xf32> to vector<64x64xf32>
    %63 = arith.mulf %58, %62 : vector<64x64xf32>
    %64 = vector.shape_cast %57 : vector<64xf32> to vector<1x64xf32>
    %65 = vector.broadcast %64 : vector<1x64xf32> to vector<64x64xf32>
    %66 = arith.addf %63, %65 : vector<64x64xf32>
    %c1_31 = arith.constant 1 : index
    %c1_32 = arith.constant 1 : index
    %c0_33 = arith.constant 0 : index
    %67 = vector.load %arg4[%c1_31, %c1_32, %c0_33] : memref<2x38x256xf32, #tpu.memory_space<vmem>>, vector<1x1x64xf32>
    %68 = vector.shape_cast %67 : vector<1x1x64xf32> to vector<64xf32>
    %c1_34 = arith.constant 1 : index
    %c20_35 = arith.constant 20 : index
    %c0_36 = arith.constant 0 : index
    %69 = vector.load %arg4[%c1_34, %c20_35, %c0_36] : memref<2x38x256xf32, #tpu.memory_space<vmem>>, vector<1x1x64xf32>
    %70 = vector.shape_cast %69 : vector<1x1x64xf32> to vector<64xf32>
    %71 = vector.extract_strided_slice %53 {offsets = [64, 0], sizes = [64, 64], strides = [1, 1]} : vector<128x64xf32> to vector<64x64xf32>
    %cst_37 = arith.constant 1.000000e+00 : f32
    %72 = vector.broadcast %cst_37 : f32 to vector<64xf32>
    %73 = arith.addf %72, %68 : vector<64xf32>
    %74 = vector.shape_cast %73 : vector<64xf32> to vector<1x64xf32>
    %75 = vector.broadcast %74 : vector<1x64xf32> to vector<64x64xf32>
    %76 = arith.mulf %71, %75 : vector<64x64xf32>
    %77 = vector.shape_cast %70 : vector<64xf32> to vector<1x64xf32>
    %78 = vector.broadcast %77 : vector<1x64xf32> to vector<64x64xf32>
    %79 = arith.addf %76, %78 : vector<64x64xf32>
    %80 = tpu.concatenate %66, %79 in 0 : vector<64x64xf32>, vector<64x64xf32> -> vector<128x64xf32>
    %81 = arith.truncf %80 : vector<128x64xf32> to vector<128x64xbf16>
    %c160 = arith.constant 160 : index
    %c0_38 = arith.constant 0 : index
    %82 = vector.load %arg2[%c160, %c0_38] : memref<3616x256xbf16, #tpu.memory_space<vmem>>, vector<64x64xbf16>
    %83 = arith.truncf %80 : vector<128x64xf32> to vector<128x64xbf16>
    %cst_39 = arith.constant dense<0.000000e+00> : vector<128x64xf32>
    %84 = tpu.matmul %83, %82, %cst_39 {dimension_numbers = #tpu.dot_dimension_numbers<[1], [0], [0], [1], [0, 0, 1, 1], [], []>} : vector<128x64xbf16>, vector<64x64xbf16>, vector<128x64xf32> -> vector<128x64xf32>
    %c2 = arith.constant 2 : index
    %c0_40 = arith.constant 0 : index
    %85 = vector.load %arg3[%c2, %c0_40] : memref<22x256xf32, #tpu.memory_space<vmem>>, vector<1x64xf32>
    %86 = vector.shape_cast %85 : vector<1x64xf32> to vector<64xf32>
    %87 = vector.shape_cast %86 : vector<64xf32> to vector<1x64xf32>
    %88 = vector.broadcast %87 : vector<1x64xf32> to vector<128x64xf32>
    %89 = arith.addf %84, %88 : vector<128x64xf32>
    %cst_41 = arith.constant 0.000000e+00 : f32
    %90 = vector.broadcast %cst_41 : f32 to vector<128x64xf32>
    %91 = arith.cmpf ogt, %89, %90 : vector<128x64xf32>
    %cst_42 = arith.constant 1.000000e-01 : f32
    %92 = vector.broadcast %cst_42 : f32 to vector<128x64xf32>
    %93 = arith.mulf %92, %89 : vector<128x64xf32>
    %94 = arith.select %91, %89, %93 : vector<128x64xi1>, vector<128x64xf32>
    %c0_43 = arith.constant 0 : index
    %c2_44 = arith.constant 2 : index
    %c0_45 = arith.constant 0 : index
    %95 = vector.load %arg4[%c0_43, %c2_44, %c0_45] : memref<2x38x256xf32, #tpu.memory_space<vmem>>, vector<1x1x64xf32>
    %96 = vector.shape_cast %95 : vector<1x1x64xf32> to vector<64xf32>
    %c0_46 = arith.constant 0 : index
    %c21 = arith.constant 21 : index
    %c0_47 = arith.constant 0 : index
    %97 = vector.load %arg4[%c0_46, %c21, %c0_47] : memref<2x38x256xf32, #tpu.memory_space<vmem>>, vector<1x1x64xf32>
    %98 = vector.shape_cast %97 : vector<1x1x64xf32> to vector<64xf32>
    %99 = vector.extract_strided_slice %94 {offsets = [0, 0], sizes = [64, 64], strides = [1, 1]} : vector<128x64xf32> to vector<64x64xf32>
    %cst_48 = arith.constant 1.000000e+00 : f32
    %100 = vector.broadcast %cst_48 : f32 to vector<64xf32>
    %101 = arith.addf %100, %96 : vector<64xf32>
    %102 = vector.shape_cast %101 : vector<64xf32> to vector<1x64xf32>
    %103 = vector.broadcast %102 : vector<1x64xf32> to vector<64x64xf32>
    %104 = arith.mulf %99, %103 : vector<64x64xf32>
    %105 = vector.shape_cast %98 : vector<64xf32> to vector<1x64xf32>
    %106 = vector.broadcast %105 : vector<1x64xf32> to vector<64x64xf32>
    %107 = arith.addf %104, %106 : vector<64x64xf32>
    %c1_49 = arith.constant 1 : index
    %c2_50 = arith.constant 2 : index
    %c0_51 = arith.constant 0 : index
    %108 = vector.load %arg4[%c1_49, %c2_50, %c0_51] : memref<2x38x256xf32, #tpu.memory_space<vmem>>, vector<1x1x64xf32>
    %109 = vector.shape_cast %108 : vector<1x1x64xf32> to vector<64xf32>
    %c1_52 = arith.constant 1 : index
    %c21_53 = arith.constant 21 : index
    %c0_54 = arith.constant 0 : index
    %110 = vector.load %arg4[%c1_52, %c21_53, %c0_54] : memref<2x38x256xf32, #tpu.memory_space<vmem>>, vector<1x1x64xf32>
    %111 = vector.shape_cast %110 : vector<1x1x64xf32> to vector<64xf32>
    %112 = vector.extract_strided_slice %94 {offsets = [64, 0], sizes = [64, 64], strides = [1, 1]} : vector<128x64xf32> to vector<64x64xf32>
    %cst_55 = arith.constant 1.000000e+00 : f32
    %113 = vector.broadcast %cst_55 : f32 to vector<64xf32>
    %114 = arith.addf %113, %109 : vector<64xf32>
    %115 = vector.shape_cast %114 : vector<64xf32> to vector<1x64xf32>
    %116 = vector.broadcast %115 : vector<1x64xf32> to vector<64x64xf32>
    %117 = arith.mulf %112, %116 : vector<64x64xf32>
    %118 = vector.shape_cast %111 : vector<64xf32> to vector<1x64xf32>
    %119 = vector.broadcast %118 : vector<1x64xf32> to vector<64x64xf32>
    %120 = arith.addf %117, %119 : vector<64x64xf32>
    %121 = tpu.concatenate %107, %120 in 0 : vector<64x64xf32>, vector<64x64xf32> -> vector<128x64xf32>
    %c224 = arith.constant 224 : index
    %c0_56 = arith.constant 0 : index
    %122 = vector.load %arg2[%c224, %c0_56] : memref<3616x256xbf16, #tpu.memory_space<vmem>>, vector<64x128xbf16>
    %123 = arith.truncf %121 : vector<128x64xf32> to vector<128x64xbf16>
    %cst_57 = arith.constant dense<0.000000e+00> : vector<128x128xf32>
    %124 = tpu.matmul %123, %122, %cst_57 {dimension_numbers = #tpu.dot_dimension_numbers<[1], [0], [0], [1], [0, 0, 1, 1], [], []>} : vector<128x64xbf16>, vector<64x128xbf16>, vector<128x128xf32> -> vector<128x128xf32>
    %c3 = arith.constant 3 : index
    %c0_58 = arith.constant 0 : index
    %125 = vector.load %arg3[%c3, %c0_58] : memref<22x256xf32, #tpu.memory_space<vmem>>, vector<1x128xf32>
    %126 = vector.shape_cast %125 : vector<1x128xf32> to vector<128xf32>
    %127 = vector.shape_cast %126 : vector<128xf32> to vector<1x128xf32>
    %128 = vector.broadcast %127 : vector<1x128xf32> to vector<128x128xf32>
    %129 = arith.addf %124, %128 : vector<128x128xf32>
    %cst_59 = arith.constant 0.000000e+00 : f32
    %130 = vector.broadcast %cst_59 : f32 to vector<128x128xf32>
    %131 = arith.cmpf ogt, %129, %130 : vector<128x128xf32>
    %cst_60 = arith.constant 1.000000e-01 : f32
    %132 = vector.broadcast %cst_60 : f32 to vector<128x128xf32>
    %133 = arith.mulf %132, %129 : vector<128x128xf32>
    %134 = arith.select %131, %129, %133 : vector<128x128xi1>, vector<128x128xf32>
    %c0_61 = arith.constant 0 : index
    %c3_62 = arith.constant 3 : index
    %c0_63 = arith.constant 0 : index
    %135 = vector.load %arg4[%c0_61, %c3_62, %c0_63] : memref<2x38x256xf32, #tpu.memory_space<vmem>>, vector<1x1x128xf32>
    %136 = vector.shape_cast %135 : vector<1x1x128xf32> to vector<128xf32>
    %c0_64 = arith.constant 0 : index
    %c22 = arith.constant 22 : index
    %c0_65 = arith.constant 0 : index
    %137 = vector.load %arg4[%c0_64, %c22, %c0_65] : memref<2x38x256xf32, #tpu.memory_space<vmem>>, vector<1x1x128xf32>
    %138 = vector.shape_cast %137 : vector<1x1x128xf32> to vector<128xf32>
    %139 = vector.extract_strided_slice %134 {offsets = [0, 0], sizes = [64, 128], strides = [1, 1]} : vector<128x128xf32> to vector<64x128xf32>
    %cst_66 = arith.constant 1.000000e+00 : f32
    %140 = vector.broadcast %cst_66 : f32 to vector<128xf32>
    %141 = arith.addf %140, %136 : vector<128xf32>
    %142 = vector.shape_cast %141 : vector<128xf32> to vector<1x128xf32>
    %143 = vector.broadcast %142 : vector<1x128xf32> to vector<64x128xf32>
    %144 = arith.mulf %139, %143 : vector<64x128xf32>
    %145 = vector.shape_cast %138 : vector<128xf32> to vector<1x128xf32>
    %146 = vector.broadcast %145 : vector<1x128xf32> to vector<64x128xf32>
    %147 = arith.addf %144, %146 : vector<64x128xf32>
    %c1_67 = arith.constant 1 : index
    %c3_68 = arith.constant 3 : index
    %c0_69 = arith.constant 0 : index
    %148 = vector.load %arg4[%c1_67, %c3_68, %c0_69] : memref<2x38x256xf32, #tpu.memory_space<vmem>>, vector<1x1x128xf32>
    %149 = vector.shape_cast %148 : vector<1x1x128xf32> to vector<128xf32>
    %c1_70 = arith.constant 1 : index
    %c22_71 = arith.constant 22 : index
    %c0_72 = arith.constant 0 : index
    %150 = vector.load %arg4[%c1_70, %c22_71, %c0_72] : memref<2x38x256xf32, #tpu.memory_space<vmem>>, vector<1x1x128xf32>
    %151 = vector.shape_cast %150 : vector<1x1x128xf32> to vector<128xf32>
    %152 = vector.extract_strided_slice %134 {offsets = [64, 0], sizes = [64, 128], strides = [1, 1]} : vector<128x128xf32> to vector<64x128xf32>
    %cst_73 = arith.constant 1.000000e+00 : f32
    %153 = vector.broadcast %cst_73 : f32 to vector<128xf32>
    %154 = arith.addf %153, %149 : vector<128xf32>
    %155 = vector.shape_cast %154 : vector<128xf32> to vector<1x128xf32>
    %156 = vector.broadcast %155 : vector<1x128xf32> to vector<64x128xf32>
    %157 = arith.mulf %152, %156 : vector<64x128xf32>
    %158 = vector.shape_cast %151 : vector<128xf32> to vector<1x128xf32>
    %159 = vector.broadcast %158 : vector<1x128xf32> to vector<64x128xf32>
    %160 = arith.addf %157, %159 : vector<64x128xf32>
    %161 = tpu.concatenate %147, %160 in 0 : vector<64x128xf32>, vector<64x128xf32> -> vector<128x128xf32>
    %162 = arith.truncf %161 : vector<128x128xf32> to vector<128x128xbf16>
    %c288 = arith.constant 288 : index
    %c0_74 = arith.constant 0 : index
    %163 = vector.load %arg2[%c288, %c0_74] : memref<3616x256xbf16, #tpu.memory_space<vmem>>, vector<128x128xbf16>
    %164 = arith.truncf %161 : vector<128x128xf32> to vector<128x128xbf16>
    %cst_75 = arith.constant dense<0.000000e+00> : vector<128x128xf32>
    %165 = tpu.matmul %164, %163, %cst_75 {dimension_numbers = #tpu.dot_dimension_numbers<[1], [0], [0], [1], [0, 0, 1, 1], [], []>} : vector<128x128xbf16>, vector<128x128xbf16>, vector<128x128xf32> -> vector<128x128xf32>
    %c4 = arith.constant 4 : index
    %c0_76 = arith.constant 0 : index
    %166 = vector.load %arg3[%c4, %c0_76] : memref<22x256xf32, #tpu.memory_space<vmem>>, vector<1x128xf32>
    %167 = vector.shape_cast %166 : vector<1x128xf32> to vector<128xf32>
    %168 = vector.shape_cast %167 : vector<128xf32> to vector<1x128xf32>
    %169 = vector.broadcast %168 : vector<1x128xf32> to vector<128x128xf32>
    %170 = arith.addf %165, %169 : vector<128x128xf32>
    %cst_77 = arith.constant 0.000000e+00 : f32
    %171 = vector.broadcast %cst_77 : f32 to vector<128x128xf32>
    %172 = arith.cmpf ogt, %170, %171 : vector<128x128xf32>
    %cst_78 = arith.constant 1.000000e-01 : f32
    %173 = vector.broadcast %cst_78 : f32 to vector<128x128xf32>
    %174 = arith.mulf %173, %170 : vector<128x128xf32>
    %175 = arith.select %172, %170, %174 : vector<128x128xi1>, vector<128x128xf32>
    %c0_79 = arith.constant 0 : index
    %c4_80 = arith.constant 4 : index
    %c0_81 = arith.constant 0 : index
    %176 = vector.load %arg4[%c0_79, %c4_80, %c0_81] : memref<2x38x256xf32, #tpu.memory_space<vmem>>, vector<1x1x128xf32>
    %177 = vector.shape_cast %176 : vector<1x1x128xf32> to vector<128xf32>
    %c0_82 = arith.constant 0 : index
    %c23 = arith.constant 23 : index
    %c0_83 = arith.constant 0 : index
    %178 = vector.load %arg4[%c0_82, %c23, %c0_83] : memref<2x38x256xf32, #tpu.memory_space<vmem>>, vector<1x1x128xf32>
    %179 = vector.shape_cast %178 : vector<1x1x128xf32> to vector<128xf32>
    %180 = vector.extract_strided_slice %175 {offsets = [0, 0], sizes = [64, 128], strides = [1, 1]} : vector<128x128xf32> to vector<64x128xf32>
    %cst_84 = arith.constant 1.000000e+00 : f32
    %181 = vector.broadcast %cst_84 : f32 to vector<128xf32>
    %182 = arith.addf %181, %177 : vector<128xf32>
    %183 = vector.shape_cast %182 : vector<128xf32> to vector<1x128xf32>
    %184 = vector.broadcast %183 : vector<1x128xf32> to vector<64x128xf32>
    %185 = arith.mulf %180, %184 : vector<64x128xf32>
    %186 = vector.shape_cast %179 : vector<128xf32> to vector<1x128xf32>
    %187 = vector.broadcast %186 : vector<1x128xf32> to vector<64x128xf32>
    %188 = arith.addf %185, %187 : vector<64x128xf32>
    %c1_85 = arith.constant 1 : index
    %c4_86 = arith.constant 4 : index
    %c0_87 = arith.constant 0 : index
    %189 = vector.load %arg4[%c1_85, %c4_86, %c0_87] : memref<2x38x256xf32, #tpu.memory_space<vmem>>, vector<1x1x128xf32>
    %190 = vector.shape_cast %189 : vector<1x1x128xf32> to vector<128xf32>
    %c1_88 = arith.constant 1 : index
    %c23_89 = arith.constant 23 : index
    %c0_90 = arith.constant 0 : index
    %191 = vector.load %arg4[%c1_88, %c23_89, %c0_90] : memref<2x38x256xf32, #tpu.memory_space<vmem>>, vector<1x1x128xf32>
    %192 = vector.shape_cast %191 : vector<1x1x128xf32> to vector<128xf32>
    %193 = vector.extract_strided_slice %175 {offsets = [64, 0], sizes = [64, 128], strides = [1, 1]} : vector<128x128xf32> to vector<64x128xf32>
    %cst_91 = arith.constant 1.000000e+00 : f32
    %194 = vector.broadcast %cst_91 : f32 to vector<128xf32>
    %195 = arith.addf %194, %190 : vector<128xf32>
    %196 = vector.shape_cast %195 : vector<128xf32> to vector<1x128xf32>
    %197 = vector.broadcast %196 : vector<1x128xf32> to vector<64x128xf32>
    %198 = arith.mulf %193, %197 : vector<64x128xf32>
    %199 = vector.shape_cast %192 : vector<128xf32> to vector<1x128xf32>
    %200 = vector.broadcast %199 : vector<1x128xf32> to vector<64x128xf32>
    %201 = arith.addf %198, %200 : vector<64x128xf32>
    %202 = tpu.concatenate %188, %201 in 0 : vector<64x128xf32>, vector<64x128xf32> -> vector<128x128xf32>
    %c416 = arith.constant 416 : index
    %c0_92 = arith.constant 0 : index
    %203 = vector.load %arg2[%c416, %c0_92] : memref<3616x256xbf16, #tpu.memory_space<vmem>>, vector<128x256xbf16>
    %204 = arith.truncf %202 : vector<128x128xf32> to vector<128x128xbf16>
    %cst_93 = arith.constant dense<0.000000e+00> : vector<128x256xf32>
    %205 = tpu.matmul %204, %203, %cst_93 {dimension_numbers = #tpu.dot_dimension_numbers<[1], [0], [0], [1], [0, 0, 1, 1], [], []>} : vector<128x128xbf16>, vector<128x256xbf16>, vector<128x256xf32> -> vector<128x256xf32>
    %c5 = arith.constant 5 : index
    %c0_94 = arith.constant 0 : index
    %206 = vector.load %arg3[%c5, %c0_94] : memref<22x256xf32, #tpu.memory_space<vmem>>, vector<1x256xf32>
    %207 = vector.shape_cast %206 : vector<1x256xf32> to vector<256xf32>
    %208 = vector.shape_cast %207 : vector<256xf32> to vector<1x256xf32>
    %209 = vector.broadcast %208 : vector<1x256xf32> to vector<128x256xf32>
    %210 = arith.addf %205, %209 : vector<128x256xf32>
    %cst_95 = arith.constant 0.000000e+00 : f32
    %211 = vector.broadcast %cst_95 : f32 to vector<128x256xf32>
    %212 = arith.cmpf ogt, %210, %211 : vector<128x256xf32>
    %cst_96 = arith.constant 1.000000e-01 : f32
    %213 = vector.broadcast %cst_96 : f32 to vector<128x256xf32>
    %214 = arith.mulf %213, %210 : vector<128x256xf32>
    %215 = arith.select %212, %210, %214 : vector<128x256xi1>, vector<128x256xf32>
    %c0_97 = arith.constant 0 : index
    %c5_98 = arith.constant 5 : index
    %c0_99 = arith.constant 0 : index
    %216 = vector.load %arg4[%c0_97, %c5_98, %c0_99] : memref<2x38x256xf32, #tpu.memory_space<vmem>>, vector<1x1x256xf32>
    %217 = vector.shape_cast %216 : vector<1x1x256xf32> to vector<256xf32>
    %c0_100 = arith.constant 0 : index
    %c24 = arith.constant 24 : index
    %c0_101 = arith.constant 0 : index
    %218 = vector.load %arg4[%c0_100, %c24, %c0_101] : memref<2x38x256xf32, #tpu.memory_space<vmem>>, vector<1x1x256xf32>
    %219 = vector.shape_cast %218 : vector<1x1x256xf32> to vector<256xf32>
    %220 = vector.extract_strided_slice %215 {offsets = [0, 0], sizes = [64, 256], strides = [1, 1]} : vector<128x256xf32> to vector<64x256xf32>
    %cst_102 = arith.constant 1.000000e+00 : f32
    %221 = vector.broadcast %cst_102 : f32 to vector<256xf32>
    %222 = arith.addf %221, %217 : vector<256xf32>
    %223 = vector.shape_cast %222 : vector<256xf32> to vector<1x256xf32>
    %224 = vector.broadcast %223 : vector<1x256xf32> to vector<64x256xf32>
    %225 = arith.mulf %220, %224 : vector<64x256xf32>
    %226 = vector.shape_cast %219 : vector<256xf32> to vector<1x256xf32>
    %227 = vector.broadcast %226 : vector<1x256xf32> to vector<64x256xf32>
    %228 = arith.addf %225, %227 : vector<64x256xf32>
    %c1_103 = arith.constant 1 : index
    %c5_104 = arith.constant 5 : index
    %c0_105 = arith.constant 0 : index
    %229 = vector.load %arg4[%c1_103, %c5_104, %c0_105] : memref<2x38x256xf32, #tpu.memory_space<vmem>>, vector<1x1x256xf32>
    %230 = vector.shape_cast %229 : vector<1x1x256xf32> to vector<256xf32>
    %c1_106 = arith.constant 1 : index
    %c24_107 = arith.constant 24 : index
    %c0_108 = arith.constant 0 : index
    %231 = vector.load %arg4[%c1_106, %c24_107, %c0_108] : memref<2x38x256xf32, #tpu.memory_space<vmem>>, vector<1x1x256xf32>
    %232 = vector.shape_cast %231 : vector<1x1x256xf32> to vector<256xf32>
    %233 = vector.extract_strided_slice %215 {offsets = [64, 0], sizes = [64, 256], strides = [1, 1]} : vector<128x256xf32> to vector<64x256xf32>
    %cst_109 = arith.constant 1.000000e+00 : f32
    %234 = vector.broadcast %cst_109 : f32 to vector<256xf32>
    %235 = arith.addf %234, %230 : vector<256xf32>
    %236 = vector.shape_cast %235 : vector<256xf32> to vector<1x256xf32>
    %237 = vector.broadcast %236 : vector<1x256xf32> to vector<64x256xf32>
    %238 = arith.mulf %233, %237 : vector<64x256xf32>
    %239 = vector.shape_cast %232 : vector<256xf32> to vector<1x256xf32>
    %240 = vector.broadcast %239 : vector<1x256xf32> to vector<64x256xf32>
    %241 = arith.addf %238, %240 : vector<64x256xf32>
    %242 = tpu.concatenate %228, %241 in 0 : vector<64x256xf32>, vector<64x256xf32> -> vector<128x256xf32>
    %243 = arith.truncf %242 : vector<128x256xf32> to vector<128x256xbf16>
    %c544 = arith.constant 544 : index
    %c0_110 = arith.constant 0 : index
    %244 = vector.load %arg2[%c544, %c0_110] : memref<3616x256xbf16, #tpu.memory_space<vmem>>, vector<256x128xbf16>
    %245 = arith.truncf %242 : vector<128x256xf32> to vector<128x256xbf16>
    %cst_111 = arith.constant dense<0.000000e+00> : vector<128x128xf32>
    %246 = tpu.matmul %245, %244, %cst_111 {dimension_numbers = #tpu.dot_dimension_numbers<[1], [0], [0], [1], [0, 0, 1, 1], [], []>} : vector<128x256xbf16>, vector<256x128xbf16>, vector<128x128xf32> -> vector<128x128xf32>
    %c6 = arith.constant 6 : index
    %c0_112 = arith.constant 0 : index
    %247 = vector.load %arg3[%c6, %c0_112] : memref<22x256xf32, #tpu.memory_space<vmem>>, vector<1x128xf32>
    %248 = vector.shape_cast %247 : vector<1x128xf32> to vector<128xf32>
    %249 = vector.shape_cast %248 : vector<128xf32> to vector<1x128xf32>
    %250 = vector.broadcast %249 : vector<1x128xf32> to vector<128x128xf32>
    %251 = arith.addf %246, %250 : vector<128x128xf32>
    %cst_113 = arith.constant 0.000000e+00 : f32
    %252 = vector.broadcast %cst_113 : f32 to vector<128x128xf32>
    %253 = arith.cmpf ogt, %251, %252 : vector<128x128xf32>
    %cst_114 = arith.constant 1.000000e-01 : f32
    %254 = vector.broadcast %cst_114 : f32 to vector<128x128xf32>
    %255 = arith.mulf %254, %251 : vector<128x128xf32>
    %256 = arith.select %253, %251, %255 : vector<128x128xi1>, vector<128x128xf32>
    %c0_115 = arith.constant 0 : index
    %c6_116 = arith.constant 6 : index
    %c0_117 = arith.constant 0 : index
    %257 = vector.load %arg4[%c0_115, %c6_116, %c0_117] : memref<2x38x256xf32, #tpu.memory_space<vmem>>, vector<1x1x128xf32>
    %258 = vector.shape_cast %257 : vector<1x1x128xf32> to vector<128xf32>
    %c0_118 = arith.constant 0 : index
    %c25 = arith.constant 25 : index
    %c0_119 = arith.constant 0 : index
    %259 = vector.load %arg4[%c0_118, %c25, %c0_119] : memref<2x38x256xf32, #tpu.memory_space<vmem>>, vector<1x1x128xf32>
    %260 = vector.shape_cast %259 : vector<1x1x128xf32> to vector<128xf32>
    %261 = vector.extract_strided_slice %256 {offsets = [0, 0], sizes = [64, 128], strides = [1, 1]} : vector<128x128xf32> to vector<64x128xf32>
    %cst_120 = arith.constant 1.000000e+00 : f32
    %262 = vector.broadcast %cst_120 : f32 to vector<128xf32>
    %263 = arith.addf %262, %258 : vector<128xf32>
    %264 = vector.shape_cast %263 : vector<128xf32> to vector<1x128xf32>
    %265 = vector.broadcast %264 : vector<1x128xf32> to vector<64x128xf32>
    %266 = arith.mulf %261, %265 : vector<64x128xf32>
    %267 = vector.shape_cast %260 : vector<128xf32> to vector<1x128xf32>
    %268 = vector.broadcast %267 : vector<1x128xf32> to vector<64x128xf32>
    %269 = arith.addf %266, %268 : vector<64x128xf32>
    %c1_121 = arith.constant 1 : index
    %c6_122 = arith.constant 6 : index
    %c0_123 = arith.constant 0 : index
    %270 = vector.load %arg4[%c1_121, %c6_122, %c0_123] : memref<2x38x256xf32, #tpu.memory_space<vmem>>, vector<1x1x128xf32>
    %271 = vector.shape_cast %270 : vector<1x1x128xf32> to vector<128xf32>
    %c1_124 = arith.constant 1 : index
    %c25_125 = arith.constant 25 : index
    %c0_126 = arith.constant 0 : index
    %272 = vector.load %arg4[%c1_124, %c25_125, %c0_126] : memref<2x38x256xf32, #tpu.memory_space<vmem>>, vector<1x1x128xf32>
    %273 = vector.shape_cast %272 : vector<1x1x128xf32> to vector<128xf32>
    %274 = vector.extract_strided_slice %256 {offsets = [64, 0], sizes = [64, 128], strides = [1, 1]} : vector<128x128xf32> to vector<64x128xf32>
    %cst_127 = arith.constant 1.000000e+00 : f32
    %275 = vector.broadcast %cst_127 : f32 to vector<128xf32>
    %276 = arith.addf %275, %271 : vector<128xf32>
    %277 = vector.shape_cast %276 : vector<128xf32> to vector<1x128xf32>
    %278 = vector.broadcast %277 : vector<1x128xf32> to vector<64x128xf32>
    %279 = arith.mulf %274, %278 : vector<64x128xf32>
    %280 = vector.shape_cast %273 : vector<128xf32> to vector<1x128xf32>
    %281 = vector.broadcast %280 : vector<1x128xf32> to vector<64x128xf32>
    %282 = arith.addf %279, %281 : vector<64x128xf32>
    %283 = tpu.concatenate %269, %282 in 0 : vector<64x128xf32>, vector<64x128xf32> -> vector<128x128xf32>
    %c800 = arith.constant 800 : index
    %c0_128 = arith.constant 0 : index
    %284 = vector.load %arg2[%c800, %c0_128] : memref<3616x256xbf16, #tpu.memory_space<vmem>>, vector<128x128xbf16>
    %285 = arith.truncf %283 : vector<128x128xf32> to vector<128x128xbf16>
    %cst_129 = arith.constant dense<0.000000e+00> : vector<128x128xf32>
    %286 = tpu.matmul %285, %284, %cst_129 {dimension_numbers = #tpu.dot_dimension_numbers<[1], [0], [0], [1], [0, 0, 1, 1], [], []>} : vector<128x128xbf16>, vector<128x128xbf16>, vector<128x128xf32> -> vector<128x128xf32>
    %c7 = arith.constant 7 : index
    %c0_130 = arith.constant 0 : index
    %287 = vector.load %arg3[%c7, %c0_130] : memref<22x256xf32, #tpu.memory_space<vmem>>, vector<1x128xf32>
    %288 = vector.shape_cast %287 : vector<1x128xf32> to vector<128xf32>
    %289 = vector.shape_cast %288 : vector<128xf32> to vector<1x128xf32>
    %290 = vector.broadcast %289 : vector<1x128xf32> to vector<128x128xf32>
    %291 = arith.addf %286, %290 : vector<128x128xf32>
    %cst_131 = arith.constant 0.000000e+00 : f32
    %292 = vector.broadcast %cst_131 : f32 to vector<128x128xf32>
    %293 = arith.cmpf ogt, %291, %292 : vector<128x128xf32>
    %cst_132 = arith.constant 1.000000e-01 : f32
    %294 = vector.broadcast %cst_132 : f32 to vector<128x128xf32>
    %295 = arith.mulf %294, %291 : vector<128x128xf32>
    %296 = arith.select %293, %291, %295 : vector<128x128xi1>, vector<128x128xf32>
    %c0_133 = arith.constant 0 : index
    %c7_134 = arith.constant 7 : index
    %c0_135 = arith.constant 0 : index
    %297 = vector.load %arg4[%c0_133, %c7_134, %c0_135] : memref<2x38x256xf32, #tpu.memory_space<vmem>>, vector<1x1x128xf32>
    %298 = vector.shape_cast %297 : vector<1x1x128xf32> to vector<128xf32>
    %c0_136 = arith.constant 0 : index
    %c26 = arith.constant 26 : index
    %c0_137 = arith.constant 0 : index
    %299 = vector.load %arg4[%c0_136, %c26, %c0_137] : memref<2x38x256xf32, #tpu.memory_space<vmem>>, vector<1x1x128xf32>
    %300 = vector.shape_cast %299 : vector<1x1x128xf32> to vector<128xf32>
    %301 = vector.extract_strided_slice %296 {offsets = [0, 0], sizes = [64, 128], strides = [1, 1]} : vector<128x128xf32> to vector<64x128xf32>
    %cst_138 = arith.constant 1.000000e+00 : f32
    %302 = vector.broadcast %cst_138 : f32 to vector<128xf32>
    %303 = arith.addf %302, %298 : vector<128xf32>
    %304 = vector.shape_cast %303 : vector<128xf32> to vector<1x128xf32>
    %305 = vector.broadcast %304 : vector<1x128xf32> to vector<64x128xf32>
    %306 = arith.mulf %301, %305 : vector<64x128xf32>
    %307 = vector.shape_cast %300 : vector<128xf32> to vector<1x128xf32>
    %308 = vector.broadcast %307 : vector<1x128xf32> to vector<64x128xf32>
    %309 = arith.addf %306, %308 : vector<64x128xf32>
    %c1_139 = arith.constant 1 : index
    %c7_140 = arith.constant 7 : index
    %c0_141 = arith.constant 0 : index
    %310 = vector.load %arg4[%c1_139, %c7_140, %c0_141] : memref<2x38x256xf32, #tpu.memory_space<vmem>>, vector<1x1x128xf32>
    %311 = vector.shape_cast %310 : vector<1x1x128xf32> to vector<128xf32>
    %c1_142 = arith.constant 1 : index
    %c26_143 = arith.constant 26 : index
    %c0_144 = arith.constant 0 : index
    %312 = vector.load %arg4[%c1_142, %c26_143, %c0_144] : memref<2x38x256xf32, #tpu.memory_space<vmem>>, vector<1x1x128xf32>
    %313 = vector.shape_cast %312 : vector<1x1x128xf32> to vector<128xf32>
    %314 = vector.extract_strided_slice %296 {offsets = [64, 0], sizes = [64, 128], strides = [1, 1]} : vector<128x128xf32> to vector<64x128xf32>
    %cst_145 = arith.constant 1.000000e+00 : f32
    %315 = vector.broadcast %cst_145 : f32 to vector<128xf32>
    %316 = arith.addf %315, %311 : vector<128xf32>
    %317 = vector.shape_cast %316 : vector<128xf32> to vector<1x128xf32>
    %318 = vector.broadcast %317 : vector<1x128xf32> to vector<64x128xf32>
    %319 = arith.mulf %314, %318 : vector<64x128xf32>
    %320 = vector.shape_cast %313 : vector<128xf32> to vector<1x128xf32>
    %321 = vector.broadcast %320 : vector<1x128xf32> to vector<64x128xf32>
    %322 = arith.addf %319, %321 : vector<64x128xf32>
    %323 = tpu.concatenate %309, %322 in 0 : vector<64x128xf32>, vector<64x128xf32> -> vector<128x128xf32>
    %c928 = arith.constant 928 : index
    %c0_146 = arith.constant 0 : index
    %324 = vector.load %arg2[%c928, %c0_146] : memref<3616x256xbf16, #tpu.memory_space<vmem>>, vector<128x128xbf16>
    %325 = arith.truncf %323 : vector<128x128xf32> to vector<128x128xbf16>
    %cst_147 = arith.constant dense<0.000000e+00> : vector<128x128xf32>
    %326 = tpu.matmul %325, %324, %cst_147 {dimension_numbers = #tpu.dot_dimension_numbers<[1], [0], [0], [1], [0, 0, 1, 1], [], []>} : vector<128x128xbf16>, vector<128x128xbf16>, vector<128x128xf32> -> vector<128x128xf32>
    %c8 = arith.constant 8 : index
    %c0_148 = arith.constant 0 : index
    %327 = vector.load %arg3[%c8, %c0_148] : memref<22x256xf32, #tpu.memory_space<vmem>>, vector<1x128xf32>
    %328 = vector.shape_cast %327 : vector<1x128xf32> to vector<128xf32>
    %329 = vector.shape_cast %328 : vector<128xf32> to vector<1x128xf32>
    %330 = vector.broadcast %329 : vector<1x128xf32> to vector<128x128xf32>
    %331 = arith.addf %326, %330 : vector<128x128xf32>
    %cst_149 = arith.constant 0.000000e+00 : f32
    %332 = vector.broadcast %cst_149 : f32 to vector<128x128xf32>
    %333 = arith.cmpf ogt, %331, %332 : vector<128x128xf32>
    %cst_150 = arith.constant 1.000000e-01 : f32
    %334 = vector.broadcast %cst_150 : f32 to vector<128x128xf32>
    %335 = arith.mulf %334, %331 : vector<128x128xf32>
    %336 = arith.select %333, %331, %335 : vector<128x128xi1>, vector<128x128xf32>
    %c0_151 = arith.constant 0 : index
    %c8_152 = arith.constant 8 : index
    %c0_153 = arith.constant 0 : index
    %337 = vector.load %arg4[%c0_151, %c8_152, %c0_153] : memref<2x38x256xf32, #tpu.memory_space<vmem>>, vector<1x1x128xf32>
    %338 = vector.shape_cast %337 : vector<1x1x128xf32> to vector<128xf32>
    %c0_154 = arith.constant 0 : index
    %c27 = arith.constant 27 : index
    %c0_155 = arith.constant 0 : index
    %339 = vector.load %arg4[%c0_154, %c27, %c0_155] : memref<2x38x256xf32, #tpu.memory_space<vmem>>, vector<1x1x128xf32>
    %340 = vector.shape_cast %339 : vector<1x1x128xf32> to vector<128xf32>
    %341 = vector.extract_strided_slice %336 {offsets = [0, 0], sizes = [64, 128], strides = [1, 1]} : vector<128x128xf32> to vector<64x128xf32>
    %cst_156 = arith.constant 1.000000e+00 : f32
    %342 = vector.broadcast %cst_156 : f32 to vector<128xf32>
    %343 = arith.addf %342, %338 : vector<128xf32>
    %344 = vector.shape_cast %343 : vector<128xf32> to vector<1x128xf32>
    %345 = vector.broadcast %344 : vector<1x128xf32> to vector<64x128xf32>
    %346 = arith.mulf %341, %345 : vector<64x128xf32>
    %347 = vector.shape_cast %340 : vector<128xf32> to vector<1x128xf32>
    %348 = vector.broadcast %347 : vector<1x128xf32> to vector<64x128xf32>
    %349 = arith.addf %346, %348 : vector<64x128xf32>
    %c1_157 = arith.constant 1 : index
    %c8_158 = arith.constant 8 : index
    %c0_159 = arith.constant 0 : index
    %350 = vector.load %arg4[%c1_157, %c8_158, %c0_159] : memref<2x38x256xf32, #tpu.memory_space<vmem>>, vector<1x1x128xf32>
    %351 = vector.shape_cast %350 : vector<1x1x128xf32> to vector<128xf32>
    %c1_160 = arith.constant 1 : index
    %c27_161 = arith.constant 27 : index
    %c0_162 = arith.constant 0 : index
    %352 = vector.load %arg4[%c1_160, %c27_161, %c0_162] : memref<2x38x256xf32, #tpu.memory_space<vmem>>, vector<1x1x128xf32>
    %353 = vector.shape_cast %352 : vector<1x1x128xf32> to vector<128xf32>
    %354 = vector.extract_strided_slice %336 {offsets = [64, 0], sizes = [64, 128], strides = [1, 1]} : vector<128x128xf32> to vector<64x128xf32>
    %cst_163 = arith.constant 1.000000e+00 : f32
    %355 = vector.broadcast %cst_163 : f32 to vector<128xf32>
    %356 = arith.addf %355, %351 : vector<128xf32>
    %357 = vector.shape_cast %356 : vector<128xf32> to vector<1x128xf32>
    %358 = vector.broadcast %357 : vector<1x128xf32> to vector<64x128xf32>
    %359 = arith.mulf %354, %358 : vector<64x128xf32>
    %360 = vector.shape_cast %353 : vector<128xf32> to vector<1x128xf32>
    %361 = vector.broadcast %360 : vector<1x128xf32> to vector<64x128xf32>
    %362 = arith.addf %359, %361 : vector<64x128xf32>
    %363 = tpu.concatenate %349, %362 in 0 : vector<64x128xf32>, vector<64x128xf32> -> vector<128x128xf32>
    %c1056 = arith.constant 1056 : index
    %c0_164 = arith.constant 0 : index
    %364 = vector.load %arg2[%c1056, %c0_164] : memref<3616x256xbf16, #tpu.memory_space<vmem>>, vector<128x128xbf16>
    %365 = arith.truncf %363 : vector<128x128xf32> to vector<128x128xbf16>
    %cst_165 = arith.constant dense<0.000000e+00> : vector<128x128xf32>
    %366 = tpu.matmul %365, %364, %cst_165 {dimension_numbers = #tpu.dot_dimension_numbers<[1], [0], [0], [1], [0, 0, 1, 1], [], []>} : vector<128x128xbf16>, vector<128x128xbf16>, vector<128x128xf32> -> vector<128x128xf32>
    %c1184 = arith.constant 1184 : index
    %c0_166 = arith.constant 0 : index
    %367 = vector.load %arg2[%c1184, %c0_166] : memref<3616x256xbf16, #tpu.memory_space<vmem>>, vector<128x128xbf16>
    %368 = arith.truncf %363 : vector<128x128xf32> to vector<128x128xbf16>
    %cst_167 = arith.constant dense<0.000000e+00> : vector<128x128xf32>
    %369 = tpu.matmul %368, %367, %cst_167 {dimension_numbers = #tpu.dot_dimension_numbers<[1], [0], [0], [1], [0, 0, 1, 1], [], []>} : vector<128x128xbf16>, vector<128x128xbf16>, vector<128x128xf32> -> vector<128x128xf32>
    %c1312 = arith.constant 1312 : index
    %c0_168 = arith.constant 0 : index
    %370 = vector.load %arg2[%c1312, %c0_168] : memref<3616x256xbf16, #tpu.memory_space<vmem>>, vector<128x128xbf16>
    %371 = arith.truncf %363 : vector<128x128xf32> to vector<128x128xbf16>
    %cst_169 = arith.constant dense<0.000000e+00> : vector<128x128xf32>
    %372 = tpu.matmul %371, %370, %cst_169 {dimension_numbers = #tpu.dot_dimension_numbers<[1], [0], [0], [1], [0, 0, 1, 1], [], []>} : vector<128x128xbf16>, vector<128x128xbf16>, vector<128x128xf32> -> vector<128x128xf32>
    %c1440 = arith.constant 1440 : index
    %c0_170 = arith.constant 0 : index
    %373 = vector.load %arg2[%c1440, %c0_170] : memref<3616x256xbf16, #tpu.memory_space<vmem>>, vector<128x128xbf16>
    %374 = vector.extract_strided_slice %369 {offsets = [0, 0], sizes = [64, 128], strides = [1, 1]} : vector<128x128xf32> to vector<64x128xf32>
    %cst_171 = arith.constant dense<0xFF800000> : vector<128xf32>
    %375 = vector.multi_reduction <maximumf>, %374, %cst_171 [0] : vector<64x128xf32> to vector<128xf32>
    %376 = vector.shape_cast %375 : vector<128xf32> to vector<1x128xf32>
    %377 = vector.broadcast %376 : vector<1x128xf32> to vector<64x128xf32>
    %378 = arith.subf %374, %377 : vector<64x128xf32>
    %379 = math.exp %378 : vector<64x128xf32>
    %cst_172 = arith.constant dense<0.000000e+00> : vector<128xf32>
    %380 = vector.multi_reduction <add>, %379, %cst_172 [0] : vector<64x128xf32> to vector<128xf32>
    %381 = vector.shape_cast %380 : vector<128xf32> to vector<1x128xf32>
    %382 = vector.broadcast %381 : vector<1x128xf32> to vector<64x128xf32>
    %383 = arith.divf %379, %382 : vector<64x128xf32>
    %384 = arith.truncf %383 : vector<64x128xf32> to vector<64x128xbf16>
    %385 = vector.extract_strided_slice %372 {offsets = [0, 0], sizes = [64, 128], strides = [1, 1]} : vector<128x128xf32> to vector<64x128xf32>
    %386 = arith.truncf %385 : vector<64x128xf32> to vector<64x128xbf16>
    %cst_173 = arith.constant dense<0.000000e+00> : vector<128x128xf32>
    %387 = tpu.matmul %384, %386, %cst_173 {dimension_numbers = #tpu.dot_dimension_numbers<[0], [0], [1], [1], [0, 1, 1, 1], [], []>} : vector<64x128xbf16>, vector<64x128xbf16>, vector<128x128xf32> -> vector<128x128xf32>
    %388 = arith.truncf %387 : vector<128x128xf32> to vector<128x128xbf16>
    %389 = arith.mulf %388, %373 : vector<128x128xbf16>
    %390 = vector.extract_strided_slice %366 {offsets = [0, 0], sizes = [64, 128], strides = [1, 1]} : vector<128x128xf32> to vector<64x128xf32>
    %391 = arith.truncf %390 : vector<64x128xf32> to vector<64x128xbf16>
    %cst_174 = arith.constant dense<0.000000e+00> : vector<64x128xf32>
    %392 = tpu.matmul %391, %389, %cst_174 {dimension_numbers = #tpu.dot_dimension_numbers<[1], [0], [0], [1], [0, 0, 1, 1], [], []>} : vector<64x128xbf16>, vector<128x128xbf16>, vector<64x128xf32> -> vector<64x128xf32>
    %393 = vector.extract_strided_slice %369 {offsets = [64, 0], sizes = [64, 128], strides = [1, 1]} : vector<128x128xf32> to vector<64x128xf32>
    %cst_175 = arith.constant dense<0xFF800000> : vector<128xf32>
    %394 = vector.multi_reduction <maximumf>, %393, %cst_175 [0] : vector<64x128xf32> to vector<128xf32>
    %395 = vector.shape_cast %394 : vector<128xf32> to vector<1x128xf32>
    %396 = vector.broadcast %395 : vector<1x128xf32> to vector<64x128xf32>
    %397 = arith.subf %393, %396 : vector<64x128xf32>
    %398 = math.exp %397 : vector<64x128xf32>
    %cst_176 = arith.constant dense<0.000000e+00> : vector<128xf32>
    %399 = vector.multi_reduction <add>, %398, %cst_176 [0] : vector<64x128xf32> to vector<128xf32>
    %400 = vector.shape_cast %399 : vector<128xf32> to vector<1x128xf32>
    %401 = vector.broadcast %400 : vector<1x128xf32> to vector<64x128xf32>
    %402 = arith.divf %398, %401 : vector<64x128xf32>
    %403 = arith.truncf %402 : vector<64x128xf32> to vector<64x128xbf16>
    %404 = vector.extract_strided_slice %372 {offsets = [64, 0], sizes = [64, 128], strides = [1, 1]} : vector<128x128xf32> to vector<64x128xf32>
    %405 = arith.truncf %404 : vector<64x128xf32> to vector<64x128xbf16>
    %cst_177 = arith.constant dense<0.000000e+00> : vector<128x128xf32>
    %406 = tpu.matmul %403, %405, %cst_177 {dimension_numbers = #tpu.dot_dimension_numbers<[0], [0], [1], [1], [0, 1, 1, 1], [], []>} : vector<64x128xbf16>, vector<64x128xbf16>, vector<128x128xf32> -> vector<128x128xf32>
    %407 = arith.truncf %406 : vector<128x128xf32> to vector<128x128xbf16>
    %408 = arith.mulf %407, %373 : vector<128x128xbf16>
    %409 = vector.extract_strided_slice %366 {offsets = [64, 0], sizes = [64, 128], strides = [1, 1]} : vector<128x128xf32> to vector<64x128xf32>
    %410 = arith.truncf %409 : vector<64x128xf32> to vector<64x128xbf16>
    %cst_178 = arith.constant dense<0.000000e+00> : vector<64x128xf32>
    %411 = tpu.matmul %410, %408, %cst_178 {dimension_numbers = #tpu.dot_dimension_numbers<[1], [0], [0], [1], [0, 0, 1, 1], [], []>} : vector<64x128xbf16>, vector<128x128xbf16>, vector<64x128xf32> -> vector<64x128xf32>
    %412 = tpu.concatenate %392, %411 in 0 : vector<64x128xf32>, vector<64x128xf32> -> vector<128x128xf32>
    %c1568 = arith.constant 1568 : index
    %c0_179 = arith.constant 0 : index
    %413 = vector.load %arg2[%c1568, %c0_179] : memref<3616x256xbf16, #tpu.memory_space<vmem>>, vector<128x128xbf16>
    %414 = arith.truncf %412 : vector<128x128xf32> to vector<128x128xbf16>
    %cst_180 = arith.constant dense<0.000000e+00> : vector<128x128xf32>
    %415 = tpu.matmul %414, %413, %cst_180 {dimension_numbers = #tpu.dot_dimension_numbers<[1], [0], [0], [1], [0, 0, 1, 1], [], []>} : vector<128x128xbf16>, vector<128x128xbf16>, vector<128x128xf32> -> vector<128x128xf32>
    %c9 = arith.constant 9 : index
    %c0_181 = arith.constant 0 : index
    %416 = vector.load %arg3[%c9, %c0_181] : memref<22x256xf32, #tpu.memory_space<vmem>>, vector<1x128xf32>
    %417 = vector.shape_cast %416 : vector<1x128xf32> to vector<128xf32>
    %418 = vector.shape_cast %417 : vector<128xf32> to vector<1x128xf32>
    %419 = vector.broadcast %418 : vector<1x128xf32> to vector<128x128xf32>
    %420 = arith.addf %415, %419 : vector<128x128xf32>
    %c1696 = arith.constant 1696 : index
    %c0_182 = arith.constant 0 : index
    %421 = vector.load %arg2[%c1696, %c0_182] : memref<3616x256xbf16, #tpu.memory_space<vmem>>, vector<128x128xbf16>
    %422 = arith.truncf %420 : vector<128x128xf32> to vector<128x128xbf16>
    %cst_183 = arith.constant dense<0.000000e+00> : vector<128x128xf32>
    %423 = tpu.matmul %422, %421, %cst_183 {dimension_numbers = #tpu.dot_dimension_numbers<[1], [0], [0], [1], [0, 0, 1, 1], [], []>} : vector<128x128xbf16>, vector<128x128xbf16>, vector<128x128xf32> -> vector<128x128xf32>
    %c1824 = arith.constant 1824 : index
    %c0_184 = arith.constant 0 : index
    %424 = vector.load %arg2[%c1824, %c0_184] : memref<3616x256xbf16, #tpu.memory_space<vmem>>, vector<256x128xbf16>
    %cst_185 = arith.constant dense<0.000000e+00> : vector<128x128xf32>
    %425 = tpu.matmul %243, %424, %cst_185 {dimension_numbers = #tpu.dot_dimension_numbers<[1], [0], [0], [1], [0, 0, 1, 1], [], []>} : vector<128x256xbf16>, vector<256x128xbf16>, vector<128x128xf32> -> vector<128x128xf32>
    %426 = arith.addf %423, %425 : vector<128x128xf32>
    %c10 = arith.constant 10 : index
    %c0_186 = arith.constant 0 : index
    %427 = vector.load %arg3[%c10, %c0_186] : memref<22x256xf32, #tpu.memory_space<vmem>>, vector<1x128xf32>
    %428 = vector.shape_cast %427 : vector<1x128xf32> to vector<128xf32>
    %429 = vector.shape_cast %428 : vector<128xf32> to vector<1x128xf32>
    %430 = vector.broadcast %429 : vector<1x128xf32> to vector<128x128xf32>
    %431 = arith.addf %426, %430 : vector<128x128xf32>
    %cst_187 = arith.constant 0.000000e+00 : f32
    %432 = vector.broadcast %cst_187 : f32 to vector<128x128xf32>
    %433 = arith.cmpf ogt, %431, %432 : vector<128x128xf32>
    %cst_188 = arith.constant 1.000000e-01 : f32
    %434 = vector.broadcast %cst_188 : f32 to vector<128x128xf32>
    %435 = arith.mulf %434, %431 : vector<128x128xf32>
    %436 = arith.select %433, %431, %435 : vector<128x128xi1>, vector<128x128xf32>
    %c0_189 = arith.constant 0 : index
    %c9_190 = arith.constant 9 : index
    %c0_191 = arith.constant 0 : index
    %437 = vector.load %arg4[%c0_189, %c9_190, %c0_191] : memref<2x38x256xf32, #tpu.memory_space<vmem>>, vector<1x1x128xf32>
    %438 = vector.shape_cast %437 : vector<1x1x128xf32> to vector<128xf32>
    %c0_192 = arith.constant 0 : index
    %c28 = arith.constant 28 : index
    %c0_193 = arith.constant 0 : index
    %439 = vector.load %arg4[%c0_192, %c28, %c0_193] : memref<2x38x256xf32, #tpu.memory_space<vmem>>, vector<1x1x128xf32>
    %440 = vector.shape_cast %439 : vector<1x1x128xf32> to vector<128xf32>
    %441 = vector.extract_strided_slice %436 {offsets = [0, 0], sizes = [64, 128], strides = [1, 1]} : vector<128x128xf32> to vector<64x128xf32>
    %cst_194 = arith.constant 1.000000e+00 : f32
    %442 = vector.broadcast %cst_194 : f32 to vector<128xf32>
    %443 = arith.addf %442, %438 : vector<128xf32>
    %444 = vector.shape_cast %443 : vector<128xf32> to vector<1x128xf32>
    %445 = vector.broadcast %444 : vector<1x128xf32> to vector<64x128xf32>
    %446 = arith.mulf %441, %445 : vector<64x128xf32>
    %447 = vector.shape_cast %440 : vector<128xf32> to vector<1x128xf32>
    %448 = vector.broadcast %447 : vector<1x128xf32> to vector<64x128xf32>
    %449 = arith.addf %446, %448 : vector<64x128xf32>
    %c1_195 = arith.constant 1 : index
    %c9_196 = arith.constant 9 : index
    %c0_197 = arith.constant 0 : index
    %450 = vector.load %arg4[%c1_195, %c9_196, %c0_197] : memref<2x38x256xf32, #tpu.memory_space<vmem>>, vector<1x1x128xf32>
    %451 = vector.shape_cast %450 : vector<1x1x128xf32> to vector<128xf32>
    %c1_198 = arith.constant 1 : index
    %c28_199 = arith.constant 28 : index
    %c0_200 = arith.constant 0 : index
    %452 = vector.load %arg4[%c1_198, %c28_199, %c0_200] : memref<2x38x256xf32, #tpu.memory_space<vmem>>, vector<1x1x128xf32>
    %453 = vector.shape_cast %452 : vector<1x1x128xf32> to vector<128xf32>
    %454 = vector.extract_strided_slice %436 {offsets = [64, 0], sizes = [64, 128], strides = [1, 1]} : vector<128x128xf32> to vector<64x128xf32>
    %cst_201 = arith.constant 1.000000e+00 : f32
    %455 = vector.broadcast %cst_201 : f32 to vector<128xf32>
    %456 = arith.addf %455, %451 : vector<128xf32>
    %457 = vector.shape_cast %456 : vector<128xf32> to vector<1x128xf32>
    %458 = vector.broadcast %457 : vector<1x128xf32> to vector<64x128xf32>
    %459 = arith.mulf %454, %458 : vector<64x128xf32>
    %460 = vector.shape_cast %453 : vector<128xf32> to vector<1x128xf32>
    %461 = vector.broadcast %460 : vector<1x128xf32> to vector<64x128xf32>
    %462 = arith.addf %459, %461 : vector<64x128xf32>
    %463 = tpu.concatenate %449, %462 in 0 : vector<64x128xf32>, vector<64x128xf32> -> vector<128x128xf32>
    %c2080 = arith.constant 2080 : index
    %c0_202 = arith.constant 0 : index
    %464 = vector.load %arg2[%c2080, %c0_202] : memref<3616x256xbf16, #tpu.memory_space<vmem>>, vector<128x128xbf16>
    %465 = arith.truncf %463 : vector<128x128xf32> to vector<128x128xbf16>
    %cst_203 = arith.constant dense<0.000000e+00> : vector<128x128xf32>
    %466 = tpu.matmul %465, %464, %cst_203 {dimension_numbers = #tpu.dot_dimension_numbers<[1], [0], [0], [1], [0, 0, 1, 1], [], []>} : vector<128x128xbf16>, vector<128x128xbf16>, vector<128x128xf32> -> vector<128x128xf32>
    %c11 = arith.constant 11 : index
    %c0_204 = arith.constant 0 : index
    %467 = vector.load %arg3[%c11, %c0_204] : memref<22x256xf32, #tpu.memory_space<vmem>>, vector<1x128xf32>
    %468 = vector.shape_cast %467 : vector<1x128xf32> to vector<128xf32>
    %469 = vector.shape_cast %468 : vector<128xf32> to vector<1x128xf32>
    %470 = vector.broadcast %469 : vector<1x128xf32> to vector<128x128xf32>
    %471 = arith.addf %466, %470 : vector<128x128xf32>
    %cst_205 = arith.constant 0.000000e+00 : f32
    %472 = vector.broadcast %cst_205 : f32 to vector<128x128xf32>
    %473 = arith.cmpf ogt, %471, %472 : vector<128x128xf32>
    %cst_206 = arith.constant 1.000000e-01 : f32
    %474 = vector.broadcast %cst_206 : f32 to vector<128x128xf32>
    %475 = arith.mulf %474, %471 : vector<128x128xf32>
    %476 = arith.select %473, %471, %475 : vector<128x128xi1>, vector<128x128xf32>
    %c0_207 = arith.constant 0 : index
    %c10_208 = arith.constant 10 : index
    %c0_209 = arith.constant 0 : index
    %477 = vector.load %arg4[%c0_207, %c10_208, %c0_209] : memref<2x38x256xf32, #tpu.memory_space<vmem>>, vector<1x1x128xf32>
    %478 = vector.shape_cast %477 : vector<1x1x128xf32> to vector<128xf32>
    %c0_210 = arith.constant 0 : index
    %c29 = arith.constant 29 : index
    %c0_211 = arith.constant 0 : index
    %479 = vector.load %arg4[%c0_210, %c29, %c0_211] : memref<2x38x256xf32, #tpu.memory_space<vmem>>, vector<1x1x128xf32>
    %480 = vector.shape_cast %479 : vector<1x1x128xf32> to vector<128xf32>
    %481 = vector.extract_strided_slice %476 {offsets = [0, 0], sizes = [64, 128], strides = [1, 1]} : vector<128x128xf32> to vector<64x128xf32>
    %cst_212 = arith.constant 1.000000e+00 : f32
    %482 = vector.broadcast %cst_212 : f32 to vector<128xf32>
    %483 = arith.addf %482, %478 : vector<128xf32>
    %484 = vector.shape_cast %483 : vector<128xf32> to vector<1x128xf32>
    %485 = vector.broadcast %484 : vector<1x128xf32> to vector<64x128xf32>
    %486 = arith.mulf %481, %485 : vector<64x128xf32>
    %487 = vector.shape_cast %480 : vector<128xf32> to vector<1x128xf32>
    %488 = vector.broadcast %487 : vector<1x128xf32> to vector<64x128xf32>
    %489 = arith.addf %486, %488 : vector<64x128xf32>
    %c1_213 = arith.constant 1 : index
    %c10_214 = arith.constant 10 : index
    %c0_215 = arith.constant 0 : index
    %490 = vector.load %arg4[%c1_213, %c10_214, %c0_215] : memref<2x38x256xf32, #tpu.memory_space<vmem>>, vector<1x1x128xf32>
    %491 = vector.shape_cast %490 : vector<1x1x128xf32> to vector<128xf32>
    %c1_216 = arith.constant 1 : index
    %c29_217 = arith.constant 29 : index
    %c0_218 = arith.constant 0 : index
    %492 = vector.load %arg4[%c1_216, %c29_217, %c0_218] : memref<2x38x256xf32, #tpu.memory_space<vmem>>, vector<1x1x128xf32>
    %493 = vector.shape_cast %492 : vector<1x1x128xf32> to vector<128xf32>
    %494 = vector.extract_strided_slice %476 {offsets = [64, 0], sizes = [64, 128], strides = [1, 1]} : vector<128x128xf32> to vector<64x128xf32>
    %cst_219 = arith.constant 1.000000e+00 : f32
    %495 = vector.broadcast %cst_219 : f32 to vector<128xf32>
    %496 = arith.addf %495, %491 : vector<128xf32>
    %497 = vector.shape_cast %496 : vector<128xf32> to vector<1x128xf32>
    %498 = vector.broadcast %497 : vector<1x128xf32> to vector<64x128xf32>
    %499 = arith.mulf %494, %498 : vector<64x128xf32>
    %500 = vector.shape_cast %493 : vector<128xf32> to vector<1x128xf32>
    %501 = vector.broadcast %500 : vector<1x128xf32> to vector<64x128xf32>
    %502 = arith.addf %499, %501 : vector<64x128xf32>
    %503 = tpu.concatenate %489, %502 in 0 : vector<64x128xf32>, vector<64x128xf32> -> vector<128x128xf32>
    %c2208 = arith.constant 2208 : index
    %c0_220 = arith.constant 0 : index
    %504 = vector.load %arg2[%c2208, %c0_220] : memref<3616x256xbf16, #tpu.memory_space<vmem>>, vector<128x128xbf16>
    %505 = arith.truncf %503 : vector<128x128xf32> to vector<128x128xbf16>
    %cst_221 = arith.constant dense<0.000000e+00> : vector<128x128xf32>
    %506 = tpu.matmul %505, %504, %cst_221 {dimension_numbers = #tpu.dot_dimension_numbers<[1], [0], [0], [1], [0, 0, 1, 1], [], []>} : vector<128x128xbf16>, vector<128x128xbf16>, vector<128x128xf32> -> vector<128x128xf32>
    %c2336 = arith.constant 2336 : index
    %c0_222 = arith.constant 0 : index
    %507 = vector.load %arg2[%c2336, %c0_222] : memref<3616x256xbf16, #tpu.memory_space<vmem>>, vector<128x128xbf16>
    %cst_223 = arith.constant dense<0.000000e+00> : vector<128x128xf32>
    %508 = tpu.matmul %162, %507, %cst_223 {dimension_numbers = #tpu.dot_dimension_numbers<[1], [0], [0], [1], [0, 0, 1, 1], [], []>} : vector<128x128xbf16>, vector<128x128xbf16>, vector<128x128xf32> -> vector<128x128xf32>
    %509 = arith.addf %506, %508 : vector<128x128xf32>
    %c12 = arith.constant 12 : index
    %c0_224 = arith.constant 0 : index
    %510 = vector.load %arg3[%c12, %c0_224] : memref<22x256xf32, #tpu.memory_space<vmem>>, vector<1x128xf32>
    %511 = vector.shape_cast %510 : vector<1x128xf32> to vector<128xf32>
    %512 = vector.shape_cast %511 : vector<128xf32> to vector<1x128xf32>
    %513 = vector.broadcast %512 : vector<1x128xf32> to vector<128x128xf32>
    %514 = arith.addf %509, %513 : vector<128x128xf32>
    %cst_225 = arith.constant 0.000000e+00 : f32
    %515 = vector.broadcast %cst_225 : f32 to vector<128x128xf32>
    %516 = arith.cmpf ogt, %514, %515 : vector<128x128xf32>
    %cst_226 = arith.constant 1.000000e-01 : f32
    %517 = vector.broadcast %cst_226 : f32 to vector<128x128xf32>
    %518 = arith.mulf %517, %514 : vector<128x128xf32>
    %519 = arith.select %516, %514, %518 : vector<128x128xi1>, vector<128x128xf32>
    %c0_227 = arith.constant 0 : index
    %c11_228 = arith.constant 11 : index
    %c0_229 = arith.constant 0 : index
    %520 = vector.load %arg4[%c0_227, %c11_228, %c0_229] : memref<2x38x256xf32, #tpu.memory_space<vmem>>, vector<1x1x128xf32>
    %521 = vector.shape_cast %520 : vector<1x1x128xf32> to vector<128xf32>
    %c0_230 = arith.constant 0 : index
    %c30 = arith.constant 30 : index
    %c0_231 = arith.constant 0 : index
    %522 = vector.load %arg4[%c0_230, %c30, %c0_231] : memref<2x38x256xf32, #tpu.memory_space<vmem>>, vector<1x1x128xf32>
    %523 = vector.shape_cast %522 : vector<1x1x128xf32> to vector<128xf32>
    %524 = vector.extract_strided_slice %519 {offsets = [0, 0], sizes = [64, 128], strides = [1, 1]} : vector<128x128xf32> to vector<64x128xf32>
    %cst_232 = arith.constant 1.000000e+00 : f32
    %525 = vector.broadcast %cst_232 : f32 to vector<128xf32>
    %526 = arith.addf %525, %521 : vector<128xf32>
    %527 = vector.shape_cast %526 : vector<128xf32> to vector<1x128xf32>
    %528 = vector.broadcast %527 : vector<1x128xf32> to vector<64x128xf32>
    %529 = arith.mulf %524, %528 : vector<64x128xf32>
    %530 = vector.shape_cast %523 : vector<128xf32> to vector<1x128xf32>
    %531 = vector.broadcast %530 : vector<1x128xf32> to vector<64x128xf32>
    %532 = arith.addf %529, %531 : vector<64x128xf32>
    %c1_233 = arith.constant 1 : index
    %c11_234 = arith.constant 11 : index
    %c0_235 = arith.constant 0 : index
    %533 = vector.load %arg4[%c1_233, %c11_234, %c0_235] : memref<2x38x256xf32, #tpu.memory_space<vmem>>, vector<1x1x128xf32>
    %534 = vector.shape_cast %533 : vector<1x1x128xf32> to vector<128xf32>
    %c1_236 = arith.constant 1 : index
    %c30_237 = arith.constant 30 : index
    %c0_238 = arith.constant 0 : index
    %535 = vector.load %arg4[%c1_236, %c30_237, %c0_238] : memref<2x38x256xf32, #tpu.memory_space<vmem>>, vector<1x1x128xf32>
    %536 = vector.shape_cast %535 : vector<1x1x128xf32> to vector<128xf32>
    %537 = vector.extract_strided_slice %519 {offsets = [64, 0], sizes = [64, 128], strides = [1, 1]} : vector<128x128xf32> to vector<64x128xf32>
    %cst_239 = arith.constant 1.000000e+00 : f32
    %538 = vector.broadcast %cst_239 : f32 to vector<128xf32>
    %539 = arith.addf %538, %534 : vector<128xf32>
    %540 = vector.shape_cast %539 : vector<128xf32> to vector<1x128xf32>
    %541 = vector.broadcast %540 : vector<1x128xf32> to vector<64x128xf32>
    %542 = arith.mulf %537, %541 : vector<64x128xf32>
    %543 = vector.shape_cast %536 : vector<128xf32> to vector<1x128xf32>
    %544 = vector.broadcast %543 : vector<1x128xf32> to vector<64x128xf32>
    %545 = arith.addf %542, %544 : vector<64x128xf32>
    %546 = tpu.concatenate %532, %545 in 0 : vector<64x128xf32>, vector<64x128xf32> -> vector<128x128xf32>
    %c2464 = arith.constant 2464 : index
    %c0_240 = arith.constant 0 : index
    %547 = vector.load %arg2[%c2464, %c0_240] : memref<3616x256xbf16, #tpu.memory_space<vmem>>, vector<128x128xbf16>
    %548 = arith.truncf %546 : vector<128x128xf32> to vector<128x128xbf16>
    %cst_241 = arith.constant dense<0.000000e+00> : vector<128x128xf32>
    %549 = tpu.matmul %548, %547, %cst_241 {dimension_numbers = #tpu.dot_dimension_numbers<[1], [0], [0], [1], [0, 0, 1, 1], [], []>} : vector<128x128xbf16>, vector<128x128xbf16>, vector<128x128xf32> -> vector<128x128xf32>
    %c13 = arith.constant 13 : index
    %c0_242 = arith.constant 0 : index
    %550 = vector.load %arg3[%c13, %c0_242] : memref<22x256xf32, #tpu.memory_space<vmem>>, vector<1x128xf32>
    %551 = vector.shape_cast %550 : vector<1x128xf32> to vector<128xf32>
    %552 = vector.shape_cast %551 : vector<128xf32> to vector<1x128xf32>
    %553 = vector.broadcast %552 : vector<1x128xf32> to vector<128x128xf32>
    %554 = arith.addf %549, %553 : vector<128x128xf32>
    %cst_243 = arith.constant 0.000000e+00 : f32
    %555 = vector.broadcast %cst_243 : f32 to vector<128x128xf32>
    %556 = arith.cmpf ogt, %554, %555 : vector<128x128xf32>
    %cst_244 = arith.constant 1.000000e-01 : f32
    %557 = vector.broadcast %cst_244 : f32 to vector<128x128xf32>
    %558 = arith.mulf %557, %554 : vector<128x128xf32>
    %559 = arith.select %556, %554, %558 : vector<128x128xi1>, vector<128x128xf32>
    %c0_245 = arith.constant 0 : index
    %c12_246 = arith.constant 12 : index
    %c0_247 = arith.constant 0 : index
    %560 = vector.load %arg4[%c0_245, %c12_246, %c0_247] : memref<2x38x256xf32, #tpu.memory_space<vmem>>, vector<1x1x128xf32>
    %561 = vector.shape_cast %560 : vector<1x1x128xf32> to vector<128xf32>
    %c0_248 = arith.constant 0 : index
    %c31 = arith.constant 31 : index
    %c0_249 = arith.constant 0 : index
    %562 = vector.load %arg4[%c0_248, %c31, %c0_249] : memref<2x38x256xf32, #tpu.memory_space<vmem>>, vector<1x1x128xf32>
    %563 = vector.shape_cast %562 : vector<1x1x128xf32> to vector<128xf32>
    %564 = vector.extract_strided_slice %559 {offsets = [0, 0], sizes = [64, 128], strides = [1, 1]} : vector<128x128xf32> to vector<64x128xf32>
    %cst_250 = arith.constant 1.000000e+00 : f32
    %565 = vector.broadcast %cst_250 : f32 to vector<128xf32>
    %566 = arith.addf %565, %561 : vector<128xf32>
    %567 = vector.shape_cast %566 : vector<128xf32> to vector<1x128xf32>
    %568 = vector.broadcast %567 : vector<1x128xf32> to vector<64x128xf32>
    %569 = arith.mulf %564, %568 : vector<64x128xf32>
    %570 = vector.shape_cast %563 : vector<128xf32> to vector<1x128xf32>
    %571 = vector.broadcast %570 : vector<1x128xf32> to vector<64x128xf32>
    %572 = arith.addf %569, %571 : vector<64x128xf32>
    %c1_251 = arith.constant 1 : index
    %c12_252 = arith.constant 12 : index
    %c0_253 = arith.constant 0 : index
    %573 = vector.load %arg4[%c1_251, %c12_252, %c0_253] : memref<2x38x256xf32, #tpu.memory_space<vmem>>, vector<1x1x128xf32>
    %574 = vector.shape_cast %573 : vector<1x1x128xf32> to vector<128xf32>
    %c1_254 = arith.constant 1 : index
    %c31_255 = arith.constant 31 : index
    %c0_256 = arith.constant 0 : index
    %575 = vector.load %arg4[%c1_254, %c31_255, %c0_256] : memref<2x38x256xf32, #tpu.memory_space<vmem>>, vector<1x1x128xf32>
    %576 = vector.shape_cast %575 : vector<1x1x128xf32> to vector<128xf32>
    %577 = vector.extract_strided_slice %559 {offsets = [64, 0], sizes = [64, 128], strides = [1, 1]} : vector<128x128xf32> to vector<64x128xf32>
    %cst_257 = arith.constant 1.000000e+00 : f32
    %578 = vector.broadcast %cst_257 : f32 to vector<128xf32>
    %579 = arith.addf %578, %574 : vector<128xf32>
    %580 = vector.shape_cast %579 : vector<128xf32> to vector<1x128xf32>
    %581 = vector.broadcast %580 : vector<1x128xf32> to vector<64x128xf32>
    %582 = arith.mulf %577, %581 : vector<64x128xf32>
    %583 = vector.shape_cast %576 : vector<128xf32> to vector<1x128xf32>
    %584 = vector.broadcast %583 : vector<1x128xf32> to vector<64x128xf32>
    %585 = arith.addf %582, %584 : vector<64x128xf32>
    %586 = tpu.concatenate %572, %585 in 0 : vector<64x128xf32>, vector<64x128xf32> -> vector<128x128xf32>
    %c2592 = arith.constant 2592 : index
    %c0_258 = arith.constant 0 : index
    %587 = vector.load %arg2[%c2592, %c0_258] : memref<3616x256xbf16, #tpu.memory_space<vmem>>, vector<128x128xbf16>
    %588 = arith.truncf %586 : vector<128x128xf32> to vector<128x128xbf16>
    %cst_259 = arith.constant dense<0.000000e+00> : vector<128x128xf32>
    %589 = tpu.matmul %588, %587, %cst_259 {dimension_numbers = #tpu.dot_dimension_numbers<[1], [0], [0], [1], [0, 0, 1, 1], [], []>} : vector<128x128xbf16>, vector<128x128xbf16>, vector<128x128xf32> -> vector<128x128xf32>
    %c2720 = arith.constant 2720 : index
    %c0_260 = arith.constant 0 : index
    %590 = vector.load %arg2[%c2720, %c0_260] : memref<3616x256xbf16, #tpu.memory_space<vmem>>, vector<64x128xbf16>
    %cst_261 = arith.constant dense<0.000000e+00> : vector<128x128xf32>
    %591 = tpu.matmul %81, %590, %cst_261 {dimension_numbers = #tpu.dot_dimension_numbers<[1], [0], [0], [1], [0, 0, 1, 1], [], []>} : vector<128x64xbf16>, vector<64x128xbf16>, vector<128x128xf32> -> vector<128x128xf32>
    %592 = arith.addf %589, %591 : vector<128x128xf32>
    %c14 = arith.constant 14 : index
    %c0_262 = arith.constant 0 : index
    %593 = vector.load %arg3[%c14, %c0_262] : memref<22x256xf32, #tpu.memory_space<vmem>>, vector<1x128xf32>
    %594 = vector.shape_cast %593 : vector<1x128xf32> to vector<128xf32>
    %595 = vector.shape_cast %594 : vector<128xf32> to vector<1x128xf32>
    %596 = vector.broadcast %595 : vector<1x128xf32> to vector<128x128xf32>
    %597 = arith.addf %592, %596 : vector<128x128xf32>
    %cst_263 = arith.constant 0.000000e+00 : f32
    %598 = vector.broadcast %cst_263 : f32 to vector<128x128xf32>
    %599 = arith.cmpf ogt, %597, %598 : vector<128x128xf32>
    %cst_264 = arith.constant 1.000000e-01 : f32
    %600 = vector.broadcast %cst_264 : f32 to vector<128x128xf32>
    %601 = arith.mulf %600, %597 : vector<128x128xf32>
    %602 = arith.select %599, %597, %601 : vector<128x128xi1>, vector<128x128xf32>
    %c0_265 = arith.constant 0 : index
    %c13_266 = arith.constant 13 : index
    %c0_267 = arith.constant 0 : index
    %603 = vector.load %arg4[%c0_265, %c13_266, %c0_267] : memref<2x38x256xf32, #tpu.memory_space<vmem>>, vector<1x1x128xf32>
    %604 = vector.shape_cast %603 : vector<1x1x128xf32> to vector<128xf32>
    %c0_268 = arith.constant 0 : index
    %c32 = arith.constant 32 : index
    %c0_269 = arith.constant 0 : index
    %605 = vector.load %arg4[%c0_268, %c32, %c0_269] : memref<2x38x256xf32, #tpu.memory_space<vmem>>, vector<1x1x128xf32>
    %606 = vector.shape_cast %605 : vector<1x1x128xf32> to vector<128xf32>
    %607 = vector.extract_strided_slice %602 {offsets = [0, 0], sizes = [64, 128], strides = [1, 1]} : vector<128x128xf32> to vector<64x128xf32>
    %cst_270 = arith.constant 1.000000e+00 : f32
    %608 = vector.broadcast %cst_270 : f32 to vector<128xf32>
    %609 = arith.addf %608, %604 : vector<128xf32>
    %610 = vector.shape_cast %609 : vector<128xf32> to vector<1x128xf32>
    %611 = vector.broadcast %610 : vector<1x128xf32> to vector<64x128xf32>
    %612 = arith.mulf %607, %611 : vector<64x128xf32>
    %613 = vector.shape_cast %606 : vector<128xf32> to vector<1x128xf32>
    %614 = vector.broadcast %613 : vector<1x128xf32> to vector<64x128xf32>
    %615 = arith.addf %612, %614 : vector<64x128xf32>
    %c1_271 = arith.constant 1 : index
    %c13_272 = arith.constant 13 : index
    %c0_273 = arith.constant 0 : index
    %616 = vector.load %arg4[%c1_271, %c13_272, %c0_273] : memref<2x38x256xf32, #tpu.memory_space<vmem>>, vector<1x1x128xf32>
    %617 = vector.shape_cast %616 : vector<1x1x128xf32> to vector<128xf32>
    %c1_274 = arith.constant 1 : index
    %c32_275 = arith.constant 32 : index
    %c0_276 = arith.constant 0 : index
    %618 = vector.load %arg4[%c1_274, %c32_275, %c0_276] : memref<2x38x256xf32, #tpu.memory_space<vmem>>, vector<1x1x128xf32>
    %619 = vector.shape_cast %618 : vector<1x1x128xf32> to vector<128xf32>
    %620 = vector.extract_strided_slice %602 {offsets = [64, 0], sizes = [64, 128], strides = [1, 1]} : vector<128x128xf32> to vector<64x128xf32>
    %cst_277 = arith.constant 1.000000e+00 : f32
    %621 = vector.broadcast %cst_277 : f32 to vector<128xf32>
    %622 = arith.addf %621, %617 : vector<128xf32>
    %623 = vector.shape_cast %622 : vector<128xf32> to vector<1x128xf32>
    %624 = vector.broadcast %623 : vector<1x128xf32> to vector<64x128xf32>
    %625 = arith.mulf %620, %624 : vector<64x128xf32>
    %626 = vector.shape_cast %619 : vector<128xf32> to vector<1x128xf32>
    %627 = vector.broadcast %626 : vector<1x128xf32> to vector<64x128xf32>
    %628 = arith.addf %625, %627 : vector<64x128xf32>
    %629 = tpu.concatenate %615, %628 in 0 : vector<64x128xf32>, vector<64x128xf32> -> vector<128x128xf32>
    %c2784 = arith.constant 2784 : index
    %c0_278 = arith.constant 0 : index
    %630 = vector.load %arg2[%c2784, %c0_278] : memref<3616x256xbf16, #tpu.memory_space<vmem>>, vector<128x128xbf16>
    %631 = arith.truncf %629 : vector<128x128xf32> to vector<128x128xbf16>
    %cst_279 = arith.constant dense<0.000000e+00> : vector<128x128xf32>
    %632 = tpu.matmul %631, %630, %cst_279 {dimension_numbers = #tpu.dot_dimension_numbers<[1], [0], [0], [1], [0, 0, 1, 1], [], []>} : vector<128x128xbf16>, vector<128x128xbf16>, vector<128x128xf32> -> vector<128x128xf32>
    %c15 = arith.constant 15 : index
    %c0_280 = arith.constant 0 : index
    %633 = vector.load %arg3[%c15, %c0_280] : memref<22x256xf32, #tpu.memory_space<vmem>>, vector<1x128xf32>
    %634 = vector.shape_cast %633 : vector<1x128xf32> to vector<128xf32>
    %635 = vector.shape_cast %634 : vector<128xf32> to vector<1x128xf32>
    %636 = vector.broadcast %635 : vector<1x128xf32> to vector<128x128xf32>
    %637 = arith.addf %632, %636 : vector<128x128xf32>
    %cst_281 = arith.constant 0.000000e+00 : f32
    %638 = vector.broadcast %cst_281 : f32 to vector<128x128xf32>
    %639 = arith.cmpf ogt, %637, %638 : vector<128x128xf32>
    %cst_282 = arith.constant 1.000000e-01 : f32
    %640 = vector.broadcast %cst_282 : f32 to vector<128x128xf32>
    %641 = arith.mulf %640, %637 : vector<128x128xf32>
    %642 = arith.select %639, %637, %641 : vector<128x128xi1>, vector<128x128xf32>
    %c0_283 = arith.constant 0 : index
    %c14_284 = arith.constant 14 : index
    %c0_285 = arith.constant 0 : index
    %643 = vector.load %arg4[%c0_283, %c14_284, %c0_285] : memref<2x38x256xf32, #tpu.memory_space<vmem>>, vector<1x1x128xf32>
    %644 = vector.shape_cast %643 : vector<1x1x128xf32> to vector<128xf32>
    %c0_286 = arith.constant 0 : index
    %c33 = arith.constant 33 : index
    %c0_287 = arith.constant 0 : index
    %645 = vector.load %arg4[%c0_286, %c33, %c0_287] : memref<2x38x256xf32, #tpu.memory_space<vmem>>, vector<1x1x128xf32>
    %646 = vector.shape_cast %645 : vector<1x1x128xf32> to vector<128xf32>
    %647 = vector.extract_strided_slice %642 {offsets = [0, 0], sizes = [64, 128], strides = [1, 1]} : vector<128x128xf32> to vector<64x128xf32>
    %cst_288 = arith.constant 1.000000e+00 : f32
    %648 = vector.broadcast %cst_288 : f32 to vector<128xf32>
    %649 = arith.addf %648, %644 : vector<128xf32>
    %650 = vector.shape_cast %649 : vector<128xf32> to vector<1x128xf32>
    %651 = vector.broadcast %650 : vector<1x128xf32> to vector<64x128xf32>
    %652 = arith.mulf %647, %651 : vector<64x128xf32>
    %653 = vector.shape_cast %646 : vector<128xf32> to vector<1x128xf32>
    %654 = vector.broadcast %653 : vector<1x128xf32> to vector<64x128xf32>
    %655 = arith.addf %652, %654 : vector<64x128xf32>
    %c1_289 = arith.constant 1 : index
    %c14_290 = arith.constant 14 : index
    %c0_291 = arith.constant 0 : index
    %656 = vector.load %arg4[%c1_289, %c14_290, %c0_291] : memref<2x38x256xf32, #tpu.memory_space<vmem>>, vector<1x1x128xf32>
    %657 = vector.shape_cast %656 : vector<1x1x128xf32> to vector<128xf32>
    %c1_292 = arith.constant 1 : index
    %c33_293 = arith.constant 33 : index
    %c0_294 = arith.constant 0 : index
    %658 = vector.load %arg4[%c1_292, %c33_293, %c0_294] : memref<2x38x256xf32, #tpu.memory_space<vmem>>, vector<1x1x128xf32>
    %659 = vector.shape_cast %658 : vector<1x1x128xf32> to vector<128xf32>
    %660 = vector.extract_strided_slice %642 {offsets = [64, 0], sizes = [64, 128], strides = [1, 1]} : vector<128x128xf32> to vector<64x128xf32>
    %cst_295 = arith.constant 1.000000e+00 : f32
    %661 = vector.broadcast %cst_295 : f32 to vector<128xf32>
    %662 = arith.addf %661, %657 : vector<128xf32>
    %663 = vector.shape_cast %662 : vector<128xf32> to vector<1x128xf32>
    %664 = vector.broadcast %663 : vector<1x128xf32> to vector<64x128xf32>
    %665 = arith.mulf %660, %664 : vector<64x128xf32>
    %666 = vector.shape_cast %659 : vector<128xf32> to vector<1x128xf32>
    %667 = vector.broadcast %666 : vector<1x128xf32> to vector<64x128xf32>
    %668 = arith.addf %665, %667 : vector<64x128xf32>
    %669 = tpu.concatenate %655, %668 in 0 : vector<64x128xf32>, vector<64x128xf32> -> vector<128x128xf32>
    %c2912 = arith.constant 2912 : index
    %c0_296 = arith.constant 0 : index
    %670 = vector.load %arg2[%c2912, %c0_296] : memref<3616x256xbf16, #tpu.memory_space<vmem>>, vector<128x128xbf16>
    %671 = arith.truncf %669 : vector<128x128xf32> to vector<128x128xbf16>
    %cst_297 = arith.constant dense<0.000000e+00> : vector<128x128xf32>
    %672 = tpu.matmul %671, %670, %cst_297 {dimension_numbers = #tpu.dot_dimension_numbers<[1], [0], [0], [1], [0, 0, 1, 1], [], []>} : vector<128x128xbf16>, vector<128x128xbf16>, vector<128x128xf32> -> vector<128x128xf32>
    %c3040 = arith.constant 3040 : index
    %c0_298 = arith.constant 0 : index
    %673 = vector.load %arg2[%c3040, %c0_298] : memref<3616x256xbf16, #tpu.memory_space<vmem>>, vector<128x128xbf16>
    %674 = arith.truncf %0 : vector<128x128xf32> to vector<128x128xbf16>
    %cst_299 = arith.constant dense<0.000000e+00> : vector<128x128xf32>
    %675 = tpu.matmul %674, %673, %cst_299 {dimension_numbers = #tpu.dot_dimension_numbers<[1], [0], [0], [1], [0, 0, 1, 1], [], []>} : vector<128x128xbf16>, vector<128x128xbf16>, vector<128x128xf32> -> vector<128x128xf32>
    %676 = arith.addf %672, %675 : vector<128x128xf32>
    %c16 = arith.constant 16 : index
    %c0_300 = arith.constant 0 : index
    %677 = vector.load %arg3[%c16, %c0_300] : memref<22x256xf32, #tpu.memory_space<vmem>>, vector<1x128xf32>
    %678 = vector.shape_cast %677 : vector<1x128xf32> to vector<128xf32>
    %679 = vector.shape_cast %678 : vector<128xf32> to vector<1x128xf32>
    %680 = vector.broadcast %679 : vector<1x128xf32> to vector<128x128xf32>
    %681 = arith.addf %676, %680 : vector<128x128xf32>
    %cst_301 = arith.constant 0.000000e+00 : f32
    %682 = vector.broadcast %cst_301 : f32 to vector<128x128xf32>
    %683 = arith.cmpf ogt, %681, %682 : vector<128x128xf32>
    %cst_302 = arith.constant 1.000000e-01 : f32
    %684 = vector.broadcast %cst_302 : f32 to vector<128x128xf32>
    %685 = arith.mulf %684, %681 : vector<128x128xf32>
    %686 = arith.select %683, %681, %685 : vector<128x128xi1>, vector<128x128xf32>
    %c0_303 = arith.constant 0 : index
    %c15_304 = arith.constant 15 : index
    %c0_305 = arith.constant 0 : index
    %687 = vector.load %arg4[%c0_303, %c15_304, %c0_305] : memref<2x38x256xf32, #tpu.memory_space<vmem>>, vector<1x1x128xf32>
    %688 = vector.shape_cast %687 : vector<1x1x128xf32> to vector<128xf32>
    %c0_306 = arith.constant 0 : index
    %c34 = arith.constant 34 : index
    %c0_307 = arith.constant 0 : index
    %689 = vector.load %arg4[%c0_306, %c34, %c0_307] : memref<2x38x256xf32, #tpu.memory_space<vmem>>, vector<1x1x128xf32>
    %690 = vector.shape_cast %689 : vector<1x1x128xf32> to vector<128xf32>
    %691 = vector.extract_strided_slice %686 {offsets = [0, 0], sizes = [64, 128], strides = [1, 1]} : vector<128x128xf32> to vector<64x128xf32>
    %cst_308 = arith.constant 1.000000e+00 : f32
    %692 = vector.broadcast %cst_308 : f32 to vector<128xf32>
    %693 = arith.addf %692, %688 : vector<128xf32>
    %694 = vector.shape_cast %693 : vector<128xf32> to vector<1x128xf32>
    %695 = vector.broadcast %694 : vector<1x128xf32> to vector<64x128xf32>
    %696 = arith.mulf %691, %695 : vector<64x128xf32>
    %697 = vector.shape_cast %690 : vector<128xf32> to vector<1x128xf32>
    %698 = vector.broadcast %697 : vector<1x128xf32> to vector<64x128xf32>
    %699 = arith.addf %696, %698 : vector<64x128xf32>
    %c1_309 = arith.constant 1 : index
    %c15_310 = arith.constant 15 : index
    %c0_311 = arith.constant 0 : index
    %700 = vector.load %arg4[%c1_309, %c15_310, %c0_311] : memref<2x38x256xf32, #tpu.memory_space<vmem>>, vector<1x1x128xf32>
    %701 = vector.shape_cast %700 : vector<1x1x128xf32> to vector<128xf32>
    %c1_312 = arith.constant 1 : index
    %c34_313 = arith.constant 34 : index
    %c0_314 = arith.constant 0 : index
    %702 = vector.load %arg4[%c1_312, %c34_313, %c0_314] : memref<2x38x256xf32, #tpu.memory_space<vmem>>, vector<1x1x128xf32>
    %703 = vector.shape_cast %702 : vector<1x1x128xf32> to vector<128xf32>
    %704 = vector.extract_strided_slice %686 {offsets = [64, 0], sizes = [64, 128], strides = [1, 1]} : vector<128x128xf32> to vector<64x128xf32>
    %cst_315 = arith.constant 1.000000e+00 : f32
    %705 = vector.broadcast %cst_315 : f32 to vector<128xf32>
    %706 = arith.addf %705, %701 : vector<128xf32>
    %707 = vector.shape_cast %706 : vector<128xf32> to vector<1x128xf32>
    %708 = vector.broadcast %707 : vector<1x128xf32> to vector<64x128xf32>
    %709 = arith.mulf %704, %708 : vector<64x128xf32>
    %710 = vector.shape_cast %703 : vector<128xf32> to vector<1x128xf32>
    %711 = vector.broadcast %710 : vector<1x128xf32> to vector<64x128xf32>
    %712 = arith.addf %709, %711 : vector<64x128xf32>
    %713 = tpu.concatenate %699, %712 in 0 : vector<64x128xf32>, vector<64x128xf32> -> vector<128x128xf32>
    %c3168 = arith.constant 3168 : index
    %c0_316 = arith.constant 0 : index
    %714 = vector.load %arg2[%c3168, %c0_316] : memref<3616x256xbf16, #tpu.memory_space<vmem>>, vector<128x128xbf16>
    %715 = arith.truncf %713 : vector<128x128xf32> to vector<128x128xbf16>
    %cst_317 = arith.constant dense<0.000000e+00> : vector<128x128xf32>
    %716 = tpu.matmul %715, %714, %cst_317 {dimension_numbers = #tpu.dot_dimension_numbers<[1], [0], [0], [1], [0, 0, 1, 1], [], []>} : vector<128x128xbf16>, vector<128x128xbf16>, vector<128x128xf32> -> vector<128x128xf32>
    %c17 = arith.constant 17 : index
    %c0_318 = arith.constant 0 : index
    %717 = vector.load %arg3[%c17, %c0_318] : memref<22x256xf32, #tpu.memory_space<vmem>>, vector<1x128xf32>
    %718 = vector.shape_cast %717 : vector<1x128xf32> to vector<128xf32>
    %719 = vector.shape_cast %718 : vector<128xf32> to vector<1x128xf32>
    %720 = vector.broadcast %719 : vector<1x128xf32> to vector<128x128xf32>
    %721 = arith.addf %716, %720 : vector<128x128xf32>
    %cst_319 = arith.constant 0.000000e+00 : f32
    %722 = vector.broadcast %cst_319 : f32 to vector<128x128xf32>
    %723 = arith.cmpf ogt, %721, %722 : vector<128x128xf32>
    %cst_320 = arith.constant 1.000000e-01 : f32
    %724 = vector.broadcast %cst_320 : f32 to vector<128x128xf32>
    %725 = arith.mulf %724, %721 : vector<128x128xf32>
    %726 = arith.select %723, %721, %725 : vector<128x128xi1>, vector<128x128xf32>
    %c0_321 = arith.constant 0 : index
    %c16_322 = arith.constant 16 : index
    %c0_323 = arith.constant 0 : index
    %727 = vector.load %arg4[%c0_321, %c16_322, %c0_323] : memref<2x38x256xf32, #tpu.memory_space<vmem>>, vector<1x1x128xf32>
    %728 = vector.shape_cast %727 : vector<1x1x128xf32> to vector<128xf32>
    %c0_324 = arith.constant 0 : index
    %c35 = arith.constant 35 : index
    %c0_325 = arith.constant 0 : index
    %729 = vector.load %arg4[%c0_324, %c35, %c0_325] : memref<2x38x256xf32, #tpu.memory_space<vmem>>, vector<1x1x128xf32>
    %730 = vector.shape_cast %729 : vector<1x1x128xf32> to vector<128xf32>
    %731 = vector.extract_strided_slice %726 {offsets = [0, 0], sizes = [64, 128], strides = [1, 1]} : vector<128x128xf32> to vector<64x128xf32>
    %cst_326 = arith.constant 1.000000e+00 : f32
    %732 = vector.broadcast %cst_326 : f32 to vector<128xf32>
    %733 = arith.addf %732, %728 : vector<128xf32>
    %734 = vector.shape_cast %733 : vector<128xf32> to vector<1x128xf32>
    %735 = vector.broadcast %734 : vector<1x128xf32> to vector<64x128xf32>
    %736 = arith.mulf %731, %735 : vector<64x128xf32>
    %737 = vector.shape_cast %730 : vector<128xf32> to vector<1x128xf32>
    %738 = vector.broadcast %737 : vector<1x128xf32> to vector<64x128xf32>
    %739 = arith.addf %736, %738 : vector<64x128xf32>
    %c1_327 = arith.constant 1 : index
    %c16_328 = arith.constant 16 : index
    %c0_329 = arith.constant 0 : index
    %740 = vector.load %arg4[%c1_327, %c16_328, %c0_329] : memref<2x38x256xf32, #tpu.memory_space<vmem>>, vector<1x1x128xf32>
    %741 = vector.shape_cast %740 : vector<1x1x128xf32> to vector<128xf32>
    %c1_330 = arith.constant 1 : index
    %c35_331 = arith.constant 35 : index
    %c0_332 = arith.constant 0 : index
    %742 = vector.load %arg4[%c1_330, %c35_331, %c0_332] : memref<2x38x256xf32, #tpu.memory_space<vmem>>, vector<1x1x128xf32>
    %743 = vector.shape_cast %742 : vector<1x1x128xf32> to vector<128xf32>
    %744 = vector.extract_strided_slice %726 {offsets = [64, 0], sizes = [64, 128], strides = [1, 1]} : vector<128x128xf32> to vector<64x128xf32>
    %cst_333 = arith.constant 1.000000e+00 : f32
    %745 = vector.broadcast %cst_333 : f32 to vector<128xf32>
    %746 = arith.addf %745, %741 : vector<128xf32>
    %747 = vector.shape_cast %746 : vector<128xf32> to vector<1x128xf32>
    %748 = vector.broadcast %747 : vector<1x128xf32> to vector<64x128xf32>
    %749 = arith.mulf %744, %748 : vector<64x128xf32>
    %750 = vector.shape_cast %743 : vector<128xf32> to vector<1x128xf32>
    %751 = vector.broadcast %750 : vector<1x128xf32> to vector<64x128xf32>
    %752 = arith.addf %749, %751 : vector<64x128xf32>
    %753 = tpu.concatenate %739, %752 in 0 : vector<64x128xf32>, vector<64x128xf32> -> vector<128x128xf32>
    %c3296 = arith.constant 3296 : index
    %c0_334 = arith.constant 0 : index
    %754 = vector.load %arg2[%c3296, %c0_334] : memref<3616x256xbf16, #tpu.memory_space<vmem>>, vector<128x64xbf16>
    %755 = arith.truncf %753 : vector<128x128xf32> to vector<128x128xbf16>
    %cst_335 = arith.constant dense<0.000000e+00> : vector<128x64xf32>
    %756 = tpu.matmul %755, %754, %cst_335 {dimension_numbers = #tpu.dot_dimension_numbers<[1], [0], [0], [1], [0, 0, 1, 1], [], []>} : vector<128x128xbf16>, vector<128x64xbf16>, vector<128x64xf32> -> vector<128x64xf32>
    %c18 = arith.constant 18 : index
    %c0_336 = arith.constant 0 : index
    %757 = vector.load %arg3[%c18, %c0_336] : memref<22x256xf32, #tpu.memory_space<vmem>>, vector<1x64xf32>
    %758 = vector.shape_cast %757 : vector<1x64xf32> to vector<64xf32>
    %759 = vector.shape_cast %758 : vector<64xf32> to vector<1x64xf32>
    %760 = vector.broadcast %759 : vector<1x64xf32> to vector<128x64xf32>
    %761 = arith.addf %756, %760 : vector<128x64xf32>
    %cst_337 = arith.constant 0.000000e+00 : f32
    %762 = vector.broadcast %cst_337 : f32 to vector<128x64xf32>
    %763 = arith.cmpf ogt, %761, %762 : vector<128x64xf32>
    %cst_338 = arith.constant 1.000000e-01 : f32
    %764 = vector.broadcast %cst_338 : f32 to vector<128x64xf32>
    %765 = arith.mulf %764, %761 : vector<128x64xf32>
    %766 = arith.select %763, %761, %765 : vector<128x64xi1>, vector<128x64xf32>
    %c0_339 = arith.constant 0 : index
    %c17_340 = arith.constant 17 : index
    %c0_341 = arith.constant 0 : index
    %767 = vector.load %arg4[%c0_339, %c17_340, %c0_341] : memref<2x38x256xf32, #tpu.memory_space<vmem>>, vector<1x1x64xf32>
    %768 = vector.shape_cast %767 : vector<1x1x64xf32> to vector<64xf32>
    %c0_342 = arith.constant 0 : index
    %c36 = arith.constant 36 : index
    %c0_343 = arith.constant 0 : index
    %769 = vector.load %arg4[%c0_342, %c36, %c0_343] : memref<2x38x256xf32, #tpu.memory_space<vmem>>, vector<1x1x64xf32>
    %770 = vector.shape_cast %769 : vector<1x1x64xf32> to vector<64xf32>
    %771 = vector.extract_strided_slice %766 {offsets = [0, 0], sizes = [64, 64], strides = [1, 1]} : vector<128x64xf32> to vector<64x64xf32>
    %cst_344 = arith.constant 1.000000e+00 : f32
    %772 = vector.broadcast %cst_344 : f32 to vector<64xf32>
    %773 = arith.addf %772, %768 : vector<64xf32>
    %774 = vector.shape_cast %773 : vector<64xf32> to vector<1x64xf32>
    %775 = vector.broadcast %774 : vector<1x64xf32> to vector<64x64xf32>
    %776 = arith.mulf %771, %775 : vector<64x64xf32>
    %777 = vector.shape_cast %770 : vector<64xf32> to vector<1x64xf32>
    %778 = vector.broadcast %777 : vector<1x64xf32> to vector<64x64xf32>
    %779 = arith.addf %776, %778 : vector<64x64xf32>
    %c1_345 = arith.constant 1 : index
    %c17_346 = arith.constant 17 : index
    %c0_347 = arith.constant 0 : index
    %780 = vector.load %arg4[%c1_345, %c17_346, %c0_347] : memref<2x38x256xf32, #tpu.memory_space<vmem>>, vector<1x1x64xf32>
    %781 = vector.shape_cast %780 : vector<1x1x64xf32> to vector<64xf32>
    %c1_348 = arith.constant 1 : index
    %c36_349 = arith.constant 36 : index
    %c0_350 = arith.constant 0 : index
    %782 = vector.load %arg4[%c1_348, %c36_349, %c0_350] : memref<2x38x256xf32, #tpu.memory_space<vmem>>, vector<1x1x64xf32>
    %783 = vector.shape_cast %782 : vector<1x1x64xf32> to vector<64xf32>
    %784 = vector.extract_strided_slice %766 {offsets = [64, 0], sizes = [64, 64], strides = [1, 1]} : vector<128x64xf32> to vector<64x64xf32>
    %cst_351 = arith.constant 1.000000e+00 : f32
    %785 = vector.broadcast %cst_351 : f32 to vector<64xf32>
    %786 = arith.addf %785, %781 : vector<64xf32>
    %787 = vector.shape_cast %786 : vector<64xf32> to vector<1x64xf32>
    %788 = vector.broadcast %787 : vector<1x64xf32> to vector<64x64xf32>
    %789 = arith.mulf %784, %788 : vector<64x64xf32>
    %790 = vector.shape_cast %783 : vector<64xf32> to vector<1x64xf32>
    %791 = vector.broadcast %790 : vector<1x64xf32> to vector<64x64xf32>
    %792 = arith.addf %789, %791 : vector<64x64xf32>
    %793 = tpu.concatenate %779, %792 in 0 : vector<64x64xf32>, vector<64x64xf32> -> vector<128x64xf32>
    %c3424 = arith.constant 3424 : index
    %c0_352 = arith.constant 0 : index
    %794 = vector.load %arg2[%c3424, %c0_352] : memref<3616x256xbf16, #tpu.memory_space<vmem>>, vector<64x128xbf16>
    %795 = arith.truncf %793 : vector<128x64xf32> to vector<128x64xbf16>
    %cst_353 = arith.constant dense<0.000000e+00> : vector<128x128xf32>
    %796 = tpu.matmul %795, %794, %cst_353 {dimension_numbers = #tpu.dot_dimension_numbers<[1], [0], [0], [1], [0, 0, 1, 1], [], []>} : vector<128x64xbf16>, vector<64x128xbf16>, vector<128x128xf32> -> vector<128x128xf32>
    %c19_354 = arith.constant 19 : index
    %c0_355 = arith.constant 0 : index
    %797 = vector.load %arg3[%c19_354, %c0_355] : memref<22x256xf32, #tpu.memory_space<vmem>>, vector<1x128xf32>
    %798 = vector.shape_cast %797 : vector<1x128xf32> to vector<128xf32>
    %799 = vector.shape_cast %798 : vector<128xf32> to vector<1x128xf32>
    %800 = vector.broadcast %799 : vector<1x128xf32> to vector<128x128xf32>
    %801 = arith.addf %796, %800 : vector<128x128xf32>
    %cst_356 = arith.constant 0.000000e+00 : f32
    %802 = vector.broadcast %cst_356 : f32 to vector<128x128xf32>
    %803 = arith.cmpf ogt, %801, %802 : vector<128x128xf32>
    %cst_357 = arith.constant 1.000000e-01 : f32
    %804 = vector.broadcast %cst_357 : f32 to vector<128x128xf32>
    %805 = arith.mulf %804, %801 : vector<128x128xf32>
    %806 = arith.select %803, %801, %805 : vector<128x128xi1>, vector<128x128xf32>
    %c0_358 = arith.constant 0 : index
    %c18_359 = arith.constant 18 : index
    %c0_360 = arith.constant 0 : index
    %807 = vector.load %arg4[%c0_358, %c18_359, %c0_360] : memref<2x38x256xf32, #tpu.memory_space<vmem>>, vector<1x1x128xf32>
    %808 = vector.shape_cast %807 : vector<1x1x128xf32> to vector<128xf32>
    %c0_361 = arith.constant 0 : index
    %c37 = arith.constant 37 : index
    %c0_362 = arith.constant 0 : index
    %809 = vector.load %arg4[%c0_361, %c37, %c0_362] : memref<2x38x256xf32, #tpu.memory_space<vmem>>, vector<1x1x128xf32>
    %810 = vector.shape_cast %809 : vector<1x1x128xf32> to vector<128xf32>
    %811 = vector.extract_strided_slice %806 {offsets = [0, 0], sizes = [64, 128], strides = [1, 1]} : vector<128x128xf32> to vector<64x128xf32>
    %cst_363 = arith.constant 1.000000e+00 : f32
    %812 = vector.broadcast %cst_363 : f32 to vector<128xf32>
    %813 = arith.addf %812, %808 : vector<128xf32>
    %814 = vector.shape_cast %813 : vector<128xf32> to vector<1x128xf32>
    %815 = vector.broadcast %814 : vector<1x128xf32> to vector<64x128xf32>
    %816 = arith.mulf %811, %815 : vector<64x128xf32>
    %817 = vector.shape_cast %810 : vector<128xf32> to vector<1x128xf32>
    %818 = vector.broadcast %817 : vector<1x128xf32> to vector<64x128xf32>
    %819 = arith.addf %816, %818 : vector<64x128xf32>
    %c1_364 = arith.constant 1 : index
    %c18_365 = arith.constant 18 : index
    %c0_366 = arith.constant 0 : index
    %820 = vector.load %arg4[%c1_364, %c18_365, %c0_366] : memref<2x38x256xf32, #tpu.memory_space<vmem>>, vector<1x1x128xf32>
    %821 = vector.shape_cast %820 : vector<1x1x128xf32> to vector<128xf32>
    %c1_367 = arith.constant 1 : index
    %c37_368 = arith.constant 37 : index
    %c0_369 = arith.constant 0 : index
    %822 = vector.load %arg4[%c1_367, %c37_368, %c0_369] : memref<2x38x256xf32, #tpu.memory_space<vmem>>, vector<1x1x128xf32>
    %823 = vector.shape_cast %822 : vector<1x1x128xf32> to vector<128xf32>
    %824 = vector.extract_strided_slice %806 {offsets = [64, 0], sizes = [64, 128], strides = [1, 1]} : vector<128x128xf32> to vector<64x128xf32>
    %cst_370 = arith.constant 1.000000e+00 : f32
    %825 = vector.broadcast %cst_370 : f32 to vector<128xf32>
    %826 = arith.addf %825, %821 : vector<128xf32>
    %827 = vector.shape_cast %826 : vector<128xf32> to vector<1x128xf32>
    %828 = vector.broadcast %827 : vector<1x128xf32> to vector<64x128xf32>
    %829 = arith.mulf %824, %828 : vector<64x128xf32>
    %830 = vector.shape_cast %823 : vector<128xf32> to vector<1x128xf32>
    %831 = vector.broadcast %830 : vector<1x128xf32> to vector<64x128xf32>
    %832 = arith.addf %829, %831 : vector<64x128xf32>
    %833 = tpu.concatenate %819, %832 in 0 : vector<64x128xf32>, vector<64x128xf32> -> vector<128x128xf32>
    %c3488 = arith.constant 3488 : index
    %c0_371 = arith.constant 0 : index
    %834 = vector.load %arg2[%c3488, %c0_371] : memref<3616x256xbf16, #tpu.memory_space<vmem>>, vector<128x128xbf16>
    %835 = arith.truncf %833 : vector<128x128xf32> to vector<128x128xbf16>
    %cst_372 = arith.constant dense<0.000000e+00> : vector<128x128xf32>
    %836 = tpu.matmul %835, %834, %cst_372 {dimension_numbers = #tpu.dot_dimension_numbers<[1], [0], [0], [1], [0, 0, 1, 1], [], []>} : vector<128x128xbf16>, vector<128x128xbf16>, vector<128x128xf32> -> vector<128x128xf32>
    %c20_373 = arith.constant 20 : index
    %c0_374 = arith.constant 0 : index
    %837 = vector.load %arg3[%c20_373, %c0_374] : memref<22x256xf32, #tpu.memory_space<vmem>>, vector<1x128xf32>
    %838 = vector.shape_cast %837 : vector<1x128xf32> to vector<128xf32>
    %839 = vector.shape_cast %838 : vector<128xf32> to vector<1x128xf32>
    %840 = vector.broadcast %839 : vector<1x128xf32> to vector<128x128xf32>
    %841 = arith.addf %836, %840 : vector<128x128xf32>
    %c21_375 = arith.constant 21 : index
    %c0_376 = arith.constant 0 : index
    %842 = vector.load %arg3[%c21_375, %c0_376] : memref<22x256xf32, #tpu.memory_space<vmem>>, vector<1x128xf32>
    %843 = vector.shape_cast %842 : vector<1x128xf32> to vector<128xf32>
    %cst_377 = arith.constant 1.000000e-01 : f32
    %844 = vector.broadcast %cst_377 : f32 to vector<128x128xf32>
    %845 = arith.mulf %841, %844 : vector<128x128xf32>
    %846 = vector.shape_cast %843 : vector<128xf32> to vector<1x128xf32>
    %847 = vector.broadcast %846 : vector<1x128xf32> to vector<128x128xf32>
    %848 = arith.mulf %0, %847 : vector<128x128xf32>
    %849 = arith.addf %845, %848 : vector<128x128xf32>
    %c0_378 = arith.constant 0 : index
    %c0_379 = arith.constant 0 : index
    %850 = vector.load %arg5[%c0_378, %c0_379] : memref<128x128xf32, #tpu.memory_space<vmem>>, vector<128x128xf32>
    tpu.vector_store %arg5[%c0_378, %c0_379], %849 {strides = array<i32>} : memref<128x128xf32, #tpu.memory_space<vmem>>, vector<128x128xf32>,
    return
  }
  func.func @transform_0(%arg0: i32) -> (i32, i32) {
    %c0_i32 = arith.constant 0 : i32
    %c0_i32_0 = arith.constant 0 : i32
    return %arg0, %c0_i32 : i32, i32
  }
  func.func @transform_1(%arg0: i32) -> (i32, i32) {
    %c0_i32 = arith.constant 0 : i32
    %c0_i32_0 = arith.constant 0 : i32
    %c0_i32_1 = arith.constant 0 : i32
    return %c0_i32, %c0_i32_0 : i32, i32
  }
  func.func @transform_2(%arg0: i32) -> (i32, i32) {
    %c0_i32 = arith.constant 0 : i32
    %c0_i32_0 = arith.constant 0 : i32
    %c0_i32_1 = arith.constant 0 : i32
    return %c0_i32, %c0_i32_0 : i32, i32
  }
  func.func @transform_3(%arg0: i32) -> (i32, i32, i32) {
    %c0_i32 = arith.constant 0 : i32
    %c0_i32_0 = arith.constant 0 : i32
    %c0_i32_1 = arith.constant 0 : i32
    return %arg0, %c0_i32, %c0_i32_0 : i32, i32, i32
  }
  func.func @transform_4(%arg0: i32) -> (i32, i32) {
    %c0_i32 = arith.constant 0 : i32
    %c0_i32_0 = arith.constant 0 : i32
    return %arg0, %c0_i32 : i32, i32
  }
}

</mosaic_0001>

<llo_original>
// kernel: tpu_custom_call.1
$region0: #{tpu_custom_call.1}
  #allocation0 [shape = 'u32[]', space=smem, size = 0x4, offset = 0x4, fixed_abs, tag = 'smem constant byte address 0x4 - core index']
  #allocation1 [shape = 'u32[144,128]{1,0:T(1,128)}', space=vmem, size = 0x12000, scoped, tag = 'internal scratch']
  %s0 = inlined_call_operand.hbm [shape: f32[256,128], index: 0, kind: input, shape index: {}]
  %s1 = inlined_call_operand.hbm [shape: bf16[3616,256], index: 1, kind: input, shape index: {}]
  %s2 = inlined_call_operand.hbm [shape: f32[22,256], index: 2, kind: input, shape index: {}]
  %s3 = inlined_call_operand.vmem [shape: f32[4,38,256], index: 3, kind: input, shape index: {}]
  %s4 = inlined_call_operand.hbm [shape: f32[256,128], index: 4, kind: output, shape index: {}]
  %s5 = sld [smem:[#allocation0]]
  $region61: #{tpu_custom_call.1} parent=0
    _
  %s7 = ssub.s32 1, %s5
  %s8 = scalar_select 0, %s7, %s5
  $region1: #{tpu_custom_call.1} parent=0
    #allocation2 [shape = 'u8[131072]{0}', space=vmem, size = 0x20000, scoped, tag = 'input window, operand 0']
    #allocation3 [shape = 's32[2]{0}', space=sflag, size = 0x8, scoped, tag = 'scoped memory for tpu_custom_call.1']
    #allocation4 [shape = 's32[2]{0}', space=sflag, size = 0x8, scoped, tag = 'scoped memory for tpu_custom_call.1']
    #allocation5 [shape = 'u8[1851392]{0}', space=vmem, size = 0x1c4000, scoped, tag = 'input window, operand 1, single buffered']
    #allocation6 [shape = 's32[1]{0}', space=sflag, size = 0x4, scoped, tag = 'scoped memory for tpu_custom_call.1']
    #allocation7 [shape = 'u8[24576]{0}', space=vmem, size = 0x6000, scoped, tag = 'input window, operand 2, single buffered']
    #allocation8 [shape = 'u8[131072]{0}', space=vmem, size = 0x20000, scoped, tag = 'output window, operand 0']
    %9 = vsyncpa [#allocation3], 0
    %s10 = scalar_lea.sflag [#allocation3], 1
    %11 = vsyncpa %s10, 0
    %12 = vsyncpa [#allocation6], 0
    %13 = vsyncpa [#allocation4], 0
    %s14 = scalar_lea.sflag [#allocation4], 1
    %15 = vsyncpa %s14, 0
    loop: start=0, step=1, limit=4
    $region2: #{tpu_custom_call.1} parent=1 // loop_pre_header
      _
    $region3: #{tpu_custom_call.1} parent=1 // loop_header
      %s17 = sphi 0, %s21
      %p18 = scmp.ge.s32.totalorder %s17, 4
      %s27 = sphi 0, %s29
      %s30 = sphi 0, %s27
      %s31 = sphi 0, %s30
      %s47 = sphi 0, %s31
      %s51 = sphi 0, %s51
      %s53 = sphi 0, %s51
      %s54 = sphi 0, %s53
      %s68 = sphi 0, %s54
      %s72 = sphi 0, %s72
      %s74 = sphi 0, %s72
      %s75 = sphi 0, %s74
      %s89 = sphi 0, %s75
      %s95 = sphi 0, %s97
      %s98 = sphi 0, %s95
      %s99 = sphi 0, %s98
      %s115 = sphi 0, %s99
      %s121 = sphi 0, %s123
      %s124 = sphi 0, %s121
      %s125 = sphi 0, %s124
      %s141 = sphi 0, %s125
    $region4: #{tpu_custom_call.1} parent=1 // loop_header_branch
      %20 = sbr.rel (%p18) target = $region8
    $region5: #{tpu_custom_call.1} parent=1 // loop_body
      %s22 = ssub.s32 %s17, 1
      %s23 = ssub.s32 %s17, 2
      %s24 = sadd.s32 %s17, 1
      %s25 = ssub.s32 %s17, %s24
      %p26 = scmp.eq.s32.totalorder %s25, 0
      %s28 = sadd.s32 %s27, 1
      %s29 = scalar_select %p26, %s27, %s28
      %p32 = pneg %p26
      %p33 = scmp.eq.s32.totalorder %s17, 1
      %p34 = por %p32, %p33
      %p35 = scmp.ne.s32.totalorder %s27, %s30
      %p36 = scmp.eq.s32.totalorder %s17, 0
      %p37 = por %p35, %p36
      %p38 = scmp.ne.s32.totalorder %s27, %s30
      %p39 = scmp.eq.s32.totalorder %s22, 1
      %p40 = por %p38, %p39
      %p41 = scmp.ne.s32.totalorder %s30, %s31
      %p42 = scmp.eq.s32.totalorder %s22, 0
      %p43 = por %p41, %p42
      %p44 = scmp.ne.s32.totalorder %s30, %s31
      %p45 = scmp.eq.s32.totalorder %s23, 1
      %p46 = por %p44, %p45
      %p48 = scmp.ne.s32.totalorder %s31, %s47
      %p49 = scmp.eq.s32.totalorder %s23, 0
      %p50 = por %p48, %p49
      %s52 = sadd.s32 %s51, 1
      %p55 = scmp.eq.s32.totalorder %s17, 1
      %p56 = scmp.ne.s32.totalorder %s51, %s53
      %p57 = scmp.eq.s32.totalorder %s17, 0
      %p58 = por %p56, %p57
      %p59 = scmp.ne.s32.totalorder %s51, %s53
      %p60 = scmp.eq.s32.totalorder %s22, 1
      %p61 = por %p59, %p60
      %p62 = scmp.ne.s32.totalorder %s53, %s54
      %p63 = scmp.eq.s32.totalorder %s22, 0
      %p64 = por %p62, %p63
      %p65 = scmp.ne.s32.totalorder %s53, %s54
      %p66 = scmp.eq.s32.totalorder %s23, 1
      %p67 = por %p65, %p66
      %p69 = scmp.ne.s32.totalorder %s54, %s68
      %p70 = scmp.eq.s32.totalorder %s23, 0
      %p71 = por %p69, %p70
      %s73 = sadd.s32 %s72, 1
      %p76 = scmp.eq.s32.totalorder %s17, 1
      %p77 = scmp.ne.s32.totalorder %s72, %s74
      %p78 = scmp.eq.s32.totalorder %s17, 0
      %p79 = por %p77, %p78
      %p80 = scmp.ne.s32.totalorder %s72, %s74
      %p81 = scmp.eq.s32.totalorder %s22, 1
      %p82 = por %p80, %p81
      %p83 = scmp.ne.s32.totalorder %s74, %s75
      %p84 = scmp.eq.s32.totalorder %s22, 0
      %p85 = por %p83, %p84
      %p86 = scmp.ne.s32.totalorder %s74, %s75
      %p87 = scmp.eq.s32.totalorder %s23, 1
      %p88 = por %p86, %p87
      %p90 = scmp.ne.s32.totalorder %s75, %s89
      %p91 = scmp.eq.s32.totalorder %s23, 0
      %p92 = por %p90, %p91
      %s93 = ssub.s32 %s17, %s24
      %p94 = scmp.eq.s32.totalorder %s93, 0
      %s96 = sadd.s32 %s95, 1
      %s97 = scalar_select %p94, %s95, %s96
      %p100 = pneg %p94
      %p101 = scmp.eq.s32.totalorder %s17, 1
      %p102 = por %p100, %p101
      %p103 = scmp.ne.s32.totalorder %s95, %s98
      %p104 = scmp.eq.s32.totalorder %s17, 0
      %p105 = por %p103, %p104
      %p106 = scmp.ne.s32.totalorder %s95, %s98
      %p107 = scmp.eq.s32.totalorder %s22, 1
      %p108 = por %p106, %p107
      %p109 = scmp.ne.s32.totalorder %s98, %s99
      %p110 = scmp.eq.s32.totalorder %s22, 0
      %p111 = por %p109, %p110
      %p112 = scmp.ne.s32.totalorder %s98, %s99
      %p113 = scmp.eq.s32.totalorder %s23, 1
      %p114 = por %p112, %p113
      %p116 = scmp.ne.s32.totalorder %s99, %s115
      %p117 = scmp.eq.s32.totalorder %s23, 0
      %p118 = por %p116, %p117
      %s119 = ssub.s32 %s17, %s24
      %p120 = scmp.eq.s32.totalorder %s119, 0
      %s122 = sadd.s32 %s121, 1
      %s123 = scalar_select %p120, %s121, %s122
      %p126 = pneg %p120
      %p127 = scmp.eq.s32.totalorder %s17, 1
      %p128 = por %p126, %p127
      %p129 = scmp.ne.s32.totalorder %s121, %s124
      %p130 = scmp.eq.s32.totalorder %s17, 0
      %p131 = por %p129, %p130
      %p132 = scmp.ne.s32.totalorder %s121, %s124
      %p133 = scmp.eq.s32.totalorder %s22, 1
      %p134 = por %p132, %p133
      %p135 = scmp.ne.s32.totalorder %s124, %s125
      %p136 = scmp.eq.s32.totalorder %s22, 0
      %p137 = por %p135, %p136
      %p138 = scmp.ne.s32.totalorder %s124, %s125
      %p139 = scmp.eq.s32.totalorder %s23, 1
      %p140 = por %p138, %p139
      %p142 = scmp.ne.s32.totalorder %s125, %s141
      %p143 = scmp.eq.s32.totalorder %s23, 0
      %p144 = por %p142, %p143
      %p145 = scmp.le.s32.totalorder 1, %s17
      %p146 = scmp.lt.s32.totalorder %s17, 3
      %p147 = pnand %p145, %p146
      %p148 = pneg %p147
      // Predicated region
      $region9: #{tpu_custom_call.1} parent=5 // pred_check
        _
      $region10: #{tpu_custom_call.1} parent=5 // pred_check_branch
        %150 = sbr.rel (%p147) target = $region12
      $region11: #{tpu_custom_call.1} parent=5 // pred_region
        %s151 = ssub.s32 %s17, 1
        // Predicated region
        $region13: #{tpu_custom_call.1} parent=11 // pred_check
          %p152 = pneg %p64
        $region14: #{tpu_custom_call.1} parent=11 // pred_check_branch
          %154 = sbr.rel (%p152) target = $region16
        $region15: #{tpu_custom_call.1} parent=11 // pred_region
          %s156 = ssub.s32 57856, 57856
          %157 = vsyncadd [#allocation6], %s156
          %s158 = sshll.u32 [#allocation5], 4
          %s159 = int_to_ptr.vmem [resolvable:$true] %s158
          %164 = dma.hbm_to_vmem [thread:$0]  %s1, 57856, %s159, [#allocation6], 128, 128, 8
        $region16: #{tpu_custom_call.1} parent=11 // pred_fallthru
          _
        // Predicated region
        $region17: #{tpu_custom_call.1} parent=11 // pred_check
          %p165 = pneg %p85
        $region18: #{tpu_custom_call.1} parent=11 // pred_check_branch
          %167 = sbr.rel (%p165) target = $region20
        $region19: #{tpu_custom_call.1} parent=11 // pred_region
          %s169 = ssub.s32 768, 768
          %170 = vsyncadd [#allocation6], %s169
          %s171 = sshll.u32 [#allocation7], 4
          %s172 = int_to_ptr.vmem [resolvable:$true] %s171
          %177 = dma.hbm_to_vmem [thread:$0]  %s2, 768, %s172, [#allocation6], 256, 256, 16
        $region20: #{tpu_custom_call.1} parent=11 // pred_fallthru
          _
      $region12: #{tpu_custom_call.1} parent=5 // pred_fallthru
        _
      %p178 = scmp.lt.s32.totalorder %s17, 2
      // Predicated region
      $region21: #{tpu_custom_call.1} parent=5 // pred_check
        %p179 = pneg %p178
      $region22: #{tpu_custom_call.1} parent=5 // pred_check_branch
        %181 = sbr.rel (%p179) target = $region24
      $region23: #{tpu_custom_call.1} parent=5 // pred_region
        // Predicated region
        $region25: #{tpu_custom_call.1} parent=23 // pred_check
          %p182 = pneg %p37
        $region26: #{tpu_custom_call.1} parent=23 // pred_check_branch
          %184 = sbr.rel (%p182) target = $region28
        $region27: #{tpu_custom_call.1} parent=23 // pred_region
          %s185 = sand.u32 %s27, 1
          %s186 = scalar_lea.sflag [#allocation3], %s185
          %s187 = sand.u32 %s27, 1
          %s188 = smul.addr %s187, 128
          %s189 = scalar_lea.vmem [#allocation2], %s188
          %s190 = smul.u32 16, %s17
          %s192 = ssub.s32 2048, 2048
          %193 = vsyncadd %s186, %s192
          %s194 = smul.addr %s190, 128
          %s195 = scalar_lea.hbm %s0, %s194
          %s196 = sshll.u32 %s189, 4
          %s197 = int_to_ptr.vmem [resolvable:$true] %s196
          %202 = dma.hbm_to_vmem [thread:$0]  %s195, 2048, %s197, %s186, 128, 128, 8
        $region28: #{tpu_custom_call.1} parent=23 // pred_fallthru
          _
        // Predicated region
        $region29: #{tpu_custom_call.1} parent=23 // pred_check
          %p203 = pneg %p105
        $region30: #{tpu_custom_call.1} parent=23 // pred_check_branch
          %205 = sbr.rel (%p203) target = $region32
        $region31: #{tpu_custom_call.1} parent=23 // pred_region
          %s206 = smul.u32 2, %s17
          %p207 = scmp.lt.s32.totalorder %s206, 3
          %s208 = scalar_select %p207, %s206, 3
          %s209 = smul.addr %s208, 10
          %s210 = smul.addr %s209, 8
          %s211 = scalar_lea.vmem %s3, %s210
          %s212 = smul.u32 2, %s17
        $region32: #{tpu_custom_call.1} parent=23 // pred_fallthru
          _
      $region24: #{tpu_custom_call.1} parent=5 // pred_fallthru
        _
      %p213 = scmp.le.s32.totalorder 1, %s17
      %p214 = scmp.lt.s32.totalorder %s17, 3
      %p215 = pnand %p213, %p214
      %p216 = pneg %p215
      // Predicated region
      $region33: #{tpu_custom_call.1} parent=5 // pred_check
        _
      $region34: #{tpu_custom_call.1} parent=5 // pred_check_branch
        %218 = sbr.rel (%p215) target = $region36
      $region35: #{tpu_custom_call.1} parent=5 // pred_region
        %s219 = ssub.s32 %s17, 1
        %s220 = sand.u32 %s30, 1
        %s221 = scalar_lea.sflag [#allocation3], %s220
        %s222 = sand.u32 %s30, 1
        %s223 = smul.addr %s222, 128
        %s224 = scalar_lea.vmem [#allocation2], %s223
        // Predicated region
        $region37: #{tpu_custom_call.1} parent=35 // pred_check
          %p225 = pneg %p43
        $region38: #{tpu_custom_call.1} parent=35 // pred_check_branch
          %227 = sbr.rel (%p225) target = $region40
        $region39: #{tpu_custom_call.1} parent=35 // pred_region
          %228 = dma.done %s221, 2048
        $region40: #{tpu_custom_call.1} parent=35 // pred_fallthru
          _
        // Predicated region
        $region41: #{tpu_custom_call.1} parent=35 // pred_check
          %p229 = pneg %p64
        $region42: #{tpu_custom_call.1} parent=35 // pred_check_branch
          %231 = sbr.rel (%p229) target = $region44
        $region43: #{tpu_custom_call.1} parent=35 // pred_region
          %232 = dma.done [#allocation6], 57856
        $region44: #{tpu_custom_call.1} parent=35 // pred_fallthru
          _
        // Predicated region
        $region45: #{tpu_custom_call.1} parent=35 // pred_check
          %p233 = pneg %p85
        $region46: #{tpu_custom_call.1} parent=35 // pred_check_branch
          %235 = sbr.rel (%p233) target = $region48
        $region47: #{tpu_custom_call.1} parent=35 // pred_region
          %236 = dma.done [#allocation6], 768
        $region48: #{tpu_custom_call.1} parent=35 // pred_fallthru
          _
        %s237 = sand.u32 %s30, 1
        %s238 = scalar_lea.sflag [#allocation3], %s237
        %s239 = sand.u32 %s30, 1
        %s240 = smul.addr %s239, 128
        %s241 = scalar_lea.vmem [#allocation2], %s240
        %p242 = pneg %p43
        %p243 = pneg %p40
        %p244 = pneg %p64
        %p245 = pneg %p61
        %p246 = pneg %p85
        %p247 = pneg %p82
        %s248 = smul.u32 2, %s22
        %p249 = scmp.lt.s32.totalorder %s248, 3
        %s250 = scalar_select %p249, %s248, 3
        %s251 = smul.addr %s250, 10
        %s252 = smul.addr %s251, 8
        %s253 = scalar_lea.vmem %s3, %s252
        %p254 = pneg %p111
        %p255 = pneg %p108
        %p256 = pneg %p137
        %p257 = pneg %p134
        %s258 = sand.u32 %s124, 1
        %s259 = scalar_lea.sflag [#allocation4], %s258
        %s260 = sand.u32 %s124, 1
        %s261 = smul.addr %s260, 128
        %s262 = scalar_lea.vmem [#allocation8], %s261
        %s263 = smul.u32 16, %s22
        %s264 = smul.u32 2, %s22
        %p265 = scmp.lt.s32.totalorder %s264, 3
        %s266 = scalar_select %p265, %s264, 3
        %s267 = smul.addr %s266, 10
        %s268 = smul.addr %s267, 8
        %s269 = scalar_lea.vmem %s3, %s268
        %s270 = smul.u32 2, %s22
        %s271 = smul.u32 16, %s22
        %v273 = vld [vmem:[%s224] sm:$0xff]
        %v274 = vld [vmem:[%s224 + $0x8] sm:$0xff]
        %v275 = vld [vmem:[%s224 + $0x10] sm:$0xff]
        %v276 = vld [vmem:[%s224 + $0x18] sm:$0xff]
        %v277 = vld [vmem:[%s224 + $0x20] sm:$0xff]
        %v278 = vld [vmem:[%s224 + $0x28] sm:$0xff]
        %v279 = vld [vmem:[%s224 + $0x30] sm:$0xff]
        %v280 = vld [vmem:[%s224 + $0x38] sm:$0xff]
        %v281 = vld [vmem:[%s224 + $0x40] sm:$0xff]
        %v282 = vld [vmem:[%s224 + $0x48] sm:$0xff]
        %v283 = vld [vmem:[%s224 + $0x50] sm:$0xff]
        %v284 = vld [vmem:[%s224 + $0x58] sm:$0xff]
        %v285 = vld [vmem:[%s224 + $0x60] sm:$0xff]
        %v286 = vld [vmem:[%s224 + $0x68] sm:$0xff]
        %v287 = vld [vmem:[%s224 + $0x70] sm:$0xff]
        %v288 = vld [vmem:[%s224 + $0x78] sm:$0xff]
        %v289 = vld [vmem:[#allocation5] sm:$0xf]
        %v290 = vld [vmem:[#allocation5 + $0x8] sm:$0xf]
        %v291 = vld [vmem:[#allocation5 + $0x10] sm:$0xf]
        %v292 = vld [vmem:[#allocation5 + $0x18] sm:$0xf]
        %v293 = vld [vmem:[#allocation5 + $0x20] sm:$0xf]
        %v294 = vld [vmem:[#allocation5 + $0x28] sm:$0xf]
        %v295 = vld [vmem:[#allocation5 + $0x30] sm:$0xf]
        %v296 = vld [vmem:[#allocation5 + $0x38] sm:$0xf]
        %v297 = vld [vmem:[#allocation5 + $0x40] sm:$0xf]
        %v298 = vld [vmem:[#allocation5 + $0x48] sm:$0xf]
        %v299 = vld [vmem:[#allocation5 + $0x50] sm:$0xf]
        %v300 = vld [vmem:[#allocation5 + $0x58] sm:$0xf]
        %v301 = vld [vmem:[#allocation5 + $0x60] sm:$0xf]
        %v302 = vld [vmem:[#allocation5 + $0x68] sm:$0xf]
        %v303 = vld [vmem:[#allocation5 + $0x70] sm:$0xf]
        %v304 = vld [vmem:[#allocation5 + $0x78] sm:$0xf]
        %v305 = vpack.c.bf16 %v274, %v273
        %v306 = vpack.c.bf16 %v276, %v275
        %v307 = vpack.c.bf16 %v278, %v277
        %v308 = vpack.c.bf16 %v280, %v279
        %v309 = vpack.c.bf16 %v282, %v281
        %v310 = vpack.c.bf16 %v284, %v283
        %v311 = vpack.c.bf16 %v286, %v285
        %v312 = vpack.c.bf16 %v288, %v287
        %v313 = vld [vmem:[#allocation7] ss:$0 sm:$0xff]
        %v330 = vunpack.c.l.b16 %v289
        %v331 = vunpack.c.l.b16 %v290
        %v332 = vunpack.c.l.b16 %v291
        %v333 = vunpack.c.l.b16 %v292
        %v334 = vunpack.c.l.b16 %v293
        %v335 = vunpack.c.l.b16 %v294
        %v336 = vunpack.c.l.b16 %v295
        %v337 = vunpack.c.l.b16 %v296
        %v338 = vunpack.c.l.b16 %v297
        %v339 = vunpack.c.l.b16 %v298
        %v340 = vunpack.c.l.b16 %v299
        %v341 = vunpack.c.l.b16 %v300
        %v342 = vunpack.c.l.b16 %v301
        %v343 = vunpack.c.l.b16 %v302
        %v344 = vunpack.c.l.b16 %v303
        %v345 = vunpack.c.l.b16 %v304
        %v346 = vpack.c.b16 %v331, %v330
        %v347 = vpack.c.b16 %v333, %v332
        %v348 = vpack.c.b16 %v335, %v334
        %v349 = vpack.c.b16 %v337, %v336
        %v350 = vpack.c.b16 %v339, %v338
        %v351 = vpack.c.b16 %v341, %v340
        %v352 = vpack.c.b16 %v343, %v342
        %v353 = vpack.c.b16 %v345, %v344
        %362 = vmatprep.subr.bf16.mxu0 0
        %363 = vmatpush1.bf16.msra.mxu0 %v346
        %364 = vmatprep.subr.bf16.mxu0 0
        %365 = vmatpush1.bf16.msra.mxu0 %v347
        %366 = vmatprep.subr.bf16.mxu0 0
        %367 = vmatpush1.bf16.msra.mxu0 %v348
        %368 = vmatprep.subr.bf16.mxu0 0
        %369 = vmatpush1.bf16.msra.mxu0 %v349
        %370 = vmatprep.subr.bf16.mxu0 0
        %371 = vmatpush1.bf16.msra.mxu0 %v350
        %372 = vmatprep.subr.bf16.mxu0 0
        %373 = vmatpush1.bf16.msra.mxu0 %v351
        %374 = vmatprep.subr.bf16.mxu0 0
        %375 = vmatpush1.bf16.msra.mxu0 %v352
        %376 = vmatprep.subr.bf16.mxu0 0
        %377 = vmatpush1.bf16.msra.mxu0 %v353
        %378 = vmatprep.subr.bf16.mxu0 0
        %379 = vmatpush1.bf16.msra.mxu0 0
        %380 = vmatprep.subr.bf16.mxu0 0
        %381 = vmatpush1.bf16.msra.mxu0 0
        %382 = vmatprep.subr.bf16.mxu0 0
        %383 = vmatpush1.bf16.msra.mxu0 0
        %384 = vmatprep.subr.bf16.mxu0 0
        %385 = vmatpush1.bf16.msra.mxu0 0
        %386 = vmatprep.subr.bf16.mxu0 0
        %387 = vmatpush1.bf16.msra.mxu0 0
        %388 = vmatprep.subr.bf16.mxu0 0
        %389 = vmatpush1.bf16.msra.mxu0 0
        %390 = vmatprep.subr.bf16.mxu0 0
        %391 = vmatpush1.bf16.msra.mxu0 0
        %392 = vmatprep.subr.bf16.mxu0 0
        %393 = vmatpush1.bf16.msra.mxu0 0
        %394 = vmatprep.mubr.bf16.mxu0 0
        %395 = vmatmul.mubr.bf16.gmra.mrb[0].mxu0 %v305
        %v396 = vpop.f32.mrb[0].mxu0
        %v397 = vadd.f32 %v313, %v396
        %v398 = vpop.f32.mrb[0].mxu0
        %v399 = vpop.f32.mrb[0].mxu0
        %v400 = vadd.f32 %v313, %v399
        %v401 = vpop.f32.mrb[0].mxu0
        %402 = vmatprep.mubr.bf16.mxu0 0
        %403 = vmatmul.mubr.bf16.gmra.mrb[0].mxu0 %v306
        %v404 = vpop.f32.mrb[0].mxu0
        %v405 = vadd.f32 %v313, %v404
        %v406 = vpop.f32.mrb[0].mxu0
        %v407 = vpop.f32.mrb[0].mxu0
        %v408 = vadd.f32 %v313, %v407
        %v409 = vpop.f32.mrb[0].mxu0
        %410 = vmatprep.mubr.bf16.mxu0 0
        %411 = vmatmul.mubr.bf16.gmra.mrb[0].mxu0 %v307
        %v412 = vpop.f32.mrb[0].mxu0
        %v413 = vadd.f32 %v313, %v412
        %v414 = vpop.f32.mrb[0].mxu0
        %v415 = vpop.f32.mrb[0].mxu0
        %v416 = vadd.f32 %v313, %v415
        %v417 = vpop.f32.mrb[0].mxu0
        %418 = vmatprep.mubr.bf16.mxu0 0
        %419 = vmatmul.mubr.bf16.gmra.mrb[0].mxu0 %v308
        %v420 = vpop.f32.mrb[0].mxu0
        %v421 = vadd.f32 %v313, %v420
        %v422 = vpop.f32.mrb[0].mxu0
        %v423 = vpop.f32.mrb[0].mxu0
        %v424 = vadd.f32 %v313, %v423
        %v425 = vpop.f32.mrb[0].mxu0
        %426 = vmatprep.mubr.bf16.mxu0 0
        %427 = vmatmul.mubr.bf16.gmra.mrb[0].mxu0 %v309
        %v428 = vpop.f32.mrb[0].mxu0
        %v429 = vadd.f32 %v313, %v428
        %v430 = vpop.f32.mrb[0].mxu0
        %v431 = vpop.f32.mrb[0].mxu0
        %v432 = vadd.f32 %v313, %v431
        %v433 = vpop.f32.mrb[0].mxu0
        %434 = vmatprep.mubr.bf16.mxu0 0
        %435 = vmatmul.mubr.bf16.gmra.mrb[0].mxu0 %v310
        %v436 = vpop.f32.mrb[0].mxu0
        %v437 = vadd.f32 %v313, %v436
        %v438 = vpop.f32.mrb[0].mxu0
        %v439 = vpop.f32.mrb[0].mxu0
        %v440 = vadd.f32 %v313, %v439
        %v441 = vpop.f32.mrb[0].mxu0
        %442 = vmatprep.mubr.bf16.mxu0 0
        %443 = vmatmul.mubr.bf16.gmra.mrb[0].mxu0 %v311
        %v444 = vpop.f32.mrb[0].mxu0
        %v445 = vadd.f32 %v313, %v444
        %v446 = vpop.f32.mrb[0].mxu0
        %v447 = vpop.f32.mrb[0].mxu0
        %v448 = vadd.f32 %v313, %v447
        %v449 = vpop.f32.mrb[0].mxu0
        %450 = vmatprep.mubr.bf16.mxu0 0
        %451 = vmatmul.mubr.bf16.gmra.mrb[0].mxu0 %v312
        %v452 = vpop.f32.mrb[0].mxu0
        %v453 = vadd.f32 %v313, %v452
        %v454 = vpop.f32.mrb[0].mxu0
        %v455 = vpop.f32.mrb[0].mxu0
        %v456 = vadd.f32 %v313, %v455
        %v457 = vpop.f32.mrb[0].mxu0
        %458 = vdwg.mxu0
        %vm459 = vcmp.gt.f32.partialorder %v397, 0.0
        %vm460 = vcmp.gt.f32.partialorder %v400, 0.0
        %vm461 = vcmp.gt.f32.partialorder %v405, 0.0
        %vm462 = vcmp.gt.f32.partialorder %v408, 0.0
        %vm463 = vcmp.gt.f32.partialorder %v413, 0.0
        %vm464 = vcmp.gt.f32.partialorder %v416, 0.0
        %vm465 = vcmp.gt.f32.partialorder %v421, 0.0
        %vm466 = vcmp.gt.f32.partialorder %v424, 0.0
        %vm467 = vcmp.gt.f32.partialorder %v429, 0.0
        %vm468 = vcmp.gt.f32.partialorder %v432, 0.0
        %vm469 = vcmp.gt.f32.partialorder %v437, 0.0
        %vm470 = vcmp.gt.f32.partialorder %v440, 0.0
        %vm471 = vcmp.gt.f32.partialorder %v445, 0.0
        %vm472 = vcmp.gt.f32.partialorder %v448, 0.0
        %vm473 = vcmp.gt.f32.partialorder %v453, 0.0
        %vm474 = vcmp.gt.f32.partialorder %v456, 0.0
        %v475 = vmul.f32 %v397, 0.1
        %v476 = vmul.f32 %v400, 0.1
        %v477 = vmul.f32 %v405, 0.1
        %v478 = vmul.f32 %v408, 0.1
        %v479 = vmul.f32 %v413, 0.1
        %v480 = vmul.f32 %v416, 0.1
        %v481 = vmul.f32 %v421, 0.1
        %v482 = vmul.f32 %v424, 0.1
        %v483 = vmul.f32 %v429, 0.1
        %v484 = vmul.f32 %v432, 0.1
        %v485 = vmul.f32 %v437, 0.1
        %v486 = vmul.f32 %v440, 0.1
        %v487 = vmul.f32 %v445, 0.1
        %v488 = vmul.f32 %v448, 0.1
        %v489 = vmul.f32 %v453, 0.1
        %v490 = vmul.f32 %v456, 0.1
        %v491 = vsel %vm459, %v397, %v475
        %v492 = vsel %vm460, %v400, %v476
        %v493 = vsel %vm461, %v405, %v477
        %v494 = vsel %vm462, %v408, %v478
        %v495 = vsel %vm463, %v413, %v479
        %v496 = vsel %vm464, %v416, %v480
        %v497 = vsel %vm465, %v421, %v481
        %v498 = vsel %vm466, %v424, %v482
        %v499 = vsel %vm467, %v429, %v483
        %v500 = vsel %vm468, %v432, %v484
        %v501 = vsel %vm469, %v437, %v485
        %v502 = vsel %vm470, %v440, %v486
        %v503 = vsel %vm471, %v445, %v487
        %v504 = vsel %vm472, %v448, %v488
        %v505 = vsel %vm473, %v453, %v489
        %v506 = vsel %vm474, %v456, %v490
        %v507 = vld [vmem:[%s269] ss:$0 sm:$0xff]
        %v508 = vld [vmem:[%s269 + $0x23] ss:$0 sm:$0xff]
        %v509 = vadd.f32 %v507, 1.0
        %v510 = vmul.f32 %v491, %v509
        %v511 = vmul.f32 %v492, %v509
        %v512 = vmul.f32 %v493, %v509
        %v513 = vmul.f32 %v494, %v509
        %v514 = vmul.f32 %v495, %v509
        %v515 = vmul.f32 %v496, %v509
        %v516 = vmul.f32 %v497, %v509
        %v517 = vmul.f32 %v498, %v509
        %v518 = vadd.f32 %v510, %v508
        %v519 = vadd.f32 %v511, %v508
        %v520 = vadd.f32 %v512, %v508
        %v521 = vadd.f32 %v513, %v508
        %v522 = vadd.f32 %v514, %v508
        %v523 = vadd.f32 %v515, %v508
        %v524 = vadd.f32 %v516, %v508
        %v525 = vadd.f32 %v517, %v508
        %s526 = scalar_lea.vmem %s269, 80
        %v527 = vld [vmem:[%s526] ss:$0 sm:$0xff]
        %v528 = vld [vmem:[%s526 + $0x23] ss:$0 sm:$0xff]
        %v529 = vadd.f32 %v527, 1.0
        %v530 = vmul.f32 %v499, %v529
        %v531 = vmul.f32 %v500, %v529
        %v532 = vmul.f32 %v501, %v529
        %v533 = vmul.f32 %v502, %v529
        %v534 = vmul.f32 %v503, %v529
        %v535 = vmul.f32 %v504, %v529
        %v536 = vmul.f32 %v505, %v529
        %v537 = vmul.f32 %v506, %v529
        %v538 = vadd.f32 %v530, %v528
        %v539 = vadd.f32 %v531, %v528
        %v540 = vadd.f32 %v532, %v528
        %v541 = vadd.f32 %v533, %v528
        %v542 = vadd.f32 %v534, %v528
        %v543 = vadd.f32 %v535, %v528
        %v544 = vadd.f32 %v536, %v528
        %v545 = vadd.f32 %v537, %v528
        %v546 = vld [vmem:[#allocation5 + $0x80] sm:$0xf]
        %v547 = vld [vmem:[#allocation5 + $0x88] sm:$0xf]
        %v548 = vld [vmem:[#allocation5 + $0x90] sm:$0xf]
        %v549 = vld [vmem:[#allocation5 + $0x98] sm:$0xf]
        %v550 = vpack.c.bf16 %v519, %v518
        %v551 = vpack.c.bf16 %v521, %v520
        %v552 = vpack.c.bf16 %v523, %v522
        %v553 = vpack.c.bf16 %v525, %v524
        %v554 = vpack.c.bf16 %v539, %v538
        %v555 = vpack.c.bf16 %v541, %v540
        %v556 = vpack.c.bf16 %v543, %v542
        %v557 = vpack.c.bf16 %v545, %v544
        %v558 = vld [vmem:[#allocation7 + $0x1] ss:$0 sm:$0xff]
        %v563 = vunpack.c.l.b16 %v546
        %v564 = vunpack.c.l.b16 %v547
        %v565 = vunpack.c.l.b16 %v548
        %v566 = vunpack.c.l.b16 %v549
        %v567 = vpack.c.b16 %v564, %v563
        %v568 = vpack.c.b16 %v566, %v565
        %vm571 = vcmask 261120
        %v573 = vsel %vm571, %v550, 0
        %v576 = vsel %vm571, %v551, 0
        %v579 = vsel %vm571, %v552, 0
        %v582 = vsel %vm571, %v553, 0
        %v585 = vsel %vm571, %v554, 0
        %v588 = vsel %vm571, %v555, 0
        %v591 = vsel %vm571, %v556, 0
        %v594 = vsel %vm571, %v557, 0
        %596 = vmatprep.subr.bf16.mxu0 0
        %597 = vmatpush1.bf16.msra.mxu0 %v567
        %598 = vmatprep.subr.bf16.mxu0 0
        %599 = vmatpush1.bf16.msra.mxu0 %v568
        %600 = vmatprep.subr.bf16.mxu0 0
        %601 = vmatpush1.bf16.msra.mxu0 0
        %602 = vmatprep.subr.bf16.mxu0 0
        %603 = vmatpush1.bf16.msra.mxu0 0
        %604 = vmatprep.subr.bf16.mxu0 0
        %605 = vmatpush1.bf16.msra.mxu0 0
        %606 = vmatprep.subr.bf16.mxu0 0
        %607 = vmatpush1.bf16.msra.mxu0 0
        %608 = vmatprep.subr.bf16.mxu0 0
        %609 = vmatpush1.bf16.msra.mxu0 0
        %610 = vmatprep.subr.bf16.mxu0 0
        %611 = vmatpush1.bf16.msra.mxu0 0
        %612 = vmatprep.subr.bf16.mxu0 0
        %613 = vmatpush1.bf16.msra.mxu0 0
        %614 = vmatprep.subr.bf16.mxu0 0
        %615 = vmatpush1.bf16.msra.mxu0 0
        %616 = vmatprep.subr.bf16.mxu0 0
        %617 = vmatpush1.bf16.msra.mxu0 0
        %618 = vmatprep.subr.bf16.mxu0 0
        %619 = vmatpush1.bf16.msra.mxu0 0
        %620 = vmatprep.subr.bf16.mxu0 0
        %621 = vmatpush1.bf16.msra.mxu0 0
        %622 = vmatprep.subr.bf16.mxu0 0
        %623 = vmatpush1.bf16.msra.mxu0 0
        %624 = vmatprep.subr.bf16.mxu0 0
        %625 = vmatpush1.bf16.msra.mxu0 0
        %626 = vmatprep.subr.bf16.mxu0 0
        %627 = vmatpush1.bf16.msra.mxu0 0
        %628 = vmatprep.mubr.bf16.mxu0 0
        %629 = vmatmul.mubr.bf16.gmra.mrb[0].mxu0 %v573
        %v630 = vpop.f32.mrb[0].mxu0
        %v631 = vadd.f32 %v558, %v630
        %v632 = vpop.f32.mrb[0].mxu0
        %v633 = vpop.f32.mrb[0].mxu0
        %v634 = vadd.f32 %v558, %v633
        %v635 = vpop.f32.mrb[0].mxu0
        %636 = vmatprep.mubr.bf16.mxu0 0
        %637 = vmatmul.mubr.bf16.gmra.mrb[0].mxu0 %v576
        %v638 = vpop.f32.mrb[0].mxu0
        %v639 = vadd.f32 %v558, %v638
        %v640 = vpop.f32.mrb[0].mxu0
        %v641 = vpop.f32.mrb[0].mxu0
        %v642 = vadd.f32 %v558, %v641
        %v643 = vpop.f32.mrb[0].mxu0
        %644 = vmatprep.mubr.bf16.mxu0 0
        %645 = vmatmul.mubr.bf16.gmra.mrb[0].mxu0 %v579
        %v646 = vpop.f32.mrb[0].mxu0
        %v647 = vadd.f32 %v558, %v646
        %v648 = vpop.f32.mrb[0].mxu0
        %v649 = vpop.f32.mrb[0].mxu0
        %v650 = vadd.f32 %v558, %v649
        %v651 = vpop.f32.mrb[0].mxu0
        %652 = vmatprep.mubr.bf16.mxu0 0
        %653 = vmatmul.mubr.bf16.gmra.mrb[0].mxu0 %v582
        %v654 = vpop.f32.mrb[0].mxu0
        %v655 = vadd.f32 %v558, %v654
        %v656 = vpop.f32.mrb[0].mxu0
        %v657 = vpop.f32.mrb[0].mxu0
        %v658 = vadd.f32 %v558, %v657
        %v659 = vpop.f32.mrb[0].mxu0
        %660 = vmatprep.mubr.bf16.mxu0 0
        %661 = vmatmul.mubr.bf16.gmra.mrb[0].mxu0 %v585
        %v662 = vpop.f32.mrb[0].mxu0
        %v663 = vadd.f32 %v558, %v662
        %v664 = vpop.f32.mrb[0].mxu0
        %v665 = vpop.f32.mrb[0].mxu0
        %v666 = vadd.f32 %v558, %v665
        %v667 = vpop.f32.mrb[0].mxu0
        %668 = vmatprep.mubr.bf16.mxu0 0
        %669 = vmatmul.mubr.bf16.gmra.mrb[0].mxu0 %v588
        %v670 = vpop.f32.mrb[0].mxu0
        %v671 = vadd.f32 %v558, %v670
        %v672 = vpop.f32.mrb[0].mxu0
        %v673 = vpop.f32.mrb[0].mxu0
        %v674 = vadd.f32 %v558, %v673
        %v675 = vpop.f32.mrb[0].mxu0
        %676 = vmatprep.mubr.bf16.mxu0 0
        %677 = vmatmul.mubr.bf16.gmra.mrb[0].mxu0 %v591
        %v678 = vpop.f32.mrb[0].mxu0
        %v679 = vadd.f32 %v558, %v678
        %v680 = vpop.f32.mrb[0].mxu0
        %v681 = vpop.f32.mrb[0].mxu0
        %v682 = vadd.f32 %v558, %v681
        %v683 = vpop.f32.mrb[0].mxu0
        %684 = vmatprep.mubr.bf16.mxu0 0
        %685 = vmatmul.mubr.bf16.gmra.mrb[0].mxu0 %v594
        %v686 = vpop.f32.mrb[0].mxu0
        %v687 = vadd.f32 %v558, %v686
        %v688 = vpop.f32.mrb[0].mxu0
        %v689 = vpop.f32.mrb[0].mxu0
        %v690 = vadd.f32 %v558, %v689
        %v691 = vpop.f32.mrb[0].mxu0
        %692 = vdwg.mxu0
        %vm693 = vcmp.gt.f32.partialorder %v631, 0.0
        %vm694 = vcmp.gt.f32.partialorder %v634, 0.0
        %vm695 = vcmp.gt.f32.partialorder %v639, 0.0
        %vm696 = vcmp.gt.f32.partialorder %v642, 0.0
        %vm697 = vcmp.gt.f32.partialorder %v647, 0.0
        %vm698 = vcmp.gt.f32.partialorder %v650, 0.0
        %vm699 = vcmp.gt.f32.partialorder %v655, 0.0
        %vm700 = vcmp.gt.f32.partialorder %v658, 0.0
        %vm701 = vcmp.gt.f32.partialorder %v663, 0.0
        %vm702 = vcmp.gt.f32.partialorder %v666, 0.0
        %vm703 = vcmp.gt.f32.partialorder %v671, 0.0
        %vm704 = vcmp.gt.f32.partialorder %v674, 0.0
        %vm705 = vcmp.gt.f32.partialorder %v679, 0.0
        %vm706 = vcmp.gt.f32.partialorder %v682, 0.0
        %vm707 = vcmp.gt.f32.partialorder %v687, 0.0
        %vm708 = vcmp.gt.f32.partialorder %v690, 0.0
        %v709 = vmul.f32 %v631, 0.1
        %v710 = vmul.f32 %v634, 0.1
        %v711 = vmul.f32 %v639, 0.1
        %v712 = vmul.f32 %v642, 0.1
        %v713 = vmul.f32 %v647, 0.1
        %v714 = vmul.f32 %v650, 0.1
        %v715 = vmul.f32 %v655, 0.1
        %v716 = vmul.f32 %v658, 0.1
        %v717 = vmul.f32 %v663, 0.1
        %v718 = vmul.f32 %v666, 0.1
        %v719 = vmul.f32 %v671, 0.1
        %v720 = vmul.f32 %v674, 0.1
        %v721 = vmul.f32 %v679, 0.1
        %v722 = vmul.f32 %v682, 0.1
        %v723 = vmul.f32 %v687, 0.1
        %v724 = vmul.f32 %v690, 0.1
        %v725 = vsel %vm693, %v631, %v709
        %v726 = vsel %vm694, %v634, %v710
        %v727 = vsel %vm695, %v639, %v711
        %v728 = vsel %vm696, %v642, %v712
        %v729 = vsel %vm697, %v647, %v713
        %v730 = vsel %vm698, %v650, %v714
        %v731 = vsel %vm699, %v655, %v715
        %v732 = vsel %vm700, %v658, %v716
        %v733 = vsel %vm701, %v663, %v717
        %v734 = vsel %vm702, %v666, %v718
        %v735 = vsel %vm703, %v671, %v719
        %v736 = vsel %vm704, %v674, %v720
        %v737 = vsel %vm705, %v679, %v721
        %v738 = vsel %vm706, %v682, %v722
        %v739 = vsel %vm707, %v687, %v723
        %v740 = vsel %vm708, %v690, %v724
        %v741 = vld [vmem:[%s269 + $0x1] ss:$0 sm:$0xff]
        %v742 = vld [vmem:[%s269 + $0x24] ss:$0 sm:$0xff]
        %v743 = vadd.f32 %v741, 1.0
        %v744 = vmul.f32 %v725, %v743
        %v745 = vmul.f32 %v726, %v743
        %v746 = vmul.f32 %v727, %v743
        %v747 = vmul.f32 %v728, %v743
        %v748 = vmul.f32 %v729, %v743
        %v749 = vmul.f32 %v730, %v743
        %v750 = vmul.f32 %v731, %v743
        %v751 = vmul.f32 %v732, %v743
        %v752 = vadd.f32 %v744, %v742
        %v753 = vadd.f32 %v745, %v742
        %v754 = vadd.f32 %v746, %v742
        %v755 = vadd.f32 %v747, %v742
        %v756 = vadd.f32 %v748, %v742
        %v757 = vadd.f32 %v749, %v742
        %v758 = vadd.f32 %v750, %v742
        %v759 = vadd.f32 %v751, %v742
        %v760 = vld [vmem:[%s526 + $0x1] ss:$0 sm:$0xff]
        %v761 = vld [vmem:[%s526 + $0x24] ss:$0 sm:$0xff]
        %v762 = vadd.f32 %v760, 1.0
        %v763 = vmul.f32 %v733, %v762
        %v764 = vmul.f32 %v734, %v762
        %v765 = vmul.f32 %v735, %v762
        %v766 = vmul.f32 %v736, %v762
        %v767 = vmul.f32 %v737, %v762
        %v768 = vmul.f32 %v738, %v762
        %v769 = vmul.f32 %v739, %v762
        %v770 = vmul.f32 %v740, %v762
        %v771 = vadd.f32 %v763, %v761
        %v772 = vadd.f32 %v764, %v761
        %v773 = vadd.f32 %v765, %v761
        %v774 = vadd.f32 %v766, %v761
        %v775 = vadd.f32 %v767, %v761
        %v776 = vadd.f32 %v768, %v761
        %v777 = vadd.f32 %v769, %v761
        %v778 = vadd.f32 %v770, %v761
        %v779 = vpack.c.bf16 %v753, %v752
        %v780 = vpack.c.bf16 %v755, %v754
        %v781 = vpack.c.bf16 %v757, %v756
        %v782 = vpack.c.bf16 %v759, %v758
        %v783 = vpack.c.bf16 %v772, %v771
        %v784 = vpack.c.bf16 %v774, %v773
        %v785 = vpack.c.bf16 %v776, %v775
        %v786 = vpack.c.bf16 %v778, %v777
        %v787 = vld [vmem:[#allocation5 + $0xa0] sm:$0xf]
        %v788 = vld [vmem:[#allocation5 + $0xa8] sm:$0xf]
        %v789 = vld [vmem:[#allocation5 + $0xb0] sm:$0xf]
        %v790 = vld [vmem:[#allocation5 + $0xb8] sm:$0xf]
        %v791 = vld [vmem:[#allocation5 + $0xc0] sm:$0xf]
        %v792 = vld [vmem:[#allocation5 + $0xc8] sm:$0xf]
        %v793 = vld [vmem:[#allocation5 + $0xd0] sm:$0xf]
        %v794 = vld [vmem:[#allocation5 + $0xd8] sm:$0xf]
        %v795 = vld [vmem:[#allocation7 + $0x2] ss:$0 sm:$0xff]
        %v804 = vunpack.c.l.b16 %v787
        %v805 = vunpack.c.l.b16 %v788
        %v806 = vunpack.c.l.b16 %v789
        %v807 = vunpack.c.l.b16 %v790
        %v808 = vunpack.c.l.b16 %v791
        %v809 = vunpack.c.l.b16 %v792
        %v810 = vunpack.c.l.b16 %v793
        %v811 = vunpack.c.l.b16 %v794
        %v812 = vpack.c.b16 %v805, %v804
        %v813 = vpack.c.b16 %v807, %v806
        %v814 = vpack.c.b16 %v809, %v808
        %v815 = vpack.c.b16 %v811, %v810
        %vm820 = vcmask 523264
        %v822 = vsel %vm820, %v779, 0
        %v825 = vsel %vm820, %v780, 0
        %v828 = vsel %vm820, %v781, 0
        %v831 = vsel %vm820, %v782, 0
        %v834 = vsel %vm820, %v783, 0
        %v837 = vsel %vm820, %v784, 0
        %v840 = vsel %vm820, %v785, 0
        %v843 = vsel %vm820, %v786, 0
        %845 = vmatprep.subr.bf16.mxu0 0
        %846 = vmatpush1.bf16.msra.mxu0 %v812
        %847 = vmatprep.subr.bf16.mxu0 0
        %848 = vmatpush1.bf16.msra.mxu0 %v813
        %849 = vmatprep.subr.bf16.mxu0 0
        %850 = vmatpush1.bf16.msra.mxu0 %v814
        %851 = vmatprep.subr.bf16.mxu0 0
        %852 = vmatpush1.bf16.msra.mxu0 %v815
        %853 = vmatprep.subr.bf16.mxu0 0
        %854 = vmatpush1.bf16.msra.mxu0 0
        %855 = vmatprep.subr.bf16.mxu0 0
        %856 = vmatpush1.bf16.msra.mxu0 0
        %857 = vmatprep.subr.bf16.mxu0 0
        %858 = vmatpush1.bf16.msra.mxu0 0
        %859 = vmatprep.subr.bf16.mxu0 0
        %860 = vmatpush1.bf16.msra.mxu0 0
        %861 = vmatprep.subr.bf16.mxu0 0
        %862 = vmatpush1.bf16.msra.mxu0 0
        %863 = vmatprep.subr.bf16.mxu0 0
        %864 = vmatpush1.bf16.msra.mxu0 0
        %865 = vmatprep.subr.bf16.mxu0 0
        %866 = vmatpush1.bf16.msra.mxu0 0
        %867 = vmatprep.subr.bf16.mxu0 0
        %868 = vmatpush1.bf16.msra.mxu0 0
        %869 = vmatprep.subr.bf16.mxu0 0
        %870 = vmatpush1.bf16.msra.mxu0 0
        %871 = vmatprep.subr.bf16.mxu0 0
        %872 = vmatpush1.bf16.msra.mxu0 0
        %873 = vmatprep.subr.bf16.mxu0 0
        %874 = vmatpush1.bf16.msra.mxu0 0
        %875 = vmatprep.subr.bf16.mxu0 0
        %876 = vmatpush1.bf16.msra.mxu0 0
        %877 = vmatprep.mubr.bf16.mxu0 0
        %878 = vmatmul.mubr.bf16.gmra.mrb[0].mxu0 %v822
        %v879 = vpop.f32.mrb[0].mxu0
        %v880 = vadd.f32 %v795, %v879
        %v881 = vpop.f32.mrb[0].mxu0
        %v882 = vpop.f32.mrb[0].mxu0
        %v883 = vadd.f32 %v795, %v882
        %v884 = vpop.f32.mrb[0].mxu0
        %885 = vmatprep.mubr.bf16.mxu0 0
        %886 = vmatmul.mubr.bf16.gmra.mrb[0].mxu0 %v825
        %v887 = vpop.f32.mrb[0].mxu0
        %v888 = vadd.f32 %v795, %v887
        %v889 = vpop.f32.mrb[0].mxu0
        %v890 = vpop.f32.mrb[0].mxu0
        %v891 = vadd.f32 %v795, %v890
        %v892 = vpop.f32.mrb[0].mxu0
        %893 = vmatprep.mubr.bf16.mxu0 0
        %894 = vmatmul.mubr.bf16.gmra.mrb[0].mxu0 %v828
        %v895 = vpop.f32.mrb[0].mxu0
        %v896 = vadd.f32 %v795, %v895
        %v897 = vpop.f32.mrb[0].mxu0
        %v898 = vpop.f32.mrb[0].mxu0
        %v899 = vadd.f32 %v795, %v898
        %v900 = vpop.f32.mrb[0].mxu0
        %901 = vmatprep.mubr.bf16.mxu0 0
        %902 = vmatmul.mubr.bf16.gmra.mrb[0].mxu0 %v831
        %v903 = vpop.f32.mrb[0].mxu0
        %v904 = vadd.f32 %v795, %v903
        %v905 = vpop.f32.mrb[0].mxu0
        %v906 = vpop.f32.mrb[0].mxu0
        %v907 = vadd.f32 %v795, %v906
        %v908 = vpop.f32.mrb[0].mxu0
        %909 = vmatprep.mubr.bf16.mxu0 0
        %910 = vmatmul.mubr.bf16.gmra.mrb[0].mxu0 %v834
        %v911 = vpop.f32.mrb[0].mxu0
        %v912 = vadd.f32 %v795, %v911
        %v913 = vpop.f32.mrb[0].mxu0
        %v914 = vpop.f32.mrb[0].mxu0
        %v915 = vadd.f32 %v795, %v914
        %v916 = vpop.f32.mrb[0].mxu0
        %917 = vmatprep.mubr.bf16.mxu0 0
        %918 = vmatmul.mubr.bf16.gmra.mrb[0].mxu0 %v837
        %v919 = vpop.f32.mrb[0].mxu0
        %v920 = vadd.f32 %v795, %v919
        %v921 = vpop.f32.mrb[0].mxu0
        %v922 = vpop.f32.mrb[0].mxu0
        %v923 = vadd.f32 %v795, %v922
        %v924 = vpop.f32.mrb[0].mxu0
        %925 = vmatprep.mubr.bf16.mxu0 0
        %926 = vmatmul.mubr.bf16.gmra.mrb[0].mxu0 %v840
        %v927 = vpop.f32.mrb[0].mxu0
        %v928 = vadd.f32 %v795, %v927
        %v929 = vpop.f32.mrb[0].mxu0
        %v930 = vpop.f32.mrb[0].mxu0
        %v931 = vadd.f32 %v795, %v930
        %v932 = vpop.f32.mrb[0].mxu0
        %933 = vmatprep.mubr.bf16.mxu0 0
        %934 = vmatmul.mubr.bf16.gmra.mrb[0].mxu0 %v843
        %v935 = vpop.f32.mrb[0].mxu0
        %v936 = vadd.f32 %v795, %v935
        %v937 = vpop.f32.mrb[0].mxu0
        %v938 = vpop.f32.mrb[0].mxu0
        %v939 = vadd.f32 %v795, %v938
        %v940 = vpop.f32.mrb[0].mxu0
        %941 = vdwg.mxu0
        %vm942 = vcmp.gt.f32.partialorder %v880, 0.0
        %vm943 = vcmp.gt.f32.partialorder %v883, 0.0
        %vm944 = vcmp.gt.f32.partialorder %v888, 0.0
        %vm945 = vcmp.gt.f32.partialorder %v891, 0.0
        %vm946 = vcmp.gt.f32.partialorder %v896, 0.0
        %vm947 = vcmp.gt.f32.partialorder %v899, 0.0
        %vm948 = vcmp.gt.f32.partialorder %v904, 0.0
        %vm949 = vcmp.gt.f32.partialorder %v907, 0.0
        %vm950 = vcmp.gt.f32.partialorder %v912, 0.0
        %vm951 = vcmp.gt.f32.partialorder %v915, 0.0
        %vm952 = vcmp.gt.f32.partialorder %v920, 0.0
        %vm953 = vcmp.gt.f32.partialorder %v923, 0.0
        %vm954 = vcmp.gt.f32.partialorder %v928, 0.0
        %vm955 = vcmp.gt.f32.partialorder %v931, 0.0
        %vm956 = vcmp.gt.f32.partialorder %v936, 0.0
        %vm957 = vcmp.gt.f32.partialorder %v939, 0.0
        %v958 = vmul.f32 %v880, 0.1
        %v959 = vmul.f32 %v883, 0.1
        %v960 = vmul.f32 %v888, 0.1
        %v961 = vmul.f32 %v891, 0.1
        %v962 = vmul.f32 %v896, 0.1
        %v963 = vmul.f32 %v899, 0.1
        %v964 = vmul.f32 %v904, 0.1
        %v965 = vmul.f32 %v907, 0.1
        %v966 = vmul.f32 %v912, 0.1
        %v967 = vmul.f32 %v915, 0.1
        %v968 = vmul.f32 %v920, 0.1
        %v969 = vmul.f32 %v923, 0.1
        %v970 = vmul.f32 %v928, 0.1
        %v971 = vmul.f32 %v931, 0.1
        %v972 = vmul.f32 %v936, 0.1
        %v973 = vmul.f32 %v939, 0.1
        %v974 = vsel %vm942, %v880, %v958
        %v975 = vsel %vm943, %v883, %v959
        %v976 = vsel %vm944, %v888, %v960
        %v977 = vsel %vm945, %v891, %v961
        %v978 = vsel %vm946, %v896, %v962
        %v979 = vsel %vm947, %v899, %v963
        %v980 = vsel %vm948, %v904, %v964
        %v981 = vsel %vm949, %v907, %v965
        %v982 = vsel %vm950, %v912, %v966
        %v983 = vsel %vm951, %v915, %v967
        %v984 = vsel %vm952, %v920, %v968
        %v985 = vsel %vm953, %v923, %v969
        %v986 = vsel %vm954, %v928, %v970
        %v987 = vsel %vm955, %v931, %v971
        %v988 = vsel %vm956, %v936, %v972
        %v989 = vsel %vm957, %v939, %v973
        %v990 = vld [vmem:[%s269 + $0x2] ss:$0 sm:$0xff]
        %v991 = vld [vmem:[%s269 + $0x25] ss:$0 sm:$0xff]
        %v992 = vadd.f32 %v990, 1.0
        %v993 = vmul.f32 %v974, %v992
        %v994 = vmul.f32 %v975, %v992
        %v995 = vmul.f32 %v976, %v992
        %v996 = vmul.f32 %v977, %v992
        %v997 = vmul.f32 %v978, %v992
        %v998 = vmul.f32 %v979, %v992
        %v999 = vmul.f32 %v980, %v992
        %v1000 = vmul.f32 %v981, %v992
        %v1001 = vadd.f32 %v993, %v991
        %v1002 = vadd.f32 %v994, %v991
        %v1003 = vadd.f32 %v995, %v991
        %v1004 = vadd.f32 %v996, %v991
        %v1005 = vadd.f32 %v997, %v991
        %v1006 = vadd.f32 %v998, %v991
        %v1007 = vadd.f32 %v999, %v991
        %v1008 = vadd.f32 %v1000, %v991
        %v1009 = vld [vmem:[%s526 + $0x2] ss:$0 sm:$0xff]
        %v1010 = vld [vmem:[%s526 + $0x25] ss:$0 sm:$0xff]
        %v1011 = vadd.f32 %v1009, 1.0
        %v1012 = vmul.f32 %v982, %v1011
        %v1013 = vmul.f32 %v983, %v1011
        %v1014 = vmul.f32 %v984, %v1011
        %v1015 = vmul.f32 %v985, %v1011
        %v1016 = vmul.f32 %v986, %v1011
        %v1017 = vmul.f32 %v987, %v1011
        %v1018 = vmul.f32 %v988, %v1011
        %v1019 = vmul.f32 %v989, %v1011
        %v1020 = vadd.f32 %v1012, %v1010
        %v1021 = vadd.f32 %v1013, %v1010
        %v1022 = vadd.f32 %v1014, %v1010
        %v1023 = vadd.f32 %v1015, %v1010
        %v1024 = vadd.f32 %v1016, %v1010
        %v1025 = vadd.f32 %v1017, %v1010
        %v1026 = vadd.f32 %v1018, %v1010
        %v1027 = vadd.f32 %v1019, %v1010
        %v1028 = vld [vmem:[#allocation5 + $0xe0] sm:$0xf]
        %v1029 = vld [vmem:[#allocation5 + $0xe8] sm:$0xf]
        %v1030 = vld [vmem:[#allocation5 + $0xf0] sm:$0xf]
        %v1031 = vld [vmem:[#allocation5 + $0xf8] sm:$0xf]
        %v1032 = vld [vmem:[#allocation5 + $0x100] sm:$0xf]
        %v1033 = vld [vmem:[#allocation5 + $0x108] sm:$0xf]
        %v1034 = vld [vmem:[#allocation5 + $0x110] sm:$0xf]
        %v1035 = vld [vmem:[#allocation5 + $0x118] sm:$0xf]
        %v1036 = vpack.c.bf16 %v1002, %v1001
        %v1037 = vpack.c.bf16 %v1004, %v1003
        %v1038 = vpack.c.bf16 %v1006, %v1005
        %v1039 = vpack.c.bf16 %v1008, %v1007
        %v1040 = vpack.c.bf16 %v1021, %v1020
        %v1041 = vpack.c.bf16 %v1023, %v1022
        %v1042 = vpack.c.bf16 %v1025, %v1024
        %v1043 = vpack.c.bf16 %v1027, %v1026
        %v1044 = vld [vmem:[#allocation7 + $0x3] ss:$0 sm:$0xff]
        %v1053 = vunpack.c.l.b16 %v1028
        %v1054 = vunpack.c.l.b16 %v1029
        %v1055 = vunpack.c.l.b16 %v1030
        %v1056 = vunpack.c.l.b16 %v1031
        %v1057 = vunpack.c.l.b16 %v1032
        %v1058 = vunpack.c.l.b16 %v1033
        %v1059 = vunpack.c.l.b16 %v1034
        %v1060 = vunpack.c.l.b16 %v1035
        %v1061 = vpack.c.b16 %v1054, %v1053
        %v1062 = vpack.c.b16 %v1056, %v1055
        %v1063 = vpack.c.b16 %v1058, %v1057
        %v1064 = vpack.c.b16 %v1060, %v1059
        %v1070 = vsel %vm820, %v1036, 0
        %v1073 = vsel %vm820, %v1037, 0
        %v1076 = vsel %vm820, %v1038, 0
        %v1079 = vsel %vm820, %v1039, 0
        %v1082 = vsel %vm820, %v1040, 0
        %v1085 = vsel %vm820, %v1041, 0
        %v1088 = vsel %vm820, %v1042, 0
        %v1091 = vsel %vm820, %v1043, 0
        %1093 = vmatprep.subr.bf16.mxu0 0
        %1094 = vmatpush1.bf16.msra.mxu0 %v1061
        %1095 = vmatprep.subr.bf16.mxu0 0
        %1096 = vmatpush1.bf16.msra.mxu0 %v1062
        %1097 = vmatprep.subr.bf16.mxu0 0
        %1098 = vmatpush1.bf16.msra.mxu0 %v1063
        %1099 = vmatprep.subr.bf16.mxu0 0
        %1100 = vmatpush1.bf16.msra.mxu0 %v1064
        %1101 = vmatprep.subr.bf16.mxu0 0
        %1102 = vmatpush1.bf16.msra.mxu0 0
        %1103 = vmatprep.subr.bf16.mxu0 0
        %1104 = vmatpush1.bf16.msra.mxu0 0
        %1105 = vmatprep.subr.bf16.mxu0 0
        %1106 = vmatpush1.bf16.msra.mxu0 0
        %1107 = vmatprep.subr.bf16.mxu0 0
        %1108 = vmatpush1.bf16.msra.mxu0 0
        %1109 = vmatprep.subr.bf16.mxu0 0
        %1110 = vmatpush1.bf16.msra.mxu0 0
        %1111 = vmatprep.subr.bf16.mxu0 0
        %1112 = vmatpush1.bf16.msra.mxu0 0
        %1113 = vmatprep.subr.bf16.mxu0 0
        %1114 = vmatpush1.bf16.msra.mxu0 0
        %1115 = vmatprep.subr.bf16.mxu0 0
        %1116 = vmatpush1.bf16.msra.mxu0 0
        %1117 = vmatprep.subr.bf16.mxu0 0
        %1118 = vmatpush1.bf16.msra.mxu0 0
        %1119 = vmatprep.subr.bf16.mxu0 0
        %1120 = vmatpush1.bf16.msra.mxu0 0
        %1121 = vmatprep.subr.bf16.mxu0 0
        %1122 = vmatpush1.bf16.msra.mxu0 0
        %1123 = vmatprep.subr.bf16.mxu0 0
        %1124 = vmatpush1.bf16.msra.mxu0 0
        %1125 = vmatprep.mubr.bf16.mxu0 0
        %1126 = vmatmul.mubr.bf16.gmra.mrb[0].mxu0 %v1070
        %v1127 = vpop.f32.mrb[0].mxu0
        %v1128 = vadd.f32 %v1044, %v1127
        %v1129 = vpop.f32.mrb[0].mxu0
        %v1130 = vpop.f32.mrb[0].mxu0
        %v1131 = vadd.f32 %v1044, %v1130
        %v1132 = vpop.f32.mrb[0].mxu0
        %1133 = vmatprep.mubr.bf16.mxu0 0
        %1134 = vmatmul.mubr.bf16.gmra.mrb[0].mxu0 %v1073
        %v1135 = vpop.f32.mrb[0].mxu0
        %v1136 = vadd.f32 %v1044, %v1135
        %v1137 = vpop.f32.mrb[0].mxu0
        %v1138 = vpop.f32.mrb[0].mxu0
        %v1139 = vadd.f32 %v1044, %v1138
        %v1140 = vpop.f32.mrb[0].mxu0
        %1141 = vmatprep.mubr.bf16.mxu0 0
        %1142 = vmatmul.mubr.bf16.gmra.mrb[0].mxu0 %v1076
        %v1143 = vpop.f32.mrb[0].mxu0
        %v1144 = vadd.f32 %v1044, %v1143
        %v1145 = vpop.f32.mrb[0].mxu0
        %v1146 = vpop.f32.mrb[0].mxu0
        %v1147 = vadd.f32 %v1044, %v1146
        %v1148 = vpop.f32.mrb[0].mxu0
        %1149 = vmatprep.mubr.bf16.mxu0 0
        %1150 = vmatmul.mubr.bf16.gmra.mrb[0].mxu0 %v1079
        %v1151 = vpop.f32.mrb[0].mxu0
        %v1152 = vadd.f32 %v1044, %v1151
        %v1153 = vpop.f32.mrb[0].mxu0
        %v1154 = vpop.f32.mrb[0].mxu0
        %v1155 = vadd.f32 %v1044, %v1154
        %v1156 = vpop.f32.mrb[0].mxu0
        %1157 = vmatprep.mubr.bf16.mxu0 0
        %1158 = vmatmul.mubr.bf16.gmra.mrb[0].mxu0 %v1082
        %v1159 = vpop.f32.mrb[0].mxu0
        %v1160 = vadd.f32 %v1044, %v1159
        %v1161 = vpop.f32.mrb[0].mxu0
        %v1162 = vpop.f32.mrb[0].mxu0
        %v1163 = vadd.f32 %v1044, %v1162
        %v1164 = vpop.f32.mrb[0].mxu0
        %1165 = vmatprep.mubr.bf16.mxu0 0
        %1166 = vmatmul.mubr.bf16.gmra.mrb[0].mxu0 %v1085
        %v1167 = vpop.f32.mrb[0].mxu0
        %v1168 = vadd.f32 %v1044, %v1167
        %v1169 = vpop.f32.mrb[0].mxu0
        %v1170 = vpop.f32.mrb[0].mxu0
        %v1171 = vadd.f32 %v1044, %v1170
        %v1172 = vpop.f32.mrb[0].mxu0
        %1173 = vmatprep.mubr.bf16.mxu0 0
        %1174 = vmatmul.mubr.bf16.gmra.mrb[0].mxu0 %v1088
        %v1175 = vpop.f32.mrb[0].mxu0
        %v1176 = vadd.f32 %v1044, %v1175
        %v1177 = vpop.f32.mrb[0].mxu0
        %v1178 = vpop.f32.mrb[0].mxu0
        %v1179 = vadd.f32 %v1044, %v1178
        %v1180 = vpop.f32.mrb[0].mxu0
        %1181 = vmatprep.mubr.bf16.mxu0 0
        %1182 = vmatmul.mubr.bf16.gmra.mrb[0].mxu0 %v1091
        %v1183 = vpop.f32.mrb[0].mxu0
        %v1184 = vadd.f32 %v1044, %v1183
        %v1185 = vpop.f32.mrb[0].mxu0
        %v1186 = vpop.f32.mrb[0].mxu0
        %v1187 = vadd.f32 %v1044, %v1186
        %v1188 = vpop.f32.mrb[0].mxu0
        %1189 = vdwg.mxu0
        %vm1190 = vcmp.gt.f32.partialorder %v1128, 0.0
        %vm1191 = vcmp.gt.f32.partialorder %v1131, 0.0
        %vm1192 = vcmp.gt.f32.partialorder %v1136, 0.0
        %vm1193 = vcmp.gt.f32.partialorder %v1139, 0.0
        %vm1194 = vcmp.gt.f32.partialorder %v1144, 0.0
        %vm1195 = vcmp.gt.f32.partialorder %v1147, 0.0
        %vm1196 = vcmp.gt.f32.partialorder %v1152, 0.0
        %vm1197 = vcmp.gt.f32.partialorder %v1155, 0.0
        %vm1198 = vcmp.gt.f32.partialorder %v1160, 0.0
        %vm1199 = vcmp.gt.f32.partialorder %v1163, 0.0
        %vm1200 = vcmp.gt.f32.partialorder %v1168, 0.0
        %vm1201 = vcmp.gt.f32.partialorder %v1171, 0.0
        %vm1202 = vcmp.gt.f32.partialorder %v1176, 0.0
        %vm1203 = vcmp.gt.f32.partialorder %v1179, 0.0
        %vm1204 = vcmp.gt.f32.partialorder %v1184, 0.0
        %vm1205 = vcmp.gt.f32.partialorder %v1187, 0.0
        %v1206 = vmul.f32 %v1128, 0.1
        %v1207 = vmul.f32 %v1131, 0.1
        %v1208 = vmul.f32 %v1136, 0.1
        %v1209 = vmul.f32 %v1139, 0.1
        %v1210 = vmul.f32 %v1144, 0.1
        %v1211 = vmul.f32 %v1147, 0.1
        %v1212 = vmul.f32 %v1152, 0.1
        %v1213 = vmul.f32 %v1155, 0.1
        %v1214 = vmul.f32 %v1160, 0.1
        %v1215 = vmul.f32 %v1163, 0.1
        %v1216 = vmul.f32 %v1168, 0.1
        %v1217 = vmul.f32 %v1171, 0.1
        %v1218 = vmul.f32 %v1176, 0.1
        %v1219 = vmul.f32 %v1179, 0.1
        %v1220 = vmul.f32 %v1184, 0.1
        %v1221 = vmul.f32 %v1187, 0.1
        %v1222 = vsel %vm1190, %v1128, %v1206
        %v1223 = vsel %vm1191, %v1131, %v1207
        %v1224 = vsel %vm1192, %v1136, %v1208
        %v1225 = vsel %vm1193, %v1139, %v1209
        %v1226 = vsel %vm1194, %v1144, %v1210
        %v1227 = vsel %vm1195, %v1147, %v1211
        %v1228 = vsel %vm1196, %v1152, %v1212
        %v1229 = vsel %vm1197, %v1155, %v1213
        %v1230 = vsel %vm1198, %v1160, %v1214
        %v1231 = vsel %vm1199, %v1163, %v1215
        %v1232 = vsel %vm1200, %v1168, %v1216
        %v1233 = vsel %vm1201, %v1171, %v1217
        %v1234 = vsel %vm1202, %v1176, %v1218
        %v1235 = vsel %vm1203, %v1179, %v1219
        %v1236 = vsel %vm1204, %v1184, %v1220
        %v1237 = vsel %vm1205, %v1187, %v1221
        %v1238 = vld [vmem:[%s269 + $0x3] ss:$0 sm:$0xff]
        %v1239 = vld [vmem:[%s269 + $0x26] ss:$0 sm:$0xff]
        %v1240 = vadd.f32 %v1238, 1.0
        %v1241 = vmul.f32 %v1222, %v1240
        %v1242 = vmul.f32 %v1223, %v1240
        %v1243 = vmul.f32 %v1224, %v1240
        %v1244 = vmul.f32 %v1225, %v1240
        %v1245 = vmul.f32 %v1226, %v1240
        %v1246 = vmul.f32 %v1227, %v1240
        %v1247 = vmul.f32 %v1228, %v1240
        %v1248 = vmul.f32 %v1229, %v1240
        %v1249 = vadd.f32 %v1241, %v1239
        %v1250 = vadd.f32 %v1242, %v1239
        %v1251 = vadd.f32 %v1243, %v1239
        %v1252 = vadd.f32 %v1244, %v1239
        %v1253 = vadd.f32 %v1245, %v1239
        %v1254 = vadd.f32 %v1246, %v1239
        %v1255 = vadd.f32 %v1247, %v1239
        %v1256 = vadd.f32 %v1248, %v1239
        %v1257 = vld [vmem:[%s526 + $0x3] ss:$0 sm:$0xff]
        %v1258 = vld [vmem:[%s526 + $0x26] ss:$0 sm:$0xff]
        %v1259 = vadd.f32 %v1257, 1.0
        %v1260 = vmul.f32 %v1230, %v1259
        %v1261 = vmul.f32 %v1231, %v1259
        %v1262 = vmul.f32 %v1232, %v1259
        %v1263 = vmul.f32 %v1233, %v1259
        %v1264 = vmul.f32 %v1234, %v1259
        %v1265 = vmul.f32 %v1235, %v1259
        %v1266 = vmul.f32 %v1236, %v1259
        %v1267 = vmul.f32 %v1237, %v1259
        %v1268 = vadd.f32 %v1260, %v1258
        %v1269 = vadd.f32 %v1261, %v1258
        %v1270 = vadd.f32 %v1262, %v1258
        %v1271 = vadd.f32 %v1263, %v1258
        %v1272 = vadd.f32 %v1264, %v1258
        %v1273 = vadd.f32 %v1265, %v1258
        %v1274 = vadd.f32 %v1266, %v1258
        %v1275 = vadd.f32 %v1267, %v1258
        %v1276 = vpack.c.bf16 %v1250, %v1249
        %v1277 = vpack.c.bf16 %v1252, %v1251
        %v1278 = vpack.c.bf16 %v1254, %v1253
        %v1279 = vpack.c.bf16 %v1256, %v1255
        %v1280 = vpack.c.bf16 %v1269, %v1268
        %v1281 = vpack.c.bf16 %v1271, %v1270
        %v1282 = vpack.c.bf16 %v1273, %v1272
        %v1283 = vpack.c.bf16 %v1275, %v1274
        %v1284 = vld [vmem:[#allocation5 + $0x120] sm:$0xf]
        %v1285 = vld [vmem:[#allocation5 + $0x128] sm:$0xf]
        %v1286 = vld [vmem:[#allocation5 + $0x130] sm:$0xf]
        %v1287 = vld [vmem:[#allocation5 + $0x138] sm:$0xf]
        %v1288 = vld [vmem:[#allocation5 + $0x140] sm:$0xf]
        %v1289 = vld [vmem:[#allocation5 + $0x148] sm:$0xf]
        %v1290 = vld [vmem:[#allocation5 + $0x150] sm:$0xf]
        %v1291 = vld [vmem:[#allocation5 + $0x158] sm:$0xf]
        %v1292 = vld [vmem:[#allocation5 + $0x160] sm:$0xf]
        %v1293 = vld [vmem:[#allocation5 + $0x168] sm:$0xf]
        %v1294 = vld [vmem:[#allocation5 + $0x170] sm:$0xf]
        %v1295 = vld [vmem:[#allocation5 + $0x178] sm:$0xf]
        %v1296 = vld [vmem:[#allocation5 + $0x180] sm:$0xf]
        %v1297 = vld [vmem:[#allocation5 + $0x188] sm:$0xf]
        %v1298 = vld [vmem:[#allocation5 + $0x190] sm:$0xf]
        %v1299 = vld [vmem:[#allocation5 + $0x198] sm:$0xf]
        %v1300 = vld [vmem:[#allocation7 + $0x4] ss:$0 sm:$0xff]
        %v1317 = vunpack.c.l.b16 %v1284
        %v1318 = vunpack.c.l.b16 %v1285
        %v1319 = vunpack.c.l.b16 %v1286
        %v1320 = vunpack.c.l.b16 %v1287
        %v1321 = vunpack.c.l.b16 %v1288
        %v1322 = vunpack.c.l.b16 %v1289
        %v1323 = vunpack.c.l.b16 %v1290
        %v1324 = vunpack.c.l.b16 %v1291
        %v1325 = vunpack.c.l.b16 %v1292
        %v1326 = vunpack.c.l.b16 %v1293
        %v1327 = vunpack.c.l.b16 %v1294
        %v1328 = vunpack.c.l.b16 %v1295
        %v1329 = vunpack.c.l.b16 %v1296
        %v1330 = vunpack.c.l.b16 %v1297
        %v1331 = vunpack.c.l.b16 %v1298
        %v1332 = vunpack.c.l.b16 %v1299
        %v1333 = vpack.c.b16 %v1318, %v1317
        %v1334 = vpack.c.b16 %v1320, %v1319
        %v1335 = vpack.c.b16 %v1322, %v1321
        %v1336 = vpack.c.b16 %v1324, %v1323
        %v1337 = vpack.c.b16 %v1326, %v1325
        %v1338 = vpack.c.b16 %v1328, %v1327
        %v1339 = vpack.c.b16 %v1330, %v1329
        %v1340 = vpack.c.b16 %v1332, %v1331
        %1349 = vmatprep.subr.bf16.mxu0 0
        %1350 = vmatpush1.bf16.msra.mxu0 %v1333
        %1351 = vmatprep.subr.bf16.mxu0 0
        %1352 = vmatpush1.bf16.msra.mxu0 %v1334
        %1353 = vmatprep.subr.bf16.mxu0 0
        %1354 = vmatpush1.bf16.msra.mxu0 %v1335
        %1355 = vmatprep.subr.bf16.mxu0 0
        %1356 = vmatpush1.bf16.msra.mxu0 %v1336
        %1357 = vmatprep.subr.bf16.mxu0 0
        %1358 = vmatpush1.bf16.msra.mxu0 %v1337
        %1359 = vmatprep.subr.bf16.mxu0 0
        %1360 = vmatpush1.bf16.msra.mxu0 %v1338
        %1361 = vmatprep.subr.bf16.mxu0 0
        %1362 = vmatpush1.bf16.msra.mxu0 %v1339
        %1363 = vmatprep.subr.bf16.mxu0 0
        %1364 = vmatpush1.bf16.msra.mxu0 %v1340
        %1365 = vmatprep.subr.bf16.mxu0 0
        %1366 = vmatpush1.bf16.msra.mxu0 0
        %1367 = vmatprep.subr.bf16.mxu0 0
        %1368 = vmatpush1.bf16.msra.mxu0 0
        %1369 = vmatprep.subr.bf16.mxu0 0
        %1370 = vmatpush1.bf16.msra.mxu0 0
        %1371 = vmatprep.subr.bf16.mxu0 0
        %1372 = vmatpush1.bf16.msra.mxu0 0
        %1373 = vmatprep.subr.bf16.mxu0 0
        %1374 = vmatpush1.bf16.msra.mxu0 0
        %1375 = vmatprep.subr.bf16.mxu0 0
        %1376 = vmatpush1.bf16.msra.mxu0 0
        %1377 = vmatprep.subr.bf16.mxu0 0
        %1378 = vmatpush1.bf16.msra.mxu0 0
        %1379 = vmatprep.subr.bf16.mxu0 0
        %1380 = vmatpush1.bf16.msra.mxu0 0
        %1381 = vmatprep.mubr.bf16.mxu0 0
        %1382 = vmatmul.mubr.bf16.gmra.mrb[0].mxu0 %v1276
        %v1383 = vpop.f32.mrb[0].mxu0
        %v1384 = vadd.f32 %v1300, %v1383
        %v1385 = vpop.f32.mrb[0].mxu0
        %v1386 = vpop.f32.mrb[0].mxu0
        %v1387 = vadd.f32 %v1300, %v1386
        %v1388 = vpop.f32.mrb[0].mxu0
        %1389 = vmatprep.mubr.bf16.mxu0 0
        %1390 = vmatmul.mubr.bf16.gmra.mrb[0].mxu0 %v1277
        %v1391 = vpop.f32.mrb[0].mxu0
        %v1392 = vadd.f32 %v1300, %v1391
        %v1393 = vpop.f32.mrb[0].mxu0
        %v1394 = vpop.f32.mrb[0].mxu0
        %v1395 = vadd.f32 %v1300, %v1394
        %v1396 = vpop.f32.mrb[0].mxu0
        %1397 = vmatprep.mubr.bf16.mxu0 0
        %1398 = vmatmul.mubr.bf16.gmra.mrb[0].mxu0 %v1278
        %v1399 = vpop.f32.mrb[0].mxu0
        %v1400 = vadd.f32 %v1300, %v1399
        %v1401 = vpop.f32.mrb[0].mxu0
        %v1402 = vpop.f32.mrb[0].mxu0
        %v1403 = vadd.f32 %v1300, %v1402
        %v1404 = vpop.f32.mrb[0].mxu0
        %1405 = vmatprep.mubr.bf16.mxu0 0
        %1406 = vmatmul.mubr.bf16.gmra.mrb[0].mxu0 %v1279
        %v1407 = vpop.f32.mrb[0].mxu0
        %v1408 = vadd.f32 %v1300, %v1407
        %v1409 = vpop.f32.mrb[0].mxu0
        %v1410 = vpop.f32.mrb[0].mxu0
        %v1411 = vadd.f32 %v1300, %v1410
        %v1412 = vpop.f32.mrb[0].mxu0
        %1413 = vmatprep.mubr.bf16.mxu0 0
        %1414 = vmatmul.mubr.bf16.gmra.mrb[0].mxu0 %v1280
        %v1415 = vpop.f32.mrb[0].mxu0
        %v1416 = vadd.f32 %v1300, %v1415
        %v1417 = vpop.f32.mrb[0].mxu0
        %v1418 = vpop.f32.mrb[0].mxu0
        %v1419 = vadd.f32 %v1300, %v1418
        %v1420 = vpop.f32.mrb[0].mxu0
        %1421 = vmatprep.mubr.bf16.mxu0 0
        %1422 = vmatmul.mubr.bf16.gmra.mrb[0].mxu0 %v1281
        %v1423 = vpop.f32.mrb[0].mxu0
        %v1424 = vadd.f32 %v1300, %v1423
        %v1425 = vpop.f32.mrb[0].mxu0
        %v1426 = vpop.f32.mrb[0].mxu0
        %v1427 = vadd.f32 %v1300, %v1426
        %v1428 = vpop.f32.mrb[0].mxu0
        %1429 = vmatprep.mubr.bf16.mxu0 0
        %1430 = vmatmul.mubr.bf16.gmra.mrb[0].mxu0 %v1282
        %v1431 = vpop.f32.mrb[0].mxu0
        %v1432 = vadd.f32 %v1300, %v1431
        %v1433 = vpop.f32.mrb[0].mxu0
        %v1434 = vpop.f32.mrb[0].mxu0
        %v1435 = vadd.f32 %v1300, %v1434
        %v1436 = vpop.f32.mrb[0].mxu0
        %1437 = vmatprep.mubr.bf16.mxu0 0
        %1438 = vmatmul.mubr.bf16.gmra.mrb[0].mxu0 %v1283
        %v1439 = vpop.f32.mrb[0].mxu0
        %v1440 = vadd.f32 %v1300, %v1439
        %v1441 = vpop.f32.mrb[0].mxu0
        %v1442 = vpop.f32.mrb[0].mxu0
        %v1443 = vadd.f32 %v1300, %v1442
        %v1444 = vpop.f32.mrb[0].mxu0
        %1445 = vdwg.mxu0
        %vm1446 = vcmp.gt.f32.partialorder %v1384, 0.0
        %vm1447 = vcmp.gt.f32.partialorder %v1387, 0.0
        %vm1448 = vcmp.gt.f32.partialorder %v1392, 0.0
        %vm1449 = vcmp.gt.f32.partialorder %v1395, 0.0
        %vm1450 = vcmp.gt.f32.partialorder %v1400, 0.0
        %vm1451 = vcmp.gt.f32.partialorder %v1403, 0.0
        %vm1452 = vcmp.gt.f32.partialorder %v1408, 0.0
        %vm1453 = vcmp.gt.f32.partialorder %v1411, 0.0
        %vm1454 = vcmp.gt.f32.partialorder %v1416, 0.0
        %vm1455 = vcmp.gt.f32.partialorder %v1419, 0.0
        %vm1456 = vcmp.gt.f32.partialorder %v1424, 0.0
        %vm1457 = vcmp.gt.f32.partialorder %v1427, 0.0
        %vm1458 = vcmp.gt.f32.partialorder %v1432, 0.0
        %vm1459 = vcmp.gt.f32.partialorder %v1435, 0.0
        %vm1460 = vcmp.gt.f32.partialorder %v1440, 0.0
        %vm1461 = vcmp.gt.f32.partialorder %v1443, 0.0
        %v1462 = vmul.f32 %v1384, 0.1
        %v1463 = vmul.f32 %v1387, 0.1
        %v1464 = vmul.f32 %v1392, 0.1
        %v1465 = vmul.f32 %v1395, 0.1
        %v1466 = vmul.f32 %v1400, 0.1
        %v1467 = vmul.f32 %v1403, 0.1
        %v1468 = vmul.f32 %v1408, 0.1
        %v1469 = vmul.f32 %v1411, 0.1
        %v1470 = vmul.f32 %v1416, 0.1
        %v1471 = vmul.f32 %v1419, 0.1
        %v1472 = vmul.f32 %v1424, 0.1
        %v1473 = vmul.f32 %v1427, 0.1
        %v1474 = vmul.f32 %v1432, 0.1
        %v1475 = vmul.f32 %v1435, 0.1
        %v1476 = vmul.f32 %v1440, 0.1
        %v1477 = vmul.f32 %v1443, 0.1
        %v1478 = vsel %vm1446, %v1384, %v1462
        %v1479 = vsel %vm1447, %v1387, %v1463
        %v1480 = vsel %vm1448, %v1392, %v1464
        %v1481 = vsel %vm1449, %v1395, %v1465
        %v1482 = vsel %vm1450, %v1400, %v1466
        %v1483 = vsel %vm1451, %v1403, %v1467
        %v1484 = vsel %vm1452, %v1408, %v1468
        %v1485 = vsel %vm1453, %v1411, %v1469
        %v1486 = vsel %vm1454, %v1416, %v1470
        %v1487 = vsel %vm1455, %v1419, %v1471
        %v1488 = vsel %vm1456, %v1424, %v1472
        %v1489 = vsel %vm1457, %v1427, %v1473
        %v1490 = vsel %vm1458, %v1432, %v1474
        %v1491 = vsel %vm1459, %v1435, %v1475
        %v1492 = vsel %vm1460, %v1440, %v1476
        %v1493 = vsel %vm1461, %v1443, %v1477
        %v1494 = vld [vmem:[%s269 + $0x4] ss:$0 sm:$0xff]
        %v1495 = vld [vmem:[%s269 + $0x27] ss:$0 sm:$0xff]
        %v1496 = vadd.f32 %v1494, 1.0
        %v1497 = vmul.f32 %v1478, %v1496
        %v1498 = vmul.f32 %v1479, %v1496
        %v1499 = vmul.f32 %v1480, %v1496
        %v1500 = vmul.f32 %v1481, %v1496
        %v1501 = vmul.f32 %v1482, %v1496
        %v1502 = vmul.f32 %v1483, %v1496
        %v1503 = vmul.f32 %v1484, %v1496
        %v1504 = vmul.f32 %v1485, %v1496
        %v1505 = vadd.f32 %v1497, %v1495
        %v1506 = vadd.f32 %v1498, %v1495
        %v1507 = vadd.f32 %v1499, %v1495
        %v1508 = vadd.f32 %v1500, %v1495
        %v1509 = vadd.f32 %v1501, %v1495
        %v1510 = vadd.f32 %v1502, %v1495
        %v1511 = vadd.f32 %v1503, %v1495
        %v1512 = vadd.f32 %v1504, %v1495
        %v1513 = vld [vmem:[%s526 + $0x4] ss:$0 sm:$0xff]
        %v1514 = vld [vmem:[%s526 + $0x27] ss:$0 sm:$0xff]
        %v1515 = vadd.f32 %v1513, 1.0
        %v1516 = vmul.f32 %v1486, %v1515
        %v1517 = vmul.f32 %v1487, %v1515
        %v1518 = vmul.f32 %v1488, %v1515
        %v1519 = vmul.f32 %v1489, %v1515
        %v1520 = vmul.f32 %v1490, %v1515
        %v1521 = vmul.f32 %v1491, %v1515
        %v1522 = vmul.f32 %v1492, %v1515
        %v1523 = vmul.f32 %v1493, %v1515
        %v1524 = vadd.f32 %v1516, %v1514
        %v1525 = vadd.f32 %v1517, %v1514
        %v1526 = vadd.f32 %v1518, %v1514
        %v1527 = vadd.f32 %v1519, %v1514
        %v1528 = vadd.f32 %v1520, %v1514
        %v1529 = vadd.f32 %v1521, %v1514
        %v1530 = vadd.f32 %v1522, %v1514
        %v1531 = vadd.f32 %v1523, %v1514
        %v1532 = vld [vmem:[#allocation5 + $0x1a0] sm:$0xff]
        %v1533 = vld [vmem:[#allocation5 + $0x1a8] sm:$0xff]
        %v1534 = vld [vmem:[#allocation5 + $0x1b0] sm:$0xff]
        %v1535 = vld [vmem:[#allocation5 + $0x1b8] sm:$0xff]
        %v1536 = vld [vmem:[#allocation5 + $0x1c0] sm:$0xff]
        %v1537 = vld [vmem:[#allocation5 + $0x1c8] sm:$0xff]
        %v1538 = vld [vmem:[#allocation5 + $0x1d0] sm:$0xff]
        %v1539 = vld [vmem:[#allocation5 + $0x1d8] sm:$0xff]
        %v1540 = vld [vmem:[#allocation5 + $0x1e0] sm:$0xff]
        %v1541 = vld [vmem:[#allocation5 + $0x1e8] sm:$0xff]
        %v1542 = vld [vmem:[#allocation5 + $0x1f0] sm:$0xff]
        %v1543 = vld [vmem:[#allocation5 + $0x1f8] sm:$0xff]
        %v1544 = vld [vmem:[#allocation5 + $0x200] sm:$0xff]
        %v1545 = vld [vmem:[#allocation5 + $0x208] sm:$0xff]
        %v1546 = vld [vmem:[#allocation5 + $0x210] sm:$0xff]
        %v1547 = vld [vmem:[#allocation5 + $0x218] sm:$0xff]
        %v1548 = vpack.c.bf16 %v1506, %v1505
        %v1549 = vpack.c.bf16 %v1508, %v1507
        %v1550 = vpack.c.bf16 %v1510, %v1509
        %v1551 = vpack.c.bf16 %v1512, %v1511
        %v1552 = vpack.c.bf16 %v1525, %v1524
        %v1553 = vpack.c.bf16 %v1527, %v1526
        %v1554 = vpack.c.bf16 %v1529, %v1528
        %v1555 = vpack.c.bf16 %v1531, %v1530
        %s1556 = scalar_lea.vmem [#allocation7], 5
        %v1557 = vld [vmem:[%s1556] ss:$8 sm:$0x3]
        %v1559 = vlaneseq
        %v1560 = vshrl.u32 %v1559, 7
        %v1561 = vsub.s32 0, %v1560
        %v1562 = vrot.slane %v1557, %v1561
        %v1563 = vlaneseq
        %v1564 = vshrl.u32 %v1563, 7
        %v1565 = vsub.s32 1, %v1564
        %v1566 = vrot.slane %v1557, %v1565
        %v1585 = vunpack.c.l.b16 %v1532
        %v1586 = vunpack.c.h.b16 %v1532
        %v1587 = vunpack.c.l.b16 %v1533
        %v1588 = vunpack.c.h.b16 %v1533
        %v1589 = vunpack.c.l.b16 %v1534
        %v1590 = vunpack.c.h.b16 %v1534
        %v1591 = vunpack.c.l.b16 %v1535
        %v1592 = vunpack.c.h.b16 %v1535
        %v1593 = vunpack.c.l.b16 %v1536
        %v1594 = vunpack.c.h.b16 %v1536
        %v1595 = vunpack.c.l.b16 %v1537
        %v1596 = vunpack.c.h.b16 %v1537
        %v1597 = vunpack.c.l.b16 %v1538
        %v1598 = vunpack.c.h.b16 %v1538
        %v1599 = vunpack.c.l.b16 %v1539
        %v1600 = vunpack.c.h.b16 %v1539
        %v1601 = vunpack.c.l.b16 %v1540
        %v1602 = vunpack.c.h.b16 %v1540
        %v1603 = vunpack.c.l.b16 %v1541
        %v1604 = vunpack.c.h.b16 %v1541
        %v1605 = vunpack.c.l.b16 %v1542
        %v1606 = vunpack.c.h.b16 %v1542
        %v1607 = vunpack.c.l.b16 %v1543
        %v1608 = vunpack.c.h.b16 %v1543
        %v1609 = vunpack.c.l.b16 %v1544
        %v1610 = vunpack.c.h.b16 %v1544
        %v1611 = vunpack.c.l.b16 %v1545
        %v1612 = vunpack.c.h.b16 %v1545
        %v1613 = vunpack.c.l.b16 %v1546
        %v1614 = vunpack.c.h.b16 %v1546
        %v1615 = vunpack.c.l.b16 %v1547
        %v1616 = vunpack.c.h.b16 %v1547
        %v1617 = vpack.c.b16 %v1587, %v1585
        %v1618 = vpack.c.b16 %v1588, %v1586
        %v1619 = vpack.c.b16 %v1591, %v1589
        %v1620 = vpack.c.b16 %v1592, %v1590
        %v1621 = vpack.c.b16 %v1595, %v1593
        %v1622 = vpack.c.b16 %v1596, %v1594
        %v1623 = vpack.c.b16 %v1599, %v1597
        %v1624 = vpack.c.b16 %v1600, %v1598
        %v1625 = vpack.c.b16 %v1603, %v1601
        %v1626 = vpack.c.b16 %v1604, %v1602
        %v1627 = vpack.c.b16 %v1607, %v1605
        %v1628 = vpack.c.b16 %v1608, %v1606
        %v1629 = vpack.c.b16 %v1611, %v1609
        %v1630 = vpack.c.b16 %v1612, %v1610
        %v1631 = vpack.c.b16 %v1615, %v1613
        %v1632 = vpack.c.b16 %v1616, %v1614
        %1649 = vmatprep.subr.bf16.mxu0 %v1618
        %1650 = vmatpush1.bf16.msra.mxu0 %v1617
        %1651 = vmatprep.subr.bf16.mxu0 %v1620
        %1652 = vmatpush1.bf16.msra.mxu0 %v1619
        %1653 = vmatprep.subr.bf16.mxu0 %v1622
        %1654 = vmatpush1.bf16.msra.mxu0 %v1621
        %1655 = vmatprep.subr.bf16.mxu0 %v1624
        %1656 = vmatpush1.bf16.msra.mxu0 %v1623
        %1657 = vmatprep.subr.bf16.mxu0 %v1626
        %1658 = vmatpush1.bf16.msra.mxu0 %v1625
        %1659 = vmatprep.subr.bf16.mxu0 %v1628
        %1660 = vmatpush1.bf16.msra.mxu0 %v1627
        %1661 = vmatprep.subr.bf16.mxu0 %v1630
        %1662 = vmatpush1.bf16.msra.mxu0 %v1629
        %1663 = vmatprep.subr.bf16.mxu0 %v1632
        %1664 = vmatpush1.bf16.msra.mxu0 %v1631
        %1665 = vmatprep.subr.bf16.mxu0 0
        %1666 = vmatpush1.bf16.msra.mxu0 0
        %1667 = vmatprep.subr.bf16.mxu0 0
        %1668 = vmatpush1.bf16.msra.mxu0 0
        %1669 = vmatprep.subr.bf16.mxu0 0
        %1670 = vmatpush1.bf16.msra.mxu0 0
        %1671 = vmatprep.subr.bf16.mxu0 0
        %1672 = vmatpush1.bf16.msra.mxu0 0
        %1673 = vmatprep.subr.bf16.mxu0 0
        %1674 = vmatpush1.bf16.msra.mxu0 0
        %1675 = vmatprep.subr.bf16.mxu0 0
        %1676 = vmatpush1.bf16.msra.mxu0 0
        %1677 = vmatprep.subr.bf16.mxu0 0
        %1678 = vmatpush1.bf16.msra.mxu0 0
        %1679 = vmatprep.subr.bf16.mxu0 0
        %1680 = vmatpush1.bf16.msra.mxu0 0
        %1681 = vmatprep.mubr.bf16.mxu0 0
        %1682 = vmatmul.mubr.bf16.gmra.mrb[0].mxu0 %v1548
        %v1683 = vpop.f32.mrb[0].mxu0
        %v1684 = vadd.f32 %v1562, %v1683
        %v1685 = vpop.f32.mrb[0].mxu0
        %v1686 = vadd.f32 %v1566, %v1685
        %v1687 = vpop.f32.mrb[0].mxu0
        %v1688 = vadd.f32 %v1562, %v1687
        %v1689 = vpop.f32.mrb[0].mxu0
        %v1690 = vadd.f32 %v1566, %v1689
        %1691 = vmatprep.mubr.bf16.mxu0 0
        %1692 = vmatmul.mubr.bf16.gmra.mrb[0].mxu0 %v1549
        %v1693 = vpop.f32.mrb[0].mxu0
        %v1694 = vadd.f32 %v1562, %v1693
        %v1695 = vpop.f32.mrb[0].mxu0
        %v1696 = vadd.f32 %v1566, %v1695
        %v1697 = vpop.f32.mrb[0].mxu0
        %v1698 = vadd.f32 %v1562, %v1697
        %v1699 = vpop.f32.mrb[0].mxu0
        %v1700 = vadd.f32 %v1566, %v1699
        %1701 = vmatprep.mubr.bf16.mxu0 0
        %1702 = vmatmul.mubr.bf16.gmra.mrb[0].mxu0 %v1550
        %v1703 = vpop.f32.mrb[0].mxu0
        %v1704 = vadd.f32 %v1562, %v1703
        %v1705 = vpop.f32.mrb[0].mxu0
        %v1706 = vadd.f32 %v1566, %v1705
        %v1707 = vpop.f32.mrb[0].mxu0
        %v1708 = vadd.f32 %v1562, %v1707
        %v1709 = vpop.f32.mrb[0].mxu0
        %v1710 = vadd.f32 %v1566, %v1709
        %1711 = vmatprep.mubr.bf16.mxu0 0
        %1712 = vmatmul.mubr.bf16.gmra.mrb[0].mxu0 %v1551
        %v1713 = vpop.f32.mrb[0].mxu0
        %v1714 = vadd.f32 %v1562, %v1713
        %v1715 = vpop.f32.mrb[0].mxu0
        %v1716 = vadd.f32 %v1566, %v1715
        %v1717 = vpop.f32.mrb[0].mxu0
        %v1718 = vadd.f32 %v1562, %v1717
        %v1719 = vpop.f32.mrb[0].mxu0
        %v1720 = vadd.f32 %v1566, %v1719
        %1721 = vmatprep.mubr.bf16.mxu0 0
        %1722 = vmatmul.mubr.bf16.gmra.mrb[0].mxu0 %v1552
        %v1723 = vpop.f32.mrb[0].mxu0
        %v1724 = vadd.f32 %v1562, %v1723
        %v1725 = vpop.f32.mrb[0].mxu0
        %v1726 = vadd.f32 %v1566, %v1725
        %v1727 = vpop.f32.mrb[0].mxu0
        %v1728 = vadd.f32 %v1562, %v1727
        %v1729 = vpop.f32.mrb[0].mxu0
        %v1730 = vadd.f32 %v1566, %v1729
        %1731 = vmatprep.mubr.bf16.mxu0 0
        %1732 = vmatmul.mubr.bf16.gmra.mrb[0].mxu0 %v1553
        %v1733 = vpop.f32.mrb[0].mxu0
        %v1734 = vadd.f32 %v1562, %v1733
        %v1735 = vpop.f32.mrb[0].mxu0
        %v1736 = vadd.f32 %v1566, %v1735
        %v1737 = vpop.f32.mrb[0].mxu0
        %v1738 = vadd.f32 %v1562, %v1737
        %v1739 = vpop.f32.mrb[0].mxu0
        %v1740 = vadd.f32 %v1566, %v1739
        %1741 = vmatprep.mubr.bf16.mxu0 0
        %1742 = vmatmul.mubr.bf16.gmra.mrb[0].mxu0 %v1554
        %v1743 = vpop.f32.mrb[0].mxu0
        %v1744 = vadd.f32 %v1562, %v1743
        %v1745 = vpop.f32.mrb[0].mxu0
        %v1746 = vadd.f32 %v1566, %v1745
        %v1747 = vpop.f32.mrb[0].mxu0
        %v1748 = vadd.f32 %v1562, %v1747
        %v1749 = vpop.f32.mrb[0].mxu0
        %v1750 = vadd.f32 %v1566, %v1749
        %1751 = vmatprep.mubr.bf16.mxu0 0
        %1752 = vmatmul.mubr.bf16.gmra.mrb[0].mxu0 %v1555
        %v1753 = vpop.f32.mrb[0].mxu0
        %v1754 = vadd.f32 %v1562, %v1753
        %v1755 = vpop.f32.mrb[0].mxu0
        %v1756 = vadd.f32 %v1566, %v1755
        %v1757 = vpop.f32.mrb[0].mxu0
        %v1758 = vadd.f32 %v1562, %v1757
        %v1759 = vpop.f32.mrb[0].mxu0
        %v1760 = vadd.f32 %v1566, %v1759
        %1761 = vdwg.mxu0
        %vm1762 = vcmp.gt.f32.partialorder %v1684, 0.0
        %vm1763 = vcmp.gt.f32.partialorder %v1686, 0.0
        %vm1764 = vcmp.gt.f32.partialorder %v1688, 0.0
        %vm1765 = vcmp.gt.f32.partialorder %v1690, 0.0
        %vm1766 = vcmp.gt.f32.partialorder %v1694, 0.0
        %vm1767 = vcmp.gt.f32.partialorder %v1696, 0.0
        %vm1768 = vcmp.gt.f32.partialorder %v1698, 0.0
        %vm1769 = vcmp.gt.f32.partialorder %v1700, 0.0
        %vm1770 = vcmp.gt.f32.partialorder %v1704, 0.0
        %vm1771 = vcmp.gt.f32.partialorder %v1706, 0.0
        %vm1772 = vcmp.gt.f32.partialorder %v1708, 0.0
        %vm1773 = vcmp.gt.f32.partialorder %v1710, 0.0
        %vm1774 = vcmp.gt.f32.partialorder %v1714, 0.0
        %vm1775 = vcmp.gt.f32.partialorder %v1716, 0.0
        %vm1776 = vcmp.gt.f32.partialorder %v1718, 0.0
        %vm1777 = vcmp.gt.f32.partialorder %v1720, 0.0
        %vm1778 = vcmp.gt.f32.partialorder %v1724, 0.0
        %vm1779 = vcmp.gt.f32.partialorder %v1726, 0.0
        %vm1780 = vcmp.gt.f32.partialorder %v1728, 0.0
        %vm1781 = vcmp.gt.f32.partialorder %v1730, 0.0
        %vm1782 = vcmp.gt.f32.partialorder %v1734, 0.0
        %vm1783 = vcmp.gt.f32.partialorder %v1736, 0.0
        %vm1784 = vcmp.gt.f32.partialorder %v1738, 0.0
        %vm1785 = vcmp.gt.f32.partialorder %v1740, 0.0
        %vm1786 = vcmp.gt.f32.partialorder %v1744, 0.0
        %vm1787 = vcmp.gt.f32.partialorder %v1746, 0.0
        %vm1788 = vcmp.gt.f32.partialorder %v1748, 0.0
        %vm1789 = vcmp.gt.f32.partialorder %v1750, 0.0
        %vm1790 = vcmp.gt.f32.partialorder %v1754, 0.0
        %vm1791 = vcmp.gt.f32.partialorder %v1756, 0.0
        %vm1792 = vcmp.gt.f32.partialorder %v1758, 0.0
        %vm1793 = vcmp.gt.f32.partialorder %v1760, 0.0
        %v1794 = vmul.f32 %v1684, 0.1
        %v1795 = vmul.f32 %v1686, 0.1
        %v1796 = vmul.f32 %v1688, 0.1
        %v1797 = vmul.f32 %v1690, 0.1
        %v1798 = vmul.f32 %v1694, 0.1
        %v1799 = vmul.f32 %v1696, 0.1
        %v1800 = vmul.f32 %v1698, 0.1
        %v1801 = vmul.f32 %v1700, 0.1
        %v1802 = vmul.f32 %v1704, 0.1
        %v1803 = vmul.f32 %v1706, 0.1
        %v1804 = vmul.f32 %v1708, 0.1
        %v1805 = vmul.f32 %v1710, 0.1
        %v1806 = vmul.f32 %v1714, 0.1
        %v1807 = vmul.f32 %v1716, 0.1
        %v1808 = vmul.f32 %v1718, 0.1
        %v1809 = vmul.f32 %v1720, 0.1
        %v1810 = vmul.f32 %v1724, 0.1
        %v1811 = vmul.f32 %v1726, 0.1
        %v1812 = vmul.f32 %v1728, 0.1
        %v1813 = vmul.f32 %v1730, 0.1
        %v1814 = vmul.f32 %v1734, 0.1
        %v1815 = vmul.f32 %v1736, 0.1
        %v1816 = vmul.f32 %v1738, 0.1
        %v1817 = vmul.f32 %v1740, 0.1
        %v1818 = vmul.f32 %v1744, 0.1
        %v1819 = vmul.f32 %v1746, 0.1
        %v1820 = vmul.f32 %v1748, 0.1
        %v1821 = vmul.f32 %v1750, 0.1
        %v1822 = vmul.f32 %v1754, 0.1
        %v1823 = vmul.f32 %v1756, 0.1
        %v1824 = vmul.f32 %v1758, 0.1
        %v1825 = vmul.f32 %v1760, 0.1
        %v1826 = vsel %vm1762, %v1684, %v1794
        %v1827 = vsel %vm1763, %v1686, %v1795
        %v1828 = vsel %vm1764, %v1688, %v1796
        %v1829 = vsel %vm1765, %v1690, %v1797
        %v1830 = vsel %vm1766, %v1694, %v1798
        %v1831 = vsel %vm1767, %v1696, %v1799
        %v1832 = vsel %vm1768, %v1698, %v1800
        %v1833 = vsel %vm1769, %v1700, %v1801
        %v1834 = vsel %vm1770, %v1704, %v1802
        %v1835 = vsel %vm1771, %v1706, %v1803
        %v1836 = vsel %vm1772, %v1708, %v1804
        %v1837 = vsel %vm1773, %v1710, %v1805
        %v1838 = vsel %vm1774, %v1714, %v1806
        %v1839 = vsel %vm1775, %v1716, %v1807
        %v1840 = vsel %vm1776, %v1718, %v1808
        %v1841 = vsel %vm1777, %v1720, %v1809
        %v1842 = vsel %vm1778, %v1724, %v1810
        %v1843 = vsel %vm1779, %v1726, %v1811
        %v1844 = vsel %vm1780, %v1728, %v1812
        %v1845 = vsel %vm1781, %v1730, %v1813
        %v1846 = vsel %vm1782, %v1734, %v1814
        %v1847 = vsel %vm1783, %v1736, %v1815
        %v1848 = vsel %vm1784, %v1738, %v1816
        %v1849 = vsel %vm1785, %v1740, %v1817
        %v1850 = vsel %vm1786, %v1744, %v1818
        %v1851 = vsel %vm1787, %v1746, %v1819
        %v1852 = vsel %vm1788, %v1748, %v1820
        %v1853 = vsel %vm1789, %v1750, %v1821
        %v1854 = vsel %vm1790, %v1754, %v1822
        %v1855 = vsel %vm1791, %v1756, %v1823
        %v1856 = vsel %vm1792, %v1758, %v1824
        %v1857 = vsel %vm1793, %v1760, %v1825
        %s1858 = scalar_lea.vmem %s269, 5
        %v1859 = vld [vmem:[%s1858] ss:$8 sm:$0x3]
        %s1860 = scalar_lea.vmem %s269, 48
        %v1861 = vld [vmem:[%s1860] ss:$8 sm:$0x3]
        %v1862 = vadd.f32 %v1859, 1.0
        %v1864 = vlaneseq
        %v1865 = vshrl.u32 %v1864, 7
        %v1866 = vsub.s32 0, %v1865
        %v1867 = vrot.slane %v1862, %v1866
        %v1868 = vlaneseq
        %v1869 = vshrl.u32 %v1868, 7
        %v1870 = vsub.s32 1, %v1869
        %v1871 = vrot.slane %v1862, %v1870
        %v1874 = vmul.f32 %v1826, %v1867
        %v1875 = vmul.f32 %v1827, %v1871
        %v1876 = vmul.f32 %v1828, %v1867
        %v1877 = vmul.f32 %v1829, %v1871
        %v1878 = vmul.f32 %v1830, %v1867
        %v1879 = vmul.f32 %v1831, %v1871
        %v1880 = vmul.f32 %v1832, %v1867
        %v1881 = vmul.f32 %v1833, %v1871
        %v1882 = vmul.f32 %v1834, %v1867
        %v1883 = vmul.f32 %v1835, %v1871
        %v1884 = vmul.f32 %v1836, %v1867
        %v1885 = vmul.f32 %v1837, %v1871
        %v1886 = vmul.f32 %v1838, %v1867
        %v1887 = vmul.f32 %v1839, %v1871
        %v1888 = vmul.f32 %v1840, %v1867
        %v1889 = vmul.f32 %v1841, %v1871
        %v1891 = vlaneseq
        %v1892 = vshrl.u32 %v1891, 7
        %v1893 = vsub.s32 0, %v1892
        %v1894 = vrot.slane %v1861, %v1893
        %v1895 = vlaneseq
        %v1896 = vshrl.u32 %v1895, 7
        %v1897 = vsub.s32 1, %v1896
        %v1898 = vrot.slane %v1861, %v1897
        %v1901 = vadd.f32 %v1874, %v1894
        %v1902 = vadd.f32 %v1875, %v1898
        %v1903 = vadd.f32 %v1876, %v1894
        %v1904 = vadd.f32 %v1877, %v1898
        %v1905 = vadd.f32 %v1878, %v1894
        %v1906 = vadd.f32 %v1879, %v1898
        %v1907 = vadd.f32 %v1880, %v1894
        %v1908 = vadd.f32 %v1881, %v1898
        %v1909 = vadd.f32 %v1882, %v1894
        %v1910 = vadd.f32 %v1883, %v1898
        %v1911 = vadd.f32 %v1884, %v1894
        %v1912 = vadd.f32 %v1885, %v1898
        %v1913 = vadd.f32 %v1886, %v1894
        %v1914 = vadd.f32 %v1887, %v1898
        %v1915 = vadd.f32 %v1888, %v1894
        %v1916 = vadd.f32 %v1889, %v1898
        %s1917 = scalar_lea.vmem %s526, 5
        %v1918 = vld [vmem:[%s1917] ss:$8 sm:$0x3]
        %s1919 = scalar_lea.vmem %s526, 48
        %v1920 = vld [vmem:[%s1919] ss:$8 sm:$0x3]
        %v1921 = vadd.f32 %v1918, 1.0
        %v1923 = vlaneseq
        %v1924 = vshrl.u32 %v1923, 7
        %v1925 = vsub.s32 0, %v1924
        %v1926 = vrot.slane %v1921, %v1925
        %v1927 = vlaneseq
        %v1928 = vshrl.u32 %v1927, 7
        %v1929 = vsub.s32 1, %v1928
        %v1930 = vrot.slane %v1921, %v1929
        %v1933 = vmul.f32 %v1842, %v1926
        %v1934 = vmul.f32 %v1843, %v1930
        %v1935 = vmul.f32 %v1844, %v1926
        %v1936 = vmul.f32 %v1845, %v1930
        %v1937 = vmul.f32 %v1846, %v1926
        %v1938 = vmul.f32 %v1847, %v1930
        %v1939 = vmul.f32 %v1848, %v1926
        %v1940 = vmul.f32 %v1849, %v1930
        %v1941 = vmul.f32 %v1850, %v1926
        %v1942 = vmul.f32 %v1851, %v1930
        %v1943 = vmul.f32 %v1852, %v1926
        %v1944 = vmul.f32 %v1853, %v1930
        %v1945 = vmul.f32 %v1854, %v1926
        %v1946 = vmul.f32 %v1855, %v1930
        %v1947 = vmul.f32 %v1856, %v1926
        %v1948 = vmul.f32 %v1857, %v1930
        %v1950 = vlaneseq
        %v1951 = vshrl.u32 %v1950, 7
        %v1952 = vsub.s32 0, %v1951
        %v1953 = vrot.slane %v1920, %v1952
        %v1954 = vlaneseq
        %v1955 = vshrl.u32 %v1954, 7
        %v1956 = vsub.s32 1, %v1955
        %v1957 = vrot.slane %v1920, %v1956
        %v1960 = vadd.f32 %v1933, %v1953
        %v1961 = vadd.f32 %v1934, %v1957
        %v1962 = vadd.f32 %v1935, %v1953
        %v1963 = vadd.f32 %v1936, %v1957
        %v1964 = vadd.f32 %v1937, %v1953
        %v1965 = vadd.f32 %v1938, %v1957
        %v1966 = vadd.f32 %v1939, %v1953
        %v1967 = vadd.f32 %v1940, %v1957
        %v1968 = vadd.f32 %v1941, %v1953
        %v1969 = vadd.f32 %v1942, %v1957
        %v1970 = vadd.f32 %v1943, %v1953
        %v1971 = vadd.f32 %v1944, %v1957
        %v1972 = vadd.f32 %v1945, %v1953
        %v1973 = vadd.f32 %v1946, %v1957
        %v1974 = vadd.f32 %v1947, %v1953
        %v1975 = vadd.f32 %v1948, %v1957
        %v1976 = vpack.c.bf16 %v1903, %v1901
        %v1977 = vpack.c.bf16 %v1904, %v1902
        %v1978 = vpack.c.bf16 %v1907, %v1905
        %v1979 = vpack.c.bf16 %v1908, %v1906
        %v1980 = vpack.c.bf16 %v1911, %v1909
        %v1981 = vpack.c.bf16 %v1912, %v1910
        %v1982 = vpack.c.bf16 %v1915, %v1913
        %v1983 = vpack.c.bf16 %v1916, %v1914
        %v1984 = vpack.c.bf16 %v1962, %v1960
        %v1985 = vpack.c.bf16 %v1963, %v1961
        %v1986 = vpack.c.bf16 %v1966, %v1964
        %v1987 = vpack.c.bf16 %v1967, %v1965
        %v1988 = vpack.c.bf16 %v1970, %v1968
        %v1989 = vpack.c.bf16 %v1971, %v1969
        %v1990 = vpack.c.bf16 %v1974, %v1972
        %v1991 = vpack.c.bf16 %v1975, %v1973
        %v1992 = vld [vmem:[#allocation5 + $0x220] sm:$0xf]
        %v1993 = vld [vmem:[#allocation5 + $0x228] sm:$0xf]
        %v1994 = vld [vmem:[#allocation5 + $0x230] sm:$0xf]
        %v1995 = vld [vmem:[#allocation5 + $0x238] sm:$0xf]
        %v1996 = vld [vmem:[#allocation5 + $0x240] sm:$0xf]
        %v1997 = vld [vmem:[#allocation5 + $0x248] sm:$0xf]
        %v1998 = vld [vmem:[#allocation5 + $0x250] sm:$0xf]
        %v1999 = vld [vmem:[#allocation5 + $0x258] sm:$0xf]
        %v2000 = vld [vmem:[#allocation5 + $0x260] sm:$0xf]
        %v2001 = vld [vmem:[#allocation5 + $0x268] sm:$0xf]
        %v2002 = vld [vmem:[#allocation5 + $0x270] sm:$0xf]
        %v2003 = vld [vmem:[#allocation5 + $0x278] sm:$0xf]
        %v2004 = vld [vmem:[#allocation5 + $0x280] sm:$0xf]
        %v2005 = vld [vmem:[#allocation5 + $0x288] sm:$0xf]
        %v2006 = vld [vmem:[#allocation5 + $0x290] sm:$0xf]
        %v2007 = vld [vmem:[#allocation5 + $0x298] sm:$0xf]
        %v2008 = vld [vmem:[#allocation5 + $0x2a0] sm:$0xf]
        %v2009 = vld [vmem:[#allocation5 + $0x2a8] sm:$0xf]
        %v2010 = vld [vmem:[#allocation5 + $0x2b0] sm:$0xf]
        %v2011 = vld [vmem:[#allocation5 + $0x2b8] sm:$0xf]
        %v2012 = vld [vmem:[#allocation5 + $0x2c0] sm:$0xf]
        %v2013 = vld [vmem:[#allocation5 + $0x2c8] sm:$0xf]
        %v2014 = vld [vmem:[#allocation5 + $0x2d0] sm:$0xf]
        %v2015 = vld [vmem:[#allocation5 + $0x2d8] sm:$0xf]
        %v2016 = vld [vmem:[#allocation5 + $0x2e0] sm:$0xf]
        %v2017 = vld [vmem:[#allocation5 + $0x2e8] sm:$0xf]
        %v2018 = vld [vmem:[#allocation5 + $0x2f0] sm:$0xf]
        %v2019 = vld [vmem:[#allocation5 + $0x2f8] sm:$0xf]
        %v2020 = vld [vmem:[#allocation5 + $0x300] sm:$0xf]
        %v2021 = vld [vmem:[#allocation5 + $0x308] sm:$0xf]
        %v2022 = vld [vmem:[#allocation5 + $0x310] sm:$0xf]
        %v2023 = vld [vmem:[#allocation5 + $0x318] sm:$0xf]
        %v2024 = vld [vmem:[#allocation7 + $0x6] ss:$0 sm:$0xff]
        %v2057 = vunpack.c.l.b16 %v1992
        %v2058 = vunpack.c.l.b16 %v1993
        %v2059 = vunpack.c.l.b16 %v1994
        %v2060 = vunpack.c.l.b16 %v1995
        %v2061 = vunpack.c.l.b16 %v1996
        %v2062 = vunpack.c.l.b16 %v1997
        %v2063 = vunpack.c.l.b16 %v1998
        %v2064 = vunpack.c.l.b16 %v1999
        %v2065 = vunpack.c.l.b16 %v2000
        %v2066 = vunpack.c.l.b16 %v2001
        %v2067 = vunpack.c.l.b16 %v2002
        %v2068 = vunpack.c.l.b16 %v2003
        %v2069 = vunpack.c.l.b16 %v2004
        %v2070 = vunpack.c.l.b16 %v2005
        %v2071 = vunpack.c.l.b16 %v2006
        %v2072 = vunpack.c.l.b16 %v2007
        %v2073 = vunpack.c.l.b16 %v2008
        %v2074 = vunpack.c.l.b16 %v2009
        %v2075 = vunpack.c.l.b16 %v2010
        %v2076 = vunpack.c.l.b16 %v2011
        %v2077 = vunpack.c.l.b16 %v2012
        %v2078 = vunpack.c.l.b16 %v2013
        %v2079 = vunpack.c.l.b16 %v2014
        %v2080 = vunpack.c.l.b16 %v2015
        %v2081 = vunpack.c.l.b16 %v2016
        %v2082 = vunpack.c.l.b16 %v2017
        %v2083 = vunpack.c.l.b16 %v2018
        %v2084 = vunpack.c.l.b16 %v2019
        %v2085 = vunpack.c.l.b16 %v2020
        %v2086 = vunpack.c.l.b16 %v2021
        %v2087 = vunpack.c.l.b16 %v2022
        %v2088 = vunpack.c.l.b16 %v2023
        %v2089 = vpack.c.b16 %v2058, %v2057
        %v2090 = vpack.c.b16 %v2060, %v2059
        %v2091 = vpack.c.b16 %v2062, %v2061
        %v2092 = vpack.c.b16 %v2064, %v2063
        %v2093 = vpack.c.b16 %v2066, %v2065
        %v2094 = vpack.c.b16 %v2068, %v2067
        %v2095 = vpack.c.b16 %v2070, %v2069
        %v2096 = vpack.c.b16 %v2072, %v2071
        %v2097 = vpack.c.b16 %v2074, %v2073
        %v2098 = vpack.c.b16 %v2076, %v2075
        %v2099 = vpack.c.b16 %v2078, %v2077
        %v2100 = vpack.c.b16 %v2080, %v2079
        %v2101 = vpack.c.b16 %v2082, %v2081
        %v2102 = vpack.c.b16 %v2084, %v2083
        %v2103 = vpack.c.b16 %v2086, %v2085
        %v2104 = vpack.c.b16 %v2088, %v2087
        %2121 = vmatprep.subr.bf16.mxu0 0
        %2122 = vmatpush1.bf16.msra.mxu0 %v2089
        %2123 = vmatprep.subr.bf16.mxu0 0
        %2124 = vmatpush1.bf16.msra.mxu0 %v2090
        %2125 = vmatprep.subr.bf16.mxu0 0
        %2126 = vmatpush1.bf16.msra.mxu0 %v2091
        %2127 = vmatprep.subr.bf16.mxu0 0
        %2128 = vmatpush1.bf16.msra.mxu0 %v2092
        %2129 = vmatprep.subr.bf16.mxu0 0
        %2130 = vmatpush1.bf16.msra.mxu0 %v2093
        %2131 = vmatprep.subr.bf16.mxu0 0
        %2132 = vmatpush1.bf16.msra.mxu0 %v2094
        %2133 = vmatprep.subr.bf16.mxu0 0
        %2134 = vmatpush1.bf16.msra.mxu0 %v2095
        %2135 = vmatprep.subr.bf16.mxu0 0
        %2136 = vmatpush1.bf16.msra.mxu0 %v2096
        %2137 = vmatprep.subr.bf16.mxu0 0
        %2138 = vmatpush1.bf16.msra.mxu0 %v2097
        %2139 = vmatprep.subr.bf16.mxu0 0
        %2140 = vmatpush1.bf16.msra.mxu0 %v2098
        %2141 = vmatprep.subr.bf16.mxu0 0
        %2142 = vmatpush1.bf16.msra.mxu0 %v2099
        %2143 = vmatprep.subr.bf16.mxu0 0
        %2144 = vmatpush1.bf16.msra.mxu0 %v2100
        %2145 = vmatprep.subr.bf16.mxu0 0
        %2146 = vmatpush1.bf16.msra.mxu0 %v2101
        %2147 = vmatprep.subr.bf16.mxu0 0
        %2148 = vmatpush1.bf16.msra.mxu0 %v2102
        %2149 = vmatprep.subr.bf16.mxu0 0
        %2150 = vmatpush1.bf16.msra.mxu0 %v2103
        %2151 = vmatprep.subr.bf16.mxu0 0
        %2152 = vmatpush1.bf16.msra.mxu0 %v2104
        %2153 = vmatprep.mubr.bf16.mxu0 %v1977
        %2154 = vmatmul.mubr.bf16.gmra.mrb[0].mxu0 %v1976
        %v2155 = vpop.f32.mrb[0].mxu0
        %v2156 = vadd.f32 %v2024, %v2155
        %v2157 = vpop.f32.mrb[0].mxu0
        %v2158 = vpop.f32.mrb[0].mxu0
        %v2159 = vadd.f32 %v2024, %v2158
        %v2160 = vpop.f32.mrb[0].mxu0
        %2161 = vmatprep.mubr.bf16.mxu0 %v1979
        %2162 = vmatmul.mubr.bf16.gmra.mrb[0].mxu0 %v1978
        %v2163 = vpop.f32.mrb[0].mxu0
        %v2164 = vadd.f32 %v2024, %v2163
        %v2165 = vpop.f32.mrb[0].mxu0
        %v2166 = vpop.f32.mrb[0].mxu0
        %v2167 = vadd.f32 %v2024, %v2166
        %v2168 = vpop.f32.mrb[0].mxu0
        %2169 = vmatprep.mubr.bf16.mxu0 %v1981
        %2170 = vmatmul.mubr.bf16.gmra.mrb[0].mxu0 %v1980
        %v2171 = vpop.f32.mrb[0].mxu0
        %v2172 = vadd.f32 %v2024, %v2171
        %v2173 = vpop.f32.mrb[0].mxu0
        %v2174 = vpop.f32.mrb[0].mxu0
        %v2175 = vadd.f32 %v2024, %v2174
        %v2176 = vpop.f32.mrb[0].mxu0
        %2177 = vmatprep.mubr.bf16.mxu0 %v1983
        %2178 = vmatmul.mubr.bf16.gmra.mrb[0].mxu0 %v1982
        %v2179 = vpop.f32.mrb[0].mxu0
        %v2180 = vadd.f32 %v2024, %v2179
        %v2181 = vpop.f32.mrb[0].mxu0
        %v2182 = vpop.f32.mrb[0].mxu0
        %v2183 = vadd.f32 %v2024, %v2182
        %v2184 = vpop.f32.mrb[0].mxu0
        %2185 = vmatprep.mubr.bf16.mxu0 %v1985
        %2186 = vmatmul.mubr.bf16.gmra.mrb[0].mxu0 %v1984
        %v2187 = vpop.f32.mrb[0].mxu0
        %v2188 = vadd.f32 %v2024, %v2187
        %v2189 = vpop.f32.mrb[0].mxu0
        %v2190 = vpop.f32.mrb[0].mxu0
        %v2191 = vadd.f32 %v2024, %v2190
        %v2192 = vpop.f32.mrb[0].mxu0
        %2193 = vmatprep.mubr.bf16.mxu0 %v1987
        %2194 = vmatmul.mubr.bf16.gmra.mrb[0].mxu0 %v1986
        %v2195 = vpop.f32.mrb[0].mxu0
        %v2196 = vadd.f32 %v2024, %v2195
        %v2197 = vpop.f32.mrb[0].mxu0
        %v2198 = vpop.f32.mrb[0].mxu0
        %v2199 = vadd.f32 %v2024, %v2198
        %v2200 = vpop.f32.mrb[0].mxu0
        %2201 = vmatprep.mubr.bf16.mxu0 %v1989
        %2202 = vmatmul.mubr.bf16.gmra.mrb[0].mxu0 %v1988
        %v2203 = vpop.f32.mrb[0].mxu0
        %v2204 = vadd.f32 %v2024, %v2203
        %v2205 = vpop.f32.mrb[0].mxu0
        %v2206 = vpop.f32.mrb[0].mxu0
        %v2207 = vadd.f32 %v2024, %v2206
        %v2208 = vpop.f32.mrb[0].mxu0
        %2209 = vmatprep.mubr.bf16.mxu0 %v1991
        %2210 = vmatmul.mubr.bf16.gmra.mrb[0].mxu0 %v1990
        %v2211 = vpop.f32.mrb[0].mxu0
        %v2212 = vadd.f32 %v2024, %v2211
        %v2213 = vpop.f32.mrb[0].mxu0
        %v2214 = vpop.f32.mrb[0].mxu0
        %v2215 = vadd.f32 %v2024, %v2214
        %v2216 = vpop.f32.mrb[0].mxu0
        %2217 = vdwg.mxu0
        %vm2218 = vcmp.gt.f32.partialorder %v2156, 0.0
        %vm2219 = vcmp.gt.f32.partialorder %v2159, 0.0
        %vm2220 = vcmp.gt.f32.partialorder %v2164, 0.0
        %vm2221 = vcmp.gt.f32.partialorder %v2167, 0.0
        %vm2222 = vcmp.gt.f32.partialorder %v2172, 0.0
        %vm2223 = vcmp.gt.f32.partialorder %v2175, 0.0
        %vm2224 = vcmp.gt.f32.partialorder %v2180, 0.0
        %vm2225 = vcmp.gt.f32.partialorder %v2183, 0.0
        %vm2226 = vcmp.gt.f32.partialorder %v2188, 0.0
        %vm2227 = vcmp.gt.f32.partialorder %v2191, 0.0
        %vm2228 = vcmp.gt.f32.partialorder %v2196, 0.0
        %vm2229 = vcmp.gt.f32.partialorder %v2199, 0.0
        %vm2230 = vcmp.gt.f32.partialorder %v2204, 0.0
        %vm2231 = vcmp.gt.f32.partialorder %v2207, 0.0
        %vm2232 = vcmp.gt.f32.partialorder %v2212, 0.0
        %vm2233 = vcmp.gt.f32.partialorder %v2215, 0.0
        %v2234 = vmul.f32 %v2156, 0.1
        %v2235 = vmul.f32 %v2159, 0.1
        %v2236 = vmul.f32 %v2164, 0.1
        %v2237 = vmul.f32 %v2167, 0.1
        %v2238 = vmul.f32 %v2172, 0.1
        %v2239 = vmul.f32 %v2175, 0.1
        %v2240 = vmul.f32 %v2180, 0.1
        %v2241 = vmul.f32 %v2183, 0.1
        %v2242 = vmul.f32 %v2188, 0.1
        %v2243 = vmul.f32 %v2191, 0.1
        %v2244 = vmul.f32 %v2196, 0.1
        %v2245 = vmul.f32 %v2199, 0.1
        %v2246 = vmul.f32 %v2204, 0.1
        %v2247 = vmul.f32 %v2207, 0.1
        %v2248 = vmul.f32 %v2212, 0.1
        %v2249 = vmul.f32 %v2215, 0.1
        %v2250 = vsel %vm2218, %v2156, %v2234
        %v2251 = vsel %vm2219, %v2159, %v2235
        %v2252 = vsel %vm2220, %v2164, %v2236
        %v2253 = vsel %vm2221, %v2167, %v2237
        %v2254 = vsel %vm2222, %v2172, %v2238
        %v2255 = vsel %vm2223, %v2175, %v2239
        %v2256 = vsel %vm2224, %v2180, %v2240
        %v2257 = vsel %vm2225, %v2183, %v2241
        %v2258 = vsel %vm2226, %v2188, %v2242
        %v2259 = vsel %vm2227, %v2191, %v2243
        %v2260 = vsel %vm2228, %v2196, %v2244
        %v2261 = vsel %vm2229, %v2199, %v2245
        %v2262 = vsel %vm2230, %v2204, %v2246
        %v2263 = vsel %vm2231, %v2207, %v2247
        %v2264 = vsel %vm2232, %v2212, %v2248
        %v2265 = vsel %vm2233, %v2215, %v2249
        %v2266 = vld [vmem:[%s269 + $0x6] ss:$0 sm:$0xff]
        %v2267 = vld [vmem:[%s269 + $0x31] ss:$0 sm:$0xff]
        %v2268 = vadd.f32 %v2266, 1.0
        %v2269 = vmul.f32 %v2250, %v2268
        %v2270 = vmul.f32 %v2251, %v2268
        %v2271 = vmul.f32 %v2252, %v2268
        %v2272 = vmul.f32 %v2253, %v2268
        %v2273 = vmul.f32 %v2254, %v2268
        %v2274 = vmul.f32 %v2255, %v2268
        %v2275 = vmul.f32 %v2256, %v2268
        %v2276 = vmul.f32 %v2257, %v2268
        %v2277 = vadd.f32 %v2269, %v2267
        %v2278 = vadd.f32 %v2270, %v2267
        %v2279 = vadd.f32 %v2271, %v2267
        %v2280 = vadd.f32 %v2272, %v2267
        %v2281 = vadd.f32 %v2273, %v2267
        %v2282 = vadd.f32 %v2274, %v2267
        %v2283 = vadd.f32 %v2275, %v2267
        %v2284 = vadd.f32 %v2276, %v2267
        %v2285 = vld [vmem:[%s526 + $0x6] ss:$0 sm:$0xff]
        %v2286 = vld [vmem:[%s526 + $0x31] ss:$0 sm:$0xff]
        %v2287 = vadd.f32 %v2285, 1.0
        %v2288 = vmul.f32 %v2258, %v2287
        %v2289 = vmul.f32 %v2259, %v2287
        %v2290 = vmul.f32 %v2260, %v2287
        %v2291 = vmul.f32 %v2261, %v2287
        %v2292 = vmul.f32 %v2262, %v2287
        %v2293 = vmul.f32 %v2263, %v2287
        %v2294 = vmul.f32 %v2264, %v2287
        %v2295 = vmul.f32 %v2265, %v2287
        %v2296 = vadd.f32 %v2288, %v2286
        %v2297 = vadd.f32 %v2289, %v2286
        %v2298 = vadd.f32 %v2290, %v2286
        %v2299 = vadd.f32 %v2291, %v2286
        %v2300 = vadd.f32 %v2292, %v2286
        %v2301 = vadd.f32 %v2293, %v2286
        %v2302 = vadd.f32 %v2294, %v2286
        %v2303 = vadd.f32 %v2295, %v2286
        %v2304 = vld [vmem:[#allocation5 + $0x320] sm:$0xf]
        %v2305 = vld [vmem:[#allocation5 + $0x328] sm:$0xf]
        %v2306 = vld [vmem:[#allocation5 + $0x330] sm:$0xf]
        %v2307 = vld [vmem:[#allocation5 + $0x338] sm:$0xf]
        %v2308 = vld [vmem:[#allocation5 + $0x340] sm:$0xf]
        %v2309 = vld [vmem:[#allocation5 + $0x348] sm:$0xf]
        %v2310 = vld [vmem:[#allocation5 + $0x350] sm:$0xf]
        %v2311 = vld [vmem:[#allocation5 + $0x358] sm:$0xf]
        %v2312 = vld [vmem:[#allocation5 + $0x360] sm:$0xf]
        %v2313 = vld [vmem:[#allocation5 + $0x368] sm:$0xf]
        %v2314 = vld [vmem:[#allocation5 + $0x370] sm:$0xf]
        %v2315 = vld [vmem:[#allocation5 + $0x378] sm:$0xf]
        %v2316 = vld [vmem:[#allocation5 + $0x380] sm:$0xf]
        %v2317 = vld [vmem:[#allocation5 + $0x388] sm:$0xf]
        %v2318 = vld [vmem:[#allocation5 + $0x390] sm:$0xf]
        %v2319 = vld [vmem:[#allocation5 + $0x398] sm:$0xf]
        %v2320 = vpack.c.bf16 %v2278, %v2277
        %v2321 = vpack.c.bf16 %v2280, %v2279
        %v2322 = vpack.c.bf16 %v2282, %v2281
        %v2323 = vpack.c.bf16 %v2284, %v2283
        %v2324 = vpack.c.bf16 %v2297, %v2296
        %v2325 = vpack.c.bf16 %v2299, %v2298
        %v2326 = vpack.c.bf16 %v2301, %v2300
        %v2327 = vpack.c.bf16 %v2303, %v2302
        %v2328 = vld [vmem:[#allocation7 + $0x7] ss:$0 sm:$0xff]
        %v2345 = vunpack.c.l.b16 %v2304
        %v2346 = vunpack.c.l.b16 %v2305
        %v2347 = vunpack.c.l.b16 %v2306
        %v2348 = vunpack.c.l.b16 %v2307
        %v2349 = vunpack.c.l.b16 %v2308
        %v2350 = vunpack.c.l.b16 %v2309
        %v2351 = vunpack.c.l.b16 %v2310
        %v2352 = vunpack.c.l.b16 %v2311
        %v2353 = vunpack.c.l.b16 %v2312
        %v2354 = vunpack.c.l.b16 %v2313
        %v2355 = vunpack.c.l.b16 %v2314
        %v2356 = vunpack.c.l.b16 %v2315
        %v2357 = vunpack.c.l.b16 %v2316
        %v2358 = vunpack.c.l.b16 %v2317
        %v2359 = vunpack.c.l.b16 %v2318
        %v2360 = vunpack.c.l.b16 %v2319
        %v2361 = vpack.c.b16 %v2346, %v2345
        %v2362 = vpack.c.b16 %v2348, %v2347
        %v2363 = vpack.c.b16 %v2350, %v2349
        %v2364 = vpack.c.b16 %v2352, %v2351
        %v2365 = vpack.c.b16 %v2354, %v2353
        %v2366 = vpack.c.b16 %v2356, %v2355
        %v2367 = vpack.c.b16 %v2358, %v2357
        %v2368 = vpack.c.b16 %v2360, %v2359
        %2377 = vmatprep.subr.bf16.mxu0 0
        %2378 = vmatpush1.bf16.msra.mxu0 %v2361
        %2379 = vmatprep.subr.bf16.mxu0 0
        %2380 = vmatpush1.bf16.msra.mxu0 %v2362
        %2381 = vmatprep.subr.bf16.mxu0 0
        %2382 = vmatpush1.bf16.msra.mxu0 %v2363
        %2383 = vmatprep.subr.bf16.mxu0 0
        %2384 = vmatpush1.bf16.msra.mxu0 %v2364
        %2385 = vmatprep.subr.bf16.mxu0 0
        %2386 = vmatpush1.bf16.msra.mxu0 %v2365
        %2387 = vmatprep.subr.bf16.mxu0 0
        %2388 = vmatpush1.bf16.msra.mxu0 %v2366
        %2389 = vmatprep.subr.bf16.mxu0 0
        %2390 = vmatpush1.bf16.msra.mxu0 %v2367
        %2391 = vmatprep.subr.bf16.mxu0 0
        %2392 = vmatpush1.bf16.msra.mxu0 %v2368
        %2393 = vmatprep.subr.bf16.mxu0 0
        %2394 = vmatpush1.bf16.msra.mxu0 0
        %2395 = vmatprep.subr.bf16.mxu0 0
        %2396 = vmatpush1.bf16.msra.mxu0 0
        %2397 = vmatprep.subr.bf16.mxu0 0
        %2398 = vmatpush1.bf16.msra.mxu0 0
        %2399 = vmatprep.subr.bf16.mxu0 0
        %2400 = vmatpush1.bf16.msra.mxu0 0
        %2401 = vmatprep.subr.bf16.mxu0 0
        %2402 = vmatpush1.bf16.msra.mxu0 0
        %2403 = vmatprep.subr.bf16.mxu0 0
        %2404 = vmatpush1.bf16.msra.mxu0 0
        %2405 = vmatprep.subr.bf16.mxu0 0
        %2406 = vmatpush1.bf16.msra.mxu0 0
        %2407 = vmatprep.subr.bf16.mxu0 0
        %2408 = vmatpush1.bf16.msra.mxu0 0
        %2409 = vmatprep.mubr.bf16.mxu0 0
        %2410 = vmatmul.mubr.bf16.gmra.mrb[0].mxu0 %v2320
        %v2411 = vpop.f32.mrb[0].mxu0
        %v2412 = vadd.f32 %v2328, %v2411
        %v2413 = vpop.f32.mrb[0].mxu0
        %v2414 = vpop.f32.mrb[0].mxu0
        %v2415 = vadd.f32 %v2328, %v2414
        %v2416 = vpop.f32.mrb[0].mxu0
        %2417 = vmatprep.mubr.bf16.mxu0 0
        %2418 = vmatmul.mubr.bf16.gmra.mrb[0].mxu0 %v2321
        %v2419 = vpop.f32.mrb[0].mxu0
        %v2420 = vadd.f32 %v2328, %v2419
        %v2421 = vpop.f32.mrb[0].mxu0
        %v2422 = vpop.f32.mrb[0].mxu0
        %v2423 = vadd.f32 %v2328, %v2422
        %v2424 = vpop.f32.mrb[0].mxu0
        %2425 = vmatprep.mubr.bf16.mxu0 0
        %2426 = vmatmul.mubr.bf16.gmra.mrb[0].mxu0 %v2322
        %v2427 = vpop.f32.mrb[0].mxu0
        %v2428 = vadd.f32 %v2328, %v2427
        %v2429 = vpop.f32.mrb[0].mxu0
        %v2430 = vpop.f32.mrb[0].mxu0
        %v2431 = vadd.f32 %v2328, %v2430
        %v2432 = vpop.f32.mrb[0].mxu0
        %2433 = vmatprep.mubr.bf16.mxu0 0
        %2434 = vmatmul.mubr.bf16.gmra.mrb[0].mxu0 %v2323
        %v2435 = vpop.f32.mrb[0].mxu0
        %v2436 = vadd.f32 %v2328, %v2435
        %v2437 = vpop.f32.mrb[0].mxu0
        %v2438 = vpop.f32.mrb[0].mxu0
        %v2439 = vadd.f32 %v2328, %v2438
        %v2440 = vpop.f32.mrb[0].mxu0
        %2441 = vmatprep.mubr.bf16.mxu0 0
        %2442 = vmatmul.mubr.bf16.gmra.mrb[0].mxu0 %v2324
        %v2443 = vpop.f32.mrb[0].mxu0
        %v2444 = vadd.f32 %v2328, %v2443
        %v2445 = vpop.f32.mrb[0].mxu0
        %v2446 = vpop.f32.mrb[0].mxu0
        %v2447 = vadd.f32 %v2328, %v2446
        %v2448 = vpop.f32.mrb[0].mxu0
        %2449 = vmatprep.mubr.bf16.mxu0 0
        %2450 = vmatmul.mubr.bf16.gmra.mrb[0].mxu0 %v2325
        %v2451 = vpop.f32.mrb[0].mxu0
        %v2452 = vadd.f32 %v2328, %v2451
        %v2453 = vpop.f32.mrb[0].mxu0
        %v2454 = vpop.f32.mrb[0].mxu0
        %v2455 = vadd.f32 %v2328, %v2454
        %v2456 = vpop.f32.mrb[0].mxu0
        %2457 = vmatprep.mubr.bf16.mxu0 0
        %2458 = vmatmul.mubr.bf16.gmra.mrb[0].mxu0 %v2326
        %v2459 = vpop.f32.mrb[0].mxu0
        %v2460 = vadd.f32 %v2328, %v2459
        %v2461 = vpop.f32.mrb[0].mxu0
        %v2462 = vpop.f32.mrb[0].mxu0
        %v2463 = vadd.f32 %v2328, %v2462
        %v2464 = vpop.f32.mrb[0].mxu0
        %2465 = vmatprep.mubr.bf16.mxu0 0
        %2466 = vmatmul.mubr.bf16.gmra.mrb[0].mxu0 %v2327
        %v2467 = vpop.f32.mrb[0].mxu0
        %v2468 = vadd.f32 %v2328, %v2467
        %v2469 = vpop.f32.mrb[0].mxu0
        %v2470 = vpop.f32.mrb[0].mxu0
        %v2471 = vadd.f32 %v2328, %v2470
        %v2472 = vpop.f32.mrb[0].mxu0
        %2473 = vdwg.mxu0
        %vm2474 = vcmp.gt.f32.partialorder %v2412, 0.0
        %vm2475 = vcmp.gt.f32.partialorder %v2415, 0.0
        %vm2476 = vcmp.gt.f32.partialorder %v2420, 0.0
        %vm2477 = vcmp.gt.f32.partialorder %v2423, 0.0
        %vm2478 = vcmp.gt.f32.partialorder %v2428, 0.0
        %vm2479 = vcmp.gt.f32.partialorder %v2431, 0.0
        %vm2480 = vcmp.gt.f32.partialorder %v2436, 0.0
        %vm2481 = vcmp.gt.f32.partialorder %v2439, 0.0
        %vm2482 = vcmp.gt.f32.partialorder %v2444, 0.0
        %vm2483 = vcmp.gt.f32.partialorder %v2447, 0.0
        %vm2484 = vcmp.gt.f32.partialorder %v2452, 0.0
        %vm2485 = vcmp.gt.f32.partialorder %v2455, 0.0
        %vm2486 = vcmp.gt.f32.partialorder %v2460, 0.0
        %vm2487 = vcmp.gt.f32.partialorder %v2463, 0.0
        %vm2488 = vcmp.gt.f32.partialorder %v2468, 0.0
        %vm2489 = vcmp.gt.f32.partialorder %v2471, 0.0
        %v2490 = vmul.f32 %v2412, 0.1
        %v2491 = vmul.f32 %v2415, 0.1
        %v2492 = vmul.f32 %v2420, 0.1
        %v2493 = vmul.f32 %v2423, 0.1
        %v2494 = vmul.f32 %v2428, 0.1
        %v2495 = vmul.f32 %v2431, 0.1
        %v2496 = vmul.f32 %v2436, 0.1
        %v2497 = vmul.f32 %v2439, 0.1
        %v2498 = vmul.f32 %v2444, 0.1
        %v2499 = vmul.f32 %v2447, 0.1
        %v2500 = vmul.f32 %v2452, 0.1
        %v2501 = vmul.f32 %v2455, 0.1
        %v2502 = vmul.f32 %v2460, 0.1
        %v2503 = vmul.f32 %v2463, 0.1
        %v2504 = vmul.f32 %v2468, 0.1
        %v2505 = vmul.f32 %v2471, 0.1
        %v2506 = vsel %vm2474, %v2412, %v2490
        %v2507 = vsel %vm2475, %v2415, %v2491
        %v2508 = vsel %vm2476, %v2420, %v2492
        %v2509 = vsel %vm2477, %v2423, %v2493
        %v2510 = vsel %vm2478, %v2428, %v2494
        %v2511 = vsel %vm2479, %v2431, %v2495
        %v2512 = vsel %vm2480, %v2436, %v2496
        %v2513 = vsel %vm2481, %v2439, %v2497
        %v2514 = vsel %vm2482, %v2444, %v2498
        %v2515 = vsel %vm2483, %v2447, %v2499
        %v2516 = vsel %vm2484, %v2452, %v2500
        %v2517 = vsel %vm2485, %v2455, %v2501
        %v2518 = vsel %vm2486, %v2460, %v2502
        %v2519 = vsel %vm2487, %v2463, %v2503
        %v2520 = vsel %vm2488, %v2468, %v2504
        %v2521 = vsel %vm2489, %v2471, %v2505
        %v2522 = vld [vmem:[%s269 + $0x7] ss:$0 sm:$0xff]
        %v2523 = vld [vmem:[%s269 + $0x32] ss:$0 sm:$0xff]
        %v2524 = vadd.f32 %v2522, 1.0
        %v2525 = vmul.f32 %v2506, %v2524
        %v2526 = vmul.f32 %v2507, %v2524
        %v2527 = vmul.f32 %v2508, %v2524
        %v2528 = vmul.f32 %v2509, %v2524
        %v2529 = vmul.f32 %v2510, %v2524
        %v2530 = vmul.f32 %v2511, %v2524
        %v2531 = vmul.f32 %v2512, %v2524
        %v2532 = vmul.f32 %v2513, %v2524
        %v2533 = vadd.f32 %v2525, %v2523
        %v2534 = vadd.f32 %v2526, %v2523
        %v2535 = vadd.f32 %v2527, %v2523
        %v2536 = vadd.f32 %v2528, %v2523
        %v2537 = vadd.f32 %v2529, %v2523
        %v2538 = vadd.f32 %v2530, %v2523
        %v2539 = vadd.f32 %v2531, %v2523
        %v2540 = vadd.f32 %v2532, %v2523
        %v2541 = vld [vmem:[%s526 + $0x7] ss:$0 sm:$0xff]
        %v2542 = vld [vmem:[%s526 + $0x32] ss:$0 sm:$0xff]
        %v2543 = vadd.f32 %v2541, 1.0
        %v2544 = vmul.f32 %v2514, %v2543
        %v2545 = vmul.f32 %v2515, %v2543
        %v2546 = vmul.f32 %v2516, %v2543
        %v2547 = vmul.f32 %v2517, %v2543
        %v2548 = vmul.f32 %v2518, %v2543
        %v2549 = vmul.f32 %v2519, %v2543
        %v2550 = vmul.f32 %v2520, %v2543
        %v2551 = vmul.f32 %v2521, %v2543
        %v2552 = vadd.f32 %v2544, %v2542
        %v2553 = vadd.f32 %v2545, %v2542
        %v2554 = vadd.f32 %v2546, %v2542
        %v2555 = vadd.f32 %v2547, %v2542
        %v2556 = vadd.f32 %v2548, %v2542
        %v2557 = vadd.f32 %v2549, %v2542
        %v2558 = vadd.f32 %v2550, %v2542
        %v2559 = vadd.f32 %v2551, %v2542
        %v2560 = vld [vmem:[#allocation5 + $0x3a0] sm:$0xf]
        %v2561 = vld [vmem:[#allocation5 + $0x3a8] sm:$0xf]
        %v2562 = vld [vmem:[#allocation5 + $0x3b0] sm:$0xf]
        %v2563 = vld [vmem:[#allocation5 + $0x3b8] sm:$0xf]
        %v2564 = vld [vmem:[#allocation5 + $0x3c0] sm:$0xf]
        %v2565 = vld [vmem:[#allocation5 + $0x3c8] sm:$0xf]
        %v2566 = vld [vmem:[#allocation5 + $0x3d0] sm:$0xf]
        %v2567 = vld [vmem:[#allocation5 + $0x3d8] sm:$0xf]
        %v2568 = vld [vmem:[#allocation5 + $0x3e0] sm:$0xf]
        %v2569 = vld [vmem:[#allocation5 + $0x3e8] sm:$0xf]
        %v2570 = vld [vmem:[#allocation5 + $0x3f0] sm:$0xf]
        %v2571 = vld [vmem:[#allocation5 + $0x3f8] sm:$0xf]
        %v2572 = vld [vmem:[#allocation5 + $0x400] sm:$0xf]
        %v2573 = vld [vmem:[#allocation5 + $0x408] sm:$0xf]
        %v2574 = vld [vmem:[#allocation5 + $0x410] sm:$0xf]
        %v2575 = vld [vmem:[#allocation5 + $0x418] sm:$0xf]
        %v2576 = vpack.c.bf16 %v2534, %v2533
        %v2577 = vpack.c.bf16 %v2536, %v2535
        %v2578 = vpack.c.bf16 %v2538, %v2537
        %v2579 = vpack.c.bf16 %v2540, %v2539
        %v2580 = vpack.c.bf16 %v2553, %v2552
        %v2581 = vpack.c.bf16 %v2555, %v2554
        %v2582 = vpack.c.bf16 %v2557, %v2556
        %v2583 = vpack.c.bf16 %v2559, %v2558
        %v2584 = vld [vmem:[#allocation7 + $0x10] ss:$0 sm:$0xff]
        %v2601 = vunpack.c.l.b16 %v2560
        %v2602 = vunpack.c.l.b16 %v2561
        %v2603 = vunpack.c.l.b16 %v2562
        %v2604 = vunpack.c.l.b16 %v2563
        %v2605 = vunpack.c.l.b16 %v2564
        %v2606 = vunpack.c.l.b16 %v2565
        %v2607 = vunpack.c.l.b16 %v2566
        %v2608 = vunpack.c.l.b16 %v2567
        %v2609 = vunpack.c.l.b16 %v2568
        %v2610 = vunpack.c.l.b16 %v2569
        %v2611 = vunpack.c.l.b16 %v2570
        %v2612 = vunpack.c.l.b16 %v2571
        %v2613 = vunpack.c.l.b16 %v2572
        %v2614 = vunpack.c.l.b16 %v2573
        %v2615 = vunpack.c.l.b16 %v2574
        %v2616 = vunpack.c.l.b16 %v2575
        %v2617 = vpack.c.b16 %v2602, %v2601
        %v2618 = vpack.c.b16 %v2604, %v2603
        %v2619 = vpack.c.b16 %v2606, %v2605
        %v2620 = vpack.c.b16 %v2608, %v2607
        %v2621 = vpack.c.b16 %v2610, %v2609
        %v2622 = vpack.c.b16 %v2612, %v2611
        %v2623 = vpack.c.b16 %v2614, %v2613
        %v2624 = vpack.c.b16 %v2616, %v2615
        %2633 = vmatprep.subr.bf16.mxu0 0
        %2634 = vmatpush1.bf16.msra.mxu0 %v2617
        %2635 = vmatprep.subr.bf16.mxu0 0
        %2636 = vmatpush1.bf16.msra.mxu0 %v2618
        %2637 = vmatprep.subr.bf16.mxu0 0
        %2638 = vmatpush1.bf16.msra.mxu0 %v2619
        %2639 = vmatprep.subr.bf16.mxu0 0
        %2640 = vmatpush1.bf16.msra.mxu0 %v2620
        %2641 = vmatprep.subr.bf16.mxu0 0
        %2642 = vmatpush1.bf16.msra.mxu0 %v2621
        %2643 = vmatprep.subr.bf16.mxu0 0
        %2644 = vmatpush1.bf16.msra.mxu0 %v2622
        %2645 = vmatprep.subr.bf16.mxu0 0
        %2646 = vmatpush1.bf16.msra.mxu0 %v2623
        %2647 = vmatprep.subr.bf16.mxu0 0
        %2648 = vmatpush1.bf16.msra.mxu0 %v2624
        %2649 = vmatprep.subr.bf16.mxu0 0
        %2650 = vmatpush1.bf16.msra.mxu0 0
        %2651 = vmatprep.subr.bf16.mxu0 0
        %2652 = vmatpush1.bf16.msra.mxu0 0
        %2653 = vmatprep.subr.bf16.mxu0 0
        %2654 = vmatpush1.bf16.msra.mxu0 0
        %2655 = vmatprep.subr.bf16.mxu0 0
        %2656 = vmatpush1.bf16.msra.mxu0 0
        %2657 = vmatprep.subr.bf16.mxu0 0
        %2658 = vmatpush1.bf16.msra.mxu0 0
        %2659 = vmatprep.subr.bf16.mxu0 0
        %2660 = vmatpush1.bf16.msra.mxu0 0
        %2661 = vmatprep.subr.bf16.mxu0 0
        %2662 = vmatpush1.bf16.msra.mxu0 0
        %2663 = vmatprep.subr.bf16.mxu0 0
        %2664 = vmatpush1.bf16.msra.mxu0 0
        %2665 = vmatprep.mubr.bf16.mxu0 0
        %2666 = vmatmul.mubr.bf16.gmra.mrb[0].mxu0 %v2576
        %v2667 = vpop.f32.mrb[0].mxu0
        %v2668 = vadd.f32 %v2584, %v2667
        %v2669 = vpop.f32.mrb[0].mxu0
        %v2670 = vpop.f32.mrb[0].mxu0
        %v2671 = vadd.f32 %v2584, %v2670
        %v2672 = vpop.f32.mrb[0].mxu0
        %2673 = vmatprep.mubr.bf16.mxu0 0
        %2674 = vmatmul.mubr.bf16.gmra.mrb[0].mxu0 %v2577
        %v2675 = vpop.f32.mrb[0].mxu0
        %v2676 = vadd.f32 %v2584, %v2675
        %v2677 = vpop.f32.mrb[0].mxu0
        %v2678 = vpop.f32.mrb[0].mxu0
        %v2679 = vadd.f32 %v2584, %v2678
        %v2680 = vpop.f32.mrb[0].mxu0
        %2681 = vmatprep.mubr.bf16.mxu0 0
        %2682 = vmatmul.mubr.bf16.gmra.mrb[0].mxu0 %v2578
        %v2683 = vpop.f32.mrb[0].mxu0
        %v2684 = vadd.f32 %v2584, %v2683
        %v2685 = vpop.f32.mrb[0].mxu0
        %v2686 = vpop.f32.mrb[0].mxu0
        %v2687 = vadd.f32 %v2584, %v2686
        %v2688 = vpop.f32.mrb[0].mxu0
        %2689 = vmatprep.mubr.bf16.mxu0 0
        %2690 = vmatmul.mubr.bf16.gmra.mrb[0].mxu0 %v2579
        %v2691 = vpop.f32.mrb[0].mxu0
        %v2692 = vadd.f32 %v2584, %v2691
        %v2693 = vpop.f32.mrb[0].mxu0
        %v2694 = vpop.f32.mrb[0].mxu0
        %v2695 = vadd.f32 %v2584, %v2694
        %v2696 = vpop.f32.mrb[0].mxu0
        %2697 = vmatprep.mubr.bf16.mxu0 0
        %2698 = vmatmul.mubr.bf16.gmra.mrb[0].mxu0 %v2580
        %v2699 = vpop.f32.mrb[0].mxu0
        %v2700 = vadd.f32 %v2584, %v2699
        %v2701 = vpop.f32.mrb[0].mxu0
        %v2702 = vpop.f32.mrb[0].mxu0
        %v2703 = vadd.f32 %v2584, %v2702
        %v2704 = vpop.f32.mrb[0].mxu0
        %2705 = vmatprep.mubr.bf16.mxu0 0
        %2706 = vmatmul.mubr.bf16.gmra.mrb[0].mxu0 %v2581
        %v2707 = vpop.f32.mrb[0].mxu0
        %v2708 = vadd.f32 %v2584, %v2707
        %v2709 = vpop.f32.mrb[0].mxu0
        %v2710 = vpop.f32.mrb[0].mxu0
        %v2711 = vadd.f32 %v2584, %v2710
        %v2712 = vpop.f32.mrb[0].mxu0
        %2713 = vmatprep.mubr.bf16.mxu0 0
        %2714 = vmatmul.mubr.bf16.gmra.mrb[0].mxu0 %v2582
        %v2715 = vpop.f32.mrb[0].mxu0
        %v2716 = vadd.f32 %v2584, %v2715
        %v2717 = vpop.f32.mrb[0].mxu0
        %v2718 = vpop.f32.mrb[0].mxu0
        %v2719 = vadd.f32 %v2584, %v2718
        %v2720 = vpop.f32.mrb[0].mxu0
        %2721 = vmatprep.mubr.bf16.mxu0 0
        %2722 = vmatmul.mubr.bf16.gmra.mrb[0].mxu0 %v2583
        %v2723 = vpop.f32.mrb[0].mxu0
        %v2724 = vadd.f32 %v2584, %v2723
        %v2725 = vpop.f32.mrb[0].mxu0
        %v2726 = vpop.f32.mrb[0].mxu0
        %v2727 = vadd.f32 %v2584, %v2726
        %v2728 = vpop.f32.mrb[0].mxu0
        %2729 = vdwg.mxu0
        %vm2730 = vcmp.gt.f32.partialorder %v2668, 0.0
        %vm2731 = vcmp.gt.f32.partialorder %v2671, 0.0
        %vm2732 = vcmp.gt.f32.partialorder %v2676, 0.0
        %vm2733 = vcmp.gt.f32.partialorder %v2679, 0.0
        %vm2734 = vcmp.gt.f32.partialorder %v2684, 0.0
        %vm2735 = vcmp.gt.f32.partialorder %v2687, 0.0
        %vm2736 = vcmp.gt.f32.partialorder %v2692, 0.0
        %vm2737 = vcmp.gt.f32.partialorder %v2695, 0.0
        %vm2738 = vcmp.gt.f32.partialorder %v2700, 0.0
        %vm2739 = vcmp.gt.f32.partialorder %v2703, 0.0
        %vm2740 = vcmp.gt.f32.partialorder %v2708, 0.0
        %vm2741 = vcmp.gt.f32.partialorder %v2711, 0.0
        %vm2742 = vcmp.gt.f32.partialorder %v2716, 0.0
        %vm2743 = vcmp.gt.f32.partialorder %v2719, 0.0
        %vm2744 = vcmp.gt.f32.partialorder %v2724, 0.0
        %vm2745 = vcmp.gt.f32.partialorder %v2727, 0.0
        %v2746 = vmul.f32 %v2668, 0.1
        %v2747 = vmul.f32 %v2671, 0.1
        %v2748 = vmul.f32 %v2676, 0.1
        %v2749 = vmul.f32 %v2679, 0.1
        %v2750 = vmul.f32 %v2684, 0.1
        %v2751 = vmul.f32 %v2687, 0.1
        %v2752 = vmul.f32 %v2692, 0.1
        %v2753 = vmul.f32 %v2695, 0.1
        %v2754 = vmul.f32 %v2700, 0.1
        %v2755 = vmul.f32 %v2703, 0.1
        %v2756 = vmul.f32 %v2708, 0.1
        %v2757 = vmul.f32 %v2711, 0.1
        %v2758 = vmul.f32 %v2716, 0.1
        %v2759 = vmul.f32 %v2719, 0.1
        %v2760 = vmul.f32 %v2724, 0.1
        %v2761 = vmul.f32 %v2727, 0.1
        %v2762 = vsel %vm2730, %v2668, %v2746
        %v2763 = vsel %vm2731, %v2671, %v2747
        %v2764 = vsel %vm2732, %v2676, %v2748
        %v2765 = vsel %vm2733, %v2679, %v2749
        %v2766 = vsel %vm2734, %v2684, %v2750
        %v2767 = vsel %vm2735, %v2687, %v2751
        %v2768 = vsel %vm2736, %v2692, %v2752
        %v2769 = vsel %vm2737, %v2695, %v2753
        %v2770 = vsel %vm2738, %v2700, %v2754
        %v2771 = vsel %vm2739, %v2703, %v2755
        %v2772 = vsel %vm2740, %v2708, %v2756
        %v2773 = vsel %vm2741, %v2711, %v2757
        %v2774 = vsel %vm2742, %v2716, %v2758
        %v2775 = vsel %vm2743, %v2719, %v2759
        %v2776 = vsel %vm2744, %v2724, %v2760
        %v2777 = vsel %vm2745, %v2727, %v2761
        %v2778 = vld [vmem:[%s269 + $0x10] ss:$0 sm:$0xff]
        %v2779 = vld [vmem:[%s269 + $0x33] ss:$0 sm:$0xff]
        %v2780 = vadd.f32 %v2778, 1.0
        %v2781 = vmul.f32 %v2762, %v2780
        %v2782 = vmul.f32 %v2763, %v2780
        %v2783 = vmul.f32 %v2764, %v2780
        %v2784 = vmul.f32 %v2765, %v2780
        %v2785 = vmul.f32 %v2766, %v2780
        %v2786 = vmul.f32 %v2767, %v2780
        %v2787 = vmul.f32 %v2768, %v2780
        %v2788 = vmul.f32 %v2769, %v2780
        %v2789 = vadd.f32 %v2781, %v2779
        %v2790 = vadd.f32 %v2782, %v2779
        %v2791 = vadd.f32 %v2783, %v2779
        %v2792 = vadd.f32 %v2784, %v2779
        %v2793 = vadd.f32 %v2785, %v2779
        %v2794 = vadd.f32 %v2786, %v2779
        %v2795 = vadd.f32 %v2787, %v2779
        %v2796 = vadd.f32 %v2788, %v2779
        %v2797 = vld [vmem:[%s526 + $0x10] ss:$0 sm:$0xff]
        %v2798 = vld [vmem:[%s526 + $0x33] ss:$0 sm:$0xff]
        %v2799 = vadd.f32 %v2797, 1.0
        %v2800 = vmul.f32 %v2770, %v2799
        %v2801 = vmul.f32 %v2771, %v2799
        %v2802 = vmul.f32 %v2772, %v2799
        %v2803 = vmul.f32 %v2773, %v2799
        %v2804 = vmul.f32 %v2774, %v2799
        %v2805 = vmul.f32 %v2775, %v2799
        %v2806 = vmul.f32 %v2776, %v2799
        %v2807 = vmul.f32 %v2777, %v2799
        %v2808 = vadd.f32 %v2800, %v2798
        %v2809 = vadd.f32 %v2801, %v2798
        %v2810 = vadd.f32 %v2802, %v2798
        %v2811 = vadd.f32 %v2803, %v2798
        %v2812 = vadd.f32 %v2804, %v2798
        %v2813 = vadd.f32 %v2805, %v2798
        %v2814 = vadd.f32 %v2806, %v2798
        %v2815 = vadd.f32 %v2807, %v2798
        %v2816 = vld [vmem:[#allocation5 + $0x420] sm:$0xf]
        %v2817 = vld [vmem:[#allocation5 + $0x428] sm:$0xf]
        %v2818 = vld [vmem:[#allocation5 + $0x430] sm:$0xf]
        %v2819 = vld [vmem:[#allocation5 + $0x438] sm:$0xf]
        %v2820 = vld [vmem:[#allocation5 + $0x440] sm:$0xf]
        %v2821 = vld [vmem:[#allocation5 + $0x448] sm:$0xf]
        %v2822 = vld [vmem:[#allocation5 + $0x450] sm:$0xf]
        %v2823 = vld [vmem:[#allocation5 + $0x458] sm:$0xf]
        %v2824 = vld [vmem:[#allocation5 + $0x460] sm:$0xf]
        %v2825 = vld [vmem:[#allocation5 + $0x468] sm:$0xf]
        %v2826 = vld [vmem:[#allocation5 + $0x470] sm:$0xf]
        %v2827 = vld [vmem:[#allocation5 + $0x478] sm:$0xf]
        %v2828 = vld [vmem:[#allocation5 + $0x480] sm:$0xf]
        %v2829 = vld [vmem:[#allocation5 + $0x488] sm:$0xf]
        %v2830 = vld [vmem:[#allocation5 + $0x490] sm:$0xf]
        %v2831 = vld [vmem:[#allocation5 + $0x498] sm:$0xf]
        %v2832 = vpack.c.bf16 %v2790, %v2789
        %v2833 = vpack.c.bf16 %v2792, %v2791
        %v2834 = vpack.c.bf16 %v2794, %v2793
        %v2835 = vpack.c.bf16 %v2796, %v2795
        %v2836 = vpack.c.bf16 %v2809, %v2808
        %v2837 = vpack.c.bf16 %v2811, %v2810
        %v2838 = vpack.c.bf16 %v2813, %v2812
        %v2839 = vpack.c.bf16 %v2815, %v2814
        %v2856 = vunpack.c.l.b16 %v2816
        %v2857 = vunpack.c.l.b16 %v2817
        %v2858 = vunpack.c.l.b16 %v2818
        %v2859 = vunpack.c.l.b16 %v2819
        %v2860 = vunpack.c.l.b16 %v2820
        %v2861 = vunpack.c.l.b16 %v2821
        %v2862 = vunpack.c.l.b16 %v2822
        %v2863 = vunpack.c.l.b16 %v2823
        %v2864 = vunpack.c.l.b16 %v2824
        %v2865 = vunpack.c.l.b16 %v2825
        %v2866 = vunpack.c.l.b16 %v2826
        %v2867 = vunpack.c.l.b16 %v2827
        %v2868 = vunpack.c.l.b16 %v2828
        %v2869 = vunpack.c.l.b16 %v2829
        %v2870 = vunpack.c.l.b16 %v2830
        %v2871 = vunpack.c.l.b16 %v2831
        %v2872 = vpack.c.b16 %v2857, %v2856
        %v2873 = vpack.c.b16 %v2859, %v2858
        %v2874 = vpack.c.b16 %v2861, %v2860
        %v2875 = vpack.c.b16 %v2863, %v2862
        %v2876 = vpack.c.b16 %v2865, %v2864
        %v2877 = vpack.c.b16 %v2867, %v2866
        %v2878 = vpack.c.b16 %v2869, %v2868
        %v2879 = vpack.c.b16 %v2871, %v2870
        %2888 = vmatprep.subr.bf16.mxu0 0
        %2889 = vmatpush1.bf16.msra.mxu0 %v2872
        %2890 = vmatprep.subr.bf16.mxu0 0
        %2891 = vmatpush1.bf16.msra.mxu0 %v2873
        %2892 = vmatprep.subr.bf16.mxu0 0
        %2893 = vmatpush1.bf16.msra.mxu0 %v2874
        %2894 = vmatprep.subr.bf16.mxu0 0
        %2895 = vmatpush1.bf16.msra.mxu0 %v2875
        %2896 = vmatprep.subr.bf16.mxu0 0
        %2897 = vmatpush1.bf16.msra.mxu0 %v2876
        %2898 = vmatprep.subr.bf16.mxu0 0
        %2899 = vmatpush1.bf16.msra.mxu0 %v2877
        %2900 = vmatprep.subr.bf16.mxu0 0
        %2901 = vmatpush1.bf16.msra.mxu0 %v2878
        %2902 = vmatprep.subr.bf16.mxu0 0
        %2903 = vmatpush1.bf16.msra.mxu0 %v2879
        %2904 = vmatprep.subr.bf16.mxu0 0
        %2905 = vmatpush1.bf16.msra.mxu0 0
        %2906 = vmatprep.subr.bf16.mxu0 0
        %2907 = vmatpush1.bf16.msra.mxu0 0
        %2908 = vmatprep.subr.bf16.mxu0 0
        %2909 = vmatpush1.bf16.msra.mxu0 0
        %2910 = vmatprep.subr.bf16.mxu0 0
        %2911 = vmatpush1.bf16.msra.mxu0 0
        %2912 = vmatprep.subr.bf16.mxu0 0
        %2913 = vmatpush1.bf16.msra.mxu0 0
        %2914 = vmatprep.subr.bf16.mxu0 0
        %2915 = vmatpush1.bf16.msra.mxu0 0
        %2916 = vmatprep.subr.bf16.mxu0 0
        %2917 = vmatpush1.bf16.msra.mxu0 0
        %2918 = vmatprep.subr.bf16.mxu0 0
        %2919 = vmatpush1.bf16.msra.mxu0 0
        %2920 = vmatprep.mubr.bf16.mxu0 0
        %2921 = vmatmul.mubr.bf16.gmra.mrb[0].mxu0 %v2832
        %v2922 = vpop.f32.mrb[0].mxu0
        %v2923 = vadd.f32 0.0, %v2922
        %v2924 = vpop.f32.mrb[0].mxu0
        %v2925 = vpop.f32.mrb[0].mxu0
        %v2926 = vadd.f32 0.0, %v2925
        %v2927 = vpop.f32.mrb[0].mxu0
        %2928 = vmatprep.mubr.bf16.mxu0 0
        %2929 = vmatmul.mubr.bf16.gmra.mrb[0].mxu0 %v2833
        %v2930 = vpop.f32.mrb[0].mxu0
        %v2931 = vadd.f32 0.0, %v2930
        %v2932 = vpop.f32.mrb[0].mxu0
        %v2933 = vpop.f32.mrb[0].mxu0
        %v2934 = vadd.f32 0.0, %v2933
        %v2935 = vpop.f32.mrb[0].mxu0
        %2936 = vmatprep.mubr.bf16.mxu0 0
        %2937 = vmatmul.mubr.bf16.gmra.mrb[0].mxu0 %v2834
        %v2938 = vpop.f32.mrb[0].mxu0
        %v2939 = vadd.f32 0.0, %v2938
        %v2940 = vpop.f32.mrb[0].mxu0
        %v2941 = vpop.f32.mrb[0].mxu0
        %v2942 = vadd.f32 0.0, %v2941
        %v2943 = vpop.f32.mrb[0].mxu0
        %2944 = vmatprep.mubr.bf16.mxu0 0
        %2945 = vmatmul.mubr.bf16.gmra.mrb[0].mxu0 %v2835
        %v2946 = vpop.f32.mrb[0].mxu0
        %v2947 = vadd.f32 0.0, %v2946
        %v2948 = vpop.f32.mrb[0].mxu0
        %v2949 = vpop.f32.mrb[0].mxu0
        %v2950 = vadd.f32 0.0, %v2949
        %v2951 = vpop.f32.mrb[0].mxu0
        %2952 = vmatprep.mubr.bf16.mxu0 0
        %2953 = vmatmul.mubr.bf16.gmra.mrb[0].mxu0 %v2836
        %v2954 = vpop.f32.mrb[0].mxu0
        %v2955 = vadd.f32 0.0, %v2954
        %v2956 = vpop.f32.mrb[0].mxu0
        %v2957 = vpop.f32.mrb[0].mxu0
        %v2958 = vadd.f32 0.0, %v2957
        %v2959 = vpop.f32.mrb[0].mxu0
        %2960 = vmatprep.mubr.bf16.mxu0 0
        %2961 = vmatmul.mubr.bf16.gmra.mrb[0].mxu0 %v2837
        %v2962 = vpop.f32.mrb[0].mxu0
        %v2963 = vadd.f32 0.0, %v2962
        %v2964 = vpop.f32.mrb[0].mxu0
        %v2965 = vpop.f32.mrb[0].mxu0
        %v2966 = vadd.f32 0.0, %v2965
        %v2967 = vpop.f32.mrb[0].mxu0
        %2968 = vmatprep.mubr.bf16.mxu0 0
        %2969 = vmatmul.mubr.bf16.gmra.mrb[0].mxu0 %v2838
        %v2970 = vpop.f32.mrb[0].mxu0
        %v2971 = vadd.f32 0.0, %v2970
        %v2972 = vpop.f32.mrb[0].mxu0
        %v2973 = vpop.f32.mrb[0].mxu0
        %v2974 = vadd.f32 0.0, %v2973
        %v2975 = vpop.f32.mrb[0].mxu0
        %2976 = vmatprep.mubr.bf16.mxu0 0
        %2977 = vmatmul.mubr.bf16.gmra.mrb[0].mxu0 %v2839
        %v2978 = vpop.f32.mrb[0].mxu0
        %v2979 = vadd.f32 0.0, %v2978
        %v2980 = vpop.f32.mrb[0].mxu0
        %v2981 = vpop.f32.mrb[0].mxu0
        %v2982 = vadd.f32 0.0, %v2981
        %v2983 = vpop.f32.mrb[0].mxu0
        %2984 = vdwg.mxu0
        %v2985 = vld [vmem:[#allocation5 + $0x4a0] sm:$0xf]
        %v2986 = vld [vmem:[#allocation5 + $0x4a8] sm:$0xf]
        %v2987 = vld [vmem:[#allocation5 + $0x4b0] sm:$0xf]
        %v2988 = vld [vmem:[#allocation5 + $0x4b8] sm:$0xf]
        %v2989 = vld [vmem:[#allocation5 + $0x4c0] sm:$0xf]
        %v2990 = vld [vmem:[#allocation5 + $0x4c8] sm:$0xf]
        %v2991 = vld [vmem:[#allocation5 + $0x4d0] sm:$0xf]
        %v2992 = vld [vmem:[#allocation5 + $0x4d8] sm:$0xf]
        %v2993 = vld [vmem:[#allocation5 + $0x4e0] sm:$0xf]
        %v2994 = vld [vmem:[#allocation5 + $0x4e8] sm:$0xf]
        %v2995 = vld [vmem:[#allocation5 + $0x4f0] sm:$0xf]
        %v2996 = vld [vmem:[#allocation5 + $0x4f8] sm:$0xf]
        %v2997 = vld [vmem:[#allocation5 + $0x500] sm:$0xf]
        %v2998 = vld [vmem:[#allocation5 + $0x508] sm:$0xf]
        %v2999 = vld [vmem:[#allocation5 + $0x510] sm:$0xf]
        %v3000 = vld [vmem:[#allocation5 + $0x518] sm:$0xf]
        %v3017 = vunpack.c.l.b16 %v2985
        %v3018 = vunpack.c.l.b16 %v2986
        %v3019 = vunpack.c.l.b16 %v2987
        %v3020 = vunpack.c.l.b16 %v2988
        %v3021 = vunpack.c.l.b16 %v2989
        %v3022 = vunpack.c.l.b16 %v2990
        %v3023 = vunpack.c.l.b16 %v2991
        %v3024 = vunpack.c.l.b16 %v2992
        %v3025 = vunpack.c.l.b16 %v2993
        %v3026 = vunpack.c.l.b16 %v2994
        %v3027 = vunpack.c.l.b16 %v2995
        %v3028 = vunpack.c.l.b16 %v2996
        %v3029 = vunpack.c.l.b16 %v2997
        %v3030 = vunpack.c.l.b16 %v2998
        %v3031 = vunpack.c.l.b16 %v2999
        %v3032 = vunpack.c.l.b16 %v3000
        %v3033 = vpack.c.b16 %v3018, %v3017
        %v3034 = vpack.c.b16 %v3020, %v3019
        %v3035 = vpack.c.b16 %v3022, %v3021
        %v3036 = vpack.c.b16 %v3024, %v3023
        %v3037 = vpack.c.b16 %v3026, %v3025
        %v3038 = vpack.c.b16 %v3028, %v3027
        %v3039 = vpack.c.b16 %v3030, %v3029
        %v3040 = vpack.c.b16 %v3032, %v3031
        %3049 = vmatprep.subr.bf16.mxu0 0
        %3050 = vmatpush1.bf16.msra.mxu0 %v3033
        %3051 = vmatprep.subr.bf16.mxu0 0
        %3052 = vmatpush1.bf16.msra.mxu0 %v3034
        %3053 = vmatprep.subr.bf16.mxu0 0
        %3054 = vmatpush1.bf16.msra.mxu0 %v3035
        %3055 = vmatprep.subr.bf16.mxu0 0
        %3056 = vmatpush1.bf16.msra.mxu0 %v3036
        %3057 = vmatprep.subr.bf16.mxu0 0
        %3058 = vmatpush1.bf16.msra.mxu0 %v3037
        %3059 = vmatprep.subr.bf16.mxu0 0
        %3060 = vmatpush1.bf16.msra.mxu0 %v3038
        %3061 = vmatprep.subr.bf16.mxu0 0
        %3062 = vmatpush1.bf16.msra.mxu0 %v3039
        %3063 = vmatprep.subr.bf16.mxu0 0
        %3064 = vmatpush1.bf16.msra.mxu0 %v3040
        %3065 = vmatprep.subr.bf16.mxu0 0
        %3066 = vmatpush1.bf16.msra.mxu0 0
        %3067 = vmatprep.subr.bf16.mxu0 0
        %3068 = vmatpush1.bf16.msra.mxu0 0
        %3069 = vmatprep.subr.bf16.mxu0 0
        %3070 = vmatpush1.bf16.msra.mxu0 0
        %3071 = vmatprep.subr.bf16.mxu0 0
        %3072 = vmatpush1.bf16.msra.mxu0 0
        %3073 = vmatprep.subr.bf16.mxu0 0
        %3074 = vmatpush1.bf16.msra.mxu0 0
        %3075 = vmatprep.subr.bf16.mxu0 0
        %3076 = vmatpush1.bf16.msra.mxu0 0
        %3077 = vmatprep.subr.bf16.mxu0 0
        %3078 = vmatpush1.bf16.msra.mxu0 0
        %3079 = vmatprep.subr.bf16.mxu0 0
        %3080 = vmatpush1.bf16.msra.mxu0 0
        %3081 = vmatprep.mubr.bf16.mxu0 0
        %3082 = vmatmul.mubr.bf16.gmra.mrb[0].mxu0 %v2832
        %v3083 = vpop.f32.mrb[0].mxu0
        %v3084 = vadd.f32 0.0, %v3083
        %v3085 = vpop.f32.mrb[0].mxu0
        %v3086 = vpop.f32.mrb[0].mxu0
        %v3087 = vadd.f32 0.0, %v3086
        %v3088 = vpop.f32.mrb[0].mxu0
        %3089 = vmatprep.mubr.bf16.mxu0 0
        %3090 = vmatmul.mubr.bf16.gmra.mrb[0].mxu0 %v2833
        %v3091 = vpop.f32.mrb[0].mxu0
        %v3092 = vadd.f32 0.0, %v3091
        %v3093 = vpop.f32.mrb[0].mxu0
        %v3094 = vpop.f32.mrb[0].mxu0
        %v3095 = vadd.f32 0.0, %v3094
        %v3096 = vpop.f32.mrb[0].mxu0
        %3097 = vmatprep.mubr.bf16.mxu0 0
        %3098 = vmatmul.mubr.bf16.gmra.mrb[0].mxu0 %v2834
        %v3099 = vpop.f32.mrb[0].mxu0
        %v3100 = vadd.f32 0.0, %v3099
        %v3101 = vpop.f32.mrb[0].mxu0
        %v3102 = vpop.f32.mrb[0].mxu0
        %v3103 = vadd.f32 0.0, %v3102
        %v3104 = vpop.f32.mrb[0].mxu0
        %3105 = vmatprep.mubr.bf16.mxu0 0
        %3106 = vmatmul.mubr.bf16.gmra.mrb[0].mxu0 %v2835
        %v3107 = vpop.f32.mrb[0].mxu0
        %v3108 = vadd.f32 0.0, %v3107
        %v3109 = vpop.f32.mrb[0].mxu0
        %v3110 = vpop.f32.mrb[0].mxu0
        %v3111 = vadd.f32 0.0, %v3110
        %v3112 = vpop.f32.mrb[0].mxu0
        %3113 = vmatprep.mubr.bf16.mxu0 0
        %3114 = vmatmul.mubr.bf16.gmra.mrb[0].mxu0 %v2836
        %v3115 = vpop.f32.mrb[0].mxu0
        %v3116 = vadd.f32 0.0, %v3115
        %v3117 = vpop.f32.mrb[0].mxu0
        %v3118 = vpop.f32.mrb[0].mxu0
        %v3119 = vadd.f32 0.0, %v3118
        %v3120 = vpop.f32.mrb[0].mxu0
        %3121 = vmatprep.mubr.bf16.mxu0 0
        %3122 = vmatmul.mubr.bf16.gmra.mrb[0].mxu0 %v2837
        %v3123 = vpop.f32.mrb[0].mxu0
        %v3124 = vadd.f32 0.0, %v3123
        %v3125 = vpop.f32.mrb[0].mxu0
        %v3126 = vpop.f32.mrb[0].mxu0
        %v3127 = vadd.f32 0.0, %v3126
        %v3128 = vpop.f32.mrb[0].mxu0
        %3129 = vmatprep.mubr.bf16.mxu0 0
        %3130 = vmatmul.mubr.bf16.gmra.mrb[0].mxu0 %v2838
        %v3131 = vpop.f32.mrb[0].mxu0
        %v3132 = vadd.f32 0.0, %v3131
        %v3133 = vpop.f32.mrb[0].mxu0
        %v3134 = vpop.f32.mrb[0].mxu0
        %v3135 = vadd.f32 0.0, %v3134
        %v3136 = vpop.f32.mrb[0].mxu0
        %3137 = vmatprep.mubr.bf16.mxu0 0
        %3138 = vmatmul.mubr.bf16.gmra.mrb[0].mxu0 %v2839
        %v3139 = vpop.f32.mrb[0].mxu0
        %v3140 = vadd.f32 0.0, %v3139
        %v3141 = vpop.f32.mrb[0].mxu0
        %v3142 = vpop.f32.mrb[0].mxu0
        %v3143 = vadd.f32 0.0, %v3142
        %v3144 = vpop.f32.mrb[0].mxu0
        %3145 = vdwg.mxu0
        %v3146 = vld [vmem:[#allocation5 + $0x520] sm:$0xf]
        %v3147 = vld [vmem:[#allocation5 + $0x528] sm:$0xf]
        %v3148 = vld [vmem:[#allocation5 + $0x530] sm:$0xf]
        %v3149 = vld [vmem:[#allocation5 + $0x538] sm:$0xf]
        %v3150 = vld [vmem:[#allocation5 + $0x540] sm:$0xf]
        %v3151 = vld [vmem:[#allocation5 + $0x548] sm:$0xf]
        %v3152 = vld [vmem:[#allocation5 + $0x550] sm:$0xf]
        %v3153 = vld [vmem:[#allocation5 + $0x558] sm:$0xf]
        %v3154 = vld [vmem:[#allocation5 + $0x560] sm:$0xf]
        %v3155 = vld [vmem:[#allocation5 + $0x568] sm:$0xf]
        %v3156 = vld [vmem:[#allocation5 + $0x570] sm:$0xf]
        %v3157 = vld [vmem:[#allocation5 + $0x578] sm:$0xf]
        %v3158 = vld [vmem:[#allocation5 + $0x580] sm:$0xf]
        %v3159 = vld [vmem:[#allocation5 + $0x588] sm:$0xf]
        %v3160 = vld [vmem:[#allocation5 + $0x590] sm:$0xf]
        %v3161 = vld [vmem:[#allocation5 + $0x598] sm:$0xf]
        %v3178 = vunpack.c.l.b16 %v3146
        %v3179 = vunpack.c.l.b16 %v3147
        %v3180 = vunpack.c.l.b16 %v3148
        %v3181 = vunpack.c.l.b16 %v3149
        %v3182 = vunpack.c.l.b16 %v3150
        %v3183 = vunpack.c.l.b16 %v3151
        %v3184 = vunpack.c.l.b16 %v3152
        %v3185 = vunpack.c.l.b16 %v3153
        %v3186 = vunpack.c.l.b16 %v3154
        %v3187 = vunpack.c.l.b16 %v3155
        %v3188 = vunpack.c.l.b16 %v3156
        %v3189 = vunpack.c.l.b16 %v3157
        %v3190 = vunpack.c.l.b16 %v3158
        %v3191 = vunpack.c.l.b16 %v3159
        %v3192 = vunpack.c.l.b16 %v3160
        %v3193 = vunpack.c.l.b16 %v3161
        %v3194 = vpack.c.b16 %v3179, %v3178
        %v3195 = vpack.c.b16 %v3181, %v3180
        %v3196 = vpack.c.b16 %v3183, %v3182
        %v3197 = vpack.c.b16 %v3185, %v3184
        %v3198 = vpack.c.b16 %v3187, %v3186
        %v3199 = vpack.c.b16 %v3189, %v3188
        %v3200 = vpack.c.b16 %v3191, %v3190
        %v3201 = vpack.c.b16 %v3193, %v3192
        %3210 = vmatprep.subr.bf16.mxu0 0
        %3211 = vmatpush1.bf16.msra.mxu0 %v3194
        %3212 = vmatprep.subr.bf16.mxu0 0
        %3213 = vmatpush1.bf16.msra.mxu0 %v3195
        %3214 = vmatprep.subr.bf16.mxu0 0
        %3215 = vmatpush1.bf16.msra.mxu0 %v3196
        %3216 = vmatprep.subr.bf16.mxu0 0
        %3217 = vmatpush1.bf16.msra.mxu0 %v3197
        %3218 = vmatprep.subr.bf16.mxu0 0
        %3219 = vmatpush1.bf16.msra.mxu0 %v3198
        %3220 = vmatprep.subr.bf16.mxu0 0
        %3221 = vmatpush1.bf16.msra.mxu0 %v3199
        %3222 = vmatprep.subr.bf16.mxu0 0
        %3223 = vmatpush1.bf16.msra.mxu0 %v3200
        %3224 = vmatprep.subr.bf16.mxu0 0
        %3225 = vmatpush1.bf16.msra.mxu0 %v3201
        %3226 = vmatprep.subr.bf16.mxu0 0
        %3227 = vmatpush1.bf16.msra.mxu0 0
        %3228 = vmatprep.subr.bf16.mxu0 0
        %3229 = vmatpush1.bf16.msra.mxu0 0
        %3230 = vmatprep.subr.bf16.mxu0 0
        %3231 = vmatpush1.bf16.msra.mxu0 0
        %3232 = vmatprep.subr.bf16.mxu0 0
        %3233 = vmatpush1.bf16.msra.mxu0 0
        %3234 = vmatprep.subr.bf16.mxu0 0
        %3235 = vmatpush1.bf16.msra.mxu0 0
        %3236 = vmatprep.subr.bf16.mxu0 0
        %3237 = vmatpush1.bf16.msra.mxu0 0
        %3238 = vmatprep.subr.bf16.mxu0 0
        %3239 = vmatpush1.bf16.msra.mxu0 0
        %3240 = vmatprep.subr.bf16.mxu0 0
        %3241 = vmatpush1.bf16.msra.mxu0 0
        %3242 = vmatprep.mubr.bf16.mxu0 0
        %3243 = vmatmul.mubr.bf16.gmra.mrb[0].mxu0 %v2832
        %v3244 = vpop.f32.mrb[0].mxu0
        %v3245 = vadd.f32 0.0, %v3244
        %v3246 = vpop.f32.mrb[0].mxu0
        %v3247 = vpop.f32.mrb[0].mxu0
        %v3248 = vadd.f32 0.0, %v3247
        %v3249 = vpop.f32.mrb[0].mxu0
        %3250 = vmatprep.mubr.bf16.mxu0 0
        %3251 = vmatmul.mubr.bf16.gmra.mrb[0].mxu0 %v2833
        %v3252 = vpop.f32.mrb[0].mxu0
        %v3253 = vadd.f32 0.0, %v3252
        %v3254 = vpop.f32.mrb[0].mxu0
        %v3255 = vpop.f32.mrb[0].mxu0
        %v3256 = vadd.f32 0.0, %v3255
        %v3257 = vpop.f32.mrb[0].mxu0
        %3258 = vmatprep.mubr.bf16.mxu0 0
        %3259 = vmatmul.mubr.bf16.gmra.mrb[0].mxu0 %v2834
        %v3260 = vpop.f32.mrb[0].mxu0
        %v3261 = vadd.f32 0.0, %v3260
        %v3262 = vpop.f32.mrb[0].mxu0
        %v3263 = vpop.f32.mrb[0].mxu0
        %v3264 = vadd.f32 0.0, %v3263
        %v3265 = vpop.f32.mrb[0].mxu0
        %3266 = vmatprep.mubr.bf16.mxu0 0
        %3267 = vmatmul.mubr.bf16.gmra.mrb[0].mxu0 %v2835
        %v3268 = vpop.f32.mrb[0].mxu0
        %v3269 = vadd.f32 0.0, %v3268
        %v3270 = vpop.f32.mrb[0].mxu0
        %v3271 = vpop.f32.mrb[0].mxu0
        %v3272 = vadd.f32 0.0, %v3271
        %v3273 = vpop.f32.mrb[0].mxu0
        %3274 = vmatprep.mubr.bf16.mxu0 0
        %3275 = vmatmul.mubr.bf16.gmra.mrb[0].mxu0 %v2836
        %v3276 = vpop.f32.mrb[0].mxu0
        %v3277 = vadd.f32 0.0, %v3276
        %v3278 = vpop.f32.mrb[0].mxu0
        %v3279 = vpop.f32.mrb[0].mxu0
        %v3280 = vadd.f32 0.0, %v3279
        %v3281 = vpop.f32.mrb[0].mxu0
        %3282 = vmatprep.mubr.bf16.mxu0 0
        %3283 = vmatmul.mubr.bf16.gmra.mrb[0].mxu0 %v2837
        %v3284 = vpop.f32.mrb[0].mxu0
        %v3285 = vadd.f32 0.0, %v3284
        %v3286 = vpop.f32.mrb[0].mxu0
        %v3287 = vpop.f32.mrb[0].mxu0
        %v3288 = vadd.f32 0.0, %v3287
        %v3289 = vpop.f32.mrb[0].mxu0
        %3290 = vmatprep.mubr.bf16.mxu0 0
        %3291 = vmatmul.mubr.bf16.gmra.mrb[0].mxu0 %v2838
        %v3292 = vpop.f32.mrb[0].mxu0
        %v3293 = vadd.f32 0.0, %v3292
        %v3294 = vpop.f32.mrb[0].mxu0
        %v3295 = vpop.f32.mrb[0].mxu0
        %v3296 = vadd.f32 0.0, %v3295
        %v3297 = vpop.f32.mrb[0].mxu0
        %3298 = vmatprep.mubr.bf16.mxu0 0
        %3299 = vmatmul.mubr.bf16.gmra.mrb[0].mxu0 %v2839
        %v3300 = vpop.f32.mrb[0].mxu0
        %v3301 = vadd.f32 0.0, %v3300
        %v3302 = vpop.f32.mrb[0].mxu0
        %v3303 = vpop.f32.mrb[0].mxu0
        %v3304 = vadd.f32 0.0, %v3303
        %v3305 = vpop.f32.mrb[0].mxu0
        %3306 = vdwg.mxu0
        %v3307 = vld [vmem:[#allocation5 + $0x5a0] sm:$0xf]
        %v3308 = vld [vmem:[#allocation5 + $0x5a8] sm:$0xf]
        %v3309 = vld [vmem:[#allocation5 + $0x5b0] sm:$0xf]
        %v3310 = vld [vmem:[#allocation5 + $0x5b8] sm:$0xf]
        %v3311 = vld [vmem:[#allocation5 + $0x5c0] sm:$0xf]
        %v3312 = vld [vmem:[#allocation5 + $0x5c8] sm:$0xf]
        %v3313 = vld [vmem:[#allocation5 + $0x5d0] sm:$0xf]
        %v3314 = vld [vmem:[#allocation5 + $0x5d8] sm:$0xf]
        %v3315 = vld [vmem:[#allocation5 + $0x5e0] sm:$0xf]
        %v3316 = vld [vmem:[#allocation5 + $0x5e8] sm:$0xf]
        %v3317 = vld [vmem:[#allocation5 + $0x5f0] sm:$0xf]
        %v3318 = vld [vmem:[#allocation5 + $0x5f8] sm:$0xf]
        %v3319 = vld [vmem:[#allocation5 + $0x600] sm:$0xf]
        %v3320 = vld [vmem:[#allocation5 + $0x608] sm:$0xf]
        %v3321 = vld [vmem:[#allocation5 + $0x610] sm:$0xf]
        %v3322 = vld [vmem:[#allocation5 + $0x618] sm:$0xf]
        %v3323 = vmax.f32 %v3084, %v3100
        %v3324 = vmax.f32 %v3087, %v3103
        %v3325 = vmax.f32 %v3092, %v3108
        %v3326 = vmax.f32 %v3095, %v3111
        %v3327 = vmax.f32 %v3323, %v3324
        %v3328 = vmax.f32 %v3325, %v3326
        %v3329 = vmax.f32 %v3327, %v3328
        %v3330 = vrot.slane %v3329, 4
        %v3331 = vmax.f32 %v3329, %v3330
        %v3332 = vrot.slane %v3331, 2
        %v3333 = vmax.f32 %v3331, %v3332
        %v3334 = vrot.slane %v3333, 1
        %v3335 = vmax.f32 %v3333, %v3334
        %v3336 = vsub.f32 %v3084, %v3335
        %v3337 = vsub.f32 %v3087, %v3335
        %v3338 = vsub.f32 %v3092, %v3335
        %v3339 = vsub.f32 %v3095, %v3335
        %v3340 = vsub.f32 %v3100, %v3335
        %v3341 = vsub.f32 %v3103, %v3335
        %v3342 = vsub.f32 %v3108, %v3335
        %v3343 = vsub.f32 %v3111, %v3335
        %v3344 = vmul.f32 %v3336, 1.442695
        %v3345 = vpow.pop %v3344
        %v3346 = vmul.f32 %v3337, 1.442695
        %v3347 = vpow.pop %v3346
        %v3348 = vmul.f32 %v3338, 1.442695
        %v3349 = vpow.pop %v3348
        %v3350 = vmul.f32 %v3339, 1.442695
        %v3351 = vpow.pop %v3350
        %v3352 = vmul.f32 %v3340, 1.442695
        %v3353 = vpow.pop %v3352
        %v3354 = vmul.f32 %v3341, 1.442695
        %v3355 = vpow.pop %v3354
        %v3356 = vmul.f32 %v3342, 1.442695
        %v3357 = vpow.pop %v3356
        %v3358 = vmul.f32 %v3343, 1.442695
        %v3359 = vpow.pop %v3358
        %v3360 = vadd.f32 %v3345, %v3347
        %v3361 = vadd.f32 %v3360, %v3349
        %v3362 = vadd.f32 %v3361, %v3351
        %v3363 = vadd.f32 %v3362, %v3353
        %v3364 = vadd.f32 %v3363, %v3355
        %v3365 = vadd.f32 %v3364, %v3357
        %v3366 = vadd.f32 %v3365, %v3359
        %v3367 = vrot.slane %v3366, 4
        %v3368 = vadd.f32 %v3366, %v3367
        %v3369 = vrot.slane %v3368, 2
        %v3370 = vadd.f32 %v3368, %v3369
        %v3371 = vrot.slane %v3370, 1
        %v3372 = vadd.f32 %v3370, %v3371
        %v3373 = vrcp.pop %v3372
        %v3374 = vmul.f32 %v3345, %v3373
        %v3375 = vmul.f32 %v3347, %v3373
        %v3376 = vmul.f32 %v3349, %v3373
        %v3377 = vmul.f32 %v3351, %v3373
        %v3378 = vmul.f32 %v3353, %v3373
        %v3379 = vmul.f32 %v3355, %v3373
        %v3380 = vmul.f32 %v3357, %v3373
        %v3381 = vmul.f32 %v3359, %v3373
        %v3382 = vpack.c.bf16 %v3375, %v3374
        %v3383 = vpack.c.bf16 %v3377, %v3376
        %v3384 = vpack.c.bf16 %v3379, %v3378
        %v3385 = vpack.c.bf16 %v3381, %v3380
        %v3386 = vpack.c.bf16 %v3248, %v3245
        %v3387 = vpack.c.bf16 %v3256, %v3253
        %v3388 = vpack.c.bf16 %v3264, %v3261
        %v3389 = vpack.c.bf16 %v3272, %v3269
        %3390 = vxpose.xlu0.c.b16.start [1/8] %v3382, 128
        %3391 = vxpose.xlu0.c.b16.cont [2/8] %v3383, 128
        %3392 = vxpose.xlu0.c.b16.cont [3/8] %v3384, 128
        %3393 = vxpose.xlu0.c.b16.cont [4/8] %v3385, 128
        %3394 = vxpose.xlu0.c.b16.cont [5/8] 0, 128
        %3395 = vxpose.xlu0.c.b16.cont [6/8] 0, 128
        %3396 = vxpose.xlu0.c.b16.cont [7/8] 0, 128
        %3397 = vxpose.xlu0.c.b16.end [8/8] 0, 128
        %v3398 = vpop.trf.xlu0
        %v3399 = vpop.trf.xlu0
        %v3400 = vpop.trf.xlu0
        %v3401 = vpop.trf.xlu0
        %v3402 = vpop.trf.xlu0
        %v3403 = vpop.trf.xlu0
        %v3404 = vpop.trf.xlu0
        %v3405 = vpop.trf.xlu0
        %v3407 = vsel %vm820, %v3398, 0
        %v3410 = vsel %vm820, %v3399, 0
        %v3413 = vsel %vm820, %v3400, 0
        %v3416 = vsel %vm820, %v3401, 0
        %v3419 = vsel %vm820, %v3402, 0
        %v3422 = vsel %vm820, %v3403, 0
        %v3425 = vsel %vm820, %v3404, 0
        %v3428 = vsel %vm820, %v3405, 0
        %3430 = vmatprep.subr.bf16.mxu0 0
        %3431 = vmatpush1.bf16.msra.mxu0 %v3386
        %3432 = vmatprep.subr.bf16.mxu0 0
        %3433 = vmatpush1.bf16.msra.mxu0 %v3387
        %3434 = vmatprep.subr.bf16.mxu0 0
        %3435 = vmatpush1.bf16.msra.mxu0 %v3388
        %3436 = vmatprep.subr.bf16.mxu0 0
        %3437 = vmatpush1.bf16.msra.mxu0 %v3389
        %3438 = vmatprep.subr.bf16.mxu0 0
        %3439 = vmatpush1.bf16.msra.mxu0 0
        %3440 = vmatprep.subr.bf16.mxu0 0
        %3441 = vmatpush1.bf16.msra.mxu0 0
        %3442 = vmatprep.subr.bf16.mxu0 0
        %3443 = vmatpush1.bf16.msra.mxu0 0
        %3444 = vmatprep.subr.bf16.mxu0 0
        %3445 = vmatpush1.bf16.msra.mxu0 0
        %3446 = vmatprep.subr.bf16.mxu0 0
        %3447 = vmatpush1.bf16.msra.mxu0 0
        %3448 = vmatprep.subr.bf16.mxu0 0
        %3449 = vmatpush1.bf16.msra.mxu0 0
        %3450 = vmatprep.subr.bf16.mxu0 0
        %3451 = vmatpush1.bf16.msra.mxu0 0
        %3452 = vmatprep.subr.bf16.mxu0 0
        %3453 = vmatpush1.bf16.msra.mxu0 0
        %3454 = vmatprep.subr.bf16.mxu0 0
        %3455 = vmatpush1.bf16.msra.mxu0 0
        %3456 = vmatprep.subr.bf16.mxu0 0
        %3457 = vmatpush1.bf16.msra.mxu0 0
        %3458 = vmatprep.subr.bf16.mxu0 0
        %3459 = vmatpush1.bf16.msra.mxu0 0
        %3460 = vmatprep.subr.bf16.mxu0 0
        %3461 = vmatpush1.bf16.msra.mxu0 0
        %3462 = vmatprep.mubr.bf16.mxu0 0
        %3463 = vmatmul.mubr.bf16.gmra.mrb[0].mxu0 %v3407
        %v3464 = vpop.f32.mrb[0].mxu0
        %v3465 = vadd.f32 0.0, %v3464
        %v3466 = vpop.f32.mrb[0].mxu0
        %v3467 = vpop.f32.mrb[0].mxu0
        %v3468 = vadd.f32 0.0, %v3467
        %v3469 = vpop.f32.mrb[0].mxu0
        %3470 = vmatprep.mubr.bf16.mxu0 0
        %3471 = vmatmul.mubr.bf16.gmra.mrb[0].mxu0 %v3410
        %v3472 = vpop.f32.mrb[0].mxu0
        %v3473 = vadd.f32 0.0, %v3472
        %v3474 = vpop.f32.mrb[0].mxu0
        %v3475 = vpop.f32.mrb[0].mxu0
        %v3476 = vadd.f32 0.0, %v3475
        %v3477 = vpop.f32.mrb[0].mxu0
        %3478 = vmatprep.mubr.bf16.mxu0 0
        %3479 = vmatmul.mubr.bf16.gmra.mrb[0].mxu0 %v3413
        %v3480 = vpop.f32.mrb[0].mxu0
        %v3481 = vadd.f32 0.0, %v3480
        %v3482 = vpop.f32.mrb[0].mxu0
        %v3483 = vpop.f32.mrb[0].mxu0
        %v3484 = vadd.f32 0.0, %v3483
        %v3485 = vpop.f32.mrb[0].mxu0
        %3486 = vmatprep.mubr.bf16.mxu0 0
        %3487 = vmatmul.mubr.bf16.gmra.mrb[0].mxu0 %v3416
        %v3488 = vpop.f32.mrb[0].mxu0
        %v3489 = vadd.f32 0.0, %v3488
        %v3490 = vpop.f32.mrb[0].mxu0
        %v3491 = vpop.f32.mrb[0].mxu0
        %v3492 = vadd.f32 0.0, %v3491
        %v3493 = vpop.f32.mrb[0].mxu0
        %3494 = vmatprep.mubr.bf16.mxu0 0
        %3495 = vmatmul.mubr.bf16.gmra.mrb[0].mxu0 %v3419
        %v3496 = vpop.f32.mrb[0].mxu0
        %v3497 = vadd.f32 0.0, %v3496
        %v3498 = vpop.f32.mrb[0].mxu0
        %v3499 = vpop.f32.mrb[0].mxu0
        %v3500 = vadd.f32 0.0, %v3499
        %v3501 = vpop.f32.mrb[0].mxu0
        %3502 = vmatprep.mubr.bf16.mxu0 0
        %3503 = vmatmul.mubr.bf16.gmra.mrb[0].mxu0 %v3422
        %v3504 = vpop.f32.mrb[0].mxu0
        %v3505 = vadd.f32 0.0, %v3504
        %v3506 = vpop.f32.mrb[0].mxu0
        %v3507 = vpop.f32.mrb[0].mxu0
        %v3508 = vadd.f32 0.0, %v3507
        %v3509 = vpop.f32.mrb[0].mxu0
        %3510 = vmatprep.mubr.bf16.mxu0 0
        %3511 = vmatmul.mubr.bf16.gmra.mrb[0].mxu0 %v3425
        %v3512 = vpop.f32.mrb[0].mxu0
        %v3513 = vadd.f32 0.0, %v3512
        %v3514 = vpop.f32.mrb[0].mxu0
        %v3515 = vpop.f32.mrb[0].mxu0
        %v3516 = vadd.f32 0.0, %v3515
        %v3517 = vpop.f32.mrb[0].mxu0
        %3518 = vmatprep.mubr.bf16.mxu0 0
        %3519 = vmatmul.mubr.bf16.gmra.mrb[0].mxu0 %v3428
        %v3520 = vpop.f32.mrb[0].mxu0
        %v3521 = vadd.f32 0.0, %v3520
        %v3522 = vpop.f32.mrb[0].mxu0
        %v3523 = vpop.f32.mrb[0].mxu0
        %v3524 = vadd.f32 0.0, %v3523
        %v3525 = vpop.f32.mrb[0].mxu0
        %3526 = vdwg.mxu0
        %v3527 = vpack.c.bf16 %v3468, %v3465
        %v3528 = vpack.c.bf16 %v3476, %v3473
        %v3529 = vpack.c.bf16 %v3484, %v3481
        %v3530 = vpack.c.bf16 %v3492, %v3489
        %v3531 = vpack.c.bf16 %v3500, %v3497
        %v3532 = vpack.c.bf16 %v3508, %v3505
        %v3533 = vpack.c.bf16 %v3516, %v3513
        %v3534 = vpack.c.bf16 %v3524, %v3521
        %v3551 = vunpack.c.l.b16 %v3307
        %v3552 = vunpack.c.l.b16 %v3308
        %v3553 = vunpack.c.l.b16 %v3309
        %v3554 = vunpack.c.l.b16 %v3310
        %v3555 = vunpack.c.l.b16 %v3311
        %v3556 = vunpack.c.l.b16 %v3312
        %v3557 = vunpack.c.l.b16 %v3313
        %v3558 = vunpack.c.l.b16 %v3314
        %v3559 = vunpack.c.l.b16 %v3315
        %v3560 = vunpack.c.l.b16 %v3316
        %v3561 = vunpack.c.l.b16 %v3317
        %v3562 = vunpack.c.l.b16 %v3318
        %v3563 = vunpack.c.l.b16 %v3319
        %v3564 = vunpack.c.l.b16 %v3320
        %v3565 = vunpack.c.l.b16 %v3321
        %v3566 = vunpack.c.l.b16 %v3322
        %v3567 = vpack.c.b16 %v3552, %v3551
        %v3568 = vpack.c.b16 %v3554, %v3553
        %v3569 = vpack.c.b16 %v3556, %v3555
        %v3570 = vpack.c.b16 %v3558, %v3557
        %v3571 = vpack.c.b16 %v3560, %v3559
        %v3572 = vpack.c.b16 %v3562, %v3561
        %v3573 = vpack.c.b16 %v3564, %v3563
        %v3574 = vpack.c.b16 %v3566, %v3565
        %v3583 = vmul.bf16 %v3527, %v3567
        %v3584 = vmul.bf16 %v3528, %v3568
        %v3585 = vmul.bf16 %v3529, %v3569
        %v3586 = vmul.bf16 %v3530, %v3570
        %v3587 = vmul.bf16 %v3531, %v3571
        %v3588 = vmul.bf16 %v3532, %v3572
        %v3589 = vmul.bf16 %v3533, %v3573
        %v3590 = vmul.bf16 %v3534, %v3574
        %v3591 = vpack.c.bf16 %v2926, %v2923
        %v3592 = vpack.c.bf16 %v2934, %v2931
        %v3593 = vpack.c.bf16 %v2942, %v2939
        %v3594 = vpack.c.bf16 %v2950, %v2947
        %3595 = vmatprep.subr.bf16.mxu0 0
        %3596 = vmatpush1.bf16.msra.mxu0 %v3583
        %3597 = vmatprep.subr.bf16.mxu0 0
        %3598 = vmatpush1.bf16.msra.mxu0 %v3584
        %3599 = vmatprep.subr.bf16.mxu0 0
        %3600 = vmatpush1.bf16.msra.mxu0 %v3585
        %3601 = vmatprep.subr.bf16.mxu0 0
        %3602 = vmatpush1.bf16.msra.mxu0 %v3586
        %3603 = vmatprep.subr.bf16.mxu0 0
        %3604 = vmatpush1.bf16.msra.mxu0 %v3587
        %3605 = vmatprep.subr.bf16.mxu0 0
        %3606 = vmatpush1.bf16.msra.mxu0 %v3588
        %3607 = vmatprep.subr.bf16.mxu0 0
        %3608 = vmatpush1.bf16.msra.mxu0 %v3589
        %3609 = vmatprep.subr.bf16.mxu0 0
        %3610 = vmatpush1.bf16.msra.mxu0 %v3590
        %3611 = vmatprep.subr.bf16.mxu0 0
        %3612 = vmatpush1.bf16.msra.mxu0 0
        %3613 = vmatprep.subr.bf16.mxu0 0
        %3614 = vmatpush1.bf16.msra.mxu0 0
        %3615 = vmatprep.subr.bf16.mxu0 0
        %3616 = vmatpush1.bf16.msra.mxu0 0
        %3617 = vmatprep.subr.bf16.mxu0 0
        %3618 = vmatpush1.bf16.msra.mxu0 0
        %3619 = vmatprep.subr.bf16.mxu0 0
        %3620 = vmatpush1.bf16.msra.mxu0 0
        %3621 = vmatprep.subr.bf16.mxu0 0
        %3622 = vmatpush1.bf16.msra.mxu0 0
        %3623 = vmatprep.subr.bf16.mxu0 0
        %3624 = vmatpush1.bf16.msra.mxu0 0
        %3625 = vmatprep.subr.bf16.mxu0 0
        %3626 = vmatpush1.bf16.msra.mxu0 0
        %3627 = vmatprep.mubr.bf16.mxu0 0
        %3628 = vmatmul.mubr.bf16.gmra.mrb[0].mxu0 %v3591
        %v3629 = vpop.f32.mrb[0].mxu0
        %v3630 = vadd.f32 0.0, %v3629
        %v3631 = vpop.f32.mrb[0].mxu0
        %v3632 = vpop.f32.mrb[0].mxu0
        %v3633 = vadd.f32 0.0, %v3632
        %v3634 = vpop.f32.mrb[0].mxu0
        %3635 = vmatprep.mubr.bf16.mxu0 0
        %3636 = vmatmul.mubr.bf16.gmra.mrb[0].mxu0 %v3592
        %v3637 = vpop.f32.mrb[0].mxu0
        %v3638 = vadd.f32 0.0, %v3637
        %v3639 = vpop.f32.mrb[0].mxu0
        %v3640 = vpop.f32.mrb[0].mxu0
        %v3641 = vadd.f32 0.0, %v3640
        %v3642 = vpop.f32.mrb[0].mxu0
        %3643 = vmatprep.mubr.bf16.mxu0 0
        %3644 = vmatmul.mubr.bf16.gmra.mrb[0].mxu0 %v3593
        %v3645 = vpop.f32.mrb[0].mxu0
        %v3646 = vadd.f32 0.0, %v3645
        %v3647 = vpop.f32.mrb[0].mxu0
        %v3648 = vpop.f32.mrb[0].mxu0
        %v3649 = vadd.f32 0.0, %v3648
        %v3650 = vpop.f32.mrb[0].mxu0
        %3651 = vmatprep.mubr.bf16.mxu0 0
        %3652 = vmatmul.mubr.bf16.gmra.mrb[0].mxu0 %v3594
        %v3653 = vpop.f32.mrb[0].mxu0
        %v3654 = vadd.f32 0.0, %v3653
        %v3655 = vpop.f32.mrb[0].mxu0
        %v3656 = vpop.f32.mrb[0].mxu0
        %v3657 = vadd.f32 0.0, %v3656
        %v3658 = vpop.f32.mrb[0].mxu0
        %3659 = vdwg.mxu0
        %v3660 = vmax.f32 %v3116, %v3132
        %v3661 = vmax.f32 %v3119, %v3135
        %v3662 = vmax.f32 %v3124, %v3140
        %v3663 = vmax.f32 %v3127, %v3143
        %v3664 = vmax.f32 %v3660, %v3661
        %v3665 = vmax.f32 %v3662, %v3663
        %v3666 = vmax.f32 %v3664, %v3665
        %v3667 = vrot.slane %v3666, 4
        %v3668 = vmax.f32 %v3666, %v3667
        %v3669 = vrot.slane %v3668, 2
        %v3670 = vmax.f32 %v3668, %v3669
        %v3671 = vrot.slane %v3670, 1
        %v3672 = vmax.f32 %v3670, %v3671
        %v3673 = vsub.f32 %v3116, %v3672
        %v3674 = vsub.f32 %v3119, %v3672
        %v3675 = vsub.f32 %v3124, %v3672
        %v3676 = vsub.f32 %v3127, %v3672
        %v3677 = vsub.f32 %v3132, %v3672
        %v3678 = vsub.f32 %v3135, %v3672
        %v3679 = vsub.f32 %v3140, %v3672
        %v3680 = vsub.f32 %v3143, %v3672
        %v3681 = vmul.f32 %v3673, 1.442695
        %v3682 = vpow.pop %v3681
        %v3683 = vmul.f32 %v3674, 1.442695
        %v3684 = vpow.pop %v3683
        %v3685 = vmul.f32 %v3675, 1.442695
        %v3686 = vpow.pop %v3685
        %v3687 = vmul.f32 %v3676, 1.442695
        %v3688 = vpow.pop %v3687
        %v3689 = vmul.f32 %v3677, 1.442695
        %v3690 = vpow.pop %v3689
        %v3691 = vmul.f32 %v3678, 1.442695
        %v3692 = vpow.pop %v3691
        %v3693 = vmul.f32 %v3679, 1.442695
        %v3694 = vpow.pop %v3693
        %v3695 = vmul.f32 %v3680, 1.442695
        %v3696 = vpow.pop %v3695
        %v3697 = vadd.f32 %v3682, %v3684
        %v3698 = vadd.f32 %v3697, %v3686
        %v3699 = vadd.f32 %v3698, %v3688
        %v3700 = vadd.f32 %v3699, %v3690
        %v3701 = vadd.f32 %v3700, %v3692
        %v3702 = vadd.f32 %v3701, %v3694
        %v3703 = vadd.f32 %v3702, %v3696
        %v3704 = vrot.slane %v3703, 4
        %v3705 = vadd.f32 %v3703, %v3704
        %v3706 = vrot.slane %v3705, 2
        %v3707 = vadd.f32 %v3705, %v3706
        %v3708 = vrot.slane %v3707, 1
        %v3709 = vadd.f32 %v3707, %v3708
        %v3710 = vrcp.pop %v3709
        %v3711 = vmul.f32 %v3682, %v3710
        %v3712 = vmul.f32 %v3684, %v3710
        %v3713 = vmul.f32 %v3686, %v3710
        %v3714 = vmul.f32 %v3688, %v3710
        %v3715 = vmul.f32 %v3690, %v3710
        %v3716 = vmul.f32 %v3692, %v3710
        %v3717 = vmul.f32 %v3694, %v3710
        %v3718 = vmul.f32 %v3696, %v3710
        %v3719 = vpack.c.bf16 %v3712, %v3711
        %v3720 = vpack.c.bf16 %v3714, %v3713
        %v3721 = vpack.c.bf16 %v3716, %v3715
        %v3722 = vpack.c.bf16 %v3718, %v3717
        %v3723 = vpack.c.bf16 %v3280, %v3277
        %v3724 = vpack.c.bf16 %v3288, %v3285
        %v3725 = vpack.c.bf16 %v3296, %v3293
        %v3726 = vpack.c.bf16 %v3304, %v3301
        %3727 = vxpose.xlu0.c.b16.start [1/8] %v3719, 128
        %3728 = vxpose.xlu0.c.b16.cont [2/8] %v3720, 128
        %3729 = vxpose.xlu0.c.b16.cont [3/8] %v3721, 128
        %3730 = vxpose.xlu0.c.b16.cont [4/8] %v3722, 128
        %3731 = vxpose.xlu0.c.b16.cont [5/8] 0, 128
        %3732 = vxpose.xlu0.c.b16.cont [6/8] 0, 128
        %3733 = vxpose.xlu0.c.b16.cont [7/8] 0, 128
        %3734 = vxpose.xlu0.c.b16.end [8/8] 0, 128
        %v3735 = vpop.trf.xlu0
        %v3736 = vpop.trf.xlu0
        %v3737 = vpop.trf.xlu0
        %v3738 = vpop.trf.xlu0
        %v3739 = vpop.trf.xlu0
        %v3740 = vpop.trf.xlu0
        %v3741 = vpop.trf.xlu0
        %v3742 = vpop.trf.xlu0
        %v3744 = vsel %vm820, %v3735, 0
        %v3747 = vsel %vm820, %v3736, 0
        %v3750 = vsel %vm820, %v3737, 0
        %v3753 = vsel %vm820, %v3738, 0
        %v3756 = vsel %vm820, %v3739, 0
        %v3759 = vsel %vm820, %v3740, 0
        %v3762 = vsel %vm820, %v3741, 0
        %v3765 = vsel %vm820, %v3742, 0
        %3767 = vmatprep.subr.bf16.mxu0 0
        %3768 = vmatpush1.bf16.msra.mxu0 %v3723
        %3769 = vmatprep.subr.bf16.mxu0 0
        %3770 = vmatpush1.bf16.msra.mxu0 %v3724
        %3771 = vmatprep.subr.bf16.mxu0 0
        %3772 = vmatpush1.bf16.msra.mxu0 %v3725
        %3773 = vmatprep.subr.bf16.mxu0 0
        %3774 = vmatpush1.bf16.msra.mxu0 %v3726
        %3775 = vmatprep.subr.bf16.mxu0 0
        %3776 = vmatpush1.bf16.msra.mxu0 0
        %3777 = vmatprep.subr.bf16.mxu0 0
        %3778 = vmatpush1.bf16.msra.mxu0 0
        %3779 = vmatprep.subr.bf16.mxu0 0
        %3780 = vmatpush1.bf16.msra.mxu0 0
        %3781 = vmatprep.subr.bf16.mxu0 0
        %3782 = vmatpush1.bf16.msra.mxu0 0
        %3783 = vmatprep.subr.bf16.mxu0 0
        %3784 = vmatpush1.bf16.msra.mxu0 0
        %3785 = vmatprep.subr.bf16.mxu0 0
        %3786 = vmatpush1.bf16.msra.mxu0 0
        %3787 = vmatprep.subr.bf16.mxu0 0
        %3788 = vmatpush1.bf16.msra.mxu0 0
        %3789 = vmatprep.subr.bf16.mxu0 0
        %3790 = vmatpush1.bf16.msra.mxu0 0
        %3791 = vmatprep.subr.bf16.mxu0 0
        %3792 = vmatpush1.bf16.msra.mxu0 0
        %3793 = vmatprep.subr.bf16.mxu0 0
        %3794 = vmatpush1.bf16.msra.mxu0 0
        %3795 = vmatprep.subr.bf16.mxu0 0
        %3796 = vmatpush1.bf16.msra.mxu0 0
        %3797 = vmatprep.subr.bf16.mxu0 0
        %3798 = vmatpush1.bf16.msra.mxu0 0
        %3799 = vmatprep.mubr.bf16.mxu0 0
        %3800 = vmatmul.mubr.bf16.gmra.mrb[0].mxu0 %v3744
        %v3801 = vpop.f32.mrb[0].mxu0
        %v3802 = vadd.f32 0.0, %v3801
        %v3803 = vpop.f32.mrb[0].mxu0
        %v3804 = vpop.f32.mrb[0].mxu0
        %v3805 = vadd.f32 0.0, %v3804
        %v3806 = vpop.f32.mrb[0].mxu0
        %3807 = vmatprep.mubr.bf16.mxu0 0
        %3808 = vmatmul.mubr.bf16.gmra.mrb[0].mxu0 %v3747
        %v3809 = vpop.f32.mrb[0].mxu0
        %v3810 = vadd.f32 0.0, %v3809
        %v3811 = vpop.f32.mrb[0].mxu0
        %v3812 = vpop.f32.mrb[0].mxu0
        %v3813 = vadd.f32 0.0, %v3812
        %v3814 = vpop.f32.mrb[0].mxu0
        %3815 = vmatprep.mubr.bf16.mxu0 0
        %3816 = vmatmul.mubr.bf16.gmra.mrb[0].mxu0 %v3750
        %v3817 = vpop.f32.mrb[0].mxu0
        %v3818 = vadd.f32 0.0, %v3817
        %v3819 = vpop.f32.mrb[0].mxu0
        %v3820 = vpop.f32.mrb[0].mxu0
        %v3821 = vadd.f32 0.0, %v3820
        %v3822 = vpop.f32.mrb[0].mxu0
        %3823 = vmatprep.mubr.bf16.mxu0 0
        %3824 = vmatmul.mubr.bf16.gmra.mrb[0].mxu0 %v3753
        %v3825 = vpop.f32.mrb[0].mxu0
        %v3826 = vadd.f32 0.0, %v3825
        %v3827 = vpop.f32.mrb[0].mxu0
        %v3828 = vpop.f32.mrb[0].mxu0
        %v3829 = vadd.f32 0.0, %v3828
        %v3830 = vpop.f32.mrb[0].mxu0
        %3831 = vmatprep.mubr.bf16.mxu0 0
        %3832 = vmatmul.mubr.bf16.gmra.mrb[0].mxu0 %v3756
        %v3833 = vpop.f32.mrb[0].mxu0
        %v3834 = vadd.f32 0.0, %v3833
        %v3835 = vpop.f32.mrb[0].mxu0
        %v3836 = vpop.f32.mrb[0].mxu0
        %v3837 = vadd.f32 0.0, %v3836
        %v3838 = vpop.f32.mrb[0].mxu0
        %3839 = vmatprep.mubr.bf16.mxu0 0
        %3840 = vmatmul.mubr.bf16.gmra.mrb[0].mxu0 %v3759
        %v3841 = vpop.f32.mrb[0].mxu0
        %v3842 = vadd.f32 0.0, %v3841
        %v3843 = vpop.f32.mrb[0].mxu0
        %v3844 = vpop.f32.mrb[0].mxu0
        %v3845 = vadd.f32 0.0, %v3844
        %v3846 = vpop.f32.mrb[0].mxu0
        %3847 = vmatprep.mubr.bf16.mxu0 0
        %3848 = vmatmul.mubr.bf16.gmra.mrb[0].mxu0 %v3762
        %v3849 = vpop.f32.mrb[0].mxu0
        %v3850 = vadd.f32 0.0, %v3849
        %v3851 = vpop.f32.mrb[0].mxu0
        %v3852 = vpop.f32.mrb[0].mxu0
        %v3853 = vadd.f32 0.0, %v3852
        %v3854 = vpop.f32.mrb[0].mxu0
        %3855 = vmatprep.mubr.bf16.mxu0 0
        %3856 = vmatmul.mubr.bf16.gmra.mrb[0].mxu0 %v3765
        %v3857 = vpop.f32.mrb[0].mxu0
        %v3858 = vadd.f32 0.0, %v3857
        %v3859 = vpop.f32.mrb[0].mxu0
        %v3860 = vpop.f32.mrb[0].mxu0
        %v3861 = vadd.f32 0.0, %v3860
        %v3862 = vpop.f32.mrb[0].mxu0
        %3863 = vdwg.mxu0
        %v3864 = vpack.c.bf16 %v3805, %v3802
        %v3865 = vpack.c.bf16 %v3813, %v3810
        %v3866 = vpack.c.bf16 %v3821, %v3818
        %v3867 = vpack.c.bf16 %v3829, %v3826
        %v3868 = vpack.c.bf16 %v3837, %v3834
        %v3869 = vpack.c.bf16 %v3845, %v3842
        %v3870 = vpack.c.bf16 %v3853, %v3850
        %v3871 = vpack.c.bf16 %v3861, %v3858
        %v3872 = vmul.bf16 %v3864, %v3567
        %v3873 = vmul.bf16 %v3865, %v3568
        %v3874 = vmul.bf16 %v3866, %v3569
        %v3875 = vmul.bf16 %v3867, %v3570
        %v3876 = vmul.bf16 %v3868, %v3571
        %v3877 = vmul.bf16 %v3869, %v3572
        %v3878 = vmul.bf16 %v3870, %v3573
        %v3879 = vmul.bf16 %v3871, %v3574
        %v3880 = vpack.c.bf16 %v2958, %v2955
        %v3881 = vpack.c.bf16 %v2966, %v2963
        %v3882 = vpack.c.bf16 %v2974, %v2971
        %v3883 = vpack.c.bf16 %v2982, %v2979
        %3884 = vmatprep.subr.bf16.mxu0 0
        %3885 = vmatpush1.bf16.msra.mxu0 %v3872
        %3886 = vmatprep.subr.bf16.mxu0 0
        %3887 = vmatpush1.bf16.msra.mxu0 %v3873
        %3888 = vmatprep.subr.bf16.mxu0 0
        %3889 = vmatpush1.bf16.msra.mxu0 %v3874
        %3890 = vmatprep.subr.bf16.mxu0 0
        %3891 = vmatpush1.bf16.msra.mxu0 %v3875
        %3892 = vmatprep.subr.bf16.mxu0 0
        %3893 = vmatpush1.bf16.msra.mxu0 %v3876
        %3894 = vmatprep.subr.bf16.mxu0 0
        %3895 = vmatpush1.bf16.msra.mxu0 %v3877
        %3896 = vmatprep.subr.bf16.mxu0 0
        %3897 = vmatpush1.bf16.msra.mxu0 %v3878
        %3898 = vmatprep.subr.bf16.mxu0 0
        %3899 = vmatpush1.bf16.msra.mxu0 %v3879
        %3900 = vmatprep.subr.bf16.mxu0 0
        %3901 = vmatpush1.bf16.msra.mxu0 0
        %3902 = vmatprep.subr.bf16.mxu0 0
        %3903 = vmatpush1.bf16.msra.mxu0 0
        %3904 = vmatprep.subr.bf16.mxu0 0
        %3905 = vmatpush1.bf16.msra.mxu0 0
        %3906 = vmatprep.subr.bf16.mxu0 0
        %3907 = vmatpush1.bf16.msra.mxu0 0
        %3908 = vmatprep.subr.bf16.mxu0 0
        %3909 = vmatpush1.bf16.msra.mxu0 0
        %3910 = vmatprep.subr.bf16.mxu0 0
        %3911 = vmatpush1.bf16.msra.mxu0 0
        %3912 = vmatprep.subr.bf16.mxu0 0
        %3913 = vmatpush1.bf16.msra.mxu0 0
        %3914 = vmatprep.subr.bf16.mxu0 0
        %3915 = vmatpush1.bf16.msra.mxu0 0
        %3916 = vmatprep.mubr.bf16.mxu0 0
        %3917 = vmatmul.mubr.bf16.gmra.mrb[0].mxu0 %v3880
        %v3918 = vpop.f32.mrb[0].mxu0
        %v3919 = vadd.f32 0.0, %v3918
        %v3920 = vpop.f32.mrb[0].mxu0
        %v3921 = vpop.f32.mrb[0].mxu0
        %v3922 = vadd.f32 0.0, %v3921
        %v3923 = vpop.f32.mrb[0].mxu0
        %3924 = vmatprep.mubr.bf16.mxu0 0
        %3925 = vmatmul.mubr.bf16.gmra.mrb[0].mxu0 %v3881
        %v3926 = vpop.f32.mrb[0].mxu0
        %v3927 = vadd.f32 0.0, %v3926
        %v3928 = vpop.f32.mrb[0].mxu0
        %v3929 = vpop.f32.mrb[0].mxu0
        %v3930 = vadd.f32 0.0, %v3929
        %v3931 = vpop.f32.mrb[0].mxu0
        %3932 = vmatprep.mubr.bf16.mxu0 0
        %3933 = vmatmul.mubr.bf16.gmra.mrb[0].mxu0 %v3882
        %v3934 = vpop.f32.mrb[0].mxu0
        %v3935 = vadd.f32 0.0, %v3934
        %v3936 = vpop.f32.mrb[0].mxu0
        %v3937 = vpop.f32.mrb[0].mxu0
        %v3938 = vadd.f32 0.0, %v3937
        %v3939 = vpop.f32.mrb[0].mxu0
        %3940 = vmatprep.mubr.bf16.mxu0 0
        %3941 = vmatmul.mubr.bf16.gmra.mrb[0].mxu0 %v3883
        %v3942 = vpop.f32.mrb[0].mxu0
        %v3943 = vadd.f32 0.0, %v3942
        %v3944 = vpop.f32.mrb[0].mxu0
        %v3945 = vpop.f32.mrb[0].mxu0
        %v3946 = vadd.f32 0.0, %v3945
        %v3947 = vpop.f32.mrb[0].mxu0
        %3948 = vdwg.mxu0
        %v3949 = vld [vmem:[#allocation5 + $0x620] sm:$0xf]
        %v3950 = vld [vmem:[#allocation5 + $0x628] sm:$0xf]
        %v3951 = vld [vmem:[#allocation5 + $0x630] sm:$0xf]
        %v3952 = vld [vmem:[#allocation5 + $0x638] sm:$0xf]
        %v3953 = vld [vmem:[#allocation5 + $0x640] sm:$0xf]
        %v3954 = vld [vmem:[#allocation5 + $0x648] sm:$0xf]
        %v3955 = vld [vmem:[#allocation5 + $0x650] sm:$0xf]
        %v3956 = vld [vmem:[#allocation5 + $0x658] sm:$0xf]
        %v3957 = vld [vmem:[#allocation5 + $0x660] sm:$0xf]
        %v3958 = vld [vmem:[#allocation5 + $0x668] sm:$0xf]
        %v3959 = vld [vmem:[#allocation5 + $0x670] sm:$0xf]
        %v3960 = vld [vmem:[#allocation5 + $0x678] sm:$0xf]
        %v3961 = vld [vmem:[#allocation5 + $0x680] sm:$0xf]
        %v3962 = vld [vmem:[#allocation5 + $0x688] sm:$0xf]
        %v3963 = vld [vmem:[#allocation5 + $0x690] sm:$0xf]
        %v3964 = vld [vmem:[#allocation5 + $0x698] sm:$0xf]
        %v3965 = vpack.c.bf16 %v3633, %v3630
        %v3966 = vpack.c.bf16 %v3641, %v3638
        %v3967 = vpack.c.bf16 %v3649, %v3646
        %v3968 = vpack.c.bf16 %v3657, %v3654
        %v3969 = vpack.c.bf16 %v3922, %v3919
        %v3970 = vpack.c.bf16 %v3930, %v3927
        %v3971 = vpack.c.bf16 %v3938, %v3935
        %v3972 = vpack.c.bf16 %v3946, %v3943
        %v3973 = vld [vmem:[#allocation7 + $0x11] ss:$0 sm:$0xff]
        %v3990 = vunpack.c.l.b16 %v3949
        %v3991 = vunpack.c.l.b16 %v3950
        %v3992 = vunpack.c.l.b16 %v3951
        %v3993 = vunpack.c.l.b16 %v3952
        %v3994 = vunpack.c.l.b16 %v3953
        %v3995 = vunpack.c.l.b16 %v3954
        %v3996 = vunpack.c.l.b16 %v3955
        %v3997 = vunpack.c.l.b16 %v3956
        %v3998 = vunpack.c.l.b16 %v3957
        %v3999 = vunpack.c.l.b16 %v3958
        %v4000 = vunpack.c.l.b16 %v3959
        %v4001 = vunpack.c.l.b16 %v3960
        %v4002 = vunpack.c.l.b16 %v3961
        %v4003 = vunpack.c.l.b16 %v3962
        %v4004 = vunpack.c.l.b16 %v3963
        %v4005 = vunpack.c.l.b16 %v3964
        %v4006 = vpack.c.b16 %v3991, %v3990
        %v4007 = vpack.c.b16 %v3993, %v3992
        %v4008 = vpack.c.b16 %v3995, %v3994
        %v4009 = vpack.c.b16 %v3997, %v3996
        %v4010 = vpack.c.b16 %v3999, %v3998
        %v4011 = vpack.c.b16 %v4001, %v4000
        %v4012 = vpack.c.b16 %v4003, %v4002
        %v4013 = vpack.c.b16 %v4005, %v4004
        %4022 = vmatprep.subr.bf16.mxu0 0
        %4023 = vmatpush1.bf16.msra.mxu0 %v4006
        %4024 = vmatprep.subr.bf16.mxu0 0
        %4025 = vmatpush1.bf16.msra.mxu0 %v4007
        %4026 = vmatprep.subr.bf16.mxu0 0
        %4027 = vmatpush1.bf16.msra.mxu0 %v4008
        %4028 = vmatprep.subr.bf16.mxu0 0
        %4029 = vmatpush1.bf16.msra.mxu0 %v4009
        %4030 = vmatprep.subr.bf16.mxu0 0
        %4031 = vmatpush1.bf16.msra.mxu0 %v4010
        %4032 = vmatprep.subr.bf16.mxu0 0
        %4033 = vmatpush1.bf16.msra.mxu0 %v4011
        %4034 = vmatprep.subr.bf16.mxu0 0
        %4035 = vmatpush1.bf16.msra.mxu0 %v4012
        %4036 = vmatprep.subr.bf16.mxu0 0
        %4037 = vmatpush1.bf16.msra.mxu0 %v4013
        %4038 = vmatprep.subr.bf16.mxu0 0
        %4039 = vmatpush1.bf16.msra.mxu0 0
        %4040 = vmatprep.subr.bf16.mxu0 0
        %4041 = vmatpush1.bf16.msra.mxu0 0
        %4042 = vmatprep.subr.bf16.mxu0 0
        %4043 = vmatpush1.bf16.msra.mxu0 0
        %4044 = vmatprep.subr.bf16.mxu0 0
        %4045 = vmatpush1.bf16.msra.mxu0 0
        %4046 = vmatprep.subr.bf16.mxu0 0
        %4047 = vmatpush1.bf16.msra.mxu0 0
        %4048 = vmatprep.subr.bf16.mxu0 0
        %4049 = vmatpush1.bf16.msra.mxu0 0
        %4050 = vmatprep.subr.bf16.mxu0 0
        %4051 = vmatpush1.bf16.msra.mxu0 0
        %4052 = vmatprep.subr.bf16.mxu0 0
        %4053 = vmatpush1.bf16.msra.mxu0 0
        %4054 = vmatprep.mubr.bf16.mxu0 0
        %4055 = vmatmul.mubr.bf16.gmra.mrb[0].mxu0 %v3965
        %v4056 = vpop.f32.mrb[0].mxu0
        %v4057 = vadd.f32 %v3973, %v4056
        %v4058 = vpop.f32.mrb[0].mxu0
        %v4059 = vpop.f32.mrb[0].mxu0
        %v4060 = vadd.f32 %v3973, %v4059
        %v4061 = vpop.f32.mrb[0].mxu0
        %4062 = vmatprep.mubr.bf16.mxu0 0
        %4063 = vmatmul.mubr.bf16.gmra.mrb[0].mxu0 %v3966
        %v4064 = vpop.f32.mrb[0].mxu0
        %v4065 = vadd.f32 %v3973, %v4064
        %v4066 = vpop.f32.mrb[0].mxu0
        %v4067 = vpop.f32.mrb[0].mxu0
        %v4068 = vadd.f32 %v3973, %v4067
        %v4069 = vpop.f32.mrb[0].mxu0
        %4070 = vmatprep.mubr.bf16.mxu0 0
        %4071 = vmatmul.mubr.bf16.gmra.mrb[0].mxu0 %v3967
        %v4072 = vpop.f32.mrb[0].mxu0
        %v4073 = vadd.f32 %v3973, %v4072
        %v4074 = vpop.f32.mrb[0].mxu0
        %v4075 = vpop.f32.mrb[0].mxu0
        %v4076 = vadd.f32 %v3973, %v4075
        %v4077 = vpop.f32.mrb[0].mxu0
        %4078 = vmatprep.mubr.bf16.mxu0 0
        %4079 = vmatmul.mubr.bf16.gmra.mrb[0].mxu0 %v3968
        %v4080 = vpop.f32.mrb[0].mxu0
        %v4081 = vadd.f32 %v3973, %v4080
        %v4082 = vpop.f32.mrb[0].mxu0
        %v4083 = vpop.f32.mrb[0].mxu0
        %v4084 = vadd.f32 %v3973, %v4083
        %v4085 = vpop.f32.mrb[0].mxu0
        %4086 = vmatprep.mubr.bf16.mxu0 0
        %4087 = vmatmul.mubr.bf16.gmra.mrb[0].mxu0 %v3969
        %v4088 = vpop.f32.mrb[0].mxu0
        %v4089 = vadd.f32 %v3973, %v4088
        %v4090 = vpop.f32.mrb[0].mxu0
        %v4091 = vpop.f32.mrb[0].mxu0
        %v4092 = vadd.f32 %v3973, %v4091
        %v4093 = vpop.f32.mrb[0].mxu0
        %4094 = vmatprep.mubr.bf16.mxu0 0
        %4095 = vmatmul.mubr.bf16.gmra.mrb[0].mxu0 %v3970
        %v4096 = vpop.f32.mrb[0].mxu0
        %v4097 = vadd.f32 %v3973, %v4096
        %v4098 = vpop.f32.mrb[0].mxu0
        %v4099 = vpop.f32.mrb[0].mxu0
        %v4100 = vadd.f32 %v3973, %v4099
        %v4101 = vpop.f32.mrb[0].mxu0
        %4102 = vmatprep.mubr.bf16.mxu0 0
        %4103 = vmatmul.mubr.bf16.gmra.mrb[0].mxu0 %v3971
        %v4104 = vpop.f32.mrb[0].mxu0
        %v4105 = vadd.f32 %v3973, %v4104
        %v4106 = vpop.f32.mrb[0].mxu0
        %v4107 = vpop.f32.mrb[0].mxu0
        %v4108 = vadd.f32 %v3973, %v4107
        %v4109 = vpop.f32.mrb[0].mxu0
        %4110 = vmatprep.mubr.bf16.mxu0 0
        %4111 = vmatmul.mubr.bf16.gmra.mrb[0].mxu0 %v3972
        %v4112 = vpop.f32.mrb[0].mxu0
        %v4113 = vadd.f32 %v3973, %v4112
        %v4114 = vpop.f32.mrb[0].mxu0
        %v4115 = vpop.f32.mrb[0].mxu0
        %v4116 = vadd.f32 %v3973, %v4115
        %v4117 = vpop.f32.mrb[0].mxu0
        %4118 = vdwg.mxu0
        %v4119 = vld [vmem:[#allocation5 + $0x6a0] sm:$0xf]
        %v4120 = vld [vmem:[#allocation5 + $0x6a8] sm:$0xf]
        %v4121 = vld [vmem:[#allocation5 + $0x6b0] sm:$0xf]
        %v4122 = vld [vmem:[#allocation5 + $0x6b8] sm:$0xf]
        %v4123 = vld [vmem:[#allocation5 + $0x6c0] sm:$0xf]
        %v4124 = vld [vmem:[#allocation5 + $0x6c8] sm:$0xf]
        %v4125 = vld [vmem:[#allocation5 + $0x6d0] sm:$0xf]
        %v4126 = vld [vmem:[#allocation5 + $0x6d8] sm:$0xf]
        %v4127 = vld [vmem:[#allocation5 + $0x6e0] sm:$0xf]
        %v4128 = vld [vmem:[#allocation5 + $0x6e8] sm:$0xf]
        %v4129 = vld [vmem:[#allocation5 + $0x6f0] sm:$0xf]
        %v4130 = vld [vmem:[#allocation5 + $0x6f8] sm:$0xf]
        %v4131 = vld [vmem:[#allocation5 + $0x700] sm:$0xf]
        %v4132 = vld [vmem:[#allocation5 + $0x708] sm:$0xf]
        %v4133 = vld [vmem:[#allocation5 + $0x710] sm:$0xf]
        %v4134 = vld [vmem:[#allocation5 + $0x718] sm:$0xf]
        %v4135 = vpack.c.bf16 %v4060, %v4057
        %v4136 = vpack.c.bf16 %v4068, %v4065
        %v4137 = vpack.c.bf16 %v4076, %v4073
        %v4138 = vpack.c.bf16 %v4084, %v4081
        %v4139 = vpack.c.bf16 %v4092, %v4089
        %v4140 = vpack.c.bf16 %v4100, %v4097
        %v4141 = vpack.c.bf16 %v4108, %v4105
        %v4142 = vpack.c.bf16 %v4116, %v4113
        %v4143 = vld [vmem:[#allocation5 + $0x720] sm:$0xf]
        %v4144 = vld [vmem:[#allocation5 + $0x728] sm:$0xf]
        %v4145 = vld [vmem:[#allocation5 + $0x730] sm:$0xf]
        %v4146 = vld [vmem:[#allocation5 + $0x738] sm:$0xf]
        %v4147 = vld [vmem:[#allocation5 + $0x740] sm:$0xf]
        %v4148 = vld [vmem:[#allocation5 + $0x748] sm:$0xf]
        %v4149 = vld [vmem:[#allocation5 + $0x750] sm:$0xf]
        %v4150 = vld [vmem:[#allocation5 + $0x758] sm:$0xf]
        %v4151 = vld [vmem:[#allocation5 + $0x760] sm:$0xf]
        %v4152 = vld [vmem:[#allocation5 + $0x768] sm:$0xf]
        %v4153 = vld [vmem:[#allocation5 + $0x770] sm:$0xf]
        %v4154 = vld [vmem:[#allocation5 + $0x778] sm:$0xf]
        %v4155 = vld [vmem:[#allocation5 + $0x780] sm:$0xf]
        %v4156 = vld [vmem:[#allocation5 + $0x788] sm:$0xf]
        %v4157 = vld [vmem:[#allocation5 + $0x790] sm:$0xf]
        %v4158 = vld [vmem:[#allocation5 + $0x798] sm:$0xf]
        %v4159 = vld [vmem:[#allocation5 + $0x7a0] sm:$0xf]
        %v4160 = vld [vmem:[#allocation5 + $0x7a8] sm:$0xf]
        %v4161 = vld [vmem:[#allocation5 + $0x7b0] sm:$0xf]
        %v4162 = vld [vmem:[#allocation5 + $0x7b8] sm:$0xf]
        %v4163 = vld [vmem:[#allocation5 + $0x7c0] sm:$0xf]
        %v4164 = vld [vmem:[#allocation5 + $0x7c8] sm:$0xf]
        %v4165 = vld [vmem:[#allocation5 + $0x7d0] sm:$0xf]
        %v4166 = vld [vmem:[#allocation5 + $0x7d8] sm:$0xf]
        %v4167 = vld [vmem:[#allocation5 + $0x7e0] sm:$0xf]
        %v4168 = vld [vmem:[#allocation5 + $0x7e8] sm:$0xf]
        %v4169 = vld [vmem:[#allocation5 + $0x7f0] sm:$0xf]
        %v4170 = vld [vmem:[#allocation5 + $0x7f8] sm:$0xf]
        %v4171 = vld [vmem:[#allocation5 + $0x800] sm:$0xf]
        %v4172 = vld [vmem:[#allocation5 + $0x808] sm:$0xf]
        %v4173 = vld [vmem:[#allocation5 + $0x810] sm:$0xf]
        %v4174 = vld [vmem:[#allocation5 + $0x818] sm:$0xf]
        %v4207 = vunpack.c.l.b16 %v4143
        %v4208 = vunpack.c.l.b16 %v4144
        %v4209 = vunpack.c.l.b16 %v4145
        %v4210 = vunpack.c.l.b16 %v4146
        %v4211 = vunpack.c.l.b16 %v4147
        %v4212 = vunpack.c.l.b16 %v4148
        %v4213 = vunpack.c.l.b16 %v4149
        %v4214 = vunpack.c.l.b16 %v4150
        %v4215 = vunpack.c.l.b16 %v4151
        %v4216 = vunpack.c.l.b16 %v4152
        %v4217 = vunpack.c.l.b16 %v4153
        %v4218 = vunpack.c.l.b16 %v4154
        %v4219 = vunpack.c.l.b16 %v4155
        %v4220 = vunpack.c.l.b16 %v4156
        %v4221 = vunpack.c.l.b16 %v4157
        %v4222 = vunpack.c.l.b16 %v4158
        %v4223 = vunpack.c.l.b16 %v4159
        %v4224 = vunpack.c.l.b16 %v4160
        %v4225 = vunpack.c.l.b16 %v4161
        %v4226 = vunpack.c.l.b16 %v4162
        %v4227 = vunpack.c.l.b16 %v4163
        %v4228 = vunpack.c.l.b16 %v4164
        %v4229 = vunpack.c.l.b16 %v4165
        %v4230 = vunpack.c.l.b16 %v4166
        %v4231 = vunpack.c.l.b16 %v4167
        %v4232 = vunpack.c.l.b16 %v4168
        %v4233 = vunpack.c.l.b16 %v4169
        %v4234 = vunpack.c.l.b16 %v4170
        %v4235 = vunpack.c.l.b16 %v4171
        %v4236 = vunpack.c.l.b16 %v4172
        %v4237 = vunpack.c.l.b16 %v4173
        %v4238 = vunpack.c.l.b16 %v4174
        %v4239 = vpack.c.b16 %v4208, %v4207
        %v4240 = vpack.c.b16 %v4210, %v4209
        %v4241 = vpack.c.b16 %v4212, %v4211
        %v4242 = vpack.c.b16 %v4214, %v4213
        %v4243 = vpack.c.b16 %v4216, %v4215
        %v4244 = vpack.c.b16 %v4218, %v4217
        %v4245 = vpack.c.b16 %v4220, %v4219
        %v4246 = vpack.c.b16 %v4222, %v4221
        %v4247 = vpack.c.b16 %v4224, %v4223
        %v4248 = vpack.c.b16 %v4226, %v4225
        %v4249 = vpack.c.b16 %v4228, %v4227
        %v4250 = vpack.c.b16 %v4230, %v4229
        %v4251 = vpack.c.b16 %v4232, %v4231
        %v4252 = vpack.c.b16 %v4234, %v4233
        %v4253 = vpack.c.b16 %v4236, %v4235
        %v4254 = vpack.c.b16 %v4238, %v4237
        %4271 = vmatprep.subr.bf16.mxu0 0
        %4272 = vmatpush1.bf16.msra.mxu0 %v4239
        %4273 = vmatprep.subr.bf16.mxu0 0
        %4274 = vmatpush1.bf16.msra.mxu0 %v4240
        %4275 = vmatprep.subr.bf16.mxu0 0
        %4276 = vmatpush1.bf16.msra.mxu0 %v4241
        %4277 = vmatprep.subr.bf16.mxu0 0
        %4278 = vmatpush1.bf16.msra.mxu0 %v4242
        %4279 = vmatprep.subr.bf16.mxu0 0
        %4280 = vmatpush1.bf16.msra.mxu0 %v4243
        %4281 = vmatprep.subr.bf16.mxu0 0
        %4282 = vmatpush1.bf16.msra.mxu0 %v4244
        %4283 = vmatprep.subr.bf16.mxu0 0
        %4284 = vmatpush1.bf16.msra.mxu0 %v4245
        %4285 = vmatprep.subr.bf16.mxu0 0
        %4286 = vmatpush1.bf16.msra.mxu0 %v4246
        %4287 = vmatprep.subr.bf16.mxu0 0
        %4288 = vmatpush1.bf16.msra.mxu0 %v4247
        %4289 = vmatprep.subr.bf16.mxu0 0
        %4290 = vmatpush1.bf16.msra.mxu0 %v4248
        %4291 = vmatprep.subr.bf16.mxu0 0
        %4292 = vmatpush1.bf16.msra.mxu0 %v4249
        %4293 = vmatprep.subr.bf16.mxu0 0
        %4294 = vmatpush1.bf16.msra.mxu0 %v4250
        %4295 = vmatprep.subr.bf16.mxu0 0
        %4296 = vmatpush1.bf16.msra.mxu0 %v4251
        %4297 = vmatprep.subr.bf16.mxu0 0
        %4298 = vmatpush1.bf16.msra.mxu0 %v4252
        %4299 = vmatprep.subr.bf16.mxu0 0
        %4300 = vmatpush1.bf16.msra.mxu0 %v4253
        %4301 = vmatprep.subr.bf16.mxu0 0
        %4302 = vmatpush1.bf16.msra.mxu0 %v4254
        %4303 = vmatprep.mubr.bf16.mxu0 %v1977
        %4304 = vmatmul.mubr.bf16.gmra.mrb[0].mxu0 %v1976
        %v4305 = vpop.f32.mrb[0].mxu0
        %v4306 = vadd.f32 0.0, %v4305
        %v4307 = vpop.f32.mrb[0].mxu0
        %v4308 = vpop.f32.mrb[0].mxu0
        %v4309 = vadd.f32 0.0, %v4308
        %v4310 = vpop.f32.mrb[0].mxu0
        %4311 = vmatprep.mubr.bf16.mxu0 %v1979
        %4312 = vmatmul.mubr.bf16.gmra.mrb[0].mxu0 %v1978
        %v4313 = vpop.f32.mrb[0].mxu0
        %v4314 = vadd.f32 0.0, %v4313
        %v4315 = vpop.f32.mrb[0].mxu0
        %v4316 = vpop.f32.mrb[0].mxu0
        %v4317 = vadd.f32 0.0, %v4316
        %v4318 = vpop.f32.mrb[0].mxu0
        %4319 = vmatprep.mubr.bf16.mxu0 %v1981
        %4320 = vmatmul.mubr.bf16.gmra.mrb[0].mxu0 %v1980
        %v4321 = vpop.f32.mrb[0].mxu0
        %v4322 = vadd.f32 0.0, %v4321
        %v4323 = vpop.f32.mrb[0].mxu0
        %v4324 = vpop.f32.mrb[0].mxu0
        %v4325 = vadd.f32 0.0, %v4324
        %v4326 = vpop.f32.mrb[0].mxu0
        %4327 = vmatprep.mubr.bf16.mxu0 %v1983
        %4328 = vmatmul.mubr.bf16.gmra.mrb[0].mxu0 %v1982
        %v4329 = vpop.f32.mrb[0].mxu0
        %v4330 = vadd.f32 0.0, %v4329
        %v4331 = vpop.f32.mrb[0].mxu0
        %v4332 = vpop.f32.mrb[0].mxu0
        %v4333 = vadd.f32 0.0, %v4332
        %v4334 = vpop.f32.mrb[0].mxu0
        %4335 = vmatprep.mubr.bf16.mxu0 %v1985
        %4336 = vmatmul.mubr.bf16.gmra.mrb[0].mxu0 %v1984
        %v4337 = vpop.f32.mrb[0].mxu0
        %v4338 = vadd.f32 0.0, %v4337
        %v4339 = vpop.f32.mrb[0].mxu0
        %v4340 = vpop.f32.mrb[0].mxu0
        %v4341 = vadd.f32 0.0, %v4340
        %v4342 = vpop.f32.mrb[0].mxu0
        %4343 = vmatprep.mubr.bf16.mxu0 %v1987
        %4344 = vmatmul.mubr.bf16.gmra.mrb[0].mxu0 %v1986
        %v4345 = vpop.f32.mrb[0].mxu0
        %v4346 = vadd.f32 0.0, %v4345
        %v4347 = vpop.f32.mrb[0].mxu0
        %v4348 = vpop.f32.mrb[0].mxu0
        %v4349 = vadd.f32 0.0, %v4348
        %v4350 = vpop.f32.mrb[0].mxu0
        %4351 = vmatprep.mubr.bf16.mxu0 %v1989
        %4352 = vmatmul.mubr.bf16.gmra.mrb[0].mxu0 %v1988
        %v4353 = vpop.f32.mrb[0].mxu0
        %v4354 = vadd.f32 0.0, %v4353
        %v4355 = vpop.f32.mrb[0].mxu0
        %v4356 = vpop.f32.mrb[0].mxu0
        %v4357 = vadd.f32 0.0, %v4356
        %v4358 = vpop.f32.mrb[0].mxu0
        %4359 = vmatprep.mubr.bf16.mxu0 %v1991
        %4360 = vmatmul.mubr.bf16.gmra.mrb[0].mxu0 %v1990
        %v4361 = vpop.f32.mrb[0].mxu0
        %v4362 = vadd.f32 0.0, %v4361
        %v4363 = vpop.f32.mrb[0].mxu0
        %v4364 = vpop.f32.mrb[0].mxu0
        %v4365 = vadd.f32 0.0, %v4364
        %v4366 = vpop.f32.mrb[0].mxu0
        %4367 = vdwg.mxu0
        %v4384 = vunpack.c.l.b16 %v4119
        %v4385 = vunpack.c.l.b16 %v4120
        %v4386 = vunpack.c.l.b16 %v4121
        %v4387 = vunpack.c.l.b16 %v4122
        %v4388 = vunpack.c.l.b16 %v4123
        %v4389 = vunpack.c.l.b16 %v4124
        %v4390 = vunpack.c.l.b16 %v4125
        %v4391 = vunpack.c.l.b16 %v4126
        %v4392 = vunpack.c.l.b16 %v4127
        %v4393 = vunpack.c.l.b16 %v4128
        %v4394 = vunpack.c.l.b16 %v4129
        %v4395 = vunpack.c.l.b16 %v4130
        %v4396 = vunpack.c.l.b16 %v4131
        %v4397 = vunpack.c.l.b16 %v4132
        %v4398 = vunpack.c.l.b16 %v4133
        %v4399 = vunpack.c.l.b16 %v4134
        %v4400 = vpack.c.b16 %v4385, %v4384
        %v4401 = vpack.c.b16 %v4387, %v4386
        %v4402 = vpack.c.b16 %v4389, %v4388
        %v4403 = vpack.c.b16 %v4391, %v4390
        %v4404 = vpack.c.b16 %v4393, %v4392
        %v4405 = vpack.c.b16 %v4395, %v4394
        %v4406 = vpack.c.b16 %v4397, %v4396
        %v4407 = vpack.c.b16 %v4399, %v4398
        %4416 = vmatprep.subr.bf16.mxu0 0
        %4417 = vmatpush1.bf16.msra.mxu0 %v4400
        %4418 = vmatprep.subr.bf16.mxu0 0
        %4419 = vmatpush1.bf16.msra.mxu0 %v4401
        %4420 = vmatprep.subr.bf16.mxu0 0
        %4421 = vmatpush1.bf16.msra.mxu0 %v4402
        %4422 = vmatprep.subr.bf16.mxu0 0
        %4423 = vmatpush1.bf16.msra.mxu0 %v4403
        %4424 = vmatprep.subr.bf16.mxu0 0
        %4425 = vmatpush1.bf16.msra.mxu0 %v4404
        %4426 = vmatprep.subr.bf16.mxu0 0
        %4427 = vmatpush1.bf16.msra.mxu0 %v4405
        %4428 = vmatprep.subr.bf16.mxu0 0
        %4429 = vmatpush1.bf16.msra.mxu0 %v4406
        %4430 = vmatprep.subr.bf16.mxu0 0
        %4431 = vmatpush1.bf16.msra.mxu0 %v4407
        %4432 = vmatprep.subr.bf16.mxu0 0
        %4433 = vmatpush1.bf16.msra.mxu0 0
        %4434 = vmatprep.subr.bf16.mxu0 0
        %4435 = vmatpush1.bf16.msra.mxu0 0
        %4436 = vmatprep.subr.bf16.mxu0 0
        %4437 = vmatpush1.bf16.msra.mxu0 0
        %4438 = vmatprep.subr.bf16.mxu0 0
        %4439 = vmatpush1.bf16.msra.mxu0 0
        %4440 = vmatprep.subr.bf16.mxu0 0
        %4441 = vmatpush1.bf16.msra.mxu0 0
        %4442 = vmatprep.subr.bf16.mxu0 0
        %4443 = vmatpush1.bf16.msra.mxu0 0
        %4444 = vmatprep.subr.bf16.mxu0 0
        %4445 = vmatpush1.bf16.msra.mxu0 0
        %4446 = vmatprep.subr.bf16.mxu0 0
        %4447 = vmatpush1.bf16.msra.mxu0 0
        %4448 = vmatprep.mubr.bf16.mxu0 0
        %4449 = vmatmul.mubr.bf16.gmra.mrb[0].mxu0 %v4135
        %v4450 = vpop.f32.mrb[0].mxu0
        %v4451 = vadd.f32 %v4306, %v4450
        %v4452 = vpop.f32.mrb[0].mxu0
        %v4453 = vpop.f32.mrb[0].mxu0
        %v4454 = vadd.f32 %v4309, %v4453
        %v4455 = vpop.f32.mrb[0].mxu0
        %4456 = vmatprep.mubr.bf16.mxu0 0
        %4457 = vmatmul.mubr.bf16.gmra.mrb[0].mxu0 %v4136
        %v4458 = vpop.f32.mrb[0].mxu0
        %v4459 = vadd.f32 %v4314, %v4458
        %v4460 = vpop.f32.mrb[0].mxu0
        %v4461 = vpop.f32.mrb[0].mxu0
        %v4462 = vadd.f32 %v4317, %v4461
        %v4463 = vpop.f32.mrb[0].mxu0
        %4464 = vmatprep.mubr.bf16.mxu0 0
        %4465 = vmatmul.mubr.bf16.gmra.mrb[0].mxu0 %v4137
        %v4466 = vpop.f32.mrb[0].mxu0
        %v4467 = vadd.f32 %v4322, %v4466
        %v4468 = vpop.f32.mrb[0].mxu0
        %v4469 = vpop.f32.mrb[0].mxu0
        %v4470 = vadd.f32 %v4325, %v4469
        %v4471 = vpop.f32.mrb[0].mxu0
        %4472 = vmatprep.mubr.bf16.mxu0 0
        %4473 = vmatmul.mubr.bf16.gmra.mrb[0].mxu0 %v4138
        %v4474 = vpop.f32.mrb[0].mxu0
        %v4475 = vadd.f32 %v4330, %v4474
        %v4476 = vpop.f32.mrb[0].mxu0
        %v4477 = vpop.f32.mrb[0].mxu0
        %v4478 = vadd.f32 %v4333, %v4477
        %v4479 = vpop.f32.mrb[0].mxu0
        %4480 = vmatprep.mubr.bf16.mxu0 0
        %4481 = vmatmul.mubr.bf16.gmra.mrb[0].mxu0 %v4139
        %v4482 = vpop.f32.mrb[0].mxu0
        %v4483 = vadd.f32 %v4338, %v4482
        %v4484 = vpop.f32.mrb[0].mxu0
        %v4485 = vpop.f32.mrb[0].mxu0
        %v4486 = vadd.f32 %v4341, %v4485
        %v4487 = vpop.f32.mrb[0].mxu0
        %4488 = vmatprep.mubr.bf16.mxu0 0
        %4489 = vmatmul.mubr.bf16.gmra.mrb[0].mxu0 %v4140
        %v4490 = vpop.f32.mrb[0].mxu0
        %v4491 = vadd.f32 %v4346, %v4490
        %v4492 = vpop.f32.mrb[0].mxu0
        %v4493 = vpop.f32.mrb[0].mxu0
        %v4494 = vadd.f32 %v4349, %v4493
        %v4495 = vpop.f32.mrb[0].mxu0
        %4496 = vmatprep.mubr.bf16.mxu0 0
        %4497 = vmatmul.mubr.bf16.gmra.mrb[0].mxu0 %v4141
        %v4498 = vpop.f32.mrb[0].mxu0
        %v4499 = vadd.f32 %v4354, %v4498
        %v4500 = vpop.f32.mrb[0].mxu0
        %v4501 = vpop.f32.mrb[0].mxu0
        %v4502 = vadd.f32 %v4357, %v4501
        %v4503 = vpop.f32.mrb[0].mxu0
        %4504 = vmatprep.mubr.bf16.mxu0 0
        %4505 = vmatmul.mubr.bf16.gmra.mrb[0].mxu0 %v4142
        %v4506 = vpop.f32.mrb[0].mxu0
        %v4507 = vadd.f32 %v4362, %v4506
        %v4508 = vpop.f32.mrb[0].mxu0
        %v4509 = vpop.f32.mrb[0].mxu0
        %v4510 = vadd.f32 %v4365, %v4509
        %v4511 = vpop.f32.mrb[0].mxu0
        %4512 = vdwg.mxu0
        %v4513 = vld [vmem:[#allocation7 + $0x12] ss:$0 sm:$0xff]
        %v4514 = vadd.f32 %v4451, %v4513
        %v4515 = vadd.f32 %v4454, %v4513
        %v4516 = vadd.f32 %v4459, %v4513
        %v4517 = vadd.f32 %v4462, %v4513
        %v4518 = vadd.f32 %v4467, %v4513
        %v4519 = vadd.f32 %v4470, %v4513
        %v4520 = vadd.f32 %v4475, %v4513
        %v4521 = vadd.f32 %v4478, %v4513
        %v4522 = vadd.f32 %v4483, %v4513
        %v4523 = vadd.f32 %v4486, %v4513
        %v4524 = vadd.f32 %v4491, %v4513
        %v4525 = vadd.f32 %v4494, %v4513
        %v4526 = vadd.f32 %v4499, %v4513
        %v4527 = vadd.f32 %v4502, %v4513
        %v4528 = vadd.f32 %v4507, %v4513
        %v4529 = vadd.f32 %v4510, %v4513
        %vm4530 = vcmp.gt.f32.partialorder %v4514, 0.0
        %vm4531 = vcmp.gt.f32.partialorder %v4515, 0.0
        %vm4532 = vcmp.gt.f32.partialorder %v4516, 0.0
        %vm4533 = vcmp.gt.f32.partialorder %v4517, 0.0
        %vm4534 = vcmp.gt.f32.partialorder %v4518, 0.0
        %vm4535 = vcmp.gt.f32.partialorder %v4519, 0.0
        %vm4536 = vcmp.gt.f32.partialorder %v4520, 0.0
        %vm4537 = vcmp.gt.f32.partialorder %v4521, 0.0
        %vm4538 = vcmp.gt.f32.partialorder %v4522, 0.0
        %vm4539 = vcmp.gt.f32.partialorder %v4523, 0.0
        %vm4540 = vcmp.gt.f32.partialorder %v4524, 0.0
        %vm4541 = vcmp.gt.f32.partialorder %v4525, 0.0
        %vm4542 = vcmp.gt.f32.partialorder %v4526, 0.0
        %vm4543 = vcmp.gt.f32.partialorder %v4527, 0.0
        %vm4544 = vcmp.gt.f32.partialorder %v4528, 0.0
        %vm4545 = vcmp.gt.f32.partialorder %v4529, 0.0
        %v4546 = vmul.f32 %v4514, 0.1
        %v4547 = vmul.f32 %v4515, 0.1
        %v4548 = vmul.f32 %v4516, 0.1
        %v4549 = vmul.f32 %v4517, 0.1
        %v4550 = vmul.f32 %v4518, 0.1
        %v4551 = vmul.f32 %v4519, 0.1
        %v4552 = vmul.f32 %v4520, 0.1
        %v4553 = vmul.f32 %v4521, 0.1
        %v4554 = vmul.f32 %v4522, 0.1
        %v4555 = vmul.f32 %v4523, 0.1
        %v4556 = vmul.f32 %v4524, 0.1
        %v4557 = vmul.f32 %v4525, 0.1
        %v4558 = vmul.f32 %v4526, 0.1
        %v4559 = vmul.f32 %v4527, 0.1
        %v4560 = vmul.f32 %v4528, 0.1
        %v4561 = vmul.f32 %v4529, 0.1
        %v4562 = vsel %vm4530, %v4514, %v4546
        %v4563 = vsel %vm4531, %v4515, %v4547
        %v4564 = vsel %vm4532, %v4516, %v4548
        %v4565 = vsel %vm4533, %v4517, %v4549
        %v4566 = vsel %vm4534, %v4518, %v4550
        %v4567 = vsel %vm4535, %v4519, %v4551
        %v4568 = vsel %vm4536, %v4520, %v4552
        %v4569 = vsel %vm4537, %v4521, %v4553
        %v4570 = vsel %vm4538, %v4522, %v4554
        %v4571 = vsel %vm4539, %v4523, %v4555
        %v4572 = vsel %vm4540, %v4524, %v4556
        %v4573 = vsel %vm4541, %v4525, %v4557
        %v4574 = vsel %vm4542, %v4526, %v4558
        %v4575 = vsel %vm4543, %v4527, %v4559
        %v4576 = vsel %vm4544, %v4528, %v4560
        %v4577 = vsel %vm4545, %v4529, %v4561
        %v4578 = vld [vmem:[%s269 + $0x11] ss:$0 sm:$0xff]
        %v4579 = vld [vmem:[%s269 + $0x34] ss:$0 sm:$0xff]
        %v4580 = vadd.f32 %v4578, 1.0
        %v4581 = vmul.f32 %v4562, %v4580
        %v4582 = vmul.f32 %v4563, %v4580
        %v4583 = vmul.f32 %v4564, %v4580
        %v4584 = vmul.f32 %v4565, %v4580
        %v4585 = vmul.f32 %v4566, %v4580
        %v4586 = vmul.f32 %v4567, %v4580
        %v4587 = vmul.f32 %v4568, %v4580
        %v4588 = vmul.f32 %v4569, %v4580
        %v4589 = vadd.f32 %v4581, %v4579
        %v4590 = vadd.f32 %v4582, %v4579
        %v4591 = vadd.f32 %v4583, %v4579
        %v4592 = vadd.f32 %v4584, %v4579
        %v4593 = vadd.f32 %v4585, %v4579
        %v4594 = vadd.f32 %v4586, %v4579
        %v4595 = vadd.f32 %v4587, %v4579
        %v4596 = vadd.f32 %v4588, %v4579
        %v4597 = vld [vmem:[%s526 + $0x11] ss:$0 sm:$0xff]
        %v4598 = vld [vmem:[%s526 + $0x34] ss:$0 sm:$0xff]
        %v4599 = vadd.f32 %v4597, 1.0
        %v4600 = vmul.f32 %v4570, %v4599
        %v4601 = vmul.f32 %v4571, %v4599
        %v4602 = vmul.f32 %v4572, %v4599
        %v4603 = vmul.f32 %v4573, %v4599
        %v4604 = vmul.f32 %v4574, %v4599
        %v4605 = vmul.f32 %v4575, %v4599
        %v4606 = vmul.f32 %v4576, %v4599
        %v4607 = vmul.f32 %v4577, %v4599
        %v4608 = vadd.f32 %v4600, %v4598
        %v4609 = vadd.f32 %v4601, %v4598
        %v4610 = vadd.f32 %v4602, %v4598
        %v4611 = vadd.f32 %v4603, %v4598
        %v4612 = vadd.f32 %v4604, %v4598
        %v4613 = vadd.f32 %v4605, %v4598
        %v4614 = vadd.f32 %v4606, %v4598
        %v4615 = vadd.f32 %v4607, %v4598
        %v4616 = vld [vmem:[#allocation5 + $0x820] sm:$0xf]
        %v4617 = vld [vmem:[#allocation5 + $0x828] sm:$0xf]
        %v4618 = vld [vmem:[#allocation5 + $0x830] sm:$0xf]
        %v4619 = vld [vmem:[#allocation5 + $0x838] sm:$0xf]
        %v4620 = vld [vmem:[#allocation5 + $0x840] sm:$0xf]
        %v4621 = vld [vmem:[#allocation5 + $0x848] sm:$0xf]
        %v4622 = vld [vmem:[#allocation5 + $0x850] sm:$0xf]
        %v4623 = vld [vmem:[#allocation5 + $0x858] sm:$0xf]
        %v4624 = vld [vmem:[#allocation5 + $0x860] sm:$0xf]
        %v4625 = vld [vmem:[#allocation5 + $0x868] sm:$0xf]
        %v4626 = vld [vmem:[#allocation5 + $0x870] sm:$0xf]
        %v4627 = vld [vmem:[#allocation5 + $0x878] sm:$0xf]
        %v4628 = vld [vmem:[#allocation5 + $0x880] sm:$0xf]
        %v4629 = vld [vmem:[#allocation5 + $0x888] sm:$0xf]
        %v4630 = vld [vmem:[#allocation5 + $0x890] sm:$0xf]
        %v4631 = vld [vmem:[#allocation5 + $0x898] sm:$0xf]
        %v4632 = vpack.c.bf16 %v4590, %v4589
        %v4633 = vpack.c.bf16 %v4592, %v4591
        %v4634 = vpack.c.bf16 %v4594, %v4593
        %v4635 = vpack.c.bf16 %v4596, %v4595
        %v4636 = vpack.c.bf16 %v4609, %v4608
        %v4637 = vpack.c.bf16 %v4611, %v4610
        %v4638 = vpack.c.bf16 %v4613, %v4612
        %v4639 = vpack.c.bf16 %v4615, %v4614
        %v4640 = vld [vmem:[#allocation7 + $0x13] ss:$0 sm:$0xff]
        %v4657 = vunpack.c.l.b16 %v4616
        %v4658 = vunpack.c.l.b16 %v4617
        %v4659 = vunpack.c.l.b16 %v4618
        %v4660 = vunpack.c.l.b16 %v4619
        %v4661 = vunpack.c.l.b16 %v4620
        %v4662 = vunpack.c.l.b16 %v4621
        %v4663 = vunpack.c.l.b16 %v4622
        %v4664 = vunpack.c.l.b16 %v4623
        %v4665 = vunpack.c.l.b16 %v4624
        %v4666 = vunpack.c.l.b16 %v4625
        %v4667 = vunpack.c.l.b16 %v4626
        %v4668 = vunpack.c.l.b16 %v4627
        %v4669 = vunpack.c.l.b16 %v4628
        %v4670 = vunpack.c.l.b16 %v4629
        %v4671 = vunpack.c.l.b16 %v4630
        %v4672 = vunpack.c.l.b16 %v4631
        %v4673 = vpack.c.b16 %v4658, %v4657
        %v4674 = vpack.c.b16 %v4660, %v4659
        %v4675 = vpack.c.b16 %v4662, %v4661
        %v4676 = vpack.c.b16 %v4664, %v4663
        %v4677 = vpack.c.b16 %v4666, %v4665
        %v4678 = vpack.c.b16 %v4668, %v4667
        %v4679 = vpack.c.b16 %v4670, %v4669
        %v4680 = vpack.c.b16 %v4672, %v4671
        %4689 = vmatprep.subr.bf16.mxu0 0
        %4690 = vmatpush1.bf16.msra.mxu0 %v4673
        %4691 = vmatprep.subr.bf16.mxu0 0
        %4692 = vmatpush1.bf16.msra.mxu0 %v4674
        %4693 = vmatprep.subr.bf16.mxu0 0
        %4694 = vmatpush1.bf16.msra.mxu0 %v4675
        %4695 = vmatprep.subr.bf16.mxu0 0
        %4696 = vmatpush1.bf16.msra.mxu0 %v4676
        %4697 = vmatprep.subr.bf16.mxu0 0
        %4698 = vmatpush1.bf16.msra.mxu0 %v4677
        %4699 = vmatprep.subr.bf16.mxu0 0
        %4700 = vmatpush1.bf16.msra.mxu0 %v4678
        %4701 = vmatprep.subr.bf16.mxu0 0
        %4702 = vmatpush1.bf16.msra.mxu0 %v4679
        %4703 = vmatprep.subr.bf16.mxu0 0
        %4704 = vmatpush1.bf16.msra.mxu0 %v4680
        %4705 = vmatprep.subr.bf16.mxu0 0
        %4706 = vmatpush1.bf16.msra.mxu0 0
        %4707 = vmatprep.subr.bf16.mxu0 0
        %4708 = vmatpush1.bf16.msra.mxu0 0
        %4709 = vmatprep.subr.bf16.mxu0 0
        %4710 = vmatpush1.bf16.msra.mxu0 0
        %4711 = vmatprep.subr.bf16.mxu0 0
        %4712 = vmatpush1.bf16.msra.mxu0 0
        %4713 = vmatprep.subr.bf16.mxu0 0
        %4714 = vmatpush1.bf16.msra.mxu0 0
        %4715 = vmatprep.subr.bf16.mxu0 0
        %4716 = vmatpush1.bf16.msra.mxu0 0
        %4717 = vmatprep.subr.bf16.mxu0 0
        %4718 = vmatpush1.bf16.msra.mxu0 0
        %4719 = vmatprep.subr.bf16.mxu0 0
        %4720 = vmatpush1.bf16.msra.mxu0 0
        %4721 = vmatprep.mubr.bf16.mxu0 0
        %4722 = vmatmul.mubr.bf16.gmra.mrb[0].mxu0 %v4632
        %v4723 = vpop.f32.mrb[0].mxu0
        %v4724 = vadd.f32 %v4640, %v4723
        %v4725 = vpop.f32.mrb[0].mxu0
        %v4726 = vpop.f32.mrb[0].mxu0
        %v4727 = vadd.f32 %v4640, %v4726
        %v4728 = vpop.f32.mrb[0].mxu0
        %4729 = vmatprep.mubr.bf16.mxu0 0
        %4730 = vmatmul.mubr.bf16.gmra.mrb[0].mxu0 %v4633
        %v4731 = vpop.f32.mrb[0].mxu0
        %v4732 = vadd.f32 %v4640, %v4731
        %v4733 = vpop.f32.mrb[0].mxu0
        %v4734 = vpop.f32.mrb[0].mxu0
        %v4735 = vadd.f32 %v4640, %v4734
        %v4736 = vpop.f32.mrb[0].mxu0
        %4737 = vmatprep.mubr.bf16.mxu0 0
        %4738 = vmatmul.mubr.bf16.gmra.mrb[0].mxu0 %v4634
        %v4739 = vpop.f32.mrb[0].mxu0
        %v4740 = vadd.f32 %v4640, %v4739
        %v4741 = vpop.f32.mrb[0].mxu0
        %v4742 = vpop.f32.mrb[0].mxu0
        %v4743 = vadd.f32 %v4640, %v4742
        %v4744 = vpop.f32.mrb[0].mxu0
        %4745 = vmatprep.mubr.bf16.mxu0 0
        %4746 = vmatmul.mubr.bf16.gmra.mrb[0].mxu0 %v4635
        %v4747 = vpop.f32.mrb[0].mxu0
        %v4748 = vadd.f32 %v4640, %v4747
        %v4749 = vpop.f32.mrb[0].mxu0
        %v4750 = vpop.f32.mrb[0].mxu0
        %v4751 = vadd.f32 %v4640, %v4750
        %v4752 = vpop.f32.mrb[0].mxu0
        %4753 = vmatprep.mubr.bf16.mxu0 0
        %4754 = vmatmul.mubr.bf16.gmra.mrb[0].mxu0 %v4636
        %v4755 = vpop.f32.mrb[0].mxu0
        %v4756 = vadd.f32 %v4640, %v4755
        %v4757 = vpop.f32.mrb[0].mxu0
        %v4758 = vpop.f32.mrb[0].mxu0
        %v4759 = vadd.f32 %v4640, %v4758
        %v4760 = vpop.f32.mrb[0].mxu0
        %4761 = vmatprep.mubr.bf16.mxu0 0
        %4762 = vmatmul.mubr.bf16.gmra.mrb[0].mxu0 %v4637
        %v4763 = vpop.f32.mrb[0].mxu0
        %v4764 = vadd.f32 %v4640, %v4763
        %v4765 = vpop.f32.mrb[0].mxu0
        %v4766 = vpop.f32.mrb[0].mxu0
        %v4767 = vadd.f32 %v4640, %v4766
        %v4768 = vpop.f32.mrb[0].mxu0
        %4769 = vmatprep.mubr.bf16.mxu0 0
        %4770 = vmatmul.mubr.bf16.gmra.mrb[0].mxu0 %v4638
        %v4771 = vpop.f32.mrb[0].mxu0
        %v4772 = vadd.f32 %v4640, %v4771
        %v4773 = vpop.f32.mrb[0].mxu0
        %v4774 = vpop.f32.mrb[0].mxu0
        %v4775 = vadd.f32 %v4640, %v4774
        %v4776 = vpop.f32.mrb[0].mxu0
        %4777 = vmatprep.mubr.bf16.mxu0 0
        %4778 = vmatmul.mubr.bf16.gmra.mrb[0].mxu0 %v4639
        %v4779 = vpop.f32.mrb[0].mxu0
        %v4780 = vadd.f32 %v4640, %v4779
        %v4781 = vpop.f32.mrb[0].mxu0
        %v4782 = vpop.f32.mrb[0].mxu0
        %v4783 = vadd.f32 %v4640, %v4782
        %v4784 = vpop.f32.mrb[0].mxu0
        %4785 = vdwg.mxu0
        %vm4786 = vcmp.gt.f32.partialorder %v4724, 0.0
        %vm4787 = vcmp.gt.f32.partialorder %v4727, 0.0
        %vm4788 = vcmp.gt.f32.partialorder %v4732, 0.0
        %vm4789 = vcmp.gt.f32.partialorder %v4735, 0.0
        %vm4790 = vcmp.gt.f32.partialorder %v4740, 0.0
        %vm4791 = vcmp.gt.f32.partialorder %v4743, 0.0
        %vm4792 = vcmp.gt.f32.partialorder %v4748, 0.0
        %vm4793 = vcmp.gt.f32.partialorder %v4751, 0.0
        %vm4794 = vcmp.gt.f32.partialorder %v4756, 0.0
        %vm4795 = vcmp.gt.f32.partialorder %v4759, 0.0
        %vm4796 = vcmp.gt.f32.partialorder %v4764, 0.0
        %vm4797 = vcmp.gt.f32.partialorder %v4767, 0.0
        %vm4798 = vcmp.gt.f32.partialorder %v4772, 0.0
        %vm4799 = vcmp.gt.f32.partialorder %v4775, 0.0
        %vm4800 = vcmp.gt.f32.partialorder %v4780, 0.0
        %vm4801 = vcmp.gt.f32.partialorder %v4783, 0.0
        %v4802 = vmul.f32 %v4724, 0.1
        %v4803 = vmul.f32 %v4727, 0.1
        %v4804 = vmul.f32 %v4732, 0.1
        %v4805 = vmul.f32 %v4735, 0.1
        %v4806 = vmul.f32 %v4740, 0.1
        %v4807 = vmul.f32 %v4743, 0.1
        %v4808 = vmul.f32 %v4748, 0.1
        %v4809 = vmul.f32 %v4751, 0.1
        %v4810 = vmul.f32 %v4756, 0.1
        %v4811 = vmul.f32 %v4759, 0.1
        %v4812 = vmul.f32 %v4764, 0.1
        %v4813 = vmul.f32 %v4767, 0.1
        %v4814 = vmul.f32 %v4772, 0.1
        %v4815 = vmul.f32 %v4775, 0.1
        %v4816 = vmul.f32 %v4780, 0.1
        %v4817 = vmul.f32 %v4783, 0.1
        %v4818 = vsel %vm4786, %v4724, %v4802
        %v4819 = vsel %vm4787, %v4727, %v4803
        %v4820 = vsel %vm4788, %v4732, %v4804
        %v4821 = vsel %vm4789, %v4735, %v4805
        %v4822 = vsel %vm4790, %v4740, %v4806
        %v4823 = vsel %vm4791, %v4743, %v4807
        %v4824 = vsel %vm4792, %v4748, %v4808
        %v4825 = vsel %vm4793, %v4751, %v4809
        %v4826 = vsel %vm4794, %v4756, %v4810
        %v4827 = vsel %vm4795, %v4759, %v4811
        %v4828 = vsel %vm4796, %v4764, %v4812
        %v4829 = vsel %vm4797, %v4767, %v4813
        %v4830 = vsel %vm4798, %v4772, %v4814
        %v4831 = vsel %vm4799, %v4775, %v4815
        %v4832 = vsel %vm4800, %v4780, %v4816
        %v4833 = vsel %vm4801, %v4783, %v4817
        %v4834 = vld [vmem:[%s269 + $0x12] ss:$0 sm:$0xff]
        %v4835 = vld [vmem:[%s269 + $0x35] ss:$0 sm:$0xff]
        %v4836 = vadd.f32 %v4834, 1.0
        %v4837 = vmul.f32 %v4818, %v4836
        %v4838 = vmul.f32 %v4819, %v4836
        %v4839 = vmul.f32 %v4820, %v4836
        %v4840 = vmul.f32 %v4821, %v4836
        %v4841 = vmul.f32 %v4822, %v4836
        %v4842 = vmul.f32 %v4823, %v4836
        %v4843 = vmul.f32 %v4824, %v4836
        %v4844 = vmul.f32 %v4825, %v4836
        %v4845 = vadd.f32 %v4837, %v4835
        %v4846 = vadd.f32 %v4838, %v4835
        %v4847 = vadd.f32 %v4839, %v4835
        %v4848 = vadd.f32 %v4840, %v4835
        %v4849 = vadd.f32 %v4841, %v4835
        %v4850 = vadd.f32 %v4842, %v4835
        %v4851 = vadd.f32 %v4843, %v4835
        %v4852 = vadd.f32 %v4844, %v4835
        %v4853 = vld [vmem:[%s526 + $0x12] ss:$0 sm:$0xff]
        %v4854 = vld [vmem:[%s526 + $0x35] ss:$0 sm:$0xff]
        %v4855 = vadd.f32 %v4853, 1.0
        %v4856 = vmul.f32 %v4826, %v4855
        %v4857 = vmul.f32 %v4827, %v4855
        %v4858 = vmul.f32 %v4828, %v4855
        %v4859 = vmul.f32 %v4829, %v4855
        %v4860 = vmul.f32 %v4830, %v4855
        %v4861 = vmul.f32 %v4831, %v4855
        %v4862 = vmul.f32 %v4832, %v4855
        %v4863 = vmul.f32 %v4833, %v4855
        %v4864 = vadd.f32 %v4856, %v4854
        %v4865 = vadd.f32 %v4857, %v4854
        %v4866 = vadd.f32 %v4858, %v4854
        %v4867 = vadd.f32 %v4859, %v4854
        %v4868 = vadd.f32 %v4860, %v4854
        %v4869 = vadd.f32 %v4861, %v4854
        %v4870 = vadd.f32 %v4862, %v4854
        %v4871 = vadd.f32 %v4863, %v4854
        %v4872 = vld [vmem:[#allocation5 + $0x8a0] sm:$0xf]
        %v4873 = vld [vmem:[#allocation5 + $0x8a8] sm:$0xf]
        %v4874 = vld [vmem:[#allocation5 + $0x8b0] sm:$0xf]
        %v4875 = vld [vmem:[#allocation5 + $0x8b8] sm:$0xf]
        %v4876 = vld [vmem:[#allocation5 + $0x8c0] sm:$0xf]
        %v4877 = vld [vmem:[#allocation5 + $0x8c8] sm:$0xf]
        %v4878 = vld [vmem:[#allocation5 + $0x8d0] sm:$0xf]
        %v4879 = vld [vmem:[#allocation5 + $0x8d8] sm:$0xf]
        %v4880 = vld [vmem:[#allocation5 + $0x8e0] sm:$0xf]
        %v4881 = vld [vmem:[#allocation5 + $0x8e8] sm:$0xf]
        %v4882 = vld [vmem:[#allocation5 + $0x8f0] sm:$0xf]
        %v4883 = vld [vmem:[#allocation5 + $0x8f8] sm:$0xf]
        %v4884 = vld [vmem:[#allocation5 + $0x900] sm:$0xf]
        %v4885 = vld [vmem:[#allocation5 + $0x908] sm:$0xf]
        %v4886 = vld [vmem:[#allocation5 + $0x910] sm:$0xf]
        %v4887 = vld [vmem:[#allocation5 + $0x918] sm:$0xf]
        %v4888 = vpack.c.bf16 %v4846, %v4845
        %v4889 = vpack.c.bf16 %v4848, %v4847
        %v4890 = vpack.c.bf16 %v4850, %v4849
        %v4891 = vpack.c.bf16 %v4852, %v4851
        %v4892 = vpack.c.bf16 %v4865, %v4864
        %v4893 = vpack.c.bf16 %v4867, %v4866
        %v4894 = vpack.c.bf16 %v4869, %v4868
        %v4895 = vpack.c.bf16 %v4871, %v4870
        %v4896 = vld [vmem:[#allocation5 + $0x920] sm:$0xf]
        %v4897 = vld [vmem:[#allocation5 + $0x928] sm:$0xf]
        %v4898 = vld [vmem:[#allocation5 + $0x930] sm:$0xf]
        %v4899 = vld [vmem:[#allocation5 + $0x938] sm:$0xf]
        %v4900 = vld [vmem:[#allocation5 + $0x940] sm:$0xf]
        %v4901 = vld [vmem:[#allocation5 + $0x948] sm:$0xf]
        %v4902 = vld [vmem:[#allocation5 + $0x950] sm:$0xf]
        %v4903 = vld [vmem:[#allocation5 + $0x958] sm:$0xf]
        %v4904 = vld [vmem:[#allocation5 + $0x960] sm:$0xf]
        %v4905 = vld [vmem:[#allocation5 + $0x968] sm:$0xf]
        %v4906 = vld [vmem:[#allocation5 + $0x970] sm:$0xf]
        %v4907 = vld [vmem:[#allocation5 + $0x978] sm:$0xf]
        %v4908 = vld [vmem:[#allocation5 + $0x980] sm:$0xf]
        %v4909 = vld [vmem:[#allocation5 + $0x988] sm:$0xf]
        %v4910 = vld [vmem:[#allocation5 + $0x990] sm:$0xf]
        %v4911 = vld [vmem:[#allocation5 + $0x998] sm:$0xf]
        %v4928 = vunpack.c.l.b16 %v4896
        %v4929 = vunpack.c.l.b16 %v4897
        %v4930 = vunpack.c.l.b16 %v4898
        %v4931 = vunpack.c.l.b16 %v4899
        %v4932 = vunpack.c.l.b16 %v4900
        %v4933 = vunpack.c.l.b16 %v4901
        %v4934 = vunpack.c.l.b16 %v4902
        %v4935 = vunpack.c.l.b16 %v4903
        %v4936 = vunpack.c.l.b16 %v4904
        %v4937 = vunpack.c.l.b16 %v4905
        %v4938 = vunpack.c.l.b16 %v4906
        %v4939 = vunpack.c.l.b16 %v4907
        %v4940 = vunpack.c.l.b16 %v4908
        %v4941 = vunpack.c.l.b16 %v4909
        %v4942 = vunpack.c.l.b16 %v4910
        %v4943 = vunpack.c.l.b16 %v4911
        %v4944 = vpack.c.b16 %v4929, %v4928
        %v4945 = vpack.c.b16 %v4931, %v4930
        %v4946 = vpack.c.b16 %v4933, %v4932
        %v4947 = vpack.c.b16 %v4935, %v4934
        %v4948 = vpack.c.b16 %v4937, %v4936
        %v4949 = vpack.c.b16 %v4939, %v4938
        %v4950 = vpack.c.b16 %v4941, %v4940
        %v4951 = vpack.c.b16 %v4943, %v4942
        %4960 = vmatprep.subr.bf16.mxu0 0
        %4961 = vmatpush1.bf16.msra.mxu0 %v4944
        %4962 = vmatprep.subr.bf16.mxu0 0
        %4963 = vmatpush1.bf16.msra.mxu0 %v4945
        %4964 = vmatprep.subr.bf16.mxu0 0
        %4965 = vmatpush1.bf16.msra.mxu0 %v4946
        %4966 = vmatprep.subr.bf16.mxu0 0
        %4967 = vmatpush1.bf16.msra.mxu0 %v4947
        %4968 = vmatprep.subr.bf16.mxu0 0
        %4969 = vmatpush1.bf16.msra.mxu0 %v4948
        %4970 = vmatprep.subr.bf16.mxu0 0
        %4971 = vmatpush1.bf16.msra.mxu0 %v4949
        %4972 = vmatprep.subr.bf16.mxu0 0
        %4973 = vmatpush1.bf16.msra.mxu0 %v4950
        %4974 = vmatprep.subr.bf16.mxu0 0
        %4975 = vmatpush1.bf16.msra.mxu0 %v4951
        %4976 = vmatprep.subr.bf16.mxu0 0
        %4977 = vmatpush1.bf16.msra.mxu0 0
        %4978 = vmatprep.subr.bf16.mxu0 0
        %4979 = vmatpush1.bf16.msra.mxu0 0
        %4980 = vmatprep.subr.bf16.mxu0 0
        %4981 = vmatpush1.bf16.msra.mxu0 0
        %4982 = vmatprep.subr.bf16.mxu0 0
        %4983 = vmatpush1.bf16.msra.mxu0 0
        %4984 = vmatprep.subr.bf16.mxu0 0
        %4985 = vmatpush1.bf16.msra.mxu0 0
        %4986 = vmatprep.subr.bf16.mxu0 0
        %4987 = vmatpush1.bf16.msra.mxu0 0
        %4988 = vmatprep.subr.bf16.mxu0 0
        %4989 = vmatpush1.bf16.msra.mxu0 0
        %4990 = vmatprep.subr.bf16.mxu0 0
        %4991 = vmatpush1.bf16.msra.mxu0 0
        %4992 = vmatprep.mubr.bf16.mxu0 0
        %4993 = vmatmul.mubr.bf16.gmra.mrb[0].mxu0 %v1276
        %v4994 = vpop.f32.mrb[0].mxu0
        %v4995 = vadd.f32 0.0, %v4994
        %v4996 = vpop.f32.mrb[0].mxu0
        %v4997 = vpop.f32.mrb[0].mxu0
        %v4998 = vadd.f32 0.0, %v4997
        %v4999 = vpop.f32.mrb[0].mxu0
        %5000 = vmatprep.mubr.bf16.mxu0 0
        %5001 = vmatmul.mubr.bf16.gmra.mrb[0].mxu0 %v1277
        %v5002 = vpop.f32.mrb[0].mxu0
        %v5003 = vadd.f32 0.0, %v5002
        %v5004 = vpop.f32.mrb[0].mxu0
        %v5005 = vpop.f32.mrb[0].mxu0
        %v5006 = vadd.f32 0.0, %v5005
        %v5007 = vpop.f32.mrb[0].mxu0
        %5008 = vmatprep.mubr.bf16.mxu0 0
        %5009 = vmatmul.mubr.bf16.gmra.mrb[0].mxu0 %v1278
        %v5010 = vpop.f32.mrb[0].mxu0
        %v5011 = vadd.f32 0.0, %v5010
        %v5012 = vpop.f32.mrb[0].mxu0
        %v5013 = vpop.f32.mrb[0].mxu0
        %v5014 = vadd.f32 0.0, %v5013
        %v5015 = vpop.f32.mrb[0].mxu0
        %5016 = vmatprep.mubr.bf16.mxu0 0
        %5017 = vmatmul.mubr.bf16.gmra.mrb[0].mxu0 %v1279
        %v5018 = vpop.f32.mrb[0].mxu0
        %v5019 = vadd.f32 0.0, %v5018
        %v5020 = vpop.f32.mrb[0].mxu0
        %v5021 = vpop.f32.mrb[0].mxu0
        %v5022 = vadd.f32 0.0, %v5021
        %v5023 = vpop.f32.mrb[0].mxu0
        %5024 = vmatprep.mubr.bf16.mxu0 0
        %5025 = vmatmul.mubr.bf16.gmra.mrb[0].mxu0 %v1280
        %v5026 = vpop.f32.mrb[0].mxu0
        %v5027 = vadd.f32 0.0, %v5026
        %v5028 = vpop.f32.mrb[0].mxu0
        %v5029 = vpop.f32.mrb[0].mxu0
        %v5030 = vadd.f32 0.0, %v5029
        %v5031 = vpop.f32.mrb[0].mxu0
        %5032 = vmatprep.mubr.bf16.mxu0 0
        %5033 = vmatmul.mubr.bf16.gmra.mrb[0].mxu0 %v1281
        %v5034 = vpop.f32.mrb[0].mxu0
        %v5035 = vadd.f32 0.0, %v5034
        %v5036 = vpop.f32.mrb[0].mxu0
        %v5037 = vpop.f32.mrb[0].mxu0
        %v5038 = vadd.f32 0.0, %v5037
        %v5039 = vpop.f32.mrb[0].mxu0
        %5040 = vmatprep.mubr.bf16.mxu0 0
        %5041 = vmatmul.mubr.bf16.gmra.mrb[0].mxu0 %v1282
        %v5042 = vpop.f32.mrb[0].mxu0
        %v5043 = vadd.f32 0.0, %v5042
        %v5044 = vpop.f32.mrb[0].mxu0
        %v5045 = vpop.f32.mrb[0].mxu0
        %v5046 = vadd.f32 0.0, %v5045
        %v5047 = vpop.f32.mrb[0].mxu0
        %5048 = vmatprep.mubr.bf16.mxu0 0
        %5049 = vmatmul.mubr.bf16.gmra.mrb[0].mxu0 %v1283
        %v5050 = vpop.f32.mrb[0].mxu0
        %v5051 = vadd.f32 0.0, %v5050
        %v5052 = vpop.f32.mrb[0].mxu0
        %v5053 = vpop.f32.mrb[0].mxu0
        %v5054 = vadd.f32 0.0, %v5053
        %v5055 = vpop.f32.mrb[0].mxu0
        %5056 = vdwg.mxu0
        %v5073 = vunpack.c.l.b16 %v4872
        %v5074 = vunpack.c.l.b16 %v4873
        %v5075 = vunpack.c.l.b16 %v4874
        %v5076 = vunpack.c.l.b16 %v4875
        %v5077 = vunpack.c.l.b16 %v4876
        %v5078 = vunpack.c.l.b16 %v4877
        %v5079 = vunpack.c.l.b16 %v4878
        %v5080 = vunpack.c.l.b16 %v4879
        %v5081 = vunpack.c.l.b16 %v4880
        %v5082 = vunpack.c.l.b16 %v4881
        %v5083 = vunpack.c.l.b16 %v4882
        %v5084 = vunpack.c.l.b16 %v4883
        %v5085 = vunpack.c.l.b16 %v4884
        %v5086 = vunpack.c.l.b16 %v4885
        %v5087 = vunpack.c.l.b16 %v4886
        %v5088 = vunpack.c.l.b16 %v4887
        %v5089 = vpack.c.b16 %v5074, %v5073
        %v5090 = vpack.c.b16 %v5076, %v5075
        %v5091 = vpack.c.b16 %v5078, %v5077
        %v5092 = vpack.c.b16 %v5080, %v5079
        %v5093 = vpack.c.b16 %v5082, %v5081
        %v5094 = vpack.c.b16 %v5084, %v5083
        %v5095 = vpack.c.b16 %v5086, %v5085
        %v5096 = vpack.c.b16 %v5088, %v5087
        %5105 = vmatprep.subr.bf16.mxu0 0
        %5106 = vmatpush1.bf16.msra.mxu0 %v5089
        %5107 = vmatprep.subr.bf16.mxu0 0
        %5108 = vmatpush1.bf16.msra.mxu0 %v5090
        %5109 = vmatprep.subr.bf16.mxu0 0
        %5110 = vmatpush1.bf16.msra.mxu0 %v5091
        %5111 = vmatprep.subr.bf16.mxu0 0
        %5112 = vmatpush1.bf16.msra.mxu0 %v5092
        %5113 = vmatprep.subr.bf16.mxu0 0
        %5114 = vmatpush1.bf16.msra.mxu0 %v5093
        %5115 = vmatprep.subr.bf16.mxu0 0
        %5116 = vmatpush1.bf16.msra.mxu0 %v5094
        %5117 = vmatprep.subr.bf16.mxu0 0
        %5118 = vmatpush1.bf16.msra.mxu0 %v5095
        %5119 = vmatprep.subr.bf16.mxu0 0
        %5120 = vmatpush1.bf16.msra.mxu0 %v5096
        %5121 = vmatprep.subr.bf16.mxu0 0
        %5122 = vmatpush1.bf16.msra.mxu0 0
        %5123 = vmatprep.subr.bf16.mxu0 0
        %5124 = vmatpush1.bf16.msra.mxu0 0
        %5125 = vmatprep.subr.bf16.mxu0 0
        %5126 = vmatpush1.bf16.msra.mxu0 0
        %5127 = vmatprep.subr.bf16.mxu0 0
        %5128 = vmatpush1.bf16.msra.mxu0 0
        %5129 = vmatprep.subr.bf16.mxu0 0
        %5130 = vmatpush1.bf16.msra.mxu0 0
        %5131 = vmatprep.subr.bf16.mxu0 0
        %5132 = vmatpush1.bf16.msra.mxu0 0
        %5133 = vmatprep.subr.bf16.mxu0 0
        %5134 = vmatpush1.bf16.msra.mxu0 0
        %5135 = vmatprep.subr.bf16.mxu0 0
        %5136 = vmatpush1.bf16.msra.mxu0 0
        %5137 = vmatprep.mubr.bf16.mxu0 0
        %5138 = vmatmul.mubr.bf16.gmra.mrb[0].mxu0 %v4888
        %v5139 = vpop.f32.mrb[0].mxu0
        %v5140 = vadd.f32 %v4995, %v5139
        %v5141 = vpop.f32.mrb[0].mxu0
        %v5142 = vpop.f32.mrb[0].mxu0
        %v5143 = vadd.f32 %v4998, %v5142
        %v5144 = vpop.f32.mrb[0].mxu0
        %5145 = vmatprep.mubr.bf16.mxu0 0
        %5146 = vmatmul.mubr.bf16.gmra.mrb[0].mxu0 %v4889
        %v5147 = vpop.f32.mrb[0].mxu0
        %v5148 = vadd.f32 %v5003, %v5147
        %v5149 = vpop.f32.mrb[0].mxu0
        %v5150 = vpop.f32.mrb[0].mxu0
        %v5151 = vadd.f32 %v5006, %v5150
        %v5152 = vpop.f32.mrb[0].mxu0
        %5153 = vmatprep.mubr.bf16.mxu0 0
        %5154 = vmatmul.mubr.bf16.gmra.mrb[0].mxu0 %v4890
        %v5155 = vpop.f32.mrb[0].mxu0
        %v5156 = vadd.f32 %v5011, %v5155
        %v5157 = vpop.f32.mrb[0].mxu0
        %v5158 = vpop.f32.mrb[0].mxu0
        %v5159 = vadd.f32 %v5014, %v5158
        %v5160 = vpop.f32.mrb[0].mxu0
        %5161 = vmatprep.mubr.bf16.mxu0 0
        %5162 = vmatmul.mubr.bf16.gmra.mrb[0].mxu0 %v4891
        %v5163 = vpop.f32.mrb[0].mxu0
        %v5164 = vadd.f32 %v5019, %v5163
        %v5165 = vpop.f32.mrb[0].mxu0
        %v5166 = vpop.f32.mrb[0].mxu0
        %v5167 = vadd.f32 %v5022, %v5166
        %v5168 = vpop.f32.mrb[0].mxu0
        %5169 = vmatprep.mubr.bf16.mxu0 0
        %5170 = vmatmul.mubr.bf16.gmra.mrb[0].mxu0 %v4892
        %v5171 = vpop.f32.mrb[0].mxu0
        %v5172 = vadd.f32 %v5027, %v5171
        %v5173 = vpop.f32.mrb[0].mxu0
        %v5174 = vpop.f32.mrb[0].mxu0
        %v5175 = vadd.f32 %v5030, %v5174
        %v5176 = vpop.f32.mrb[0].mxu0
        %5177 = vmatprep.mubr.bf16.mxu0 0
        %5178 = vmatmul.mubr.bf16.gmra.mrb[0].mxu0 %v4893
        %v5179 = vpop.f32.mrb[0].mxu0
        %v5180 = vadd.f32 %v5035, %v5179
        %v5181 = vpop.f32.mrb[0].mxu0
        %v5182 = vpop.f32.mrb[0].mxu0
        %v5183 = vadd.f32 %v5038, %v5182
        %v5184 = vpop.f32.mrb[0].mxu0
        %5185 = vmatprep.mubr.bf16.mxu0 0
        %5186 = vmatmul.mubr.bf16.gmra.mrb[0].mxu0 %v4894
        %v5187 = vpop.f32.mrb[0].mxu0
        %v5188 = vadd.f32 %v5043, %v5187
        %v5189 = vpop.f32.mrb[0].mxu0
        %v5190 = vpop.f32.mrb[0].mxu0
        %v5191 = vadd.f32 %v5046, %v5190
        %v5192 = vpop.f32.mrb[0].mxu0
        %5193 = vmatprep.mubr.bf16.mxu0 0
        %5194 = vmatmul.mubr.bf16.gmra.mrb[0].mxu0 %v4895
        %v5195 = vpop.f32.mrb[0].mxu0
        %v5196 = vadd.f32 %v5051, %v5195
        %v5197 = vpop.f32.mrb[0].mxu0
        %v5198 = vpop.f32.mrb[0].mxu0
        %v5199 = vadd.f32 %v5054, %v5198
        %v5200 = vpop.f32.mrb[0].mxu0
        %5201 = vdwg.mxu0
        %v5202 = vld [vmem:[#allocation7 + $0x14] ss:$0 sm:$0xff]
        %v5203 = vadd.f32 %v5140, %v5202
        %v5204 = vadd.f32 %v5143, %v5202
        %v5205 = vadd.f32 %v5148, %v5202
        %v5206 = vadd.f32 %v5151, %v5202
        %v5207 = vadd.f32 %v5156, %v5202
        %v5208 = vadd.f32 %v5159, %v5202
        %v5209 = vadd.f32 %v5164, %v5202
        %v5210 = vadd.f32 %v5167, %v5202
        %v5211 = vadd.f32 %v5172, %v5202
        %v5212 = vadd.f32 %v5175, %v5202
        %v5213 = vadd.f32 %v5180, %v5202
        %v5214 = vadd.f32 %v5183, %v5202
        %v5215 = vadd.f32 %v5188, %v5202
        %v5216 = vadd.f32 %v5191, %v5202
        %v5217 = vadd.f32 %v5196, %v5202
        %v5218 = vadd.f32 %v5199, %v5202
        %vm5219 = vcmp.gt.f32.partialorder %v5203, 0.0
        %vm5220 = vcmp.gt.f32.partialorder %v5204, 0.0
        %vm5221 = vcmp.gt.f32.partialorder %v5205, 0.0
        %vm5222 = vcmp.gt.f32.partialorder %v5206, 0.0
        %vm5223 = vcmp.gt.f32.partialorder %v5207, 0.0
        %vm5224 = vcmp.gt.f32.partialorder %v5208, 0.0
        %vm5225 = vcmp.gt.f32.partialorder %v5209, 0.0
        %vm5226 = vcmp.gt.f32.partialorder %v5210, 0.0
        %vm5227 = vcmp.gt.f32.partialorder %v5211, 0.0
        %vm5228 = vcmp.gt.f32.partialorder %v5212, 0.0
        %vm5229 = vcmp.gt.f32.partialorder %v5213, 0.0
        %vm5230 = vcmp.gt.f32.partialorder %v5214, 0.0
        %vm5231 = vcmp.gt.f32.partialorder %v5215, 0.0
        %vm5232 = vcmp.gt.f32.partialorder %v5216, 0.0
        %vm5233 = vcmp.gt.f32.partialorder %v5217, 0.0
        %vm5234 = vcmp.gt.f32.partialorder %v5218, 0.0
        %v5235 = vmul.f32 %v5203, 0.1
        %v5236 = vmul.f32 %v5204, 0.1
        %v5237 = vmul.f32 %v5205, 0.1
        %v5238 = vmul.f32 %v5206, 0.1
        %v5239 = vmul.f32 %v5207, 0.1
        %v5240 = vmul.f32 %v5208, 0.1
        %v5241 = vmul.f32 %v5209, 0.1
        %v5242 = vmul.f32 %v5210, 0.1
        %v5243 = vmul.f32 %v5211, 0.1
        %v5244 = vmul.f32 %v5212, 0.1
        %v5245 = vmul.f32 %v5213, 0.1
        %v5246 = vmul.f32 %v5214, 0.1
        %v5247 = vmul.f32 %v5215, 0.1
        %v5248 = vmul.f32 %v5216, 0.1
        %v5249 = vmul.f32 %v5217, 0.1
        %v5250 = vmul.f32 %v5218, 0.1
        %v5251 = vsel %vm5219, %v5203, %v5235
        %v5252 = vsel %vm5220, %v5204, %v5236
        %v5253 = vsel %vm5221, %v5205, %v5237
        %v5254 = vsel %vm5222, %v5206, %v5238
        %v5255 = vsel %vm5223, %v5207, %v5239
        %v5256 = vsel %vm5224, %v5208, %v5240
        %v5257 = vsel %vm5225, %v5209, %v5241
        %v5258 = vsel %vm5226, %v5210, %v5242
        %v5259 = vsel %vm5227, %v5211, %v5243
        %v5260 = vsel %vm5228, %v5212, %v5244
        %v5261 = vsel %vm5229, %v5213, %v5245
        %v5262 = vsel %vm5230, %v5214, %v5246
        %v5263 = vsel %vm5231, %v5215, %v5247
        %v5264 = vsel %vm5232, %v5216, %v5248
        %v5265 = vsel %vm5233, %v5217, %v5249
        %v5266 = vsel %vm5234, %v5218, %v5250
        %v5267 = vld [vmem:[%s269 + $0x13] ss:$0 sm:$0xff]
        %v5268 = vld [vmem:[%s269 + $0x36] ss:$0 sm:$0xff]
        %v5269 = vadd.f32 %v5267, 1.0
        %v5270 = vmul.f32 %v5251, %v5269
        %v5271 = vmul.f32 %v5252, %v5269
        %v5272 = vmul.f32 %v5253, %v5269
        %v5273 = vmul.f32 %v5254, %v5269
        %v5274 = vmul.f32 %v5255, %v5269
        %v5275 = vmul.f32 %v5256, %v5269
        %v5276 = vmul.f32 %v5257, %v5269
        %v5277 = vmul.f32 %v5258, %v5269
        %v5278 = vadd.f32 %v5270, %v5268
        %v5279 = vadd.f32 %v5271, %v5268
        %v5280 = vadd.f32 %v5272, %v5268
        %v5281 = vadd.f32 %v5273, %v5268
        %v5282 = vadd.f32 %v5274, %v5268
        %v5283 = vadd.f32 %v5275, %v5268
        %v5284 = vadd.f32 %v5276, %v5268
        %v5285 = vadd.f32 %v5277, %v5268
        %v5286 = vld [vmem:[%s526 + $0x13] ss:$0 sm:$0xff]
        %v5287 = vld [vmem:[%s526 + $0x36] ss:$0 sm:$0xff]
        %v5288 = vadd.f32 %v5286, 1.0
        %v5289 = vmul.f32 %v5259, %v5288
        %v5290 = vmul.f32 %v5260, %v5288
        %v5291 = vmul.f32 %v5261, %v5288
        %v5292 = vmul.f32 %v5262, %v5288
        %v5293 = vmul.f32 %v5263, %v5288
        %v5294 = vmul.f32 %v5264, %v5288
        %v5295 = vmul.f32 %v5265, %v5288
        %v5296 = vmul.f32 %v5266, %v5288
        %v5297 = vadd.f32 %v5289, %v5287
        %v5298 = vadd.f32 %v5290, %v5287
        %v5299 = vadd.f32 %v5291, %v5287
        %v5300 = vadd.f32 %v5292, %v5287
        %v5301 = vadd.f32 %v5293, %v5287
        %v5302 = vadd.f32 %v5294, %v5287
        %v5303 = vadd.f32 %v5295, %v5287
        %v5304 = vadd.f32 %v5296, %v5287
        %v5305 = vld [vmem:[#allocation5 + $0x9a0] sm:$0xf]
        %v5306 = vld [vmem:[#allocation5 + $0x9a8] sm:$0xf]
        %v5307 = vld [vmem:[#allocation5 + $0x9b0] sm:$0xf]
        %v5308 = vld [vmem:[#allocation5 + $0x9b8] sm:$0xf]
        %v5309 = vld [vmem:[#allocation5 + $0x9c0] sm:$0xf]
        %v5310 = vld [vmem:[#allocation5 + $0x9c8] sm:$0xf]
        %v5311 = vld [vmem:[#allocation5 + $0x9d0] sm:$0xf]
        %v5312 = vld [vmem:[#allocation5 + $0x9d8] sm:$0xf]
        %v5313 = vld [vmem:[#allocation5 + $0x9e0] sm:$0xf]
        %v5314 = vld [vmem:[#allocation5 + $0x9e8] sm:$0xf]
        %v5315 = vld [vmem:[#allocation5 + $0x9f0] sm:$0xf]
        %v5316 = vld [vmem:[#allocation5 + $0x9f8] sm:$0xf]
        %v5317 = vld [vmem:[#allocation5 + $0xa00] sm:$0xf]
        %v5318 = vld [vmem:[#allocation5 + $0xa08] sm:$0xf]
        %v5319 = vld [vmem:[#allocation5 + $0xa10] sm:$0xf]
        %v5320 = vld [vmem:[#allocation5 + $0xa18] sm:$0xf]
        %v5321 = vpack.c.bf16 %v5279, %v5278
        %v5322 = vpack.c.bf16 %v5281, %v5280
        %v5323 = vpack.c.bf16 %v5283, %v5282
        %v5324 = vpack.c.bf16 %v5285, %v5284
        %v5325 = vpack.c.bf16 %v5298, %v5297
        %v5326 = vpack.c.bf16 %v5300, %v5299
        %v5327 = vpack.c.bf16 %v5302, %v5301
        %v5328 = vpack.c.bf16 %v5304, %v5303
        %v5329 = vld [vmem:[#allocation7 + $0x15] ss:$0 sm:$0xff]
        %v5346 = vunpack.c.l.b16 %v5305
        %v5347 = vunpack.c.l.b16 %v5306
        %v5348 = vunpack.c.l.b16 %v5307
        %v5349 = vunpack.c.l.b16 %v5308
        %v5350 = vunpack.c.l.b16 %v5309
        %v5351 = vunpack.c.l.b16 %v5310
        %v5352 = vunpack.c.l.b16 %v5311
        %v5353 = vunpack.c.l.b16 %v5312
        %v5354 = vunpack.c.l.b16 %v5313
        %v5355 = vunpack.c.l.b16 %v5314
        %v5356 = vunpack.c.l.b16 %v5315
        %v5357 = vunpack.c.l.b16 %v5316
        %v5358 = vunpack.c.l.b16 %v5317
        %v5359 = vunpack.c.l.b16 %v5318
        %v5360 = vunpack.c.l.b16 %v5319
        %v5361 = vunpack.c.l.b16 %v5320
        %v5362 = vpack.c.b16 %v5347, %v5346
        %v5363 = vpack.c.b16 %v5349, %v5348
        %v5364 = vpack.c.b16 %v5351, %v5350
        %v5365 = vpack.c.b16 %v5353, %v5352
        %v5366 = vpack.c.b16 %v5355, %v5354
        %v5367 = vpack.c.b16 %v5357, %v5356
        %v5368 = vpack.c.b16 %v5359, %v5358
        %v5369 = vpack.c.b16 %v5361, %v5360
        %5378 = vmatprep.subr.bf16.mxu0 0
        %5379 = vmatpush1.bf16.msra.mxu0 %v5362
        %5380 = vmatprep.subr.bf16.mxu0 0
        %5381 = vmatpush1.bf16.msra.mxu0 %v5363
        %5382 = vmatprep.subr.bf16.mxu0 0
        %5383 = vmatpush1.bf16.msra.mxu0 %v5364
        %5384 = vmatprep.subr.bf16.mxu0 0
        %5385 = vmatpush1.bf16.msra.mxu0 %v5365
        %5386 = vmatprep.subr.bf16.mxu0 0
        %5387 = vmatpush1.bf16.msra.mxu0 %v5366
        %5388 = vmatprep.subr.bf16.mxu0 0
        %5389 = vmatpush1.bf16.msra.mxu0 %v5367
        %5390 = vmatprep.subr.bf16.mxu0 0
        %5391 = vmatpush1.bf16.msra.mxu0 %v5368
        %5392 = vmatprep.subr.bf16.mxu0 0
        %5393 = vmatpush1.bf16.msra.mxu0 %v5369
        %5394 = vmatprep.subr.bf16.mxu0 0
        %5395 = vmatpush1.bf16.msra.mxu0 0
        %5396 = vmatprep.subr.bf16.mxu0 0
        %5397 = vmatpush1.bf16.msra.mxu0 0
        %5398 = vmatprep.subr.bf16.mxu0 0
        %5399 = vmatpush1.bf16.msra.mxu0 0
        %5400 = vmatprep.subr.bf16.mxu0 0
        %5401 = vmatpush1.bf16.msra.mxu0 0
        %5402 = vmatprep.subr.bf16.mxu0 0
        %5403 = vmatpush1.bf16.msra.mxu0 0
        %5404 = vmatprep.subr.bf16.mxu0 0
        %5405 = vmatpush1.bf16.msra.mxu0 0
        %5406 = vmatprep.subr.bf16.mxu0 0
        %5407 = vmatpush1.bf16.msra.mxu0 0
        %5408 = vmatprep.subr.bf16.mxu0 0
        %5409 = vmatpush1.bf16.msra.mxu0 0
        %5410 = vmatprep.mubr.bf16.mxu0 0
        %5411 = vmatmul.mubr.bf16.gmra.mrb[0].mxu0 %v5321
        %v5412 = vpop.f32.mrb[0].mxu0
        %v5413 = vadd.f32 %v5329, %v5412
        %v5414 = vpop.f32.mrb[0].mxu0
        %v5415 = vpop.f32.mrb[0].mxu0
        %v5416 = vadd.f32 %v5329, %v5415
        %v5417 = vpop.f32.mrb[0].mxu0
        %5418 = vmatprep.mubr.bf16.mxu0 0
        %5419 = vmatmul.mubr.bf16.gmra.mrb[0].mxu0 %v5322
        %v5420 = vpop.f32.mrb[0].mxu0
        %v5421 = vadd.f32 %v5329, %v5420
        %v5422 = vpop.f32.mrb[0].mxu0
        %v5423 = vpop.f32.mrb[0].mxu0
        %v5424 = vadd.f32 %v5329, %v5423
        %v5425 = vpop.f32.mrb[0].mxu0
        %5426 = vmatprep.mubr.bf16.mxu0 0
        %5427 = vmatmul.mubr.bf16.gmra.mrb[0].mxu0 %v5323
        %v5428 = vpop.f32.mrb[0].mxu0
        %v5429 = vadd.f32 %v5329, %v5428
        %v5430 = vpop.f32.mrb[0].mxu0
        %v5431 = vpop.f32.mrb[0].mxu0
        %v5432 = vadd.f32 %v5329, %v5431
        %v5433 = vpop.f32.mrb[0].mxu0
        %5434 = vmatprep.mubr.bf16.mxu0 0
        %5435 = vmatmul.mubr.bf16.gmra.mrb[0].mxu0 %v5324
        %v5436 = vpop.f32.mrb[0].mxu0
        %v5437 = vadd.f32 %v5329, %v5436
        %v5438 = vpop.f32.mrb[0].mxu0
        %v5439 = vpop.f32.mrb[0].mxu0
        %v5440 = vadd.f32 %v5329, %v5439
        %v5441 = vpop.f32.mrb[0].mxu0
        %5442 = vmatprep.mubr.bf16.mxu0 0
        %5443 = vmatmul.mubr.bf16.gmra.mrb[0].mxu0 %v5325
        %v5444 = vpop.f32.mrb[0].mxu0
        %v5445 = vadd.f32 %v5329, %v5444
        %v5446 = vpop.f32.mrb[0].mxu0
        %v5447 = vpop.f32.mrb[0].mxu0
        %v5448 = vadd.f32 %v5329, %v5447
        %v5449 = vpop.f32.mrb[0].mxu0
        %5450 = vmatprep.mubr.bf16.mxu0 0
        %5451 = vmatmul.mubr.bf16.gmra.mrb[0].mxu0 %v5326
        %v5452 = vpop.f32.mrb[0].mxu0
        %v5453 = vadd.f32 %v5329, %v5452
        %v5454 = vpop.f32.mrb[0].mxu0
        %v5455 = vpop.f32.mrb[0].mxu0
        %v5456 = vadd.f32 %v5329, %v5455
        %v5457 = vpop.f32.mrb[0].mxu0
        %5458 = vmatprep.mubr.bf16.mxu0 0
        %5459 = vmatmul.mubr.bf16.gmra.mrb[0].mxu0 %v5327
        %v5460 = vpop.f32.mrb[0].mxu0
        %v5461 = vadd.f32 %v5329, %v5460
        %v5462 = vpop.f32.mrb[0].mxu0
        %v5463 = vpop.f32.mrb[0].mxu0
        %v5464 = vadd.f32 %v5329, %v5463
        %v5465 = vpop.f32.mrb[0].mxu0
        %5466 = vmatprep.mubr.bf16.mxu0 0
        %5467 = vmatmul.mubr.bf16.gmra.mrb[0].mxu0 %v5328
        %v5468 = vpop.f32.mrb[0].mxu0
        %v5469 = vadd.f32 %v5329, %v5468
        %v5470 = vpop.f32.mrb[0].mxu0
        %v5471 = vpop.f32.mrb[0].mxu0
        %v5472 = vadd.f32 %v5329, %v5471
        %v5473 = vpop.f32.mrb[0].mxu0
        %5474 = vdwg.mxu0
        %vm5475 = vcmp.gt.f32.partialorder %v5413, 0.0
        %vm5476 = vcmp.gt.f32.partialorder %v5416, 0.0
        %vm5477 = vcmp.gt.f32.partialorder %v5421, 0.0
        %vm5478 = vcmp.gt.f32.partialorder %v5424, 0.0
        %vm5479 = vcmp.gt.f32.partialorder %v5429, 0.0
        %vm5480 = vcmp.gt.f32.partialorder %v5432, 0.0
        %vm5481 = vcmp.gt.f32.partialorder %v5437, 0.0
        %vm5482 = vcmp.gt.f32.partialorder %v5440, 0.0
        %vm5483 = vcmp.gt.f32.partialorder %v5445, 0.0
        %vm5484 = vcmp.gt.f32.partialorder %v5448, 0.0
        %vm5485 = vcmp.gt.f32.partialorder %v5453, 0.0
        %vm5486 = vcmp.gt.f32.partialorder %v5456, 0.0
        %vm5487 = vcmp.gt.f32.partialorder %v5461, 0.0
        %vm5488 = vcmp.gt.f32.partialorder %v5464, 0.0
        %vm5489 = vcmp.gt.f32.partialorder %v5469, 0.0
        %vm5490 = vcmp.gt.f32.partialorder %v5472, 0.0
        %v5491 = vmul.f32 %v5413, 0.1
        %v5492 = vmul.f32 %v5416, 0.1
        %v5493 = vmul.f32 %v5421, 0.1
        %v5494 = vmul.f32 %v5424, 0.1
        %v5495 = vmul.f32 %v5429, 0.1
        %v5496 = vmul.f32 %v5432, 0.1
        %v5497 = vmul.f32 %v5437, 0.1
        %v5498 = vmul.f32 %v5440, 0.1
        %v5499 = vmul.f32 %v5445, 0.1
        %v5500 = vmul.f32 %v5448, 0.1
        %v5501 = vmul.f32 %v5453, 0.1
        %v5502 = vmul.f32 %v5456, 0.1
        %v5503 = vmul.f32 %v5461, 0.1
        %v5504 = vmul.f32 %v5464, 0.1
        %v5505 = vmul.f32 %v5469, 0.1
        %v5506 = vmul.f32 %v5472, 0.1
        %v5507 = vsel %vm5475, %v5413, %v5491
        %v5508 = vsel %vm5476, %v5416, %v5492
        %v5509 = vsel %vm5477, %v5421, %v5493
        %v5510 = vsel %vm5478, %v5424, %v5494
        %v5511 = vsel %vm5479, %v5429, %v5495
        %v5512 = vsel %vm5480, %v5432, %v5496
        %v5513 = vsel %vm5481, %v5437, %v5497
        %v5514 = vsel %vm5482, %v5440, %v5498
        %v5515 = vsel %vm5483, %v5445, %v5499
        %v5516 = vsel %vm5484, %v5448, %v5500
        %v5517 = vsel %vm5485, %v5453, %v5501
        %v5518 = vsel %vm5486, %v5456, %v5502
        %v5519 = vsel %vm5487, %v5461, %v5503
        %v5520 = vsel %vm5488, %v5464, %v5504
        %v5521 = vsel %vm5489, %v5469, %v5505
        %v5522 = vsel %vm5490, %v5472, %v5506
        %v5523 = vld [vmem:[%s269 + $0x14] ss:$0 sm:$0xff]
        %v5524 = vld [vmem:[%s269 + $0x37] ss:$0 sm:$0xff]
        %v5525 = vadd.f32 %v5523, 1.0
        %v5526 = vmul.f32 %v5507, %v5525
        %v5527 = vmul.f32 %v5508, %v5525
        %v5528 = vmul.f32 %v5509, %v5525
        %v5529 = vmul.f32 %v5510, %v5525
        %v5530 = vmul.f32 %v5511, %v5525
        %v5531 = vmul.f32 %v5512, %v5525
        %v5532 = vmul.f32 %v5513, %v5525
        %v5533 = vmul.f32 %v5514, %v5525
        %v5534 = vadd.f32 %v5526, %v5524
        %v5535 = vadd.f32 %v5527, %v5524
        %v5536 = vadd.f32 %v5528, %v5524
        %v5537 = vadd.f32 %v5529, %v5524
        %v5538 = vadd.f32 %v5530, %v5524
        %v5539 = vadd.f32 %v5531, %v5524
        %v5540 = vadd.f32 %v5532, %v5524
        %v5541 = vadd.f32 %v5533, %v5524
        %v5542 = vld [vmem:[%s526 + $0x14] ss:$0 sm:$0xff]
        %v5543 = vld [vmem:[%s526 + $0x37] ss:$0 sm:$0xff]
        %v5544 = vadd.f32 %v5542, 1.0
        %v5545 = vmul.f32 %v5515, %v5544
        %v5546 = vmul.f32 %v5516, %v5544
        %v5547 = vmul.f32 %v5517, %v5544
        %v5548 = vmul.f32 %v5518, %v5544
        %v5549 = vmul.f32 %v5519, %v5544
        %v5550 = vmul.f32 %v5520, %v5544
        %v5551 = vmul.f32 %v5521, %v5544
        %v5552 = vmul.f32 %v5522, %v5544
        %v5553 = vadd.f32 %v5545, %v5543
        %v5554 = vadd.f32 %v5546, %v5543
        %v5555 = vadd.f32 %v5547, %v5543
        %v5556 = vadd.f32 %v5548, %v5543
        %v5557 = vadd.f32 %v5549, %v5543
        %v5558 = vadd.f32 %v5550, %v5543
        %v5559 = vadd.f32 %v5551, %v5543
        %v5560 = vadd.f32 %v5552, %v5543
        %v5561 = vld [vmem:[#allocation5 + $0xa20] sm:$0xf]
        %v5562 = vld [vmem:[#allocation5 + $0xa28] sm:$0xf]
        %v5563 = vld [vmem:[#allocation5 + $0xa30] sm:$0xf]
        %v5564 = vld [vmem:[#allocation5 + $0xa38] sm:$0xf]
        %v5565 = vld [vmem:[#allocation5 + $0xa40] sm:$0xf]
        %v5566 = vld [vmem:[#allocation5 + $0xa48] sm:$0xf]
        %v5567 = vld [vmem:[#allocation5 + $0xa50] sm:$0xf]
        %v5568 = vld [vmem:[#allocation5 + $0xa58] sm:$0xf]
        %v5569 = vld [vmem:[#allocation5 + $0xa60] sm:$0xf]
        %v5570 = vld [vmem:[#allocation5 + $0xa68] sm:$0xf]
        %v5571 = vld [vmem:[#allocation5 + $0xa70] sm:$0xf]
        %v5572 = vld [vmem:[#allocation5 + $0xa78] sm:$0xf]
        %v5573 = vld [vmem:[#allocation5 + $0xa80] sm:$0xf]
        %v5574 = vld [vmem:[#allocation5 + $0xa88] sm:$0xf]
        %v5575 = vld [vmem:[#allocation5 + $0xa90] sm:$0xf]
        %v5576 = vld [vmem:[#allocation5 + $0xa98] sm:$0xf]
        %v5577 = vpack.c.bf16 %v5535, %v5534
        %v5578 = vpack.c.bf16 %v5537, %v5536
        %v5579 = vpack.c.bf16 %v5539, %v5538
        %v5580 = vpack.c.bf16 %v5541, %v5540
        %v5581 = vpack.c.bf16 %v5554, %v5553
        %v5582 = vpack.c.bf16 %v5556, %v5555
        %v5583 = vpack.c.bf16 %v5558, %v5557
        %v5584 = vpack.c.bf16 %v5560, %v5559
        %v5585 = vld [vmem:[#allocation5 + $0xaa0] sm:$0xf]
        %v5586 = vld [vmem:[#allocation5 + $0xaa8] sm:$0xf]
        %v5587 = vld [vmem:[#allocation5 + $0xab0] sm:$0xf]
        %v5588 = vld [vmem:[#allocation5 + $0xab8] sm:$0xf]
        %v5589 = vld [vmem:[#allocation5 + $0xac0] sm:$0xf]
        %v5590 = vld [vmem:[#allocation5 + $0xac8] sm:$0xf]
        %v5591 = vld [vmem:[#allocation5 + $0xad0] sm:$0xf]
        %v5592 = vld [vmem:[#allocation5 + $0xad8] sm:$0xf]
        %v5601 = vunpack.c.l.b16 %v5585
        %v5602 = vunpack.c.l.b16 %v5586
        %v5603 = vunpack.c.l.b16 %v5587
        %v5604 = vunpack.c.l.b16 %v5588
        %v5605 = vunpack.c.l.b16 %v5589
        %v5606 = vunpack.c.l.b16 %v5590
        %v5607 = vunpack.c.l.b16 %v5591
        %v5608 = vunpack.c.l.b16 %v5592
        %v5609 = vpack.c.b16 %v5602, %v5601
        %v5610 = vpack.c.b16 %v5604, %v5603
        %v5611 = vpack.c.b16 %v5606, %v5605
        %v5612 = vpack.c.b16 %v5608, %v5607
        %5617 = vmatprep.subr.bf16.mxu0 0
        %5618 = vmatpush1.bf16.msra.mxu0 %v5609
        %5619 = vmatprep.subr.bf16.mxu0 0
        %5620 = vmatpush1.bf16.msra.mxu0 %v5610
        %5621 = vmatprep.subr.bf16.mxu0 0
        %5622 = vmatpush1.bf16.msra.mxu0 %v5611
        %5623 = vmatprep.subr.bf16.mxu0 0
        %5624 = vmatpush1.bf16.msra.mxu0 %v5612
        %5625 = vmatprep.subr.bf16.mxu0 0
        %5626 = vmatpush1.bf16.msra.mxu0 0
        %5627 = vmatprep.subr.bf16.mxu0 0
        %5628 = vmatpush1.bf16.msra.mxu0 0
        %5629 = vmatprep.subr.bf16.mxu0 0
        %5630 = vmatpush1.bf16.msra.mxu0 0
        %5631 = vmatprep.subr.bf16.mxu0 0
        %5632 = vmatpush1.bf16.msra.mxu0 0
        %5633 = vmatprep.subr.bf16.mxu0 0
        %5634 = vmatpush1.bf16.msra.mxu0 0
        %5635 = vmatprep.subr.bf16.mxu0 0
        %5636 = vmatpush1.bf16.msra.mxu0 0
        %5637 = vmatprep.subr.bf16.mxu0 0
        %5638 = vmatpush1.bf16.msra.mxu0 0
        %5639 = vmatprep.subr.bf16.mxu0 0
        %5640 = vmatpush1.bf16.msra.mxu0 0
        %5641 = vmatprep.subr.bf16.mxu0 0
        %5642 = vmatpush1.bf16.msra.mxu0 0
        %5643 = vmatprep.subr.bf16.mxu0 0
        %5644 = vmatpush1.bf16.msra.mxu0 0
        %5645 = vmatprep.subr.bf16.mxu0 0
        %5646 = vmatpush1.bf16.msra.mxu0 0
        %5647 = vmatprep.subr.bf16.mxu0 0
        %5648 = vmatpush1.bf16.msra.mxu0 0
        %5649 = vmatprep.mubr.bf16.mxu0 0
        %5650 = vmatmul.mubr.bf16.gmra.mrb[0].mxu0 %v822
        %v5651 = vpop.f32.mrb[0].mxu0
        %v5652 = vadd.f32 0.0, %v5651
        %v5653 = vpop.f32.mrb[0].mxu0
        %v5654 = vpop.f32.mrb[0].mxu0
        %v5655 = vadd.f32 0.0, %v5654
        %v5656 = vpop.f32.mrb[0].mxu0
        %5657 = vmatprep.mubr.bf16.mxu0 0
        %5658 = vmatmul.mubr.bf16.gmra.mrb[0].mxu0 %v825
        %v5659 = vpop.f32.mrb[0].mxu0
        %v5660 = vadd.f32 0.0, %v5659
        %v5661 = vpop.f32.mrb[0].mxu0
        %v5662 = vpop.f32.mrb[0].mxu0
        %v5663 = vadd.f32 0.0, %v5662
        %v5664 = vpop.f32.mrb[0].mxu0
        %5665 = vmatprep.mubr.bf16.mxu0 0
        %5666 = vmatmul.mubr.bf16.gmra.mrb[0].mxu0 %v828
        %v5667 = vpop.f32.mrb[0].mxu0
        %v5668 = vadd.f32 0.0, %v5667
        %v5669 = vpop.f32.mrb[0].mxu0
        %v5670 = vpop.f32.mrb[0].mxu0
        %v5671 = vadd.f32 0.0, %v5670
        %v5672 = vpop.f32.mrb[0].mxu0
        %5673 = vmatprep.mubr.bf16.mxu0 0
        %5674 = vmatmul.mubr.bf16.gmra.mrb[0].mxu0 %v831
        %v5675 = vpop.f32.mrb[0].mxu0
        %v5676 = vadd.f32 0.0, %v5675
        %v5677 = vpop.f32.mrb[0].mxu0
        %v5678 = vpop.f32.mrb[0].mxu0
        %v5679 = vadd.f32 0.0, %v5678
        %v5680 = vpop.f32.mrb[0].mxu0
        %5681 = vmatprep.mubr.bf16.mxu0 0
        %5682 = vmatmul.mubr.bf16.gmra.mrb[0].mxu0 %v834
        %v5683 = vpop.f32.mrb[0].mxu0
        %v5684 = vadd.f32 0.0, %v5683
        %v5685 = vpop.f32.mrb[0].mxu0
        %v5686 = vpop.f32.mrb[0].mxu0
        %v5687 = vadd.f32 0.0, %v5686
        %v5688 = vpop.f32.mrb[0].mxu0
        %5689 = vmatprep.mubr.bf16.mxu0 0
        %5690 = vmatmul.mubr.bf16.gmra.mrb[0].mxu0 %v837
        %v5691 = vpop.f32.mrb[0].mxu0
        %v5692 = vadd.f32 0.0, %v5691
        %v5693 = vpop.f32.mrb[0].mxu0
        %v5694 = vpop.f32.mrb[0].mxu0
        %v5695 = vadd.f32 0.0, %v5694
        %v5696 = vpop.f32.mrb[0].mxu0
        %5697 = vmatprep.mubr.bf16.mxu0 0
        %5698 = vmatmul.mubr.bf16.gmra.mrb[0].mxu0 %v840
        %v5699 = vpop.f32.mrb[0].mxu0
        %v5700 = vadd.f32 0.0, %v5699
        %v5701 = vpop.f32.mrb[0].mxu0
        %v5702 = vpop.f32.mrb[0].mxu0
        %v5703 = vadd.f32 0.0, %v5702
        %v5704 = vpop.f32.mrb[0].mxu0
        %5705 = vmatprep.mubr.bf16.mxu0 0
        %5706 = vmatmul.mubr.bf16.gmra.mrb[0].mxu0 %v843
        %v5707 = vpop.f32.mrb[0].mxu0
        %v5708 = vadd.f32 0.0, %v5707
        %v5709 = vpop.f32.mrb[0].mxu0
        %v5710 = vpop.f32.mrb[0].mxu0
        %v5711 = vadd.f32 0.0, %v5710
        %v5712 = vpop.f32.mrb[0].mxu0
        %5713 = vdwg.mxu0
        %v5730 = vunpack.c.l.b16 %v5561
        %v5731 = vunpack.c.l.b16 %v5562
        %v5732 = vunpack.c.l.b16 %v5563
        %v5733 = vunpack.c.l.b16 %v5564
        %v5734 = vunpack.c.l.b16 %v5565
        %v5735 = vunpack.c.l.b16 %v5566
        %v5736 = vunpack.c.l.b16 %v5567
        %v5737 = vunpack.c.l.b16 %v5568
        %v5738 = vunpack.c.l.b16 %v5569
        %v5739 = vunpack.c.l.b16 %v5570
        %v5740 = vunpack.c.l.b16 %v5571
        %v5741 = vunpack.c.l.b16 %v5572
        %v5742 = vunpack.c.l.b16 %v5573
        %v5743 = vunpack.c.l.b16 %v5574
        %v5744 = vunpack.c.l.b16 %v5575
        %v5745 = vunpack.c.l.b16 %v5576
        %v5746 = vpack.c.b16 %v5731, %v5730
        %v5747 = vpack.c.b16 %v5733, %v5732
        %v5748 = vpack.c.b16 %v5735, %v5734
        %v5749 = vpack.c.b16 %v5737, %v5736
        %v5750 = vpack.c.b16 %v5739, %v5738
        %v5751 = vpack.c.b16 %v5741, %v5740
        %v5752 = vpack.c.b16 %v5743, %v5742
        %v5753 = vpack.c.b16 %v5745, %v5744
        %5762 = vmatprep.subr.bf16.mxu0 0
        %5763 = vmatpush1.bf16.msra.mxu0 %v5746
        %5764 = vmatprep.subr.bf16.mxu0 0
        %5765 = vmatpush1.bf16.msra.mxu0 %v5747
        %5766 = vmatprep.subr.bf16.mxu0 0
        %5767 = vmatpush1.bf16.msra.mxu0 %v5748
        %5768 = vmatprep.subr.bf16.mxu0 0
        %5769 = vmatpush1.bf16.msra.mxu0 %v5749
        %5770 = vmatprep.subr.bf16.mxu0 0
        %5771 = vmatpush1.bf16.msra.mxu0 %v5750
        %5772 = vmatprep.subr.bf16.mxu0 0
        %5773 = vmatpush1.bf16.msra.mxu0 %v5751
        %5774 = vmatprep.subr.bf16.mxu0 0
        %5775 = vmatpush1.bf16.msra.mxu0 %v5752
        %5776 = vmatprep.subr.bf16.mxu0 0
        %5777 = vmatpush1.bf16.msra.mxu0 %v5753
        %5778 = vmatprep.subr.bf16.mxu0 0
        %5779 = vmatpush1.bf16.msra.mxu0 0
        %5780 = vmatprep.subr.bf16.mxu0 0
        %5781 = vmatpush1.bf16.msra.mxu0 0
        %5782 = vmatprep.subr.bf16.mxu0 0
        %5783 = vmatpush1.bf16.msra.mxu0 0
        %5784 = vmatprep.subr.bf16.mxu0 0
        %5785 = vmatpush1.bf16.msra.mxu0 0
        %5786 = vmatprep.subr.bf16.mxu0 0
        %5787 = vmatpush1.bf16.msra.mxu0 0
        %5788 = vmatprep.subr.bf16.mxu0 0
        %5789 = vmatpush1.bf16.msra.mxu0 0
        %5790 = vmatprep.subr.bf16.mxu0 0
        %5791 = vmatpush1.bf16.msra.mxu0 0
        %5792 = vmatprep.subr.bf16.mxu0 0
        %5793 = vmatpush1.bf16.msra.mxu0 0
        %5794 = vmatprep.mubr.bf16.mxu0 0
        %5795 = vmatmul.mubr.bf16.gmra.mrb[0].mxu0 %v5577
        %v5796 = vpop.f32.mrb[0].mxu0
        %v5797 = vadd.f32 %v5652, %v5796
        %v5798 = vpop.f32.mrb[0].mxu0
        %v5799 = vpop.f32.mrb[0].mxu0
        %v5800 = vadd.f32 %v5655, %v5799
        %v5801 = vpop.f32.mrb[0].mxu0
        %5802 = vmatprep.mubr.bf16.mxu0 0
        %5803 = vmatmul.mubr.bf16.gmra.mrb[0].mxu0 %v5578
        %v5804 = vpop.f32.mrb[0].mxu0
        %v5805 = vadd.f32 %v5660, %v5804
        %v5806 = vpop.f32.mrb[0].mxu0
        %v5807 = vpop.f32.mrb[0].mxu0
        %v5808 = vadd.f32 %v5663, %v5807
        %v5809 = vpop.f32.mrb[0].mxu0
        %5810 = vmatprep.mubr.bf16.mxu0 0
        %5811 = vmatmul.mubr.bf16.gmra.mrb[0].mxu0 %v5579
        %v5812 = vpop.f32.mrb[0].mxu0
        %v5813 = vadd.f32 %v5668, %v5812
        %v5814 = vpop.f32.mrb[0].mxu0
        %v5815 = vpop.f32.mrb[0].mxu0
        %v5816 = vadd.f32 %v5671, %v5815
        %v5817 = vpop.f32.mrb[0].mxu0
        %5818 = vmatprep.mubr.bf16.mxu0 0
        %5819 = vmatmul.mubr.bf16.gmra.mrb[0].mxu0 %v5580
        %v5820 = vpop.f32.mrb[0].mxu0
        %v5821 = vadd.f32 %v5676, %v5820
        %v5822 = vpop.f32.mrb[0].mxu0
        %v5823 = vpop.f32.mrb[0].mxu0
        %v5824 = vadd.f32 %v5679, %v5823
        %v5825 = vpop.f32.mrb[0].mxu0
        %5826 = vmatprep.mubr.bf16.mxu0 0
        %5827 = vmatmul.mubr.bf16.gmra.mrb[0].mxu0 %v5581
        %v5828 = vpop.f32.mrb[0].mxu0
        %v5829 = vadd.f32 %v5684, %v5828
        %v5830 = vpop.f32.mrb[0].mxu0
        %v5831 = vpop.f32.mrb[0].mxu0
        %v5832 = vadd.f32 %v5687, %v5831
        %v5833 = vpop.f32.mrb[0].mxu0
        %5834 = vmatprep.mubr.bf16.mxu0 0
        %5835 = vmatmul.mubr.bf16.gmra.mrb[0].mxu0 %v5582
        %v5836 = vpop.f32.mrb[0].mxu0
        %v5837 = vadd.f32 %v5692, %v5836
        %v5838 = vpop.f32.mrb[0].mxu0
        %v5839 = vpop.f32.mrb[0].mxu0
        %v5840 = vadd.f32 %v5695, %v5839
        %v5841 = vpop.f32.mrb[0].mxu0
        %5842 = vmatprep.mubr.bf16.mxu0 0
        %5843 = vmatmul.mubr.bf16.gmra.mrb[0].mxu0 %v5583
        %v5844 = vpop.f32.mrb[0].mxu0
        %v5845 = vadd.f32 %v5700, %v5844
        %v5846 = vpop.f32.mrb[0].mxu0
        %v5847 = vpop.f32.mrb[0].mxu0
        %v5848 = vadd.f32 %v5703, %v5847
        %v5849 = vpop.f32.mrb[0].mxu0
        %5850 = vmatprep.mubr.bf16.mxu0 0
        %5851 = vmatmul.mubr.bf16.gmra.mrb[0].mxu0 %v5584
        %v5852 = vpop.f32.mrb[0].mxu0
        %v5853 = vadd.f32 %v5708, %v5852
        %v5854 = vpop.f32.mrb[0].mxu0
        %v5855 = vpop.f32.mrb[0].mxu0
        %v5856 = vadd.f32 %v5711, %v5855
        %v5857 = vpop.f32.mrb[0].mxu0
        %5858 = vdwg.mxu0
        %v5859 = vld [vmem:[#allocation7 + $0x16] ss:$0 sm:$0xff]
        %v5860 = vadd.f32 %v5797, %v5859
        %v5861 = vadd.f32 %v5800, %v5859
        %v5862 = vadd.f32 %v5805, %v5859
        %v5863 = vadd.f32 %v5808, %v5859
        %v5864 = vadd.f32 %v5813, %v5859
        %v5865 = vadd.f32 %v5816, %v5859
        %v5866 = vadd.f32 %v5821, %v5859
        %v5867 = vadd.f32 %v5824, %v5859
        %v5868 = vadd.f32 %v5829, %v5859
        %v5869 = vadd.f32 %v5832, %v5859
        %v5870 = vadd.f32 %v5837, %v5859
        %v5871 = vadd.f32 %v5840, %v5859
        %v5872 = vadd.f32 %v5845, %v5859
        %v5873 = vadd.f32 %v5848, %v5859
        %v5874 = vadd.f32 %v5853, %v5859
        %v5875 = vadd.f32 %v5856, %v5859
        %vm5876 = vcmp.gt.f32.partialorder %v5860, 0.0
        %vm5877 = vcmp.gt.f32.partialorder %v5861, 0.0
        %vm5878 = vcmp.gt.f32.partialorder %v5862, 0.0
        %vm5879 = vcmp.gt.f32.partialorder %v5863, 0.0
        %vm5880 = vcmp.gt.f32.partialorder %v5864, 0.0
        %vm5881 = vcmp.gt.f32.partialorder %v5865, 0.0
        %vm5882 = vcmp.gt.f32.partialorder %v5866, 0.0
        %vm5883 = vcmp.gt.f32.partialorder %v5867, 0.0
        %vm5884 = vcmp.gt.f32.partialorder %v5868, 0.0
        %vm5885 = vcmp.gt.f32.partialorder %v5869, 0.0
        %vm5886 = vcmp.gt.f32.partialorder %v5870, 0.0
        %vm5887 = vcmp.gt.f32.partialorder %v5871, 0.0
        %vm5888 = vcmp.gt.f32.partialorder %v5872, 0.0
        %vm5889 = vcmp.gt.f32.partialorder %v5873, 0.0
        %vm5890 = vcmp.gt.f32.partialorder %v5874, 0.0
        %vm5891 = vcmp.gt.f32.partialorder %v5875, 0.0
        %v5892 = vmul.f32 %v5860, 0.1
        %v5893 = vmul.f32 %v5861, 0.1
        %v5894 = vmul.f32 %v5862, 0.1
        %v5895 = vmul.f32 %v5863, 0.1
        %v5896 = vmul.f32 %v5864, 0.1
        %v5897 = vmul.f32 %v5865, 0.1
        %v5898 = vmul.f32 %v5866, 0.1
        %v5899 = vmul.f32 %v5867, 0.1
        %v5900 = vmul.f32 %v5868, 0.1
        %v5901 = vmul.f32 %v5869, 0.1
        %v5902 = vmul.f32 %v5870, 0.1
        %v5903 = vmul.f32 %v5871, 0.1
        %v5904 = vmul.f32 %v5872, 0.1
        %v5905 = vmul.f32 %v5873, 0.1
        %v5906 = vmul.f32 %v5874, 0.1
        %v5907 = vmul.f32 %v5875, 0.1
        %v5908 = vsel %vm5876, %v5860, %v5892
        %v5909 = vsel %vm5877, %v5861, %v5893
        %v5910 = vsel %vm5878, %v5862, %v5894
        %v5911 = vsel %vm5879, %v5863, %v5895
        %v5912 = vsel %vm5880, %v5864, %v5896
        %v5913 = vsel %vm5881, %v5865, %v5897
        %v5914 = vsel %vm5882, %v5866, %v5898
        %v5915 = vsel %vm5883, %v5867, %v5899
        %v5916 = vsel %vm5884, %v5868, %v5900
        %v5917 = vsel %vm5885, %v5869, %v5901
        %v5918 = vsel %vm5886, %v5870, %v5902
        %v5919 = vsel %vm5887, %v5871, %v5903
        %v5920 = vsel %vm5888, %v5872, %v5904
        %v5921 = vsel %vm5889, %v5873, %v5905
        %v5922 = vsel %vm5890, %v5874, %v5906
        %v5923 = vsel %vm5891, %v5875, %v5907
        %v5924 = vld [vmem:[%s269 + $0x15] ss:$0 sm:$0xff]
        %v5925 = vld [vmem:[%s269 + $0x40] ss:$0 sm:$0xff]
        %v5926 = vadd.f32 %v5924, 1.0
        %v5927 = vmul.f32 %v5908, %v5926
        %v5928 = vmul.f32 %v5909, %v5926
        %v5929 = vmul.f32 %v5910, %v5926
        %v5930 = vmul.f32 %v5911, %v5926
        %v5931 = vmul.f32 %v5912, %v5926
        %v5932 = vmul.f32 %v5913, %v5926
        %v5933 = vmul.f32 %v5914, %v5926
        %v5934 = vmul.f32 %v5915, %v5926
        %v5935 = vadd.f32 %v5927, %v5925
        %v5936 = vadd.f32 %v5928, %v5925
        %v5937 = vadd.f32 %v5929, %v5925
        %v5938 = vadd.f32 %v5930, %v5925
        %v5939 = vadd.f32 %v5931, %v5925
        %v5940 = vadd.f32 %v5932, %v5925
        %v5941 = vadd.f32 %v5933, %v5925
        %v5942 = vadd.f32 %v5934, %v5925
        %v5943 = vld [vmem:[%s526 + $0x15] ss:$0 sm:$0xff]
        %v5944 = vld [vmem:[%s526 + $0x40] ss:$0 sm:$0xff]
        %v5945 = vadd.f32 %v5943, 1.0
        %v5946 = vmul.f32 %v5916, %v5945
        %v5947 = vmul.f32 %v5917, %v5945
        %v5948 = vmul.f32 %v5918, %v5945
        %v5949 = vmul.f32 %v5919, %v5945
        %v5950 = vmul.f32 %v5920, %v5945
        %v5951 = vmul.f32 %v5921, %v5945
        %v5952 = vmul.f32 %v5922, %v5945
        %v5953 = vmul.f32 %v5923, %v5945
        %v5954 = vadd.f32 %v5946, %v5944
        %v5955 = vadd.f32 %v5947, %v5944
        %v5956 = vadd.f32 %v5948, %v5944
        %v5957 = vadd.f32 %v5949, %v5944
        %v5958 = vadd.f32 %v5950, %v5944
        %v5959 = vadd.f32 %v5951, %v5944
        %v5960 = vadd.f32 %v5952, %v5944
        %v5961 = vadd.f32 %v5953, %v5944
        %v5962 = vld [vmem:[#allocation5 + $0xae0] sm:$0xf]
        %v5963 = vld [vmem:[#allocation5 + $0xae8] sm:$0xf]
        %v5964 = vld [vmem:[#allocation5 + $0xaf0] sm:$0xf]
        %v5965 = vld [vmem:[#allocation5 + $0xaf8] sm:$0xf]
        %v5966 = vld [vmem:[#allocation5 + $0xb00] sm:$0xf]
        %v5967 = vld [vmem:[#allocation5 + $0xb08] sm:$0xf]
        %v5968 = vld [vmem:[#allocation5 + $0xb10] sm:$0xf]
        %v5969 = vld [vmem:[#allocation5 + $0xb18] sm:$0xf]
        %v5970 = vld [vmem:[#allocation5 + $0xb20] sm:$0xf]
        %v5971 = vld [vmem:[#allocation5 + $0xb28] sm:$0xf]
        %v5972 = vld [vmem:[#allocation5 + $0xb30] sm:$0xf]
        %v5973 = vld [vmem:[#allocation5 + $0xb38] sm:$0xf]
        %v5974 = vld [vmem:[#allocation5 + $0xb40] sm:$0xf]
        %v5975 = vld [vmem:[#allocation5 + $0xb48] sm:$0xf]
        %v5976 = vld [vmem:[#allocation5 + $0xb50] sm:$0xf]
        %v5977 = vld [vmem:[#allocation5 + $0xb58] sm:$0xf]
        %v5978 = vpack.c.bf16 %v5936, %v5935
        %v5979 = vpack.c.bf16 %v5938, %v5937
        %v5980 = vpack.c.bf16 %v5940, %v5939
        %v5981 = vpack.c.bf16 %v5942, %v5941
        %v5982 = vpack.c.bf16 %v5955, %v5954
        %v5983 = vpack.c.bf16 %v5957, %v5956
        %v5984 = vpack.c.bf16 %v5959, %v5958
        %v5985 = vpack.c.bf16 %v5961, %v5960
        %v5986 = vld [vmem:[#allocation7 + $0x17] ss:$0 sm:$0xff]
        %v6003 = vunpack.c.l.b16 %v5962
        %v6004 = vunpack.c.l.b16 %v5963
        %v6005 = vunpack.c.l.b16 %v5964
        %v6006 = vunpack.c.l.b16 %v5965
        %v6007 = vunpack.c.l.b16 %v5966
        %v6008 = vunpack.c.l.b16 %v5967
        %v6009 = vunpack.c.l.b16 %v5968
        %v6010 = vunpack.c.l.b16 %v5969
        %v6011 = vunpack.c.l.b16 %v5970
        %v6012 = vunpack.c.l.b16 %v5971
        %v6013 = vunpack.c.l.b16 %v5972
        %v6014 = vunpack.c.l.b16 %v5973
        %v6015 = vunpack.c.l.b16 %v5974
        %v6016 = vunpack.c.l.b16 %v5975
        %v6017 = vunpack.c.l.b16 %v5976
        %v6018 = vunpack.c.l.b16 %v5977
        %v6019 = vpack.c.b16 %v6004, %v6003
        %v6020 = vpack.c.b16 %v6006, %v6005
        %v6021 = vpack.c.b16 %v6008, %v6007
        %v6022 = vpack.c.b16 %v6010, %v6009
        %v6023 = vpack.c.b16 %v6012, %v6011
        %v6024 = vpack.c.b16 %v6014, %v6013
        %v6025 = vpack.c.b16 %v6016, %v6015
        %v6026 = vpack.c.b16 %v6018, %v6017
        %6035 = vmatprep.subr.bf16.mxu0 0
        %6036 = vmatpush1.bf16.msra.mxu0 %v6019
        %6037 = vmatprep.subr.bf16.mxu0 0
        %6038 = vmatpush1.bf16.msra.mxu0 %v6020
        %6039 = vmatprep.subr.bf16.mxu0 0
        %6040 = vmatpush1.bf16.msra.mxu0 %v6021
        %6041 = vmatprep.subr.bf16.mxu0 0
        %6042 = vmatpush1.bf16.msra.mxu0 %v6022
        %6043 = vmatprep.subr.bf16.mxu0 0
        %6044 = vmatpush1.bf16.msra.mxu0 %v6023
        %6045 = vmatprep.subr.bf16.mxu0 0
        %6046 = vmatpush1.bf16.msra.mxu0 %v6024
        %6047 = vmatprep.subr.bf16.mxu0 0
        %6048 = vmatpush1.bf16.msra.mxu0 %v6025
        %6049 = vmatprep.subr.bf16.mxu0 0
        %6050 = vmatpush1.bf16.msra.mxu0 %v6026
        %6051 = vmatprep.subr.bf16.mxu0 0
        %6052 = vmatpush1.bf16.msra.mxu0 0
        %6053 = vmatprep.subr.bf16.mxu0 0
        %6054 = vmatpush1.bf16.msra.mxu0 0
        %6055 = vmatprep.subr.bf16.mxu0 0
        %6056 = vmatpush1.bf16.msra.mxu0 0
        %6057 = vmatprep.subr.bf16.mxu0 0
        %6058 = vmatpush1.bf16.msra.mxu0 0
        %6059 = vmatprep.subr.bf16.mxu0 0
        %6060 = vmatpush1.bf16.msra.mxu0 0
        %6061 = vmatprep.subr.bf16.mxu0 0
        %6062 = vmatpush1.bf16.msra.mxu0 0
        %6063 = vmatprep.subr.bf16.mxu0 0
        %6064 = vmatpush1.bf16.msra.mxu0 0
        %6065 = vmatprep.subr.bf16.mxu0 0
        %6066 = vmatpush1.bf16.msra.mxu0 0
        %6067 = vmatprep.mubr.bf16.mxu0 0
        %6068 = vmatmul.mubr.bf16.gmra.mrb[0].mxu0 %v5978
        %v6069 = vpop.f32.mrb[0].mxu0
        %v6070 = vadd.f32 %v5986, %v6069
        %v6071 = vpop.f32.mrb[0].mxu0
        %v6072 = vpop.f32.mrb[0].mxu0
        %v6073 = vadd.f32 %v5986, %v6072
        %v6074 = vpop.f32.mrb[0].mxu0
        %6075 = vmatprep.mubr.bf16.mxu0 0
        %6076 = vmatmul.mubr.bf16.gmra.mrb[0].mxu0 %v5979
        %v6077 = vpop.f32.mrb[0].mxu0
        %v6078 = vadd.f32 %v5986, %v6077
        %v6079 = vpop.f32.mrb[0].mxu0
        %v6080 = vpop.f32.mrb[0].mxu0
        %v6081 = vadd.f32 %v5986, %v6080
        %v6082 = vpop.f32.mrb[0].mxu0
        %6083 = vmatprep.mubr.bf16.mxu0 0
        %6084 = vmatmul.mubr.bf16.gmra.mrb[0].mxu0 %v5980
        %v6085 = vpop.f32.mrb[0].mxu0
        %v6086 = vadd.f32 %v5986, %v6085
        %v6087 = vpop.f32.mrb[0].mxu0
        %v6088 = vpop.f32.mrb[0].mxu0
        %v6089 = vadd.f32 %v5986, %v6088
        %v6090 = vpop.f32.mrb[0].mxu0
        %6091 = vmatprep.mubr.bf16.mxu0 0
        %6092 = vmatmul.mubr.bf16.gmra.mrb[0].mxu0 %v5981
        %v6093 = vpop.f32.mrb[0].mxu0
        %v6094 = vadd.f32 %v5986, %v6093
        %v6095 = vpop.f32.mrb[0].mxu0
        %v6096 = vpop.f32.mrb[0].mxu0
        %v6097 = vadd.f32 %v5986, %v6096
        %v6098 = vpop.f32.mrb[0].mxu0
        %6099 = vmatprep.mubr.bf16.mxu0 0
        %6100 = vmatmul.mubr.bf16.gmra.mrb[0].mxu0 %v5982
        %v6101 = vpop.f32.mrb[0].mxu0
        %v6102 = vadd.f32 %v5986, %v6101
        %v6103 = vpop.f32.mrb[0].mxu0
        %v6104 = vpop.f32.mrb[0].mxu0
        %v6105 = vadd.f32 %v5986, %v6104
        %v6106 = vpop.f32.mrb[0].mxu0
        %6107 = vmatprep.mubr.bf16.mxu0 0
        %6108 = vmatmul.mubr.bf16.gmra.mrb[0].mxu0 %v5983
        %v6109 = vpop.f32.mrb[0].mxu0
        %v6110 = vadd.f32 %v5986, %v6109
        %v6111 = vpop.f32.mrb[0].mxu0
        %v6112 = vpop.f32.mrb[0].mxu0
        %v6113 = vadd.f32 %v5986, %v6112
        %v6114 = vpop.f32.mrb[0].mxu0
        %6115 = vmatprep.mubr.bf16.mxu0 0
        %6116 = vmatmul.mubr.bf16.gmra.mrb[0].mxu0 %v5984
        %v6117 = vpop.f32.mrb[0].mxu0
        %v6118 = vadd.f32 %v5986, %v6117
        %v6119 = vpop.f32.mrb[0].mxu0
        %v6120 = vpop.f32.mrb[0].mxu0
        %v6121 = vadd.f32 %v5986, %v6120
        %v6122 = vpop.f32.mrb[0].mxu0
        %6123 = vmatprep.mubr.bf16.mxu0 0
        %6124 = vmatmul.mubr.bf16.gmra.mrb[0].mxu0 %v5985
        %v6125 = vpop.f32.mrb[0].mxu0
        %v6126 = vadd.f32 %v5986, %v6125
        %v6127 = vpop.f32.mrb[0].mxu0
        %v6128 = vpop.f32.mrb[0].mxu0
        %v6129 = vadd.f32 %v5986, %v6128
        %v6130 = vpop.f32.mrb[0].mxu0
        %6131 = vdwg.mxu0
        %vm6132 = vcmp.gt.f32.partialorder %v6070, 0.0
        %vm6133 = vcmp.gt.f32.partialorder %v6073, 0.0
        %vm6134 = vcmp.gt.f32.partialorder %v6078, 0.0
        %vm6135 = vcmp.gt.f32.partialorder %v6081, 0.0
        %vm6136 = vcmp.gt.f32.partialorder %v6086, 0.0
        %vm6137 = vcmp.gt.f32.partialorder %v6089, 0.0
        %vm6138 = vcmp.gt.f32.partialorder %v6094, 0.0
        %vm6139 = vcmp.gt.f32.partialorder %v6097, 0.0
        %vm6140 = vcmp.gt.f32.partialorder %v6102, 0.0
        %vm6141 = vcmp.gt.f32.partialorder %v6105, 0.0
        %vm6142 = vcmp.gt.f32.partialorder %v6110, 0.0
        %vm6143 = vcmp.gt.f32.partialorder %v6113, 0.0
        %vm6144 = vcmp.gt.f32.partialorder %v6118, 0.0
        %vm6145 = vcmp.gt.f32.partialorder %v6121, 0.0
        %vm6146 = vcmp.gt.f32.partialorder %v6126, 0.0
        %vm6147 = vcmp.gt.f32.partialorder %v6129, 0.0
        %v6148 = vmul.f32 %v6070, 0.1
        %v6149 = vmul.f32 %v6073, 0.1
        %v6150 = vmul.f32 %v6078, 0.1
        %v6151 = vmul.f32 %v6081, 0.1
        %v6152 = vmul.f32 %v6086, 0.1
        %v6153 = vmul.f32 %v6089, 0.1
        %v6154 = vmul.f32 %v6094, 0.1
        %v6155 = vmul.f32 %v6097, 0.1
        %v6156 = vmul.f32 %v6102, 0.1
        %v6157 = vmul.f32 %v6105, 0.1
        %v6158 = vmul.f32 %v6110, 0.1
        %v6159 = vmul.f32 %v6113, 0.1
        %v6160 = vmul.f32 %v6118, 0.1
        %v6161 = vmul.f32 %v6121, 0.1
        %v6162 = vmul.f32 %v6126, 0.1
        %v6163 = vmul.f32 %v6129, 0.1
        %v6164 = vsel %vm6132, %v6070, %v6148
        %v6165 = vsel %vm6133, %v6073, %v6149
        %v6166 = vsel %vm6134, %v6078, %v6150
        %v6167 = vsel %vm6135, %v6081, %v6151
        %v6168 = vsel %vm6136, %v6086, %v6152
        %v6169 = vsel %vm6137, %v6089, %v6153
        %v6170 = vsel %vm6138, %v6094, %v6154
        %v6171 = vsel %vm6139, %v6097, %v6155
        %v6172 = vsel %vm6140, %v6102, %v6156
        %v6173 = vsel %vm6141, %v6105, %v6157
        %v6174 = vsel %vm6142, %v6110, %v6158
        %v6175 = vsel %vm6143, %v6113, %v6159
        %v6176 = vsel %vm6144, %v6118, %v6160
        %v6177 = vsel %vm6145, %v6121, %v6161
        %v6178 = vsel %vm6146, %v6126, %v6162
        %v6179 = vsel %vm6147, %v6129, %v6163
        %v6180 = vld [vmem:[%s269 + $0x16] ss:$0 sm:$0xff]
        %v6181 = vld [vmem:[%s269 + $0x41] ss:$0 sm:$0xff]
        %v6182 = vadd.f32 %v6180, 1.0
        %v6183 = vmul.f32 %v6164, %v6182
        %v6184 = vmul.f32 %v6165, %v6182
        %v6185 = vmul.f32 %v6166, %v6182
        %v6186 = vmul.f32 %v6167, %v6182
        %v6187 = vmul.f32 %v6168, %v6182
        %v6188 = vmul.f32 %v6169, %v6182
        %v6189 = vmul.f32 %v6170, %v6182
        %v6190 = vmul.f32 %v6171, %v6182
        %v6191 = vadd.f32 %v6183, %v6181
        %v6192 = vadd.f32 %v6184, %v6181
        %v6193 = vadd.f32 %v6185, %v6181
        %v6194 = vadd.f32 %v6186, %v6181
        %v6195 = vadd.f32 %v6187, %v6181
        %v6196 = vadd.f32 %v6188, %v6181
        %v6197 = vadd.f32 %v6189, %v6181
        %v6198 = vadd.f32 %v6190, %v6181
        %v6199 = vld [vmem:[%s526 + $0x16] ss:$0 sm:$0xff]
        %v6200 = vld [vmem:[%s526 + $0x41] ss:$0 sm:$0xff]
        %v6201 = vadd.f32 %v6199, 1.0
        %v6202 = vmul.f32 %v6172, %v6201
        %v6203 = vmul.f32 %v6173, %v6201
        %v6204 = vmul.f32 %v6174, %v6201
        %v6205 = vmul.f32 %v6175, %v6201
        %v6206 = vmul.f32 %v6176, %v6201
        %v6207 = vmul.f32 %v6177, %v6201
        %v6208 = vmul.f32 %v6178, %v6201
        %v6209 = vmul.f32 %v6179, %v6201
        %v6210 = vadd.f32 %v6202, %v6200
        %v6211 = vadd.f32 %v6203, %v6200
        %v6212 = vadd.f32 %v6204, %v6200
        %v6213 = vadd.f32 %v6205, %v6200
        %v6214 = vadd.f32 %v6206, %v6200
        %v6215 = vadd.f32 %v6207, %v6200
        %v6216 = vadd.f32 %v6208, %v6200
        %v6217 = vadd.f32 %v6209, %v6200
        %v6218 = vld [vmem:[#allocation5 + $0xb60] sm:$0xf]
        %v6219 = vld [vmem:[#allocation5 + $0xb68] sm:$0xf]
        %v6220 = vld [vmem:[#allocation5 + $0xb70] sm:$0xf]
        %v6221 = vld [vmem:[#allocation5 + $0xb78] sm:$0xf]
        %v6222 = vld [vmem:[#allocation5 + $0xb80] sm:$0xf]
        %v6223 = vld [vmem:[#allocation5 + $0xb88] sm:$0xf]
        %v6224 = vld [vmem:[#allocation5 + $0xb90] sm:$0xf]
        %v6225 = vld [vmem:[#allocation5 + $0xb98] sm:$0xf]
        %v6226 = vld [vmem:[#allocation5 + $0xba0] sm:$0xf]
        %v6227 = vld [vmem:[#allocation5 + $0xba8] sm:$0xf]
        %v6228 = vld [vmem:[#allocation5 + $0xbb0] sm:$0xf]
        %v6229 = vld [vmem:[#allocation5 + $0xbb8] sm:$0xf]
        %v6230 = vld [vmem:[#allocation5 + $0xbc0] sm:$0xf]
        %v6231 = vld [vmem:[#allocation5 + $0xbc8] sm:$0xf]
        %v6232 = vld [vmem:[#allocation5 + $0xbd0] sm:$0xf]
        %v6233 = vld [vmem:[#allocation5 + $0xbd8] sm:$0xf]
        %v6234 = vpack.c.bf16 %v6192, %v6191
        %v6235 = vpack.c.bf16 %v6194, %v6193
        %v6236 = vpack.c.bf16 %v6196, %v6195
        %v6237 = vpack.c.bf16 %v6198, %v6197
        %v6238 = vpack.c.bf16 %v6211, %v6210
        %v6239 = vpack.c.bf16 %v6213, %v6212
        %v6240 = vpack.c.bf16 %v6215, %v6214
        %v6241 = vpack.c.bf16 %v6217, %v6216
        %v6242 = vld [vmem:[#allocation5 + $0xbe0] sm:$0xf]
        %v6243 = vld [vmem:[#allocation5 + $0xbe8] sm:$0xf]
        %v6244 = vld [vmem:[#allocation5 + $0xbf0] sm:$0xf]
        %v6245 = vld [vmem:[#allocation5 + $0xbf8] sm:$0xf]
        %v6246 = vld [vmem:[#allocation5 + $0xc00] sm:$0xf]
        %v6247 = vld [vmem:[#allocation5 + $0xc08] sm:$0xf]
        %v6248 = vld [vmem:[#allocation5 + $0xc10] sm:$0xf]
        %v6249 = vld [vmem:[#allocation5 + $0xc18] sm:$0xf]
        %v6250 = vld [vmem:[#allocation5 + $0xc20] sm:$0xf]
        %v6251 = vld [vmem:[#allocation5 + $0xc28] sm:$0xf]
        %v6252 = vld [vmem:[#allocation5 + $0xc30] sm:$0xf]
        %v6253 = vld [vmem:[#allocation5 + $0xc38] sm:$0xf]
        %v6254 = vld [vmem:[#allocation5 + $0xc40] sm:$0xf]
        %v6255 = vld [vmem:[#allocation5 + $0xc48] sm:$0xf]
        %v6256 = vld [vmem:[#allocation5 + $0xc50] sm:$0xf]
        %v6257 = vld [vmem:[#allocation5 + $0xc58] sm:$0xf]
        %v6274 = vunpack.c.l.b16 %v6242
        %v6275 = vunpack.c.l.b16 %v6243
        %v6276 = vunpack.c.l.b16 %v6244
        %v6277 = vunpack.c.l.b16 %v6245
        %v6278 = vunpack.c.l.b16 %v6246
        %v6279 = vunpack.c.l.b16 %v6247
        %v6280 = vunpack.c.l.b16 %v6248
        %v6281 = vunpack.c.l.b16 %v6249
        %v6282 = vunpack.c.l.b16 %v6250
        %v6283 = vunpack.c.l.b16 %v6251
        %v6284 = vunpack.c.l.b16 %v6252
        %v6285 = vunpack.c.l.b16 %v6253
        %v6286 = vunpack.c.l.b16 %v6254
        %v6287 = vunpack.c.l.b16 %v6255
        %v6288 = vunpack.c.l.b16 %v6256
        %v6289 = vunpack.c.l.b16 %v6257
        %v6290 = vpack.c.b16 %v6275, %v6274
        %v6291 = vpack.c.b16 %v6277, %v6276
        %v6292 = vpack.c.b16 %v6279, %v6278
        %v6293 = vpack.c.b16 %v6281, %v6280
        %v6294 = vpack.c.b16 %v6283, %v6282
        %v6295 = vpack.c.b16 %v6285, %v6284
        %v6296 = vpack.c.b16 %v6287, %v6286
        %v6297 = vpack.c.b16 %v6289, %v6288
        %6306 = vmatprep.subr.bf16.mxu0 0
        %6307 = vmatpush1.bf16.msra.mxu0 %v6290
        %6308 = vmatprep.subr.bf16.mxu0 0
        %6309 = vmatpush1.bf16.msra.mxu0 %v6291
        %6310 = vmatprep.subr.bf16.mxu0 0
        %6311 = vmatpush1.bf16.msra.mxu0 %v6292
        %6312 = vmatprep.subr.bf16.mxu0 0
        %6313 = vmatpush1.bf16.msra.mxu0 %v6293
        %6314 = vmatprep.subr.bf16.mxu0 0
        %6315 = vmatpush1.bf16.msra.mxu0 %v6294
        %6316 = vmatprep.subr.bf16.mxu0 0
        %6317 = vmatpush1.bf16.msra.mxu0 %v6295
        %6318 = vmatprep.subr.bf16.mxu0 0
        %6319 = vmatpush1.bf16.msra.mxu0 %v6296
        %6320 = vmatprep.subr.bf16.mxu0 0
        %6321 = vmatpush1.bf16.msra.mxu0 %v6297
        %6322 = vmatprep.subr.bf16.mxu0 0
        %6323 = vmatpush1.bf16.msra.mxu0 0
        %6324 = vmatprep.subr.bf16.mxu0 0
        %6325 = vmatpush1.bf16.msra.mxu0 0
        %6326 = vmatprep.subr.bf16.mxu0 0
        %6327 = vmatpush1.bf16.msra.mxu0 0
        %6328 = vmatprep.subr.bf16.mxu0 0
        %6329 = vmatpush1.bf16.msra.mxu0 0
        %6330 = vmatprep.subr.bf16.mxu0 0
        %6331 = vmatpush1.bf16.msra.mxu0 0
        %6332 = vmatprep.subr.bf16.mxu0 0
        %6333 = vmatpush1.bf16.msra.mxu0 0
        %6334 = vmatprep.subr.bf16.mxu0 0
        %6335 = vmatpush1.bf16.msra.mxu0 0
        %6336 = vmatprep.subr.bf16.mxu0 0
        %6337 = vmatpush1.bf16.msra.mxu0 0
        %6338 = vmatprep.mubr.bf16.mxu0 0
        %6339 = vmatmul.mubr.bf16.gmra.mrb[0].mxu0 %v305
        %v6340 = vpop.f32.mrb[0].mxu0
        %v6341 = vadd.f32 0.0, %v6340
        %v6342 = vpop.f32.mrb[0].mxu0
        %v6343 = vpop.f32.mrb[0].mxu0
        %v6344 = vadd.f32 0.0, %v6343
        %v6345 = vpop.f32.mrb[0].mxu0
        %6346 = vmatprep.mubr.bf16.mxu0 0
        %6347 = vmatmul.mubr.bf16.gmra.mrb[0].mxu0 %v306
        %v6348 = vpop.f32.mrb[0].mxu0
        %v6349 = vadd.f32 0.0, %v6348
        %v6350 = vpop.f32.mrb[0].mxu0
        %v6351 = vpop.f32.mrb[0].mxu0
        %v6352 = vadd.f32 0.0, %v6351
        %v6353 = vpop.f32.mrb[0].mxu0
        %6354 = vmatprep.mubr.bf16.mxu0 0
        %6355 = vmatmul.mubr.bf16.gmra.mrb[0].mxu0 %v307
        %v6356 = vpop.f32.mrb[0].mxu0
        %v6357 = vadd.f32 0.0, %v6356
        %v6358 = vpop.f32.mrb[0].mxu0
        %v6359 = vpop.f32.mrb[0].mxu0
        %v6360 = vadd.f32 0.0, %v6359
        %v6361 = vpop.f32.mrb[0].mxu0
        %6362 = vmatprep.mubr.bf16.mxu0 0
        %6363 = vmatmul.mubr.bf16.gmra.mrb[0].mxu0 %v308
        %v6364 = vpop.f32.mrb[0].mxu0
        %v6365 = vadd.f32 0.0, %v6364
        %v6366 = vpop.f32.mrb[0].mxu0
        %v6367 = vpop.f32.mrb[0].mxu0
        %v6368 = vadd.f32 0.0, %v6367
        %v6369 = vpop.f32.mrb[0].mxu0
        %6370 = vmatprep.mubr.bf16.mxu0 0
        %6371 = vmatmul.mubr.bf16.gmra.mrb[0].mxu0 %v309
        %v6372 = vpop.f32.mrb[0].mxu0
        %v6373 = vadd.f32 0.0, %v6372
        %v6374 = vpop.f32.mrb[0].mxu0
        %v6375 = vpop.f32.mrb[0].mxu0
        %v6376 = vadd.f32 0.0, %v6375
        %v6377 = vpop.f32.mrb[0].mxu0
        %6378 = vmatprep.mubr.bf16.mxu0 0
        %6379 = vmatmul.mubr.bf16.gmra.mrb[0].mxu0 %v310
        %v6380 = vpop.f32.mrb[0].mxu0
        %v6381 = vadd.f32 0.0, %v6380
        %v6382 = vpop.f32.mrb[0].mxu0
        %v6383 = vpop.f32.mrb[0].mxu0
        %v6384 = vadd.f32 0.0, %v6383
        %v6385 = vpop.f32.mrb[0].mxu0
        %6386 = vmatprep.mubr.bf16.mxu0 0
        %6387 = vmatmul.mubr.bf16.gmra.mrb[0].mxu0 %v311
        %v6388 = vpop.f32.mrb[0].mxu0
        %v6389 = vadd.f32 0.0, %v6388
        %v6390 = vpop.f32.mrb[0].mxu0
        %v6391 = vpop.f32.mrb[0].mxu0
        %v6392 = vadd.f32 0.0, %v6391
        %v6393 = vpop.f32.mrb[0].mxu0
        %6394 = vmatprep.mubr.bf16.mxu0 0
        %6395 = vmatmul.mubr.bf16.gmra.mrb[0].mxu0 %v312
        %v6396 = vpop.f32.mrb[0].mxu0
        %v6397 = vadd.f32 0.0, %v6396
        %v6398 = vpop.f32.mrb[0].mxu0
        %v6399 = vpop.f32.mrb[0].mxu0
        %v6400 = vadd.f32 0.0, %v6399
        %v6401 = vpop.f32.mrb[0].mxu0
        %6402 = vdwg.mxu0
        %v6419 = vunpack.c.l.b16 %v6218
        %v6420 = vunpack.c.l.b16 %v6219
        %v6421 = vunpack.c.l.b16 %v6220
        %v6422 = vunpack.c.l.b16 %v6221
        %v6423 = vunpack.c.l.b16 %v6222
        %v6424 = vunpack.c.l.b16 %v6223
        %v6425 = vunpack.c.l.b16 %v6224
        %v6426 = vunpack.c.l.b16 %v6225
        %v6427 = vunpack.c.l.b16 %v6226
        %v6428 = vunpack.c.l.b16 %v6227
        %v6429 = vunpack.c.l.b16 %v6228
        %v6430 = vunpack.c.l.b16 %v6229
        %v6431 = vunpack.c.l.b16 %v6230
        %v6432 = vunpack.c.l.b16 %v6231
        %v6433 = vunpack.c.l.b16 %v6232
        %v6434 = vunpack.c.l.b16 %v6233
        %v6435 = vpack.c.b16 %v6420, %v6419
        %v6436 = vpack.c.b16 %v6422, %v6421
        %v6437 = vpack.c.b16 %v6424, %v6423
        %v6438 = vpack.c.b16 %v6426, %v6425
        %v6439 = vpack.c.b16 %v6428, %v6427
        %v6440 = vpack.c.b16 %v6430, %v6429
        %v6441 = vpack.c.b16 %v6432, %v6431
        %v6442 = vpack.c.b16 %v6434, %v6433
        %6451 = vmatprep.subr.bf16.mxu0 0
        %6452 = vmatpush1.bf16.msra.mxu0 %v6435
        %6453 = vmatprep.subr.bf16.mxu0 0
        %6454 = vmatpush1.bf16.msra.mxu0 %v6436
        %6455 = vmatprep.subr.bf16.mxu0 0
        %6456 = vmatpush1.bf16.msra.mxu0 %v6437
        %6457 = vmatprep.subr.bf16.mxu0 0
        %6458 = vmatpush1.bf16.msra.mxu0 %v6438
        %6459 = vmatprep.subr.bf16.mxu0 0
        %6460 = vmatpush1.bf16.msra.mxu0 %v6439
        %6461 = vmatprep.subr.bf16.mxu0 0
        %6462 = vmatpush1.bf16.msra.mxu0 %v6440
        %6463 = vmatprep.subr.bf16.mxu0 0
        %6464 = vmatpush1.bf16.msra.mxu0 %v6441
        %6465 = vmatprep.subr.bf16.mxu0 0
        %6466 = vmatpush1.bf16.msra.mxu0 %v6442
        %6467 = vmatprep.subr.bf16.mxu0 0
        %6468 = vmatpush1.bf16.msra.mxu0 0
        %6469 = vmatprep.subr.bf16.mxu0 0
        %6470 = vmatpush1.bf16.msra.mxu0 0
        %6471 = vmatprep.subr.bf16.mxu0 0
        %6472 = vmatpush1.bf16.msra.mxu0 0
        %6473 = vmatprep.subr.bf16.mxu0 0
        %6474 = vmatpush1.bf16.msra.mxu0 0
        %6475 = vmatprep.subr.bf16.mxu0 0
        %6476 = vmatpush1.bf16.msra.mxu0 0
        %6477 = vmatprep.subr.bf16.mxu0 0
        %6478 = vmatpush1.bf16.msra.mxu0 0
        %6479 = vmatprep.subr.bf16.mxu0 0
        %6480 = vmatpush1.bf16.msra.mxu0 0
        %6481 = vmatprep.subr.bf16.mxu0 0
        %6482 = vmatpush1.bf16.msra.mxu0 0
        %6483 = vmatprep.mubr.bf16.mxu0 0
        %6484 = vmatmul.mubr.bf16.gmra.mrb[0].mxu0 %v6234
        %v6485 = vpop.f32.mrb[0].mxu0
        %v6486 = vadd.f32 %v6341, %v6485
        %v6487 = vpop.f32.mrb[0].mxu0
        %v6488 = vpop.f32.mrb[0].mxu0
        %v6489 = vadd.f32 %v6344, %v6488
        %v6490 = vpop.f32.mrb[0].mxu0
        %6491 = vmatprep.mubr.bf16.mxu0 0
        %6492 = vmatmul.mubr.bf16.gmra.mrb[0].mxu0 %v6235
        %v6493 = vpop.f32.mrb[0].mxu0
        %v6494 = vadd.f32 %v6349, %v6493
        %v6495 = vpop.f32.mrb[0].mxu0
        %v6496 = vpop.f32.mrb[0].mxu0
        %v6497 = vadd.f32 %v6352, %v6496
        %v6498 = vpop.f32.mrb[0].mxu0
        %6499 = vmatprep.mubr.bf16.mxu0 0
        %6500 = vmatmul.mubr.bf16.gmra.mrb[0].mxu0 %v6236
        %v6501 = vpop.f32.mrb[0].mxu0
        %v6502 = vadd.f32 %v6357, %v6501
        %v6503 = vpop.f32.mrb[0].mxu0
        %v6504 = vpop.f32.mrb[0].mxu0
        %v6505 = vadd.f32 %v6360, %v6504
        %v6506 = vpop.f32.mrb[0].mxu0
        %6507 = vmatprep.mubr.bf16.mxu0 0
        %6508 = vmatmul.mubr.bf16.gmra.mrb[0].mxu0 %v6237
        %v6509 = vpop.f32.mrb[0].mxu0
        %v6510 = vadd.f32 %v6365, %v6509
        %v6511 = vpop.f32.mrb[0].mxu0
        %v6512 = vpop.f32.mrb[0].mxu0
        %v6513 = vadd.f32 %v6368, %v6512
        %v6514 = vpop.f32.mrb[0].mxu0
        %6515 = vmatprep.mubr.bf16.mxu0 0
        %6516 = vmatmul.mubr.bf16.gmra.mrb[0].mxu0 %v6238
        %v6517 = vpop.f32.mrb[0].mxu0
        %v6518 = vadd.f32 %v6373, %v6517
        %v6519 = vpop.f32.mrb[0].mxu0
        %v6520 = vpop.f32.mrb[0].mxu0
        %v6521 = vadd.f32 %v6376, %v6520
        %v6522 = vpop.f32.mrb[0].mxu0
        %6523 = vmatprep.mubr.bf16.mxu0 0
        %6524 = vmatmul.mubr.bf16.gmra.mrb[0].mxu0 %v6239
        %v6525 = vpop.f32.mrb[0].mxu0
        %v6526 = vadd.f32 %v6381, %v6525
        %v6527 = vpop.f32.mrb[0].mxu0
        %v6528 = vpop.f32.mrb[0].mxu0
        %v6529 = vadd.f32 %v6384, %v6528
        %v6530 = vpop.f32.mrb[0].mxu0
        %6531 = vmatprep.mubr.bf16.mxu0 0
        %6532 = vmatmul.mubr.bf16.gmra.mrb[0].mxu0 %v6240
        %v6533 = vpop.f32.mrb[0].mxu0
        %v6534 = vadd.f32 %v6389, %v6533
        %v6535 = vpop.f32.mrb[0].mxu0
        %v6536 = vpop.f32.mrb[0].mxu0
        %v6537 = vadd.f32 %v6392, %v6536
        %v6538 = vpop.f32.mrb[0].mxu0
        %6539 = vmatprep.mubr.bf16.mxu0 0
        %6540 = vmatmul.mubr.bf16.gmra.mrb[0].mxu0 %v6241
        %v6541 = vpop.f32.mrb[0].mxu0
        %v6542 = vadd.f32 %v6397, %v6541
        %v6543 = vpop.f32.mrb[0].mxu0
        %v6544 = vpop.f32.mrb[0].mxu0
        %v6545 = vadd.f32 %v6400, %v6544
        %v6546 = vpop.f32.mrb[0].mxu0
        %6547 = vdwg.mxu0
        %v6548 = vld [vmem:[#allocation7 + $0x20] ss:$0 sm:$0xff]
        %v6549 = vadd.f32 %v6486, %v6548
        %v6550 = vadd.f32 %v6489, %v6548
        %v6551 = vadd.f32 %v6494, %v6548
        %v6552 = vadd.f32 %v6497, %v6548
        %v6553 = vadd.f32 %v6502, %v6548
        %v6554 = vadd.f32 %v6505, %v6548
        %v6555 = vadd.f32 %v6510, %v6548
        %v6556 = vadd.f32 %v6513, %v6548
        %v6557 = vadd.f32 %v6518, %v6548
        %v6558 = vadd.f32 %v6521, %v6548
        %v6559 = vadd.f32 %v6526, %v6548
        %v6560 = vadd.f32 %v6529, %v6548
        %v6561 = vadd.f32 %v6534, %v6548
        %v6562 = vadd.f32 %v6537, %v6548
        %v6563 = vadd.f32 %v6542, %v6548
        %v6564 = vadd.f32 %v6545, %v6548
        %vm6565 = vcmp.gt.f32.partialorder %v6549, 0.0
        %vm6566 = vcmp.gt.f32.partialorder %v6550, 0.0
        %vm6567 = vcmp.gt.f32.partialorder %v6551, 0.0
        %vm6568 = vcmp.gt.f32.partialorder %v6552, 0.0
        %vm6569 = vcmp.gt.f32.partialorder %v6553, 0.0
        %vm6570 = vcmp.gt.f32.partialorder %v6554, 0.0
        %vm6571 = vcmp.gt.f32.partialorder %v6555, 0.0
        %vm6572 = vcmp.gt.f32.partialorder %v6556, 0.0
        %vm6573 = vcmp.gt.f32.partialorder %v6557, 0.0
        %vm6574 = vcmp.gt.f32.partialorder %v6558, 0.0
        %vm6575 = vcmp.gt.f32.partialorder %v6559, 0.0
        %vm6576 = vcmp.gt.f32.partialorder %v6560, 0.0
        %vm6577 = vcmp.gt.f32.partialorder %v6561, 0.0
        %vm6578 = vcmp.gt.f32.partialorder %v6562, 0.0
        %vm6579 = vcmp.gt.f32.partialorder %v6563, 0.0
        %vm6580 = vcmp.gt.f32.partialorder %v6564, 0.0
        %v6581 = vmul.f32 %v6549, 0.1
        %v6582 = vmul.f32 %v6550, 0.1
        %v6583 = vmul.f32 %v6551, 0.1
        %v6584 = vmul.f32 %v6552, 0.1
        %v6585 = vmul.f32 %v6553, 0.1
        %v6586 = vmul.f32 %v6554, 0.1
        %v6587 = vmul.f32 %v6555, 0.1
        %v6588 = vmul.f32 %v6556, 0.1
        %v6589 = vmul.f32 %v6557, 0.1
        %v6590 = vmul.f32 %v6558, 0.1
        %v6591 = vmul.f32 %v6559, 0.1
        %v6592 = vmul.f32 %v6560, 0.1
        %v6593 = vmul.f32 %v6561, 0.1
        %v6594 = vmul.f32 %v6562, 0.1
        %v6595 = vmul.f32 %v6563, 0.1
        %v6596 = vmul.f32 %v6564, 0.1
        %v6597 = vsel %vm6565, %v6549, %v6581
        %v6598 = vsel %vm6566, %v6550, %v6582
        %v6599 = vsel %vm6567, %v6551, %v6583
        %v6600 = vsel %vm6568, %v6552, %v6584
        %v6601 = vsel %vm6569, %v6553, %v6585
        %v6602 = vsel %vm6570, %v6554, %v6586
        %v6603 = vsel %vm6571, %v6555, %v6587
        %v6604 = vsel %vm6572, %v6556, %v6588
        %v6605 = vsel %vm6573, %v6557, %v6589
        %v6606 = vsel %vm6574, %v6558, %v6590
        %v6607 = vsel %vm6575, %v6559, %v6591
        %v6608 = vsel %vm6576, %v6560, %v6592
        %v6609 = vsel %vm6577, %v6561, %v6593
        %v6610 = vsel %vm6578, %v6562, %v6594
        %v6611 = vsel %vm6579, %v6563, %v6595
        %v6612 = vsel %vm6580, %v6564, %v6596
        %v6613 = vld [vmem:[%s269 + $0x17] ss:$0 sm:$0xff]
        %v6614 = vld [vmem:[%s269 + $0x42] ss:$0 sm:$0xff]
        %v6615 = vadd.f32 %v6613, 1.0
        %v6616 = vmul.f32 %v6597, %v6615
        %v6617 = vmul.f32 %v6598, %v6615
        %v6618 = vmul.f32 %v6599, %v6615
        %v6619 = vmul.f32 %v6600, %v6615
        %v6620 = vmul.f32 %v6601, %v6615
        %v6621 = vmul.f32 %v6602, %v6615
        %v6622 = vmul.f32 %v6603, %v6615
        %v6623 = vmul.f32 %v6604, %v6615
        %v6624 = vadd.f32 %v6616, %v6614
        %v6625 = vadd.f32 %v6617, %v6614
        %v6626 = vadd.f32 %v6618, %v6614
        %v6627 = vadd.f32 %v6619, %v6614
        %v6628 = vadd.f32 %v6620, %v6614
        %v6629 = vadd.f32 %v6621, %v6614
        %v6630 = vadd.f32 %v6622, %v6614
        %v6631 = vadd.f32 %v6623, %v6614
        %v6632 = vld [vmem:[%s526 + $0x17] ss:$0 sm:$0xff]
        %v6633 = vld [vmem:[%s526 + $0x42] ss:$0 sm:$0xff]
        %v6634 = vadd.f32 %v6632, 1.0
        %v6635 = vmul.f32 %v6605, %v6634
        %v6636 = vmul.f32 %v6606, %v6634
        %v6637 = vmul.f32 %v6607, %v6634
        %v6638 = vmul.f32 %v6608, %v6634
        %v6639 = vmul.f32 %v6609, %v6634
        %v6640 = vmul.f32 %v6610, %v6634
        %v6641 = vmul.f32 %v6611, %v6634
        %v6642 = vmul.f32 %v6612, %v6634
        %v6643 = vadd.f32 %v6635, %v6633
        %v6644 = vadd.f32 %v6636, %v6633
        %v6645 = vadd.f32 %v6637, %v6633
        %v6646 = vadd.f32 %v6638, %v6633
        %v6647 = vadd.f32 %v6639, %v6633
        %v6648 = vadd.f32 %v6640, %v6633
        %v6649 = vadd.f32 %v6641, %v6633
        %v6650 = vadd.f32 %v6642, %v6633
        %v6651 = vld [vmem:[#allocation5 + $0xc60] sm:$0xf]
        %v6652 = vld [vmem:[#allocation5 + $0xc68] sm:$0xf]
        %v6653 = vld [vmem:[#allocation5 + $0xc70] sm:$0xf]
        %v6654 = vld [vmem:[#allocation5 + $0xc78] sm:$0xf]
        %v6655 = vld [vmem:[#allocation5 + $0xc80] sm:$0xf]
        %v6656 = vld [vmem:[#allocation5 + $0xc88] sm:$0xf]
        %v6657 = vld [vmem:[#allocation5 + $0xc90] sm:$0xf]
        %v6658 = vld [vmem:[#allocation5 + $0xc98] sm:$0xf]
        %v6659 = vld [vmem:[#allocation5 + $0xca0] sm:$0xf]
        %v6660 = vld [vmem:[#allocation5 + $0xca8] sm:$0xf]
        %v6661 = vld [vmem:[#allocation5 + $0xcb0] sm:$0xf]
        %v6662 = vld [vmem:[#allocation5 + $0xcb8] sm:$0xf]
        %v6663 = vld [vmem:[#allocation5 + $0xcc0] sm:$0xf]
        %v6664 = vld [vmem:[#allocation5 + $0xcc8] sm:$0xf]
        %v6665 = vld [vmem:[#allocation5 + $0xcd0] sm:$0xf]
        %v6666 = vld [vmem:[#allocation5 + $0xcd8] sm:$0xf]
        %v6667 = vpack.c.bf16 %v6625, %v6624
        %v6668 = vpack.c.bf16 %v6627, %v6626
        %v6669 = vpack.c.bf16 %v6629, %v6628
        %v6670 = vpack.c.bf16 %v6631, %v6630
        %v6671 = vpack.c.bf16 %v6644, %v6643
        %v6672 = vpack.c.bf16 %v6646, %v6645
        %v6673 = vpack.c.bf16 %v6648, %v6647
        %v6674 = vpack.c.bf16 %v6650, %v6649
        %v6675 = vld [vmem:[#allocation7 + $0x21] ss:$0 sm:$0xff]
        %v6692 = vunpack.c.l.b16 %v6651
        %v6693 = vunpack.c.l.b16 %v6652
        %v6694 = vunpack.c.l.b16 %v6653
        %v6695 = vunpack.c.l.b16 %v6654
        %v6696 = vunpack.c.l.b16 %v6655
        %v6697 = vunpack.c.l.b16 %v6656
        %v6698 = vunpack.c.l.b16 %v6657
        %v6699 = vunpack.c.l.b16 %v6658
        %v6700 = vunpack.c.l.b16 %v6659
        %v6701 = vunpack.c.l.b16 %v6660
        %v6702 = vunpack.c.l.b16 %v6661
        %v6703 = vunpack.c.l.b16 %v6662
        %v6704 = vunpack.c.l.b16 %v6663
        %v6705 = vunpack.c.l.b16 %v6664
        %v6706 = vunpack.c.l.b16 %v6665
        %v6707 = vunpack.c.l.b16 %v6666
        %v6708 = vpack.c.b16 %v6693, %v6692
        %v6709 = vpack.c.b16 %v6695, %v6694
        %v6710 = vpack.c.b16 %v6697, %v6696
        %v6711 = vpack.c.b16 %v6699, %v6698
        %v6712 = vpack.c.b16 %v6701, %v6700
        %v6713 = vpack.c.b16 %v6703, %v6702
        %v6714 = vpack.c.b16 %v6705, %v6704
        %v6715 = vpack.c.b16 %v6707, %v6706
        %6724 = vmatprep.subr.bf16.mxu0 0
        %6725 = vmatpush1.bf16.msra.mxu0 %v6708
        %6726 = vmatprep.subr.bf16.mxu0 0
        %6727 = vmatpush1.bf16.msra.mxu0 %v6709
        %6728 = vmatprep.subr.bf16.mxu0 0
        %6729 = vmatpush1.bf16.msra.mxu0 %v6710
        %6730 = vmatprep.subr.bf16.mxu0 0
        %6731 = vmatpush1.bf16.msra.mxu0 %v6711
        %6732 = vmatprep.subr.bf16.mxu0 0
        %6733 = vmatpush1.bf16.msra.mxu0 %v6712
        %6734 = vmatprep.subr.bf16.mxu0 0
        %6735 = vmatpush1.bf16.msra.mxu0 %v6713
        %6736 = vmatprep.subr.bf16.mxu0 0
        %6737 = vmatpush1.bf16.msra.mxu0 %v6714
        %6738 = vmatprep.subr.bf16.mxu0 0
        %6739 = vmatpush1.bf16.msra.mxu0 %v6715
        %6740 = vmatprep.subr.bf16.mxu0 0
        %6741 = vmatpush1.bf16.msra.mxu0 0
        %6742 = vmatprep.subr.bf16.mxu0 0
        %6743 = vmatpush1.bf16.msra.mxu0 0
        %6744 = vmatprep.subr.bf16.mxu0 0
        %6745 = vmatpush1.bf16.msra.mxu0 0
        %6746 = vmatprep.subr.bf16.mxu0 0
        %6747 = vmatpush1.bf16.msra.mxu0 0
        %6748 = vmatprep.subr.bf16.mxu0 0
        %6749 = vmatpush1.bf16.msra.mxu0 0
        %6750 = vmatprep.subr.bf16.mxu0 0
        %6751 = vmatpush1.bf16.msra.mxu0 0
        %6752 = vmatprep.subr.bf16.mxu0 0
        %6753 = vmatpush1.bf16.msra.mxu0 0
        %6754 = vmatprep.subr.bf16.mxu0 0
        %6755 = vmatpush1.bf16.msra.mxu0 0
        %6756 = vmatprep.mubr.bf16.mxu0 0
        %6757 = vmatmul.mubr.bf16.gmra.mrb[0].mxu0 %v6667
        %v6758 = vpop.f32.mrb[0].mxu0
        %v6759 = vadd.f32 %v6675, %v6758
        %v6760 = vpop.f32.mrb[0].mxu0
        %v6761 = vpop.f32.mrb[0].mxu0
        %v6762 = vadd.f32 %v6675, %v6761
        %v6763 = vpop.f32.mrb[0].mxu0
        %6764 = vmatprep.mubr.bf16.mxu0 0
        %6765 = vmatmul.mubr.bf16.gmra.mrb[0].mxu0 %v6668
        %v6766 = vpop.f32.mrb[0].mxu0
        %v6767 = vadd.f32 %v6675, %v6766
        %v6768 = vpop.f32.mrb[0].mxu0
        %v6769 = vpop.f32.mrb[0].mxu0
        %v6770 = vadd.f32 %v6675, %v6769
        %v6771 = vpop.f32.mrb[0].mxu0
        %6772 = vmatprep.mubr.bf16.mxu0 0
        %6773 = vmatmul.mubr.bf16.gmra.mrb[0].mxu0 %v6669
        %v6774 = vpop.f32.mrb[0].mxu0
        %v6775 = vadd.f32 %v6675, %v6774
        %v6776 = vpop.f32.mrb[0].mxu0
        %v6777 = vpop.f32.mrb[0].mxu0
        %v6778 = vadd.f32 %v6675, %v6777
        %v6779 = vpop.f32.mrb[0].mxu0
        %6780 = vmatprep.mubr.bf16.mxu0 0
        %6781 = vmatmul.mubr.bf16.gmra.mrb[0].mxu0 %v6670
        %v6782 = vpop.f32.mrb[0].mxu0
        %v6783 = vadd.f32 %v6675, %v6782
        %v6784 = vpop.f32.mrb[0].mxu0
        %v6785 = vpop.f32.mrb[0].mxu0
        %v6786 = vadd.f32 %v6675, %v6785
        %v6787 = vpop.f32.mrb[0].mxu0
        %6788 = vmatprep.mubr.bf16.mxu0 0
        %6789 = vmatmul.mubr.bf16.gmra.mrb[0].mxu0 %v6671
        %v6790 = vpop.f32.mrb[0].mxu0
        %v6791 = vadd.f32 %v6675, %v6790
        %v6792 = vpop.f32.mrb[0].mxu0
        %v6793 = vpop.f32.mrb[0].mxu0
        %v6794 = vadd.f32 %v6675, %v6793
        %v6795 = vpop.f32.mrb[0].mxu0
        %6796 = vmatprep.mubr.bf16.mxu0 0
        %6797 = vmatmul.mubr.bf16.gmra.mrb[0].mxu0 %v6672
        %v6798 = vpop.f32.mrb[0].mxu0
        %v6799 = vadd.f32 %v6675, %v6798
        %v6800 = vpop.f32.mrb[0].mxu0
        %v6801 = vpop.f32.mrb[0].mxu0
        %v6802 = vadd.f32 %v6675, %v6801
        %v6803 = vpop.f32.mrb[0].mxu0
        %6804 = vmatprep.mubr.bf16.mxu0 0
        %6805 = vmatmul.mubr.bf16.gmra.mrb[0].mxu0 %v6673
        %v6806 = vpop.f32.mrb[0].mxu0
        %v6807 = vadd.f32 %v6675, %v6806
        %v6808 = vpop.f32.mrb[0].mxu0
        %v6809 = vpop.f32.mrb[0].mxu0
        %v6810 = vadd.f32 %v6675, %v6809
        %v6811 = vpop.f32.mrb[0].mxu0
        %6812 = vmatprep.mubr.bf16.mxu0 0
        %6813 = vmatmul.mubr.bf16.gmra.mrb[0].mxu0 %v6674
        %v6814 = vpop.f32.mrb[0].mxu0
        %v6815 = vadd.f32 %v6675, %v6814
        %v6816 = vpop.f32.mrb[0].mxu0
        %v6817 = vpop.f32.mrb[0].mxu0
        %v6818 = vadd.f32 %v6675, %v6817
        %v6819 = vpop.f32.mrb[0].mxu0
        %6820 = vdwg.mxu0
        %vm6821 = vcmp.gt.f32.partialorder %v6759, 0.0
        %vm6822 = vcmp.gt.f32.partialorder %v6762, 0.0
        %vm6823 = vcmp.gt.f32.partialorder %v6767, 0.0
        %vm6824 = vcmp.gt.f32.partialorder %v6770, 0.0
        %vm6825 = vcmp.gt.f32.partialorder %v6775, 0.0
        %vm6826 = vcmp.gt.f32.partialorder %v6778, 0.0
        %vm6827 = vcmp.gt.f32.partialorder %v6783, 0.0
        %vm6828 = vcmp.gt.f32.partialorder %v6786, 0.0
        %vm6829 = vcmp.gt.f32.partialorder %v6791, 0.0
        %vm6830 = vcmp.gt.f32.partialorder %v6794, 0.0
        %vm6831 = vcmp.gt.f32.partialorder %v6799, 0.0
        %vm6832 = vcmp.gt.f32.partialorder %v6802, 0.0
        %vm6833 = vcmp.gt.f32.partialorder %v6807, 0.0
        %vm6834 = vcmp.gt.f32.partialorder %v6810, 0.0
        %vm6835 = vcmp.gt.f32.partialorder %v6815, 0.0
        %vm6836 = vcmp.gt.f32.partialorder %v6818, 0.0
        %v6837 = vmul.f32 %v6759, 0.1
        %v6838 = vmul.f32 %v6762, 0.1
        %v6839 = vmul.f32 %v6767, 0.1
        %v6840 = vmul.f32 %v6770, 0.1
        %v6841 = vmul.f32 %v6775, 0.1
        %v6842 = vmul.f32 %v6778, 0.1
        %v6843 = vmul.f32 %v6783, 0.1
        %v6844 = vmul.f32 %v6786, 0.1
        %v6845 = vmul.f32 %v6791, 0.1
        %v6846 = vmul.f32 %v6794, 0.1
        %v6847 = vmul.f32 %v6799, 0.1
        %v6848 = vmul.f32 %v6802, 0.1
        %v6849 = vmul.f32 %v6807, 0.1
        %v6850 = vmul.f32 %v6810, 0.1
        %v6851 = vmul.f32 %v6815, 0.1
        %v6852 = vmul.f32 %v6818, 0.1
        %v6853 = vsel %vm6821, %v6759, %v6837
        %v6854 = vsel %vm6822, %v6762, %v6838
        %v6855 = vsel %vm6823, %v6767, %v6839
        %v6856 = vsel %vm6824, %v6770, %v6840
        %v6857 = vsel %vm6825, %v6775, %v6841
        %v6858 = vsel %vm6826, %v6778, %v6842
        %v6859 = vsel %vm6827, %v6783, %v6843
        %v6860 = vsel %vm6828, %v6786, %v6844
        %v6861 = vsel %vm6829, %v6791, %v6845
        %v6862 = vsel %vm6830, %v6794, %v6846
        %v6863 = vsel %vm6831, %v6799, %v6847
        %v6864 = vsel %vm6832, %v6802, %v6848
        %v6865 = vsel %vm6833, %v6807, %v6849
        %v6866 = vsel %vm6834, %v6810, %v6850
        %v6867 = vsel %vm6835, %v6815, %v6851
        %v6868 = vsel %vm6836, %v6818, %v6852
        %v6869 = vld [vmem:[%s269 + $0x20] ss:$0 sm:$0xff]
        %v6870 = vld [vmem:[%s269 + $0x43] ss:$0 sm:$0xff]
        %v6871 = vadd.f32 %v6869, 1.0
        %v6872 = vmul.f32 %v6853, %v6871
        %v6873 = vmul.f32 %v6854, %v6871
        %v6874 = vmul.f32 %v6855, %v6871
        %v6875 = vmul.f32 %v6856, %v6871
        %v6876 = vmul.f32 %v6857, %v6871
        %v6877 = vmul.f32 %v6858, %v6871
        %v6878 = vmul.f32 %v6859, %v6871
        %v6879 = vmul.f32 %v6860, %v6871
        %v6880 = vadd.f32 %v6872, %v6870
        %v6881 = vadd.f32 %v6873, %v6870
        %v6882 = vadd.f32 %v6874, %v6870
        %v6883 = vadd.f32 %v6875, %v6870
        %v6884 = vadd.f32 %v6876, %v6870
        %v6885 = vadd.f32 %v6877, %v6870
        %v6886 = vadd.f32 %v6878, %v6870
        %v6887 = vadd.f32 %v6879, %v6870
        %v6888 = vld [vmem:[%s526 + $0x20] ss:$0 sm:$0xff]
        %v6889 = vld [vmem:[%s526 + $0x43] ss:$0 sm:$0xff]
        %v6890 = vadd.f32 %v6888, 1.0
        %v6891 = vmul.f32 %v6861, %v6890
        %v6892 = vmul.f32 %v6862, %v6890
        %v6893 = vmul.f32 %v6863, %v6890
        %v6894 = vmul.f32 %v6864, %v6890
        %v6895 = vmul.f32 %v6865, %v6890
        %v6896 = vmul.f32 %v6866, %v6890
        %v6897 = vmul.f32 %v6867, %v6890
        %v6898 = vmul.f32 %v6868, %v6890
        %v6899 = vadd.f32 %v6891, %v6889
        %v6900 = vadd.f32 %v6892, %v6889
        %v6901 = vadd.f32 %v6893, %v6889
        %v6902 = vadd.f32 %v6894, %v6889
        %v6903 = vadd.f32 %v6895, %v6889
        %v6904 = vadd.f32 %v6896, %v6889
        %v6905 = vadd.f32 %v6897, %v6889
        %v6906 = vadd.f32 %v6898, %v6889
        %v6907 = vld [vmem:[#allocation5 + $0xce0] sm:$0xf]
        %v6908 = vld [vmem:[#allocation5 + $0xce8] sm:$0xf]
        %v6909 = vld [vmem:[#allocation5 + $0xcf0] sm:$0xf]
        %v6910 = vld [vmem:[#allocation5 + $0xcf8] sm:$0xf]
        %v6911 = vld [vmem:[#allocation5 + $0xd00] sm:$0xf]
        %v6912 = vld [vmem:[#allocation5 + $0xd08] sm:$0xf]
        %v6913 = vld [vmem:[#allocation5 + $0xd10] sm:$0xf]
        %v6914 = vld [vmem:[#allocation5 + $0xd18] sm:$0xf]
        %v6915 = vld [vmem:[#allocation5 + $0xd20] sm:$0xf]
        %v6916 = vld [vmem:[#allocation5 + $0xd28] sm:$0xf]
        %v6917 = vld [vmem:[#allocation5 + $0xd30] sm:$0xf]
        %v6918 = vld [vmem:[#allocation5 + $0xd38] sm:$0xf]
        %v6919 = vld [vmem:[#allocation5 + $0xd40] sm:$0xf]
        %v6920 = vld [vmem:[#allocation5 + $0xd48] sm:$0xf]
        %v6921 = vld [vmem:[#allocation5 + $0xd50] sm:$0xf]
        %v6922 = vld [vmem:[#allocation5 + $0xd58] sm:$0xf]
        %v6923 = vpack.c.bf16 %v6881, %v6880
        %v6924 = vpack.c.bf16 %v6883, %v6882
        %v6925 = vpack.c.bf16 %v6885, %v6884
        %v6926 = vpack.c.bf16 %v6887, %v6886
        %v6927 = vpack.c.bf16 %v6900, %v6899
        %v6928 = vpack.c.bf16 %v6902, %v6901
        %v6929 = vpack.c.bf16 %v6904, %v6903
        %v6930 = vpack.c.bf16 %v6906, %v6905
        %v6931 = vld [vmem:[#allocation7 + $0x22] ss:$0 sm:$0xff]
        %v6948 = vunpack.c.l.b16 %v6907
        %v6949 = vunpack.c.l.b16 %v6908
        %v6950 = vunpack.c.l.b16 %v6909
        %v6951 = vunpack.c.l.b16 %v6910
        %v6952 = vunpack.c.l.b16 %v6911
        %v6953 = vunpack.c.l.b16 %v6912
        %v6954 = vunpack.c.l.b16 %v6913
        %v6955 = vunpack.c.l.b16 %v6914
        %v6956 = vunpack.c.l.b16 %v6915
        %v6957 = vunpack.c.l.b16 %v6916
        %v6958 = vunpack.c.l.b16 %v6917
        %v6959 = vunpack.c.l.b16 %v6918
        %v6960 = vunpack.c.l.b16 %v6919
        %v6961 = vunpack.c.l.b16 %v6920
        %v6962 = vunpack.c.l.b16 %v6921
        %v6963 = vunpack.c.l.b16 %v6922
        %v6964 = vpack.c.b16 %v6949, %v6948
        %v6965 = vpack.c.b16 %v6951, %v6950
        %v6966 = vpack.c.b16 %v6953, %v6952
        %v6967 = vpack.c.b16 %v6955, %v6954
        %v6968 = vpack.c.b16 %v6957, %v6956
        %v6969 = vpack.c.b16 %v6959, %v6958
        %v6970 = vpack.c.b16 %v6961, %v6960
        %v6971 = vpack.c.b16 %v6963, %v6962
        %6980 = vmatprep.subr.bf16.mxu0 0
        %6981 = vmatpush1.bf16.msra.mxu0 %v6964
        %6982 = vmatprep.subr.bf16.mxu0 0
        %6983 = vmatpush1.bf16.msra.mxu0 %v6965
        %6984 = vmatprep.subr.bf16.mxu0 0
        %6985 = vmatpush1.bf16.msra.mxu0 %v6966
        %6986 = vmatprep.subr.bf16.mxu0 0
        %6987 = vmatpush1.bf16.msra.mxu0 %v6967
        %6988 = vmatprep.subr.bf16.mxu0 0
        %6989 = vmatpush1.bf16.msra.mxu0 %v6968
        %6990 = vmatprep.subr.bf16.mxu0 0
        %6991 = vmatpush1.bf16.msra.mxu0 %v6969
        %6992 = vmatprep.subr.bf16.mxu0 0
        %6993 = vmatpush1.bf16.msra.mxu0 %v6970
        %6994 = vmatprep.subr.bf16.mxu0 0
        %6995 = vmatpush1.bf16.msra.mxu0 %v6971
        %6996 = vmatprep.subr.bf16.mxu0 0
        %6997 = vmatpush1.bf16.msra.mxu0 0
        %6998 = vmatprep.subr.bf16.mxu0 0
        %6999 = vmatpush1.bf16.msra.mxu0 0
        %7000 = vmatprep.subr.bf16.mxu0 0
        %7001 = vmatpush1.bf16.msra.mxu0 0
        %7002 = vmatprep.subr.bf16.mxu0 0
        %7003 = vmatpush1.bf16.msra.mxu0 0
        %7004 = vmatprep.subr.bf16.mxu0 0
        %7005 = vmatpush1.bf16.msra.mxu0 0
        %7006 = vmatprep.subr.bf16.mxu0 0
        %7007 = vmatpush1.bf16.msra.mxu0 0
        %7008 = vmatprep.subr.bf16.mxu0 0
        %7009 = vmatpush1.bf16.msra.mxu0 0
        %7010 = vmatprep.subr.bf16.mxu0 0
        %7011 = vmatpush1.bf16.msra.mxu0 0
        %7012 = vmatprep.mubr.bf16.mxu0 0
        %7013 = vmatmul.mubr.bf16.gmra.mrb[0].mxu0 %v6923
        %v7014 = vpop.f32.mrb[0].mxu0
        %v7015 = vadd.f32 %v6931, %v7014
        %v7016 = vpop.f32.mrb[0].mxu0
        %v7017 = vpop.f32.mrb[0].mxu0
        %v7018 = vadd.f32 %v6931, %v7017
        %v7019 = vpop.f32.mrb[0].mxu0
        %7020 = vmatprep.mubr.bf16.mxu0 0
        %7021 = vmatmul.mubr.bf16.gmra.mrb[0].mxu0 %v6924
        %v7022 = vpop.f32.mrb[0].mxu0
        %v7023 = vadd.f32 %v6931, %v7022
        %v7024 = vpop.f32.mrb[0].mxu0
        %v7025 = vpop.f32.mrb[0].mxu0
        %v7026 = vadd.f32 %v6931, %v7025
        %v7027 = vpop.f32.mrb[0].mxu0
        %7028 = vmatprep.mubr.bf16.mxu0 0
        %7029 = vmatmul.mubr.bf16.gmra.mrb[0].mxu0 %v6925
        %v7030 = vpop.f32.mrb[0].mxu0
        %v7031 = vadd.f32 %v6931, %v7030
        %v7032 = vpop.f32.mrb[0].mxu0
        %v7033 = vpop.f32.mrb[0].mxu0
        %v7034 = vadd.f32 %v6931, %v7033
        %v7035 = vpop.f32.mrb[0].mxu0
        %7036 = vmatprep.mubr.bf16.mxu0 0
        %7037 = vmatmul.mubr.bf16.gmra.mrb[0].mxu0 %v6926
        %v7038 = vpop.f32.mrb[0].mxu0
        %v7039 = vadd.f32 %v6931, %v7038
        %v7040 = vpop.f32.mrb[0].mxu0
        %v7041 = vpop.f32.mrb[0].mxu0
        %v7042 = vadd.f32 %v6931, %v7041
        %v7043 = vpop.f32.mrb[0].mxu0
        %7044 = vmatprep.mubr.bf16.mxu0 0
        %7045 = vmatmul.mubr.bf16.gmra.mrb[0].mxu0 %v6927
        %v7046 = vpop.f32.mrb[0].mxu0
        %v7047 = vadd.f32 %v6931, %v7046
        %v7048 = vpop.f32.mrb[0].mxu0
        %v7049 = vpop.f32.mrb[0].mxu0
        %v7050 = vadd.f32 %v6931, %v7049
        %v7051 = vpop.f32.mrb[0].mxu0
        %7052 = vmatprep.mubr.bf16.mxu0 0
        %7053 = vmatmul.mubr.bf16.gmra.mrb[0].mxu0 %v6928
        %v7054 = vpop.f32.mrb[0].mxu0
        %v7055 = vadd.f32 %v6931, %v7054
        %v7056 = vpop.f32.mrb[0].mxu0
        %v7057 = vpop.f32.mrb[0].mxu0
        %v7058 = vadd.f32 %v6931, %v7057
        %v7059 = vpop.f32.mrb[0].mxu0
        %7060 = vmatprep.mubr.bf16.mxu0 0
        %7061 = vmatmul.mubr.bf16.gmra.mrb[0].mxu0 %v6929
        %v7062 = vpop.f32.mrb[0].mxu0
        %v7063 = vadd.f32 %v6931, %v7062
        %v7064 = vpop.f32.mrb[0].mxu0
        %v7065 = vpop.f32.mrb[0].mxu0
        %v7066 = vadd.f32 %v6931, %v7065
        %v7067 = vpop.f32.mrb[0].mxu0
        %7068 = vmatprep.mubr.bf16.mxu0 0
        %7069 = vmatmul.mubr.bf16.gmra.mrb[0].mxu0 %v6930
        %v7070 = vpop.f32.mrb[0].mxu0
        %v7071 = vadd.f32 %v6931, %v7070
        %v7072 = vpop.f32.mrb[0].mxu0
        %v7073 = vpop.f32.mrb[0].mxu0
        %v7074 = vadd.f32 %v6931, %v7073
        %v7075 = vpop.f32.mrb[0].mxu0
        %7076 = vdwg.mxu0
        %vm7077 = vcmp.gt.f32.partialorder %v7015, 0.0
        %vm7078 = vcmp.gt.f32.partialorder %v7018, 0.0
        %vm7079 = vcmp.gt.f32.partialorder %v7023, 0.0
        %vm7080 = vcmp.gt.f32.partialorder %v7026, 0.0
        %vm7081 = vcmp.gt.f32.partialorder %v7031, 0.0
        %vm7082 = vcmp.gt.f32.partialorder %v7034, 0.0
        %vm7083 = vcmp.gt.f32.partialorder %v7039, 0.0
        %vm7084 = vcmp.gt.f32.partialorder %v7042, 0.0
        %vm7085 = vcmp.gt.f32.partialorder %v7047, 0.0
        %vm7086 = vcmp.gt.f32.partialorder %v7050, 0.0
        %vm7087 = vcmp.gt.f32.partialorder %v7055, 0.0
        %vm7088 = vcmp.gt.f32.partialorder %v7058, 0.0
        %vm7089 = vcmp.gt.f32.partialorder %v7063, 0.0
        %vm7090 = vcmp.gt.f32.partialorder %v7066, 0.0
        %vm7091 = vcmp.gt.f32.partialorder %v7071, 0.0
        %vm7092 = vcmp.gt.f32.partialorder %v7074, 0.0
        %v7093 = vmul.f32 %v7015, 0.1
        %v7094 = vmul.f32 %v7018, 0.1
        %v7095 = vmul.f32 %v7023, 0.1
        %v7096 = vmul.f32 %v7026, 0.1
        %v7097 = vmul.f32 %v7031, 0.1
        %v7098 = vmul.f32 %v7034, 0.1
        %v7099 = vmul.f32 %v7039, 0.1
        %v7100 = vmul.f32 %v7042, 0.1
        %v7101 = vmul.f32 %v7047, 0.1
        %v7102 = vmul.f32 %v7050, 0.1
        %v7103 = vmul.f32 %v7055, 0.1
        %v7104 = vmul.f32 %v7058, 0.1
        %v7105 = vmul.f32 %v7063, 0.1
        %v7106 = vmul.f32 %v7066, 0.1
        %v7107 = vmul.f32 %v7071, 0.1
        %v7108 = vmul.f32 %v7074, 0.1
        %v7109 = vsel %vm7077, %v7015, %v7093
        %v7110 = vsel %vm7078, %v7018, %v7094
        %v7111 = vsel %vm7079, %v7023, %v7095
        %v7112 = vsel %vm7080, %v7026, %v7096
        %v7113 = vsel %vm7081, %v7031, %v7097
        %v7114 = vsel %vm7082, %v7034, %v7098
        %v7115 = vsel %vm7083, %v7039, %v7099
        %v7116 = vsel %vm7084, %v7042, %v7100
        %v7117 = vsel %vm7085, %v7047, %v7101
        %v7118 = vsel %vm7086, %v7050, %v7102
        %v7119 = vsel %vm7087, %v7055, %v7103
        %v7120 = vsel %vm7088, %v7058, %v7104
        %v7121 = vsel %vm7089, %v7063, %v7105
        %v7122 = vsel %vm7090, %v7066, %v7106
        %v7123 = vsel %vm7091, %v7071, %v7107
        %v7124 = vsel %vm7092, %v7074, %v7108
        %v7125 = vld [vmem:[%s269 + $0x21] ss:$0 sm:$0xff]
        %v7126 = vld [vmem:[%s269 + $0x44] ss:$0 sm:$0xff]
        %v7127 = vadd.f32 %v7125, 1.0
        %v7128 = vmul.f32 %v7109, %v7127
        %v7129 = vmul.f32 %v7110, %v7127
        %v7130 = vmul.f32 %v7111, %v7127
        %v7131 = vmul.f32 %v7112, %v7127
        %v7132 = vmul.f32 %v7113, %v7127
        %v7133 = vmul.f32 %v7114, %v7127
        %v7134 = vmul.f32 %v7115, %v7127
        %v7135 = vmul.f32 %v7116, %v7127
        %v7136 = vadd.f32 %v7128, %v7126
        %v7137 = vadd.f32 %v7129, %v7126
        %v7138 = vadd.f32 %v7130, %v7126
        %v7139 = vadd.f32 %v7131, %v7126
        %v7140 = vadd.f32 %v7132, %v7126
        %v7141 = vadd.f32 %v7133, %v7126
        %v7142 = vadd.f32 %v7134, %v7126
        %v7143 = vadd.f32 %v7135, %v7126
        %v7144 = vld [vmem:[%s526 + $0x21] ss:$0 sm:$0xff]
        %v7145 = vld [vmem:[%s526 + $0x44] ss:$0 sm:$0xff]
        %v7146 = vadd.f32 %v7144, 1.0
        %v7147 = vmul.f32 %v7117, %v7146
        %v7148 = vmul.f32 %v7118, %v7146
        %v7149 = vmul.f32 %v7119, %v7146
        %v7150 = vmul.f32 %v7120, %v7146
        %v7151 = vmul.f32 %v7121, %v7146
        %v7152 = vmul.f32 %v7122, %v7146
        %v7153 = vmul.f32 %v7123, %v7146
        %v7154 = vmul.f32 %v7124, %v7146
        %v7155 = vadd.f32 %v7147, %v7145
        %v7156 = vadd.f32 %v7148, %v7145
        %v7157 = vadd.f32 %v7149, %v7145
        %v7158 = vadd.f32 %v7150, %v7145
        %v7159 = vadd.f32 %v7151, %v7145
        %v7160 = vadd.f32 %v7152, %v7145
        %v7161 = vadd.f32 %v7153, %v7145
        %v7162 = vadd.f32 %v7154, %v7145
        %v7163 = vld [vmem:[#allocation5 + $0xd60] sm:$0xf]
        %v7164 = vld [vmem:[#allocation5 + $0xd68] sm:$0xf]
        %v7165 = vld [vmem:[#allocation5 + $0xd70] sm:$0xf]
        %v7166 = vld [vmem:[#allocation5 + $0xd78] sm:$0xf]
        %v7167 = vld [vmem:[#allocation5 + $0xd80] sm:$0xf]
        %v7168 = vld [vmem:[#allocation5 + $0xd88] sm:$0xf]
        %v7169 = vld [vmem:[#allocation5 + $0xd90] sm:$0xf]
        %v7170 = vld [vmem:[#allocation5 + $0xd98] sm:$0xf]
        %v7171 = vpack.c.bf16 %v7137, %v7136
        %v7172 = vpack.c.bf16 %v7139, %v7138
        %v7173 = vpack.c.bf16 %v7141, %v7140
        %v7174 = vpack.c.bf16 %v7143, %v7142
        %v7175 = vpack.c.bf16 %v7156, %v7155
        %v7176 = vpack.c.bf16 %v7158, %v7157
        %v7177 = vpack.c.bf16 %v7160, %v7159
        %v7178 = vpack.c.bf16 %v7162, %v7161
        %v7179 = vld [vmem:[#allocation7 + $0x23] ss:$0 sm:$0xff]
        %v7188 = vunpack.c.l.b16 %v7163
        %v7189 = vunpack.c.l.b16 %v7164
        %v7190 = vunpack.c.l.b16 %v7165
        %v7191 = vunpack.c.l.b16 %v7166
        %v7192 = vunpack.c.l.b16 %v7167
        %v7193 = vunpack.c.l.b16 %v7168
        %v7194 = vunpack.c.l.b16 %v7169
        %v7195 = vunpack.c.l.b16 %v7170
        %v7196 = vpack.c.b16 %v7189, %v7188
        %v7197 = vpack.c.b16 %v7191, %v7190
        %v7198 = vpack.c.b16 %v7193, %v7192
        %v7199 = vpack.c.b16 %v7195, %v7194
        %v7205 = vsel %vm820, %v7171, 0
        %v7208 = vsel %vm820, %v7172, 0
        %v7211 = vsel %vm820, %v7173, 0
        %v7214 = vsel %vm820, %v7174, 0
        %v7217 = vsel %vm820, %v7175, 0
        %v7220 = vsel %vm820, %v7176, 0
        %v7223 = vsel %vm820, %v7177, 0
        %v7226 = vsel %vm820, %v7178, 0
        %7228 = vmatprep.subr.bf16.mxu0 0
        %7229 = vmatpush1.bf16.msra.mxu0 %v7196
        %7230 = vmatprep.subr.bf16.mxu0 0
        %7231 = vmatpush1.bf16.msra.mxu0 %v7197
        %7232 = vmatprep.subr.bf16.mxu0 0
        %7233 = vmatpush1.bf16.msra.mxu0 %v7198
        %7234 = vmatprep.subr.bf16.mxu0 0
        %7235 = vmatpush1.bf16.msra.mxu0 %v7199
        %7236 = vmatprep.subr.bf16.mxu0 0
        %7237 = vmatpush1.bf16.msra.mxu0 0
        %7238 = vmatprep.subr.bf16.mxu0 0
        %7239 = vmatpush1.bf16.msra.mxu0 0
        %7240 = vmatprep.subr.bf16.mxu0 0
        %7241 = vmatpush1.bf16.msra.mxu0 0
        %7242 = vmatprep.subr.bf16.mxu0 0
        %7243 = vmatpush1.bf16.msra.mxu0 0
        %7244 = vmatprep.subr.bf16.mxu0 0
        %7245 = vmatpush1.bf16.msra.mxu0 0
        %7246 = vmatprep.subr.bf16.mxu0 0
        %7247 = vmatpush1.bf16.msra.mxu0 0
        %7248 = vmatprep.subr.bf16.mxu0 0
        %7249 = vmatpush1.bf16.msra.mxu0 0
        %7250 = vmatprep.subr.bf16.mxu0 0
        %7251 = vmatpush1.bf16.msra.mxu0 0
        %7252 = vmatprep.subr.bf16.mxu0 0
        %7253 = vmatpush1.bf16.msra.mxu0 0
        %7254 = vmatprep.subr.bf16.mxu0 0
        %7255 = vmatpush1.bf16.msra.mxu0 0
        %7256 = vmatprep.subr.bf16.mxu0 0
        %7257 = vmatpush1.bf16.msra.mxu0 0
        %7258 = vmatprep.subr.bf16.mxu0 0
        %7259 = vmatpush1.bf16.msra.mxu0 0
        %7260 = vmatprep.mubr.bf16.mxu0 0
        %7261 = vmatmul.mubr.bf16.gmra.mrb[0].mxu0 %v7205
        %v7262 = vpop.f32.mrb[0].mxu0
        %v7263 = vadd.f32 %v7179, %v7262
        %v7264 = vpop.f32.mrb[0].mxu0
        %v7265 = vpop.f32.mrb[0].mxu0
        %v7266 = vadd.f32 %v7179, %v7265
        %v7267 = vpop.f32.mrb[0].mxu0
        %7268 = vmatprep.mubr.bf16.mxu0 0
        %7269 = vmatmul.mubr.bf16.gmra.mrb[0].mxu0 %v7208
        %v7270 = vpop.f32.mrb[0].mxu0
        %v7271 = vadd.f32 %v7179, %v7270
        %v7272 = vpop.f32.mrb[0].mxu0
        %v7273 = vpop.f32.mrb[0].mxu0
        %v7274 = vadd.f32 %v7179, %v7273
        %v7275 = vpop.f32.mrb[0].mxu0
        %7276 = vmatprep.mubr.bf16.mxu0 0
        %7277 = vmatmul.mubr.bf16.gmra.mrb[0].mxu0 %v7211
        %v7278 = vpop.f32.mrb[0].mxu0
        %v7279 = vadd.f32 %v7179, %v7278
        %v7280 = vpop.f32.mrb[0].mxu0
        %v7281 = vpop.f32.mrb[0].mxu0
        %v7282 = vadd.f32 %v7179, %v7281
        %v7283 = vpop.f32.mrb[0].mxu0
        %7284 = vmatprep.mubr.bf16.mxu0 0
        %7285 = vmatmul.mubr.bf16.gmra.mrb[0].mxu0 %v7214
        %v7286 = vpop.f32.mrb[0].mxu0
        %v7287 = vadd.f32 %v7179, %v7286
        %v7288 = vpop.f32.mrb[0].mxu0
        %v7289 = vpop.f32.mrb[0].mxu0
        %v7290 = vadd.f32 %v7179, %v7289
        %v7291 = vpop.f32.mrb[0].mxu0
        %7292 = vmatprep.mubr.bf16.mxu0 0
        %7293 = vmatmul.mubr.bf16.gmra.mrb[0].mxu0 %v7217
        %v7294 = vpop.f32.mrb[0].mxu0
        %v7295 = vadd.f32 %v7179, %v7294
        %v7296 = vpop.f32.mrb[0].mxu0
        %v7297 = vpop.f32.mrb[0].mxu0
        %v7298 = vadd.f32 %v7179, %v7297
        %v7299 = vpop.f32.mrb[0].mxu0
        %7300 = vmatprep.mubr.bf16.mxu0 0
        %7301 = vmatmul.mubr.bf16.gmra.mrb[0].mxu0 %v7220
        %v7302 = vpop.f32.mrb[0].mxu0
        %v7303 = vadd.f32 %v7179, %v7302
        %v7304 = vpop.f32.mrb[0].mxu0
        %v7305 = vpop.f32.mrb[0].mxu0
        %v7306 = vadd.f32 %v7179, %v7305
        %v7307 = vpop.f32.mrb[0].mxu0
        %7308 = vmatprep.mubr.bf16.mxu0 0
        %7309 = vmatmul.mubr.bf16.gmra.mrb[0].mxu0 %v7223
        %v7310 = vpop.f32.mrb[0].mxu0
        %v7311 = vadd.f32 %v7179, %v7310
        %v7312 = vpop.f32.mrb[0].mxu0
        %v7313 = vpop.f32.mrb[0].mxu0
        %v7314 = vadd.f32 %v7179, %v7313
        %v7315 = vpop.f32.mrb[0].mxu0
        %7316 = vmatprep.mubr.bf16.mxu0 0
        %7317 = vmatmul.mubr.bf16.gmra.mrb[0].mxu0 %v7226
        %v7318 = vpop.f32.mrb[0].mxu0
        %v7319 = vadd.f32 %v7179, %v7318
        %v7320 = vpop.f32.mrb[0].mxu0
        %v7321 = vpop.f32.mrb[0].mxu0
        %v7322 = vadd.f32 %v7179, %v7321
        %v7323 = vpop.f32.mrb[0].mxu0
        %7324 = vdwg.mxu0
        %vm7325 = vcmp.gt.f32.partialorder %v7263, 0.0
        %vm7326 = vcmp.gt.f32.partialorder %v7266, 0.0
        %vm7327 = vcmp.gt.f32.partialorder %v7271, 0.0
        %vm7328 = vcmp.gt.f32.partialorder %v7274, 0.0
        %vm7329 = vcmp.gt.f32.partialorder %v7279, 0.0
        %vm7330 = vcmp.gt.f32.partialorder %v7282, 0.0
        %vm7331 = vcmp.gt.f32.partialorder %v7287, 0.0
        %vm7332 = vcmp.gt.f32.partialorder %v7290, 0.0
        %vm7333 = vcmp.gt.f32.partialorder %v7295, 0.0
        %vm7334 = vcmp.gt.f32.partialorder %v7298, 0.0
        %vm7335 = vcmp.gt.f32.partialorder %v7303, 0.0
        %vm7336 = vcmp.gt.f32.partialorder %v7306, 0.0
        %vm7337 = vcmp.gt.f32.partialorder %v7311, 0.0
        %vm7338 = vcmp.gt.f32.partialorder %v7314, 0.0
        %vm7339 = vcmp.gt.f32.partialorder %v7319, 0.0
        %vm7340 = vcmp.gt.f32.partialorder %v7322, 0.0
        %v7341 = vmul.f32 %v7263, 0.1
        %v7342 = vmul.f32 %v7266, 0.1
        %v7343 = vmul.f32 %v7271, 0.1
        %v7344 = vmul.f32 %v7274, 0.1
        %v7345 = vmul.f32 %v7279, 0.1
        %v7346 = vmul.f32 %v7282, 0.1
        %v7347 = vmul.f32 %v7287, 0.1
        %v7348 = vmul.f32 %v7290, 0.1
        %v7349 = vmul.f32 %v7295, 0.1
        %v7350 = vmul.f32 %v7298, 0.1
        %v7351 = vmul.f32 %v7303, 0.1
        %v7352 = vmul.f32 %v7306, 0.1
        %v7353 = vmul.f32 %v7311, 0.1
        %v7354 = vmul.f32 %v7314, 0.1
        %v7355 = vmul.f32 %v7319, 0.1
        %v7356 = vmul.f32 %v7322, 0.1
        %v7357 = vsel %vm7325, %v7263, %v7341
        %v7358 = vsel %vm7326, %v7266, %v7342
        %v7359 = vsel %vm7327, %v7271, %v7343
        %v7360 = vsel %vm7328, %v7274, %v7344
        %v7361 = vsel %vm7329, %v7279, %v7345
        %v7362 = vsel %vm7330, %v7282, %v7346
        %v7363 = vsel %vm7331, %v7287, %v7347
        %v7364 = vsel %vm7332, %v7290, %v7348
        %v7365 = vsel %vm7333, %v7295, %v7349
        %v7366 = vsel %vm7334, %v7298, %v7350
        %v7367 = vsel %vm7335, %v7303, %v7351
        %v7368 = vsel %vm7336, %v7306, %v7352
        %v7369 = vsel %vm7337, %v7311, %v7353
        %v7370 = vsel %vm7338, %v7314, %v7354
        %v7371 = vsel %vm7339, %v7319, %v7355
        %v7372 = vsel %vm7340, %v7322, %v7356
        %v7373 = vld [vmem:[%s269 + $0x22] ss:$0 sm:$0xff]
        %v7374 = vld [vmem:[%s269 + $0x45] ss:$0 sm:$0xff]
        %v7375 = vadd.f32 %v7373, 1.0
        %v7376 = vmul.f32 %v7357, %v7375
        %v7377 = vmul.f32 %v7358, %v7375
        %v7378 = vmul.f32 %v7359, %v7375
        %v7379 = vmul.f32 %v7360, %v7375
        %v7380 = vmul.f32 %v7361, %v7375
        %v7381 = vmul.f32 %v7362, %v7375
        %v7382 = vmul.f32 %v7363, %v7375
        %v7383 = vmul.f32 %v7364, %v7375
        %v7384 = vadd.f32 %v7376, %v7374
        %v7385 = vadd.f32 %v7377, %v7374
        %v7386 = vadd.f32 %v7378, %v7374
        %v7387 = vadd.f32 %v7379, %v7374
        %v7388 = vadd.f32 %v7380, %v7374
        %v7389 = vadd.f32 %v7381, %v7374
        %v7390 = vadd.f32 %v7382, %v7374
        %v7391 = vadd.f32 %v7383, %v7374
        %v7392 = vld [vmem:[%s526 + $0x22] ss:$0 sm:$0xff]
        %v7393 = vld [vmem:[%s526 + $0x45] ss:$0 sm:$0xff]
        %v7394 = vadd.f32 %v7392, 1.0
        %v7395 = vmul.f32 %v7365, %v7394
        %v7396 = vmul.f32 %v7366, %v7394
        %v7397 = vmul.f32 %v7367, %v7394
        %v7398 = vmul.f32 %v7368, %v7394
        %v7399 = vmul.f32 %v7369, %v7394
        %v7400 = vmul.f32 %v7370, %v7394
        %v7401 = vmul.f32 %v7371, %v7394
        %v7402 = vmul.f32 %v7372, %v7394
        %v7403 = vadd.f32 %v7395, %v7393
        %v7404 = vadd.f32 %v7396, %v7393
        %v7405 = vadd.f32 %v7397, %v7393
        %v7406 = vadd.f32 %v7398, %v7393
        %v7407 = vadd.f32 %v7399, %v7393
        %v7408 = vadd.f32 %v7400, %v7393
        %v7409 = vadd.f32 %v7401, %v7393
        %v7410 = vadd.f32 %v7402, %v7393
        %v7411 = vld [vmem:[#allocation5 + $0xda0] sm:$0xf]
        %v7412 = vld [vmem:[#allocation5 + $0xda8] sm:$0xf]
        %v7413 = vld [vmem:[#allocation5 + $0xdb0] sm:$0xf]
        %v7414 = vld [vmem:[#allocation5 + $0xdb8] sm:$0xf]
        %v7415 = vld [vmem:[#allocation5 + $0xdc0] sm:$0xf]
        %v7416 = vld [vmem:[#allocation5 + $0xdc8] sm:$0xf]
        %v7417 = vld [vmem:[#allocation5 + $0xdd0] sm:$0xf]
        %v7418 = vld [vmem:[#allocation5 + $0xdd8] sm:$0xf]
        %v7419 = vld [vmem:[#allocation5 + $0xde0] sm:$0xf]
        %v7420 = vld [vmem:[#allocation5 + $0xde8] sm:$0xf]
        %v7421 = vld [vmem:[#allocation5 + $0xdf0] sm:$0xf]
        %v7422 = vld [vmem:[#allocation5 + $0xdf8] sm:$0xf]
        %v7423 = vld [vmem:[#allocation5 + $0xe00] sm:$0xf]
        %v7424 = vld [vmem:[#allocation5 + $0xe08] sm:$0xf]
        %v7425 = vld [vmem:[#allocation5 + $0xe10] sm:$0xf]
        %v7426 = vld [vmem:[#allocation5 + $0xe18] sm:$0xf]
        %v7427 = vpack.c.bf16 %v7385, %v7384
        %v7428 = vpack.c.bf16 %v7387, %v7386
        %v7429 = vpack.c.bf16 %v7389, %v7388
        %v7430 = vpack.c.bf16 %v7391, %v7390
        %v7431 = vpack.c.bf16 %v7404, %v7403
        %v7432 = vpack.c.bf16 %v7406, %v7405
        %v7433 = vpack.c.bf16 %v7408, %v7407
        %v7434 = vpack.c.bf16 %v7410, %v7409
        %v7435 = vld [vmem:[#allocation7 + $0x24] ss:$0 sm:$0xff]
        %v7452 = vunpack.c.l.b16 %v7411
        %v7453 = vunpack.c.l.b16 %v7412
        %v7454 = vunpack.c.l.b16 %v7413
        %v7455 = vunpack.c.l.b16 %v7414
        %v7456 = vunpack.c.l.b16 %v7415
        %v7457 = vunpack.c.l.b16 %v7416
        %v7458 = vunpack.c.l.b16 %v7417
        %v7459 = vunpack.c.l.b16 %v7418
        %v7460 = vunpack.c.l.b16 %v7419
        %v7461 = vunpack.c.l.b16 %v7420
        %v7462 = vunpack.c.l.b16 %v7421
        %v7463 = vunpack.c.l.b16 %v7422
        %v7464 = vunpack.c.l.b16 %v7423
        %v7465 = vunpack.c.l.b16 %v7424
        %v7466 = vunpack.c.l.b16 %v7425
        %v7467 = vunpack.c.l.b16 %v7426
        %v7468 = vpack.c.b16 %v7453, %v7452
        %v7469 = vpack.c.b16 %v7455, %v7454
        %v7470 = vpack.c.b16 %v7457, %v7456
        %v7471 = vpack.c.b16 %v7459, %v7458
        %v7472 = vpack.c.b16 %v7461, %v7460
        %v7473 = vpack.c.b16 %v7463, %v7462
        %v7474 = vpack.c.b16 %v7465, %v7464
        %v7475 = vpack.c.b16 %v7467, %v7466
        %7484 = vmatprep.subr.bf16.mxu0 0
        %7485 = vmatpush1.bf16.msra.mxu0 %v7468
        %7486 = vmatprep.subr.bf16.mxu0 0
        %7487 = vmatpush1.bf16.msra.mxu0 %v7469
        %7488 = vmatprep.subr.bf16.mxu0 0
        %7489 = vmatpush1.bf16.msra.mxu0 %v7470
        %7490 = vmatprep.subr.bf16.mxu0 0
        %7491 = vmatpush1.bf16.msra.mxu0 %v7471
        %7492 = vmatprep.subr.bf16.mxu0 0
        %7493 = vmatpush1.bf16.msra.mxu0 %v7472
        %7494 = vmatprep.subr.bf16.mxu0 0
        %7495 = vmatpush1.bf16.msra.mxu0 %v7473
        %7496 = vmatprep.subr.bf16.mxu0 0
        %7497 = vmatpush1.bf16.msra.mxu0 %v7474
        %7498 = vmatprep.subr.bf16.mxu0 0
        %7499 = vmatpush1.bf16.msra.mxu0 %v7475
        %7500 = vmatprep.subr.bf16.mxu0 0
        %7501 = vmatpush1.bf16.msra.mxu0 0
        %7502 = vmatprep.subr.bf16.mxu0 0
        %7503 = vmatpush1.bf16.msra.mxu0 0
        %7504 = vmatprep.subr.bf16.mxu0 0
        %7505 = vmatpush1.bf16.msra.mxu0 0
        %7506 = vmatprep.subr.bf16.mxu0 0
        %7507 = vmatpush1.bf16.msra.mxu0 0
        %7508 = vmatprep.subr.bf16.mxu0 0
        %7509 = vmatpush1.bf16.msra.mxu0 0
        %7510 = vmatprep.subr.bf16.mxu0 0
        %7511 = vmatpush1.bf16.msra.mxu0 0
        %7512 = vmatprep.subr.bf16.mxu0 0
        %7513 = vmatpush1.bf16.msra.mxu0 0
        %7514 = vmatprep.subr.bf16.mxu0 0
        %7515 = vmatpush1.bf16.msra.mxu0 0
        %7516 = vmatprep.mubr.bf16.mxu0 0
        %7517 = vmatmul.mubr.bf16.gmra.mrb[0].mxu0 %v7427
        %v7518 = vpop.f32.mrb[0].mxu0
        %v7519 = vadd.f32 %v7435, %v7518
        %v7520 = vpop.f32.mrb[0].mxu0
        %v7521 = vpop.f32.mrb[0].mxu0
        %v7522 = vadd.f32 %v7435, %v7521
        %v7523 = vpop.f32.mrb[0].mxu0
        %7524 = vmatprep.mubr.bf16.mxu0 0
        %7525 = vmatmul.mubr.bf16.gmra.mrb[0].mxu0 %v7428
        %v7526 = vpop.f32.mrb[0].mxu0
        %v7527 = vadd.f32 %v7435, %v7526
        %v7528 = vpop.f32.mrb[0].mxu0
        %v7529 = vpop.f32.mrb[0].mxu0
        %v7530 = vadd.f32 %v7435, %v7529
        %v7531 = vpop.f32.mrb[0].mxu0
        %7532 = vmatprep.mubr.bf16.mxu0 0
        %7533 = vmatmul.mubr.bf16.gmra.mrb[0].mxu0 %v7429
        %v7534 = vpop.f32.mrb[0].mxu0
        %v7535 = vadd.f32 %v7435, %v7534
        %v7536 = vpop.f32.mrb[0].mxu0
        %v7537 = vpop.f32.mrb[0].mxu0
        %v7538 = vadd.f32 %v7435, %v7537
        %v7539 = vpop.f32.mrb[0].mxu0
        %7540 = vmatprep.mubr.bf16.mxu0 0
        %7541 = vmatmul.mubr.bf16.gmra.mrb[0].mxu0 %v7430
        %v7542 = vpop.f32.mrb[0].mxu0
        %v7543 = vadd.f32 %v7435, %v7542
        %v7544 = vpop.f32.mrb[0].mxu0
        %v7545 = vpop.f32.mrb[0].mxu0
        %v7546 = vadd.f32 %v7435, %v7545
        %v7547 = vpop.f32.mrb[0].mxu0
        %7548 = vmatprep.mubr.bf16.mxu0 0
        %7549 = vmatmul.mubr.bf16.gmra.mrb[0].mxu0 %v7431
        %v7550 = vpop.f32.mrb[0].mxu0
        %v7551 = vadd.f32 %v7435, %v7550
        %v7552 = vpop.f32.mrb[0].mxu0
        %v7553 = vpop.f32.mrb[0].mxu0
        %v7554 = vadd.f32 %v7435, %v7553
        %v7555 = vpop.f32.mrb[0].mxu0
        %7556 = vmatprep.mubr.bf16.mxu0 0
        %7557 = vmatmul.mubr.bf16.gmra.mrb[0].mxu0 %v7432
        %v7558 = vpop.f32.mrb[0].mxu0
        %v7559 = vadd.f32 %v7435, %v7558
        %v7560 = vpop.f32.mrb[0].mxu0
        %v7561 = vpop.f32.mrb[0].mxu0
        %v7562 = vadd.f32 %v7435, %v7561
        %v7563 = vpop.f32.mrb[0].mxu0
        %7564 = vmatprep.mubr.bf16.mxu0 0
        %7565 = vmatmul.mubr.bf16.gmra.mrb[0].mxu0 %v7433
        %v7566 = vpop.f32.mrb[0].mxu0
        %v7567 = vadd.f32 %v7435, %v7566
        %v7568 = vpop.f32.mrb[0].mxu0
        %v7569 = vpop.f32.mrb[0].mxu0
        %v7570 = vadd.f32 %v7435, %v7569
        %v7571 = vpop.f32.mrb[0].mxu0
        %7572 = vmatprep.mubr.bf16.mxu0 0
        %7573 = vmatmul.mubr.bf16.gmra.mrb[0].mxu0 %v7434
        %v7574 = vpop.f32.mrb[0].mxu0
        %v7575 = vadd.f32 %v7435, %v7574
        %v7576 = vpop.f32.mrb[0].mxu0
        %v7577 = vpop.f32.mrb[0].mxu0
        %v7578 = vadd.f32 %v7435, %v7577
        %v7579 = vpop.f32.mrb[0].mxu0
        %7580 = vdwg.mxu0
        %v7581 = vld [vmem:[#allocation7 + $0x25] ss:$0 sm:$0xff]
        %v7582 = vmul.f32 %v7519, 0.1
        %v7583 = vmul.f32 %v7522, 0.1
        %v7584 = vmul.f32 %v7527, 0.1
        %v7585 = vmul.f32 %v7530, 0.1
        %v7586 = vmul.f32 %v7535, 0.1
        %v7587 = vmul.f32 %v7538, 0.1
        %v7588 = vmul.f32 %v7543, 0.1
        %v7589 = vmul.f32 %v7546, 0.1
        %v7590 = vmul.f32 %v7551, 0.1
        %v7591 = vmul.f32 %v7554, 0.1
        %v7592 = vmul.f32 %v7559, 0.1
        %v7593 = vmul.f32 %v7562, 0.1
        %v7594 = vmul.f32 %v7567, 0.1
        %v7595 = vmul.f32 %v7570, 0.1
        %v7596 = vmul.f32 %v7575, 0.1
        %v7597 = vmul.f32 %v7578, 0.1
        %v7598 = vmul.f32 %v273, %v7581
        %v7599 = vmul.f32 %v274, %v7581
        %v7600 = vmul.f32 %v275, %v7581
        %v7601 = vmul.f32 %v276, %v7581
        %v7602 = vmul.f32 %v277, %v7581
        %v7603 = vmul.f32 %v278, %v7581
        %v7604 = vmul.f32 %v279, %v7581
        %v7605 = vmul.f32 %v280, %v7581
        %v7606 = vmul.f32 %v281, %v7581
        %v7607 = vmul.f32 %v282, %v7581
        %v7608 = vmul.f32 %v283, %v7581
        %v7609 = vmul.f32 %v284, %v7581
        %v7610 = vmul.f32 %v285, %v7581
        %v7611 = vmul.f32 %v286, %v7581
        %v7612 = vmul.f32 %v287, %v7581
        %v7613 = vmul.f32 %v288, %v7581
        %v7614 = vadd.f32 %v7582, %v7598
        %v7615 = vadd.f32 %v7583, %v7599
        %v7616 = vadd.f32 %v7584, %v7600
        %v7617 = vadd.f32 %v7585, %v7601
        %v7618 = vadd.f32 %v7586, %v7602
        %v7619 = vadd.f32 %v7587, %v7603
        %v7620 = vadd.f32 %v7588, %v7604
        %v7621 = vadd.f32 %v7589, %v7605
        %v7622 = vadd.f32 %v7590, %v7606
        %v7623 = vadd.f32 %v7591, %v7607
        %v7624 = vadd.f32 %v7592, %v7608
        %v7625 = vadd.f32 %v7593, %v7609
        %v7626 = vadd.f32 %v7594, %v7610
        %v7627 = vadd.f32 %v7595, %v7611
        %v7628 = vadd.f32 %v7596, %v7612
        %v7629 = vadd.f32 %v7597, %v7613
        %7630 = vst [vmem:[%s262] sm:$0xff] %v7614
        %7631 = vst [vmem:[%s262 + $0x8] sm:$0xff] %v7615
        %7632 = vst [vmem:[%s262 + $0x10] sm:$0xff] %v7616
        %7633 = vst [vmem:[%s262 + $0x18] sm:$0xff] %v7617
        %7634 = vst [vmem:[%s262 + $0x20] sm:$0xff] %v7618
        %7635 = vst [vmem:[%s262 + $0x28] sm:$0xff] %v7619
        %7636 = vst [vmem:[%s262 + $0x30] sm:$0xff] %v7620
        %7637 = vst [vmem:[%s262 + $0x38] sm:$0xff] %v7621
        %7638 = vst [vmem:[%s262 + $0x40] sm:$0xff] %v7622
        %7639 = vst [vmem:[%s262 + $0x48] sm:$0xff] %v7623
        %7640 = vst [vmem:[%s262 + $0x50] sm:$0xff] %v7624
        %7641 = vst [vmem:[%s262 + $0x58] sm:$0xff] %v7625
        %7642 = vst [vmem:[%s262 + $0x60] sm:$0xff] %v7626
        %7643 = vst [vmem:[%s262 + $0x68] sm:$0xff] %v7627
        %7644 = vst [vmem:[%s262 + $0x70] sm:$0xff] %v7628
        %7645 = vst [vmem:[%s262 + $0x78] sm:$0xff] %v7629
        %s7646 = sand.u32 %s124, 1
        %s7647 = scalar_lea.sflag [#allocation4], %s7646
        %s7648 = sand.u32 %s124, 1
        %s7649 = smul.addr %s7648, 128
        %s7650 = scalar_lea.vmem [#allocation8], %s7649
        // Predicated region
        $region49: #{tpu_custom_call.1} parent=35 // pred_check
          %p7651 = pneg %p134
        $region50: #{tpu_custom_call.1} parent=35 // pred_check_branch
          %7653 = sbr.rel (%p7651) target = $region52
        $region51: #{tpu_custom_call.1} parent=35 // pred_region
          %s7654 = smul.u32 16, %s22
          %s7656 = ssub.s32 2048, 2048
          %7657 = vsyncadd %s7647, %s7656
          %s7658 = smul.addr %s7654, 128
          %s7659 = scalar_lea.hbm %s4, %s7658
          %s7660 = sshll.u32 %s7650, 4
          %s7661 = int_to_ptr.vmem [resolvable:$true] %s7660
          %7666 = dma.vmem_to_hbm [thread:$0]  %s7661, 2048, %s7659, %s7647, 128, 128, 8
        $region52: #{tpu_custom_call.1} parent=35 // pred_fallthru
          _
      $region36: #{tpu_custom_call.1} parent=5 // pred_fallthru
        _
      %p7667 = scmp.le.s32.totalorder 2, %s17
      // Predicated region
      $region53: #{tpu_custom_call.1} parent=5 // pred_check
        %p7668 = pneg %p7667
      $region54: #{tpu_custom_call.1} parent=5 // pred_check_branch
        %7670 = sbr.rel (%p7668) target = $region56
      $region55: #{tpu_custom_call.1} parent=5 // pred_region
        %s7671 = ssub.s32 %s17, 2
        // Predicated region
        $region57: #{tpu_custom_call.1} parent=55 // pred_check
          %p7672 = pneg %p140
        $region58: #{tpu_custom_call.1} parent=55 // pred_check_branch
          %7674 = sbr.rel (%p7672) target = $region60
        $region59: #{tpu_custom_call.1} parent=55 // pred_region
          %s7675 = sand.u32 %s125, 1
          %s7676 = scalar_lea.sflag [#allocation4], %s7675
          %s7677 = sand.u32 %s125, 1
          %s7678 = smul.addr %s7677, 128
          %s7679 = scalar_lea.vmem [#allocation8], %s7678
          %7680 = dma.done %s7676, 2048
        $region60: #{tpu_custom_call.1} parent=55 // pred_fallthru
          _
      $region56: #{tpu_custom_call.1} parent=5 // pred_fallthru
        _
    $region6: #{tpu_custom_call.1} parent=1 // loop_footer
      %s21 = sadd.s32 1, %s17
    $region7: #{tpu_custom_call.1} parent=1 // loop_footer_branch
      %16 = sbr.rel target = $region3
    $region8: #{tpu_custom_call.1} parent=1 // loop_exit
      _
    %7681 = vsyncpa [#allocation3], 1
    %s7682 = scalar_lea.sflag [#allocation3], 1
    %7683 = vsyncpa %s7682, 1
    %7684 = vsyncpa [#allocation6], 1
    %7685 = vsyncpa [#allocation4], 1
    %s7686 = scalar_lea.sflag [#allocation4], 1
    %7687 = vsyncpa %s7686, 1

</llo_original>
